<compile_context>
chip_gen: v7x
topology: tpu7x:2x2x1
jax: 0.10.0
libtpu: 0.0.40
codegen_flags: <defaults>
</compile_context>

<pallas_src>
import functools

import jax
import jax.numpy as jnp
import numpy as np
from jax.experimental import pallas as pl
from jax.experimental.pallas import tpu as pltpu


def _ceil_to(v, m):
    return -(-v // m) * m


# --------------------------- fused decoder kernel --------------------------- #

def _decoder_kernel(x4, x3, x2, x1, x0,
                    u1, u2, u3, u4_hbm,
                    w1, w2, w3, w4,
                    s1, b1, s2, b2, s3, b3,
                    o_ref,
                    u4_vmem, u4_sem, patch_ref,
                    *, n, stage_meta):
    """Entire decoder in one kernel invocation; everything stays VMEM-resident.

    Activation layout: (C_pad, N * pp128) with
      C_pad = channels rounded up to 8 (sublanes),
      pp128 = per-image (H+2)*(W+2) (zero 1-pixel halo) rounded up to 128 lanes.
    Each image owns a disjoint, 128-aligned lane slab, so upsampling is a
    per-image matmul against one shared block and all stores are lane-dense.
    """
    # Prefetch u4 (largest remaining input, bf16) so its HBM->VMEM transfer
    # overlaps with stages 1-3 compute instead of serializing before the body.
    u4_copy = pltpu.make_async_copy(u4_hbm, u4_vmem, u4_sem)
    u4_copy.start()

    taps = tuple((kh, kw) for kh in range(3) for kw in range(3))

    def mm(a, b):
        return jax.lax.dot_general(a, b, (((1,), (0,)), ((), ())),
                                   preferred_element_type=jnp.float32)

    def im2col_store(x, row0, c_p, lane0, width, wpo):
        # 9 XLU lane rotations of x (c_p, width); written straight into the
        # persistent patch scratch (no concatenate / fresh SSA buffers).
        # For tap (kh, kw), output position f needs input at lane f + delta;
        # wrap-around only ever lands on halo / lane-pad lanes whose outputs
        # are discarded downstream (zero halo + zero u-matrix rows/cols).
        for t, (kh, kw) in enumerate(taps):
            delta = (kh - 1) * wpo + (kw - 1)
            v = x if delta == 0 else pltpu.roll(x, shift=(-delta) % width, axis=1)
            patch_ref[row0 + t * c_p: row0 + (t + 1) * c_p,
                      lane0: lane0 + width] = v

    def stage(prev, u, skip, w, scale, bias, relu, meta):
        wpo, ppi, ppo, cpp, csp = meta
        nf = n * ppo
        uf = u.astype(jnp.float32)              # bf16 in HBM, f32 in-kernel
        # --- skip-tensor im2col taps (full lane width) ---
        im2col_store(skip, 9 * cpp, csp, 0, nf, wpo)
        # --- bilinear upsample (per-image block-diagonal matmul) + taps ---
        for b in range(n):
            up_b = mm(prev[:, b * ppi:(b + 1) * ppi], uf)   # (cpp, ppo) f32
            im2col_store(up_b, 0, cpp, b * ppo, ppo, wpo)
        # --- one fused conv matmul over [prev | skip] patches ---
        k = 9 * (cpp + csp)
        y = mm(w.astype(jnp.float32), patch_ref[0:k, 0:nf])  # (cout_p, nf) f32
        if scale is not None:
            y = y * scale + bias                # folded eval-mode BN (f32 VPU)
        if relu:
            y = jnp.maximum(y, 0.0)
        return y

    y = stage(x4[...], u1[...], x3[...], w1[...], s1[...], b1[...], True,
              stage_meta[0])
    y = stage(y, u2[...], x2[...], w2[...], s2[...], b2[...], True,
              stage_meta[1])
    y = stage(y, u3[...], x1[...], w3[...], s3[...], b3[...], True,
              stage_meta[2])
    u4_copy.wait()                              # u4 transfer hidden behind 1-3
    y = stage(y, u4_vmem[...], x0[...], w4[...], None, None, False,
              stage_meta[3])                    # conv4: no BN / ReLU
    o_ref[...] = y                              # lane-dense f32 store


# --------------------------- host-side layout prep -------------------------- #

def _nchw_to_flat(x):
    """(N,C,H,W) -> (pad8(C), N * pad128((H+2)*(W+2))), zero 1-pixel halo.

    Each image's flattened padded-spatial block is individually rounded up to a
    multiple of 128 lanes so per-image lane slices stay 128-aligned.
    """
    n, c, h, w = x.shape
    pp = (h + 2) * (w + 2)
    pp128 = _ceil_to(pp, 128)
    xc = jnp.transpose(x, (1, 0, 2, 3))
    xc = jnp.pad(xc, ((0, 0), (0, 0), (1, 1), (1, 1)))
    flat = xc.reshape(c, n, pp)
    flat = jnp.pad(flat, ((0, _ceil_to(c, 8) - c), (0, 0), (0, pp128 - pp)))
    return flat.reshape(_ceil_to(c, 8), n * pp128)


def _interp_coeffs(out_size, in_size):
    """PyTorch bilinear, align_corners=False (incl. negative-source clamp)."""
    s = (np.arange(out_size, dtype=np.float64) + 0.5) * (in_size / out_size) - 0.5
    s = np.maximum(s, 0.0)
    i0 = np.floor(s).astype(np.int64)
    frac = s - i0
    i0 = np.clip(i0, 0, in_size - 1)
    i1 = np.clip(i0 + 1, 0, in_size - 1)
    m = np.zeros((out_size, in_size), np.float64)
    m[np.arange(out_size), i0] += 1.0 - frac
    m[np.arange(out_size), i1] += frac
    return m


def _upsample_block(h_in, w_in, h_out, w_out):
    """Per-image (pp_in_128, pp_out_128) map: padded-flat in -> padded-flat out.

    Zero rows for halo / lane-pad inputs (garbage cannot leak in); zero columns
    for halo / lane-pad outputs (output emerges with a clean zero halo, ready
    for the next SAME conv).  Stored bf16 (only real HBM-heavy input).
    """
    my = _interp_coeffs(h_out, h_in)
    mx = _interp_coeffs(w_out, w_in)
    k2 = np.kron(my, mx).astype(np.float32)         # (h_out*w_out, h_in*w_in)
    wp_i, wp_o = w_in + 2, w_out + 2
    ppi128 = _ceil_to((h_in + 2) * wp_i, 128)
    ppo128 = _ceil_to((h_out + 2) * wp_o, 128)
    u = np.zeros((ppi128, ppo128), np.float32)
    in_idx = ((np.arange(h_in) + 1)[:, None] * wp_i
              + (np.arange(w_in) + 1)[None, :]).reshape(-1)
    out_idx = ((np.arange(h_out) + 1)[:, None] * wp_o
               + (np.arange(w_out) + 1)[None, :]).reshape(-1)
    u[np.ix_(in_idx, out_idx)] = k2.T
    return jnp.asarray(u, dtype=jnp.bfloat16)


def _conv_weight_matrix(w_hwio, c_prev):
    """HWIO weight -> single fused (Cout_p, 9*Cprev_p + 9*Cskip_p) bf16 matrix.

    The prev-part and skip-part are folded separately (taps-major, channel
    padding to 8) then concatenated along K, so each stage needs only one MXU
    matmul over the stacked [prev | skip] im2col patches.
    """
    cout = w_hwio.shape[-1]
    cout_p = _ceil_to(cout, 8)

    def fold(wpart):
        c = wpart.shape[2]
        c_p = _ceil_to(c, 8)
        wt = jnp.transpose(wpart, (3, 0, 1, 2)).reshape(cout, 9, c)
        wt = jnp.pad(wt, ((0, cout_p - cout), (0, 0), (0, c_p - c)))
        return wt.reshape(cout_p, 9 * c_p)

    fused = jnp.concatenate([fold(w_hwio[:, :, :c_prev, :]),
                             fold(w_hwio[:, :, c_prev:, :])], axis=1)
    return fused.astype(jnp.bfloat16)


# ------------------------------ parameters ---------------------------------- #

def init_decoder_params(key, skip_channels, output_channels):
    in_ch = [skip_channels[3] + output_channels[0],
             skip_channels[2] + output_channels[1],
             skip_channels[1] + output_channels[2],
             skip_channels[0] + output_channels[3]]
    out_ch = [output_channels[1], output_channels[2],
              output_channels[3], output_channels[4]]
    eps = 1e-5
    keys = jax.random.split(key, 4)
    params = {}
    for i in range(4):
        fan_in = in_ch[i] * 9
        w = jax.random.normal(keys[i], (3, 3, in_ch[i], out_ch[i]),
                              jnp.float32) / jnp.sqrt(float(fan_in))
        params[f"conv{i + 1}_w"] = w
        if i < 3:
            # Eval-mode BatchNorm folded to scale/bias (default running stats).
            gamma = jnp.ones((out_ch[i],), jnp.float32)
            beta = jnp.zeros((out_ch[i],), jnp.float32)
            rmean = jnp.zeros((out_ch[i],), jnp.float32)
            rvar = jnp.ones((out_ch[i],), jnp.float32)
            scale = gamma / jnp.sqrt(rvar + eps)
            params[f"bn{i + 1}_scale"] = scale
            params[f"bn{i + 1}_bias"] = beta - rmean * scale
    return params


# ------------------------------ forward (Pallas) ----------------------------- #

def decoder_forward(params, x0, x1, x2, x3, x4):
    """Inputs NCHW (PyTorch convention); output NCHW."""
    n = x0.shape[0]

    def pp128(h, w):
        return _ceil_to((h + 2) * (w + 2), 128)

    hw_in = [(x4.shape[2], x4.shape[3]), (x3.shape[2], x3.shape[3]),
             (x2.shape[2], x2.shape[3]), (x1.shape[2], x1.shape[3])]
    hw_out = [(x3.shape[2], x3.shape[3]), (x2.shape[2], x2.shape[3]),
              (x1.shape[2], x1.shape[3]), (x0.shape[2], x0.shape[3])]

    # Boundary layout prep (one-time, host side): per-image 128-aligned flat
    # layout, zero halo, padded channel dims.  Skip tensors stay f32 (tiny).
    x4f, x3f, x2f = _nchw_to_flat(x4), _nchw_to_flat(x3), _nchw_to_flat(x2)
    x1f, x0f = _nchw_to_flat(x1), _nchw_to_flat(x0)

    # One shared per-image bilinear block per stage (block-diagonal structure),
    # stored bf16: u4 drops from 7.5 MB dense-batched f32 to ~0.94 MB.
    u_blocks = [_upsample_block(hi, wi, ho, wo)
                for (hi, wi), (ho, wo) in zip(hw_in, hw_out)]

    # Fused conv weight matrices (prev|skip concatenated along K), bf16.
    c_prev = [x4.shape[1], params["conv1_w"].shape[-1],
              params["conv2_w"].shape[-1], params["conv3_w"].shape[-1]]
    c_skip = [x3.shape[1], x2.shape[1], x1.shape[1], x0.shape[1]]
    wmats = [_conv_weight_matrix(params[f"conv{i + 1}_w"], c_prev[i])
             for i in range(4)]

    # Folded-BN affines padded to Cout_pad (pad rows kept exactly zero), f32.
    affines = []
    for i in range(3):
        cout = params[f"conv{i + 1}_w"].shape[-1]
        cp = _ceil_to(cout, 8)
        s = jnp.zeros((cp, 1), jnp.float32).at[:cout, 0].set(params[f"bn{i + 1}_scale"])
        b = jnp.zeros((cp, 1), jnp.float32).at[:cout, 0].set(params[f"bn{i + 1}_bias"])
        affines += [s, b]

    # Per-stage static metadata: (padded out width, pp_in_128, pp_out_128,
    # prev-channel pad, skip-channel pad).
    stage_meta = tuple(
        (wo + 2, pp128(hi, wi), pp128(ho, wo),
         _ceil_to(c_prev[i], 8), _ceil_to(c_skip[i], 8))
        for i, ((hi, wi), (ho, wo)) in enumerate(zip(hw_in, hw_out)))

    cout4 = params["conv4_w"].shape[-1]
    cout4_p = _ceil_to(cout4, 8)
    nf_out = n * pp128(*hw_out[3])

    k_max = max(9 * (cpp + csp) for (_, _, _, cpp, csp) in stage_meta)
    nf_max = max(n * ppo for (_, _, ppo, _, _) in stage_meta)

    kernel = functools.partial(_decoder_kernel, n=n, stage_meta=stage_meta)
    vmem = pl.BlockSpec(memory_space=pltpu.MemorySpace.VMEM)
    hbm = pl.BlockSpec(memory_space=pl.ANY)      # u4: manual overlapped DMA

    out_flat = pl.pallas_call(
        kernel,
        out_shape=jax.ShapeDtypeStruct((cout4_p, nf_out), jnp.float32),
        in_specs=[vmem] * 5 + [vmem, vmem, vmem, hbm] + [vmem] * 4 + [vmem] * 6,
        out_specs=vmem,
        scratch_shapes=[
            pltpu.VMEM(u_blocks[3].shape, jnp.bfloat16),   # u4 landing buffer
            pltpu.SemaphoreType.DMA(()),                   # u4 copy semaphore
            pltpu.VMEM((k_max, nf_max), jnp.float32),      # persistent patches
        ],
        compiler_params=pltpu.CompilerParams(
            vmem_limit_bytes=24 * 1024 * 1024),            # peak ~8-9 MiB
    )(x4f, x3f, x2f, x1f, x0f,
      u_blocks[0], u_blocks[1], u_blocks[2], u_blocks[3],
      *wmats, *affines)

    # Host-side crop: drop channel pad, lane pad and the 1-pixel halo.
    h0, w0 = hw_out[3]
    ppo = (h0 + 2) * (w0 + 2)
    ppo_128 = pp128(h0, w0)
    y = out_flat[:cout4].reshape(cout4, n, ppo_128)[:, :, :ppo]
    y = y.reshape(cout4, n, h0 + 2, w0 + 2)[:, :, 1:-1, 1:-1]
    return jnp.transpose(y, (1, 0, 2, 3))        # back to NCHW


# ------------------------- pure-JAX reference ------------------------------- #

def _bilinear_resize_nhwc(x, out_h, out_w):
    """PyTorch F.interpolate(mode='bilinear', align_corners=False) on NHWC."""
    n, h, w, c = x.shape
    ys = (jnp.arange(out_h, dtype=jnp.float32) + 0.5) * (h / out_h) - 0.5
    xs = (jnp.arange(out_w, dtype=jnp.float32) + 0.5) * (w / out_w) - 0.5
    ys = jnp.maximum(ys, 0.0)
    xs = jnp.maximum(xs, 0.0)
    y0f = jnp.floor(ys)
    x0f = jnp.floor(xs)
    wy = (ys - y0f)[None, :, None, None]
    wx = (xs - x0f)[None, None, :, None]
    y0 = jnp.clip(y0f.astype(jnp.int32), 0, h - 1)
    y1 = jnp.clip(y0f.astype(jnp.int32) + 1, 0, h - 1)
    x0 = jnp.clip(x0f.astype(jnp.int32), 0, w - 1)
    x1 = jnp.clip(x0f.astype(jnp.int32) + 1, 0, w - 1)
    r0 = x[:, y0, :, :]
    r1 = x[:, y1, :, :]
    top = r0[:, :, x0, :] * (1.0 - wx) + r0[:, :, x1, :] * wx
    bot = r1[:, :, x0, :] * (1.0 - wx) + r1[:, :, x1, :] * wx
    return top * (1.0 - wy) + bot * wy


def _ref_conv_bn_relu(x, w, scale, bias, relu):
    y = jax.lax.conv_general_dilated(
        x, w, window_strides=(1, 1), padding="SAME",
        dimension_numbers=("NHWC", "HWIO", "NHWC"),
        preferred_element_type=jnp.float32)
    if scale is not None:
        y = y * scale[None, None, None, :] + bias[None, None, None, :]
    return jnp.maximum(y, 0.0) if relu else y


def decoder_forward_reference(params, x0, x1, x2, x3, x4):
    to_nhwc = lambda t: jnp.transpose(t, (0, 2, 3, 1))
    x0, x1, x2, x3, x4 = map(to_nhwc, (x0, x1, x2, x3, x4))
    x = _bilinear_resize_nhwc(x4, x3.shape[1], x3.shape[2])
    x = jnp.concatenate([x, x3], axis=-1)
    x = _ref_conv_bn_relu(x, params["conv1_w"], params["bn1_scale"], params["bn1_bias"], True)
    x = _bilinear_resize_nhwc(x, x2.shape[1], x2.shape[2])
    x = jnp.concatenate([x, x2], axis=-1)
    x = _ref_conv_bn_relu(x, params["conv2_w"], params["bn2_scale"], params["bn2_bias"], True)
    x = _bilinear_resize_nhwc(x, x1.shape[1], x1.shape[2])
    x = jnp.concatenate([x, x1], axis=-1)
    x = _ref_conv_bn_relu(x, params["conv3_w"], params["bn3_scale"], params["bn3_bias"], True)
    x = _bilinear_resize_nhwc(x, x0.shape[1], x0.shape[2])
    x = jnp.concatenate([x, x0], axis=-1)
    x = _ref_conv_bn_relu(x, params["conv4_w"], None, None, False)
    return jnp.transpose(x, (0, 3, 1, 2))


# ---------------------------------- main ------------------------------------ #

if __name__ == "__main__":
    skip_channels = [4, 6, 8, 10]        # channels of x0, x1, x2, x3
    output_channels = [12, 10, 8, 6, 4]  # [ch(x4), conv1..conv4 out channels]
    N = 2

    key = jax.random.PRNGKey(0)
    ks = jax.random.split(key, 6)
    x0 = jax.random.normal(ks[0], (N, skip_channels[0], 32, 32), jnp.float32)
    x1 = jax.random.normal(ks[1], (N, skip_channels[1], 16, 16), jnp.float32)
    x2 = jax.random.normal(ks[2], (N, skip_channels[2], 8, 8), jnp.float32)
    x3 = jax.random.normal(ks[3], (N, skip_channels[3], 4, 4), jnp.float32)
    x4 = jax.random.normal(ks[4], (N, output_channels[0], 2, 2), jnp.float32)

    params = init_decoder_params(ks[5], skip_channels, output_channels)

    out = jax.block_until_ready(decoder_forward(params, x0, x1, x2, x3, x4))
    assert out.shape == (N, output_channels[4], 32, 32), out.shape

    ref = jax.block_until_ready(
        decoder_forward_reference(params, x0, x1, x2, x3, x4))
    # Tolerance covers TPU default-precision (bf16-pass) MXU matmuls on BOTH
    # the Pallas kernel and the XLA reference across the 4 stacked stages, plus
    # the bf16 HBM storage of the interpolation / weight matrices.
    err = float(jnp.max(jnp.abs(out - ref)))
    assert jnp.allclose(out, ref, atol=3e-2, rtol=3e-2), err

    print("KERNEL_OK")
</pallas_src>

<mosaic_0001>
module attributes {stable_mosaic.version = 11 : i64} {
  func.func @_decoder_kernel(%arg0: memref<16x256xf32, #tpu.memory_space<vmem>>, %arg1: memref<16x256xf32, #tpu.memory_space<vmem>>, %arg2: memref<8x256xf32, #tpu.memory_space<vmem>>, %arg3: memref<8x768xf32, #tpu.memory_space<vmem>>, %arg4: memref<8x2560xf32, #tpu.memory_space<vmem>>, %arg5: memref<128x128xbf16, #tpu.memory_space<vmem>>, %arg6: memref<128x128xbf16, #tpu.memory_space<vmem>>, %arg7: memref<128x384xbf16, #tpu.memory_space<vmem>>, %arg8: memref<384x1280xbf16, #tpu.memory_space<any>>, %arg9: memref<16x288xbf16, #tpu.memory_space<vmem>>, %arg10: memref<8x216xbf16, #tpu.memory_space<vmem>>, %arg11: memref<8x144xbf16, #tpu.memory_space<vmem>>, %arg12: memref<8x144xbf16, #tpu.memory_space<vmem>>, %arg13: memref<16x1xf32, #tpu.memory_space<vmem>>, %arg14: memref<16x1xf32, #tpu.memory_space<vmem>>, %arg15: memref<8x1xf32, #tpu.memory_space<vmem>>, %arg16: memref<8x1xf32, #tpu.memory_space<vmem>>, %arg17: memref<8x1xf32, #tpu.memory_space<vmem>>, %arg18: memref<8x1xf32, #tpu.memory_space<vmem>>, %arg19: memref<8x2560xf32, #tpu.memory_space<vmem>>, %arg20: memref<384x1280xbf16, #tpu.memory_space<vmem>>, %arg21: memref<!tpu.dma_semaphore, #tpu.memory_space<semaphore_mem>>, %arg22: memref<288x2560xf32, #tpu.memory_space<vmem>>) attributes {dimension_semantics = [], scalar_prefetch = 0 : i64, scratch_operands = 3 : i64, tpu.core_type = #tpu.core_type<tc>} {
    tpu.enqueue_dma source(%arg8 : memref<384x1280xbf16, #tpu.memory_space<any>>) target(%arg20 : memref<384x1280xbf16, #tpu.memory_space<vmem>>) target_semaphore(%arg21 : memref<!tpu.dma_semaphore, #tpu.memory_space<semaphore_mem>>)
    %c0 = arith.constant 0 : index
    %c0_0 = arith.constant 0 : index
    %0 = vector.load %arg0[%c0, %c0_0] : memref<16x256xf32, #tpu.memory_space<vmem>>, vector<16x256xf32>
    %c0_1 = arith.constant 0 : index
    %c0_2 = arith.constant 0 : index
    %1 = vector.load %arg5[%c0_1, %c0_2] : memref<128x128xbf16, #tpu.memory_space<vmem>>, vector<128x128xbf16>
    %c0_3 = arith.constant 0 : index
    %c0_4 = arith.constant 0 : index
    %2 = vector.load %arg1[%c0_3, %c0_4] : memref<16x256xf32, #tpu.memory_space<vmem>>, vector<16x256xf32>
    %c0_5 = arith.constant 0 : index
    %c0_6 = arith.constant 0 : index
    %3 = vector.load %arg9[%c0_5, %c0_6] : memref<16x288xbf16, #tpu.memory_space<vmem>>, vector<16x288xbf16>
    %c0_7 = arith.constant 0 : index
    %c0_8 = arith.constant 0 : index
    %4 = vector.load %arg13[%c0_7, %c0_8] : memref<16x1xf32, #tpu.memory_space<vmem>>, vector<16x1xf32>
    %c0_9 = arith.constant 0 : index
    %c0_10 = arith.constant 0 : index
    %5 = vector.load %arg14[%c0_9, %c0_10] : memref<16x1xf32, #tpu.memory_space<vmem>>, vector<16x1xf32>
    %6 = arith.extf %1 : vector<128x128xbf16> to vector<128x128xf32>
    %c7_i32 = arith.constant 7 : i32
    %7 = tpu.dynamic_rotate %2 by %c7_i32 dim 1 : vector<16x256xf32>, i32 -> vector<16x256xf32>
    %c144 = arith.constant 144 : index
    %c0_11 = arith.constant 0 : index
    %8 = vector.load %arg22[%c144, %c0_11] : memref<288x2560xf32, #tpu.memory_space<vmem>>, vector<16x256xf32>
    tpu.vector_store %arg22[%c144, %c0_11], %7 {strides = array<i32>} : memref<288x2560xf32, #tpu.memory_space<vmem>>, vector<16x256xf32>,
    %c6_i32 = arith.constant 6 : i32
    %9 = tpu.dynamic_rotate %2 by %c6_i32 dim 1 : vector<16x256xf32>, i32 -> vector<16x256xf32>
    %c160 = arith.constant 160 : index
    %c0_12 = arith.constant 0 : index
    %10 = vector.load %arg22[%c160, %c0_12] : memref<288x2560xf32, #tpu.memory_space<vmem>>, vector<16x256xf32>
    tpu.vector_store %arg22[%c160, %c0_12], %9 {strides = array<i32>} : memref<288x2560xf32, #tpu.memory_space<vmem>>, vector<16x256xf32>,
    %c5_i32 = arith.constant 5 : i32
    %11 = tpu.dynamic_rotate %2 by %c5_i32 dim 1 : vector<16x256xf32>, i32 -> vector<16x256xf32>
    %c176 = arith.constant 176 : index
    %c0_13 = arith.constant 0 : index
    %12 = vector.load %arg22[%c176, %c0_13] : memref<288x2560xf32, #tpu.memory_space<vmem>>, vector<16x256xf32>
    tpu.vector_store %arg22[%c176, %c0_13], %11 {strides = array<i32>} : memref<288x2560xf32, #tpu.memory_space<vmem>>, vector<16x256xf32>,
    %c1_i32 = arith.constant 1 : i32
    %13 = tpu.dynamic_rotate %2 by %c1_i32 dim 1 : vector<16x256xf32>, i32 -> vector<16x256xf32>
    %c192 = arith.constant 192 : index
    %c0_14 = arith.constant 0 : index
    %14 = vector.load %arg22[%c192, %c0_14] : memref<288x2560xf32, #tpu.memory_space<vmem>>, vector<16x256xf32>
    tpu.vector_store %arg22[%c192, %c0_14], %13 {strides = array<i32>} : memref<288x2560xf32, #tpu.memory_space<vmem>>, vector<16x256xf32>,
    %c208 = arith.constant 208 : index
    %c0_15 = arith.constant 0 : index
    %15 = vector.load %arg22[%c208, %c0_15] : memref<288x2560xf32, #tpu.memory_space<vmem>>, vector<16x256xf32>
    tpu.vector_store %arg22[%c208, %c0_15], %2 {strides = array<i32>} : memref<288x2560xf32, #tpu.memory_space<vmem>>, vector<16x256xf32>,
    %c255_i32 = arith.constant 255 : i32
    %16 = tpu.dynamic_rotate %2 by %c255_i32 dim 1 : vector<16x256xf32>, i32 -> vector<16x256xf32>
    %c224 = arith.constant 224 : index
    %c0_16 = arith.constant 0 : index
    %17 = vector.load %arg22[%c224, %c0_16] : memref<288x2560xf32, #tpu.memory_space<vmem>>, vector<16x256xf32>
    tpu.vector_store %arg22[%c224, %c0_16], %16 {strides = array<i32>} : memref<288x2560xf32, #tpu.memory_space<vmem>>, vector<16x256xf32>,
    %c251_i32 = arith.constant 251 : i32
    %18 = tpu.dynamic_rotate %2 by %c251_i32 dim 1 : vector<16x256xf32>, i32 -> vector<16x256xf32>
    %c240 = arith.constant 240 : index
    %c0_17 = arith.constant 0 : index
    %19 = vector.load %arg22[%c240, %c0_17] : memref<288x2560xf32, #tpu.memory_space<vmem>>, vector<16x256xf32>
    tpu.vector_store %arg22[%c240, %c0_17], %18 {strides = array<i32>} : memref<288x2560xf32, #tpu.memory_space<vmem>>, vector<16x256xf32>,
    %c250_i32 = arith.constant 250 : i32
    %20 = tpu.dynamic_rotate %2 by %c250_i32 dim 1 : vector<16x256xf32>, i32 -> vector<16x256xf32>
    %c256 = arith.constant 256 : index
    %c0_18 = arith.constant 0 : index
    %21 = vector.load %arg22[%c256, %c0_18] : memref<288x2560xf32, #tpu.memory_space<vmem>>, vector<16x256xf32>
    tpu.vector_store %arg22[%c256, %c0_18], %20 {strides = array<i32>} : memref<288x2560xf32, #tpu.memory_space<vmem>>, vector<16x256xf32>,
    %c249_i32 = arith.constant 249 : i32
    %22 = tpu.dynamic_rotate %2 by %c249_i32 dim 1 : vector<16x256xf32>, i32 -> vector<16x256xf32>
    %c272 = arith.constant 272 : index
    %c0_19 = arith.constant 0 : index
    %23 = vector.load %arg22[%c272, %c0_19] : memref<288x2560xf32, #tpu.memory_space<vmem>>, vector<16x256xf32>
    tpu.vector_store %arg22[%c272, %c0_19], %22 {strides = array<i32>} : memref<288x2560xf32, #tpu.memory_space<vmem>>, vector<16x256xf32>,
    %24 = vector.extract_strided_slice %0 {offsets = [0, 0], sizes = [16, 128], strides = [1, 1]} : vector<16x256xf32> to vector<16x128xf32>
    %cst = arith.constant dense<0.000000e+00> : vector<16x128xf32>
    %25 = tpu.matmul %24, %6, %cst {dimension_numbers = #tpu.dot_dimension_numbers<[1], [0], [0], [1], [0, 0, 1, 1], [], []>} : vector<16x128xf32>, vector<128x128xf32>, vector<16x128xf32> -> vector<16x128xf32>
    %c7_i32_20 = arith.constant 7 : i32
    %26 = tpu.dynamic_rotate %25 by %c7_i32_20 dim 1 : vector<16x128xf32>, i32 -> vector<16x128xf32>
    %c0_21 = arith.constant 0 : index
    %c0_22 = arith.constant 0 : index
    %27 = vector.load %arg22[%c0_21, %c0_22] : memref<288x2560xf32, #tpu.memory_space<vmem>>, vector<16x128xf32>
    tpu.vector_store %arg22[%c0_21, %c0_22], %26 {strides = array<i32>} : memref<288x2560xf32, #tpu.memory_space<vmem>>, vector<16x128xf32>,
    %c6_i32_23 = arith.constant 6 : i32
    %28 = tpu.dynamic_rotate %25 by %c6_i32_23 dim 1 : vector<16x128xf32>, i32 -> vector<16x128xf32>
    %c16 = arith.constant 16 : index
    %c0_24 = arith.constant 0 : index
    %29 = vector.load %arg22[%c16, %c0_24] : memref<288x2560xf32, #tpu.memory_space<vmem>>, vector<16x128xf32>
    tpu.vector_store %arg22[%c16, %c0_24], %28 {strides = array<i32>} : memref<288x2560xf32, #tpu.memory_space<vmem>>, vector<16x128xf32>,
    %c5_i32_25 = arith.constant 5 : i32
    %30 = tpu.dynamic_rotate %25 by %c5_i32_25 dim 1 : vector<16x128xf32>, i32 -> vector<16x128xf32>
    %c32 = arith.constant 32 : index
    %c0_26 = arith.constant 0 : index
    %31 = vector.load %arg22[%c32, %c0_26] : memref<288x2560xf32, #tpu.memory_space<vmem>>, vector<16x128xf32>
    tpu.vector_store %arg22[%c32, %c0_26], %30 {strides = array<i32>} : memref<288x2560xf32, #tpu.memory_space<vmem>>, vector<16x128xf32>,
    %c1_i32_27 = arith.constant 1 : i32
    %32 = tpu.dynamic_rotate %25 by %c1_i32_27 dim 1 : vector<16x128xf32>, i32 -> vector<16x128xf32>
    %c48 = arith.constant 48 : index
    %c0_28 = arith.constant 0 : index
    %33 = vector.load %arg22[%c48, %c0_28] : memref<288x2560xf32, #tpu.memory_space<vmem>>, vector<16x128xf32>
    tpu.vector_store %arg22[%c48, %c0_28], %32 {strides = array<i32>} : memref<288x2560xf32, #tpu.memory_space<vmem>>, vector<16x128xf32>,
    %c64 = arith.constant 64 : index
    %c0_29 = arith.constant 0 : index
    %34 = vector.load %arg22[%c64, %c0_29] : memref<288x2560xf32, #tpu.memory_space<vmem>>, vector<16x128xf32>
    tpu.vector_store %arg22[%c64, %c0_29], %25 {strides = array<i32>} : memref<288x2560xf32, #tpu.memory_space<vmem>>, vector<16x128xf32>,
    %c127_i32 = arith.constant 127 : i32
    %35 = tpu.dynamic_rotate %25 by %c127_i32 dim 1 : vector<16x128xf32>, i32 -> vector<16x128xf32>
    %c80 = arith.constant 80 : index
    %c0_30 = arith.constant 0 : index
    %36 = vector.load %arg22[%c80, %c0_30] : memref<288x2560xf32, #tpu.memory_space<vmem>>, vector<16x128xf32>
    tpu.vector_store %arg22[%c80, %c0_30], %35 {strides = array<i32>} : memref<288x2560xf32, #tpu.memory_space<vmem>>, vector<16x128xf32>,
    %c123_i32 = arith.constant 123 : i32
    %37 = tpu.dynamic_rotate %25 by %c123_i32 dim 1 : vector<16x128xf32>, i32 -> vector<16x128xf32>
    %c96 = arith.constant 96 : index
    %c0_31 = arith.constant 0 : index
    %38 = vector.load %arg22[%c96, %c0_31] : memref<288x2560xf32, #tpu.memory_space<vmem>>, vector<16x128xf32>
    tpu.vector_store %arg22[%c96, %c0_31], %37 {strides = array<i32>} : memref<288x2560xf32, #tpu.memory_space<vmem>>, vector<16x128xf32>,
    %c122_i32 = arith.constant 122 : i32
    %39 = tpu.dynamic_rotate %25 by %c122_i32 dim 1 : vector<16x128xf32>, i32 -> vector<16x128xf32>
    %c112 = arith.constant 112 : index
    %c0_32 = arith.constant 0 : index
    %40 = vector.load %arg22[%c112, %c0_32] : memref<288x2560xf32, #tpu.memory_space<vmem>>, vector<16x128xf32>
    tpu.vector_store %arg22[%c112, %c0_32], %39 {strides = array<i32>} : memref<288x2560xf32, #tpu.memory_space<vmem>>, vector<16x128xf32>,
    %c121_i32 = arith.constant 121 : i32
    %41 = tpu.dynamic_rotate %25 by %c121_i32 dim 1 : vector<16x128xf32>, i32 -> vector<16x128xf32>
    %c128 = arith.constant 128 : index
    %c0_33 = arith.constant 0 : index
    %42 = vector.load %arg22[%c128, %c0_33] : memref<288x2560xf32, #tpu.memory_space<vmem>>, vector<16x128xf32>
    tpu.vector_store %arg22[%c128, %c0_33], %41 {strides = array<i32>} : memref<288x2560xf32, #tpu.memory_space<vmem>>, vector<16x128xf32>,
    %43 = vector.extract_strided_slice %0 {offsets = [0, 128], sizes = [16, 128], strides = [1, 1]} : vector<16x256xf32> to vector<16x128xf32>
    %cst_34 = arith.constant dense<0.000000e+00> : vector<16x128xf32>
    %44 = tpu.matmul %43, %6, %cst_34 {dimension_numbers = #tpu.dot_dimension_numbers<[1], [0], [0], [1], [0, 0, 1, 1], [], []>} : vector<16x128xf32>, vector<128x128xf32>, vector<16x128xf32> -> vector<16x128xf32>
    %c7_i32_35 = arith.constant 7 : i32
    %45 = tpu.dynamic_rotate %44 by %c7_i32_35 dim 1 : vector<16x128xf32>, i32 -> vector<16x128xf32>
    %c0_36 = arith.constant 0 : index
    %c128_37 = arith.constant 128 : index
    %46 = vector.load %arg22[%c0_36, %c128_37] : memref<288x2560xf32, #tpu.memory_space<vmem>>, vector<16x128xf32>
    tpu.vector_store %arg22[%c0_36, %c128_37], %45 {strides = array<i32>} : memref<288x2560xf32, #tpu.memory_space<vmem>>, vector<16x128xf32>,
    %c6_i32_38 = arith.constant 6 : i32
    %47 = tpu.dynamic_rotate %44 by %c6_i32_38 dim 1 : vector<16x128xf32>, i32 -> vector<16x128xf32>
    %c16_39 = arith.constant 16 : index
    %c128_40 = arith.constant 128 : index
    %48 = vector.load %arg22[%c16_39, %c128_40] : memref<288x2560xf32, #tpu.memory_space<vmem>>, vector<16x128xf32>
    tpu.vector_store %arg22[%c16_39, %c128_40], %47 {strides = array<i32>} : memref<288x2560xf32, #tpu.memory_space<vmem>>, vector<16x128xf32>,
    %c5_i32_41 = arith.constant 5 : i32
    %49 = tpu.dynamic_rotate %44 by %c5_i32_41 dim 1 : vector<16x128xf32>, i32 -> vector<16x128xf32>
    %c32_42 = arith.constant 32 : index
    %c128_43 = arith.constant 128 : index
    %50 = vector.load %arg22[%c32_42, %c128_43] : memref<288x2560xf32, #tpu.memory_space<vmem>>, vector<16x128xf32>
    tpu.vector_store %arg22[%c32_42, %c128_43], %49 {strides = array<i32>} : memref<288x2560xf32, #tpu.memory_space<vmem>>, vector<16x128xf32>,
    %c1_i32_44 = arith.constant 1 : i32
    %51 = tpu.dynamic_rotate %44 by %c1_i32_44 dim 1 : vector<16x128xf32>, i32 -> vector<16x128xf32>
    %c48_45 = arith.constant 48 : index
    %c128_46 = arith.constant 128 : index
    %52 = vector.load %arg22[%c48_45, %c128_46] : memref<288x2560xf32, #tpu.memory_space<vmem>>, vector<16x128xf32>
    tpu.vector_store %arg22[%c48_45, %c128_46], %51 {strides = array<i32>} : memref<288x2560xf32, #tpu.memory_space<vmem>>, vector<16x128xf32>,
    %c64_47 = arith.constant 64 : index
    %c128_48 = arith.constant 128 : index
    %53 = vector.load %arg22[%c64_47, %c128_48] : memref<288x2560xf32, #tpu.memory_space<vmem>>, vector<16x128xf32>
    tpu.vector_store %arg22[%c64_47, %c128_48], %44 {strides = array<i32>} : memref<288x2560xf32, #tpu.memory_space<vmem>>, vector<16x128xf32>,
    %c127_i32_49 = arith.constant 127 : i32
    %54 = tpu.dynamic_rotate %44 by %c127_i32_49 dim 1 : vector<16x128xf32>, i32 -> vector<16x128xf32>
    %c80_50 = arith.constant 80 : index
    %c128_51 = arith.constant 128 : index
    %55 = vector.load %arg22[%c80_50, %c128_51] : memref<288x2560xf32, #tpu.memory_space<vmem>>, vector<16x128xf32>
    tpu.vector_store %arg22[%c80_50, %c128_51], %54 {strides = array<i32>} : memref<288x2560xf32, #tpu.memory_space<vmem>>, vector<16x128xf32>,
    %c123_i32_52 = arith.constant 123 : i32
    %56 = tpu.dynamic_rotate %44 by %c123_i32_52 dim 1 : vector<16x128xf32>, i32 -> vector<16x128xf32>
    %c96_53 = arith.constant 96 : index
    %c128_54 = arith.constant 128 : index
    %57 = vector.load %arg22[%c96_53, %c128_54] : memref<288x2560xf32, #tpu.memory_space<vmem>>, vector<16x128xf32>
    tpu.vector_store %arg22[%c96_53, %c128_54], %56 {strides = array<i32>} : memref<288x2560xf32, #tpu.memory_space<vmem>>, vector<16x128xf32>,
    %c122_i32_55 = arith.constant 122 : i32
    %58 = tpu.dynamic_rotate %44 by %c122_i32_55 dim 1 : vector<16x128xf32>, i32 -> vector<16x128xf32>
    %c112_56 = arith.constant 112 : index
    %c128_57 = arith.constant 128 : index
    %59 = vector.load %arg22[%c112_56, %c128_57] : memref<288x2560xf32, #tpu.memory_space<vmem>>, vector<16x128xf32>
    tpu.vector_store %arg22[%c112_56, %c128_57], %58 {strides = array<i32>} : memref<288x2560xf32, #tpu.memory_space<vmem>>, vector<16x128xf32>,
    %c121_i32_58 = arith.constant 121 : i32
    %60 = tpu.dynamic_rotate %44 by %c121_i32_58 dim 1 : vector<16x128xf32>, i32 -> vector<16x128xf32>
    %c128_59 = arith.constant 128 : index
    %c128_60 = arith.constant 128 : index
    %61 = vector.load %arg22[%c128_59, %c128_60] : memref<288x2560xf32, #tpu.memory_space<vmem>>, vector<16x128xf32>
    tpu.vector_store %arg22[%c128_59, %c128_60], %60 {strides = array<i32>} : memref<288x2560xf32, #tpu.memory_space<vmem>>, vector<16x128xf32>,
    %62 = arith.extf %3 : vector<16x288xbf16> to vector<16x288xf32>
    %c0_61 = arith.constant 0 : index
    %c0_62 = arith.constant 0 : index
    %63 = vector.load %arg22[%c0_61, %c0_62] : memref<288x2560xf32, #tpu.memory_space<vmem>>, vector<288x256xf32>
    %cst_63 = arith.constant dense<0.000000e+00> : vector<16x256xf32>
    %64 = tpu.matmul %62, %63, %cst_63 {dimension_numbers = #tpu.dot_dimension_numbers<[1], [0], [0], [1], [0, 0, 1, 1], [], []>} : vector<16x288xf32>, vector<288x256xf32>, vector<16x256xf32> -> vector<16x256xf32>
    %65 = vector.broadcast %4 : vector<16x1xf32> to vector<16x256xf32>
    %66 = arith.mulf %64, %65 : vector<16x256xf32>
    %67 = vector.broadcast %5 : vector<16x1xf32> to vector<16x256xf32>
    %68 = arith.addf %66, %67 : vector<16x256xf32>
    %cst_64 = arith.constant 0.000000e+00 : f32
    %69 = vector.broadcast %cst_64 : f32 to vector<16x256xf32>
    %70 = arith.maximumf %68, %69 : vector<16x256xf32>
    %c0_65 = arith.constant 0 : index
    %c0_66 = arith.constant 0 : index
    %71 = vector.load %arg6[%c0_65, %c0_66] : memref<128x128xbf16, #tpu.memory_space<vmem>>, vector<128x128xbf16>
    %c0_67 = arith.constant 0 : index
    %c0_68 = arith.constant 0 : index
    %72 = vector.load %arg2[%c0_67, %c0_68] : memref<8x256xf32, #tpu.memory_space<vmem>>, vector<8x256xf32>
    %c0_69 = arith.constant 0 : index
    %c0_70 = arith.constant 0 : index
    %73 = vector.load %arg10[%c0_69, %c0_70] : memref<8x216xbf16, #tpu.memory_space<vmem>>, vector<8x216xbf16>
    %c0_71 = arith.constant 0 : index
    %c0_72 = arith.constant 0 : index
    %74 = vector.load %arg15[%c0_71, %c0_72] : memref<8x1xf32, #tpu.memory_space<vmem>>, vector<8x1xf32>
    %c0_73 = arith.constant 0 : index
    %c0_74 = arith.constant 0 : index
    %75 = vector.load %arg16[%c0_73, %c0_74] : memref<8x1xf32, #tpu.memory_space<vmem>>, vector<8x1xf32>
    %76 = arith.extf %71 : vector<128x128xbf16> to vector<128x128xf32>
    %c11_i32 = arith.constant 11 : i32
    %77 = tpu.dynamic_rotate %72 by %c11_i32 dim 1 : vector<8x256xf32>, i32 -> vector<8x256xf32>
    %c144_75 = arith.constant 144 : index
    %c0_76 = arith.constant 0 : index
    %78 = vector.load %arg22[%c144_75, %c0_76] : memref<288x2560xf32, #tpu.memory_space<vmem>>, vector<8x256xf32>
    tpu.vector_store %arg22[%c144_75, %c0_76], %77 {strides = array<i32>} : memref<288x2560xf32, #tpu.memory_space<vmem>>, vector<8x256xf32>,
    %c10_i32 = arith.constant 10 : i32
    %79 = tpu.dynamic_rotate %72 by %c10_i32 dim 1 : vector<8x256xf32>, i32 -> vector<8x256xf32>
    %c152 = arith.constant 152 : index
    %c0_77 = arith.constant 0 : index
    %80 = vector.load %arg22[%c152, %c0_77] : memref<288x2560xf32, #tpu.memory_space<vmem>>, vector<8x256xf32>
    tpu.vector_store %arg22[%c152, %c0_77], %79 {strides = array<i32>} : memref<288x2560xf32, #tpu.memory_space<vmem>>, vector<8x256xf32>,
    %c9_i32 = arith.constant 9 : i32
    %81 = tpu.dynamic_rotate %72 by %c9_i32 dim 1 : vector<8x256xf32>, i32 -> vector<8x256xf32>
    %c160_78 = arith.constant 160 : index
    %c0_79 = arith.constant 0 : index
    %82 = vector.load %arg22[%c160_78, %c0_79] : memref<288x2560xf32, #tpu.memory_space<vmem>>, vector<8x256xf32>
    tpu.vector_store %arg22[%c160_78, %c0_79], %81 {strides = array<i32>} : memref<288x2560xf32, #tpu.memory_space<vmem>>, vector<8x256xf32>,
    %c1_i32_80 = arith.constant 1 : i32
    %83 = tpu.dynamic_rotate %72 by %c1_i32_80 dim 1 : vector<8x256xf32>, i32 -> vector<8x256xf32>
    %c168 = arith.constant 168 : index
    %c0_81 = arith.constant 0 : index
    %84 = vector.load %arg22[%c168, %c0_81] : memref<288x2560xf32, #tpu.memory_space<vmem>>, vector<8x256xf32>
    tpu.vector_store %arg22[%c168, %c0_81], %83 {strides = array<i32>} : memref<288x2560xf32, #tpu.memory_space<vmem>>, vector<8x256xf32>,
    %c176_82 = arith.constant 176 : index
    %c0_83 = arith.constant 0 : index
    %85 = vector.load %arg22[%c176_82, %c0_83] : memref<288x2560xf32, #tpu.memory_space<vmem>>, vector<8x256xf32>
    tpu.vector_store %arg22[%c176_82, %c0_83], %72 {strides = array<i32>} : memref<288x2560xf32, #tpu.memory_space<vmem>>, vector<8x256xf32>,
    %c255_i32_84 = arith.constant 255 : i32
    %86 = tpu.dynamic_rotate %72 by %c255_i32_84 dim 1 : vector<8x256xf32>, i32 -> vector<8x256xf32>
    %c184 = arith.constant 184 : index
    %c0_85 = arith.constant 0 : index
    %87 = vector.load %arg22[%c184, %c0_85] : memref<288x2560xf32, #tpu.memory_space<vmem>>, vector<8x256xf32>
    tpu.vector_store %arg22[%c184, %c0_85], %86 {strides = array<i32>} : memref<288x2560xf32, #tpu.memory_space<vmem>>, vector<8x256xf32>,
    %c247_i32 = arith.constant 247 : i32
    %88 = tpu.dynamic_rotate %72 by %c247_i32 dim 1 : vector<8x256xf32>, i32 -> vector<8x256xf32>
    %c192_86 = arith.constant 192 : index
    %c0_87 = arith.constant 0 : index
    %89 = vector.load %arg22[%c192_86, %c0_87] : memref<288x2560xf32, #tpu.memory_space<vmem>>, vector<8x256xf32>
    tpu.vector_store %arg22[%c192_86, %c0_87], %88 {strides = array<i32>} : memref<288x2560xf32, #tpu.memory_space<vmem>>, vector<8x256xf32>,
    %c246_i32 = arith.constant 246 : i32
    %90 = tpu.dynamic_rotate %72 by %c246_i32 dim 1 : vector<8x256xf32>, i32 -> vector<8x256xf32>
    %c200 = arith.constant 200 : index
    %c0_88 = arith.constant 0 : index
    %91 = vector.load %arg22[%c200, %c0_88] : memref<288x2560xf32, #tpu.memory_space<vmem>>, vector<8x256xf32>
    tpu.vector_store %arg22[%c200, %c0_88], %90 {strides = array<i32>} : memref<288x2560xf32, #tpu.memory_space<vmem>>, vector<8x256xf32>,
    %c245_i32 = arith.constant 245 : i32
    %92 = tpu.dynamic_rotate %72 by %c245_i32 dim 1 : vector<8x256xf32>, i32 -> vector<8x256xf32>
    %c208_89 = arith.constant 208 : index
    %c0_90 = arith.constant 0 : index
    %93 = vector.load %arg22[%c208_89, %c0_90] : memref<288x2560xf32, #tpu.memory_space<vmem>>, vector<8x256xf32>
    tpu.vector_store %arg22[%c208_89, %c0_90], %92 {strides = array<i32>} : memref<288x2560xf32, #tpu.memory_space<vmem>>, vector<8x256xf32>,
    %94 = vector.extract_strided_slice %70 {offsets = [0, 0], sizes = [16, 128], strides = [1, 1]} : vector<16x256xf32> to vector<16x128xf32>
    %cst_91 = arith.constant dense<0.000000e+00> : vector<16x128xf32>
    %95 = tpu.matmul %94, %76, %cst_91 {dimension_numbers = #tpu.dot_dimension_numbers<[1], [0], [0], [1], [0, 0, 1, 1], [], []>} : vector<16x128xf32>, vector<128x128xf32>, vector<16x128xf32> -> vector<16x128xf32>
    %c11_i32_92 = arith.constant 11 : i32
    %96 = tpu.dynamic_rotate %95 by %c11_i32_92 dim 1 : vector<16x128xf32>, i32 -> vector<16x128xf32>
    %c0_93 = arith.constant 0 : index
    %c0_94 = arith.constant 0 : index
    %97 = vector.load %arg22[%c0_93, %c0_94] : memref<288x2560xf32, #tpu.memory_space<vmem>>, vector<16x128xf32>
    tpu.vector_store %arg22[%c0_93, %c0_94], %96 {strides = array<i32>} : memref<288x2560xf32, #tpu.memory_space<vmem>>, vector<16x128xf32>,
    %c10_i32_95 = arith.constant 10 : i32
    %98 = tpu.dynamic_rotate %95 by %c10_i32_95 dim 1 : vector<16x128xf32>, i32 -> vector<16x128xf32>
    %c16_96 = arith.constant 16 : index
    %c0_97 = arith.constant 0 : index
    %99 = vector.load %arg22[%c16_96, %c0_97] : memref<288x2560xf32, #tpu.memory_space<vmem>>, vector<16x128xf32>
    tpu.vector_store %arg22[%c16_96, %c0_97], %98 {strides = array<i32>} : memref<288x2560xf32, #tpu.memory_space<vmem>>, vector<16x128xf32>,
    %c9_i32_98 = arith.constant 9 : i32
    %100 = tpu.dynamic_rotate %95 by %c9_i32_98 dim 1 : vector<16x128xf32>, i32 -> vector<16x128xf32>
    %c32_99 = arith.constant 32 : index
    %c0_100 = arith.constant 0 : index
    %101 = vector.load %arg22[%c32_99, %c0_100] : memref<288x2560xf32, #tpu.memory_space<vmem>>, vector<16x128xf32>
    tpu.vector_store %arg22[%c32_99, %c0_100], %100 {strides = array<i32>} : memref<288x2560xf32, #tpu.memory_space<vmem>>, vector<16x128xf32>,
    %c1_i32_101 = arith.constant 1 : i32
    %102 = tpu.dynamic_rotate %95 by %c1_i32_101 dim 1 : vector<16x128xf32>, i32 -> vector<16x128xf32>
    %c48_102 = arith.constant 48 : index
    %c0_103 = arith.constant 0 : index
    %103 = vector.load %arg22[%c48_102, %c0_103] : memref<288x2560xf32, #tpu.memory_space<vmem>>, vector<16x128xf32>
    tpu.vector_store %arg22[%c48_102, %c0_103], %102 {strides = array<i32>} : memref<288x2560xf32, #tpu.memory_space<vmem>>, vector<16x128xf32>,
    %c64_104 = arith.constant 64 : index
    %c0_105 = arith.constant 0 : index
    %104 = vector.load %arg22[%c64_104, %c0_105] : memref<288x2560xf32, #tpu.memory_space<vmem>>, vector<16x128xf32>
    tpu.vector_store %arg22[%c64_104, %c0_105], %95 {strides = array<i32>} : memref<288x2560xf32, #tpu.memory_space<vmem>>, vector<16x128xf32>,
    %c127_i32_106 = arith.constant 127 : i32
    %105 = tpu.dynamic_rotate %95 by %c127_i32_106 dim 1 : vector<16x128xf32>, i32 -> vector<16x128xf32>
    %c80_107 = arith.constant 80 : index
    %c0_108 = arith.constant 0 : index
    %106 = vector.load %arg22[%c80_107, %c0_108] : memref<288x2560xf32, #tpu.memory_space<vmem>>, vector<16x128xf32>
    tpu.vector_store %arg22[%c80_107, %c0_108], %105 {strides = array<i32>} : memref<288x2560xf32, #tpu.memory_space<vmem>>, vector<16x128xf32>,
    %c119_i32 = arith.constant 119 : i32
    %107 = tpu.dynamic_rotate %95 by %c119_i32 dim 1 : vector<16x128xf32>, i32 -> vector<16x128xf32>
    %c96_109 = arith.constant 96 : index
    %c0_110 = arith.constant 0 : index
    %108 = vector.load %arg22[%c96_109, %c0_110] : memref<288x2560xf32, #tpu.memory_space<vmem>>, vector<16x128xf32>
    tpu.vector_store %arg22[%c96_109, %c0_110], %107 {strides = array<i32>} : memref<288x2560xf32, #tpu.memory_space<vmem>>, vector<16x128xf32>,
    %c118_i32 = arith.constant 118 : i32
    %109 = tpu.dynamic_rotate %95 by %c118_i32 dim 1 : vector<16x128xf32>, i32 -> vector<16x128xf32>
    %c112_111 = arith.constant 112 : index
    %c0_112 = arith.constant 0 : index
    %110 = vector.load %arg22[%c112_111, %c0_112] : memref<288x2560xf32, #tpu.memory_space<vmem>>, vector<16x128xf32>
    tpu.vector_store %arg22[%c112_111, %c0_112], %109 {strides = array<i32>} : memref<288x2560xf32, #tpu.memory_space<vmem>>, vector<16x128xf32>,
    %c117_i32 = arith.constant 117 : i32
    %111 = tpu.dynamic_rotate %95 by %c117_i32 dim 1 : vector<16x128xf32>, i32 -> vector<16x128xf32>
    %c128_113 = arith.constant 128 : index
    %c0_114 = arith.constant 0 : index
    %112 = vector.load %arg22[%c128_113, %c0_114] : memref<288x2560xf32, #tpu.memory_space<vmem>>, vector<16x128xf32>
    tpu.vector_store %arg22[%c128_113, %c0_114], %111 {strides = array<i32>} : memref<288x2560xf32, #tpu.memory_space<vmem>>, vector<16x128xf32>,
    %113 = vector.extract_strided_slice %70 {offsets = [0, 128], sizes = [16, 128], strides = [1, 1]} : vector<16x256xf32> to vector<16x128xf32>
    %cst_115 = arith.constant dense<0.000000e+00> : vector<16x128xf32>
    %114 = tpu.matmul %113, %76, %cst_115 {dimension_numbers = #tpu.dot_dimension_numbers<[1], [0], [0], [1], [0, 0, 1, 1], [], []>} : vector<16x128xf32>, vector<128x128xf32>, vector<16x128xf32> -> vector<16x128xf32>
    %c11_i32_116 = arith.constant 11 : i32
    %115 = tpu.dynamic_rotate %114 by %c11_i32_116 dim 1 : vector<16x128xf32>, i32 -> vector<16x128xf32>
    %c0_117 = arith.constant 0 : index
    %c128_118 = arith.constant 128 : index
    %116 = vector.load %arg22[%c0_117, %c128_118] : memref<288x2560xf32, #tpu.memory_space<vmem>>, vector<16x128xf32>
    tpu.vector_store %arg22[%c0_117, %c128_118], %115 {strides = array<i32>} : memref<288x2560xf32, #tpu.memory_space<vmem>>, vector<16x128xf32>,
    %c10_i32_119 = arith.constant 10 : i32
    %117 = tpu.dynamic_rotate %114 by %c10_i32_119 dim 1 : vector<16x128xf32>, i32 -> vector<16x128xf32>
    %c16_120 = arith.constant 16 : index
    %c128_121 = arith.constant 128 : index
    %118 = vector.load %arg22[%c16_120, %c128_121] : memref<288x2560xf32, #tpu.memory_space<vmem>>, vector<16x128xf32>
    tpu.vector_store %arg22[%c16_120, %c128_121], %117 {strides = array<i32>} : memref<288x2560xf32, #tpu.memory_space<vmem>>, vector<16x128xf32>,
    %c9_i32_122 = arith.constant 9 : i32
    %119 = tpu.dynamic_rotate %114 by %c9_i32_122 dim 1 : vector<16x128xf32>, i32 -> vector<16x128xf32>
    %c32_123 = arith.constant 32 : index
    %c128_124 = arith.constant 128 : index
    %120 = vector.load %arg22[%c32_123, %c128_124] : memref<288x2560xf32, #tpu.memory_space<vmem>>, vector<16x128xf32>
    tpu.vector_store %arg22[%c32_123, %c128_124], %119 {strides = array<i32>} : memref<288x2560xf32, #tpu.memory_space<vmem>>, vector<16x128xf32>,
    %c1_i32_125 = arith.constant 1 : i32
    %121 = tpu.dynamic_rotate %114 by %c1_i32_125 dim 1 : vector<16x128xf32>, i32 -> vector<16x128xf32>
    %c48_126 = arith.constant 48 : index
    %c128_127 = arith.constant 128 : index
    %122 = vector.load %arg22[%c48_126, %c128_127] : memref<288x2560xf32, #tpu.memory_space<vmem>>, vector<16x128xf32>
    tpu.vector_store %arg22[%c48_126, %c128_127], %121 {strides = array<i32>} : memref<288x2560xf32, #tpu.memory_space<vmem>>, vector<16x128xf32>,
    %c64_128 = arith.constant 64 : index
    %c128_129 = arith.constant 128 : index
    %123 = vector.load %arg22[%c64_128, %c128_129] : memref<288x2560xf32, #tpu.memory_space<vmem>>, vector<16x128xf32>
    tpu.vector_store %arg22[%c64_128, %c128_129], %114 {strides = array<i32>} : memref<288x2560xf32, #tpu.memory_space<vmem>>, vector<16x128xf32>,
    %c127_i32_130 = arith.constant 127 : i32
    %124 = tpu.dynamic_rotate %114 by %c127_i32_130 dim 1 : vector<16x128xf32>, i32 -> vector<16x128xf32>
    %c80_131 = arith.constant 80 : index
    %c128_132 = arith.constant 128 : index
    %125 = vector.load %arg22[%c80_131, %c128_132] : memref<288x2560xf32, #tpu.memory_space<vmem>>, vector<16x128xf32>
    tpu.vector_store %arg22[%c80_131, %c128_132], %124 {strides = array<i32>} : memref<288x2560xf32, #tpu.memory_space<vmem>>, vector<16x128xf32>,
    %c119_i32_133 = arith.constant 119 : i32
    %126 = tpu.dynamic_rotate %114 by %c119_i32_133 dim 1 : vector<16x128xf32>, i32 -> vector<16x128xf32>
    %c96_134 = arith.constant 96 : index
    %c128_135 = arith.constant 128 : index
    %127 = vector.load %arg22[%c96_134, %c128_135] : memref<288x2560xf32, #tpu.memory_space<vmem>>, vector<16x128xf32>
    tpu.vector_store %arg22[%c96_134, %c128_135], %126 {strides = array<i32>} : memref<288x2560xf32, #tpu.memory_space<vmem>>, vector<16x128xf32>,
    %c118_i32_136 = arith.constant 118 : i32
    %128 = tpu.dynamic_rotate %114 by %c118_i32_136 dim 1 : vector<16x128xf32>, i32 -> vector<16x128xf32>
    %c112_137 = arith.constant 112 : index
    %c128_138 = arith.constant 128 : index
    %129 = vector.load %arg22[%c112_137, %c128_138] : memref<288x2560xf32, #tpu.memory_space<vmem>>, vector<16x128xf32>
    tpu.vector_store %arg22[%c112_137, %c128_138], %128 {strides = array<i32>} : memref<288x2560xf32, #tpu.memory_space<vmem>>, vector<16x128xf32>,
    %c117_i32_139 = arith.constant 117 : i32
    %130 = tpu.dynamic_rotate %114 by %c117_i32_139 dim 1 : vector<16x128xf32>, i32 -> vector<16x128xf32>
    %c128_140 = arith.constant 128 : index
    %c128_141 = arith.constant 128 : index
    %131 = vector.load %arg22[%c128_140, %c128_141] : memref<288x2560xf32, #tpu.memory_space<vmem>>, vector<16x128xf32>
    tpu.vector_store %arg22[%c128_140, %c128_141], %130 {strides = array<i32>} : memref<288x2560xf32, #tpu.memory_space<vmem>>, vector<16x128xf32>,
    %132 = arith.extf %73 : vector<8x216xbf16> to vector<8x216xf32>
    %c0_142 = arith.constant 0 : index
    %c0_143 = arith.constant 0 : index
    %133 = vector.load %arg22[%c0_142, %c0_143] : memref<288x2560xf32, #tpu.memory_space<vmem>>, vector<216x256xf32>
    %cst_144 = arith.constant dense<0.000000e+00> : vector<8x256xf32>
    %134 = tpu.matmul %132, %133, %cst_144 {dimension_numbers = #tpu.dot_dimension_numbers<[1], [0], [0], [1], [0, 0, 1, 1], [], []>} : vector<8x216xf32>, vector<216x256xf32>, vector<8x256xf32> -> vector<8x256xf32>
    %135 = vector.broadcast %74 : vector<8x1xf32> to vector<8x256xf32>
    %136 = arith.mulf %134, %135 : vector<8x256xf32>
    %137 = vector.broadcast %75 : vector<8x1xf32> to vector<8x256xf32>
    %138 = arith.addf %136, %137 : vector<8x256xf32>
    %cst_145 = arith.constant 0.000000e+00 : f32
    %139 = vector.broadcast %cst_145 : f32 to vector<8x256xf32>
    %140 = arith.maximumf %138, %139 : vector<8x256xf32>
    %c0_146 = arith.constant 0 : index
    %c0_147 = arith.constant 0 : index
    %141 = vector.load %arg7[%c0_146, %c0_147] : memref<128x384xbf16, #tpu.memory_space<vmem>>, vector<128x384xbf16>
    %c0_148 = arith.constant 0 : index
    %c0_149 = arith.constant 0 : index
    %142 = vector.load %arg3[%c0_148, %c0_149] : memref<8x768xf32, #tpu.memory_space<vmem>>, vector<8x768xf32>
    %c0_150 = arith.constant 0 : index
    %c0_151 = arith.constant 0 : index
    %143 = vector.load %arg11[%c0_150, %c0_151] : memref<8x144xbf16, #tpu.memory_space<vmem>>, vector<8x144xbf16>
    %c0_152 = arith.constant 0 : index
    %c0_153 = arith.constant 0 : index
    %144 = vector.load %arg17[%c0_152, %c0_153] : memref<8x1xf32, #tpu.memory_space<vmem>>, vector<8x1xf32>
    %c0_154 = arith.constant 0 : index
    %c0_155 = arith.constant 0 : index
    %145 = vector.load %arg18[%c0_154, %c0_155] : memref<8x1xf32, #tpu.memory_space<vmem>>, vector<8x1xf32>
    %146 = arith.extf %141 : vector<128x384xbf16> to vector<128x384xf32>
    %c19_i32 = arith.constant 19 : i32
    %147 = tpu.dynamic_rotate %142 by %c19_i32 dim 1 : vector<8x768xf32>, i32 -> vector<8x768xf32>
    %c72 = arith.constant 72 : index
    %c0_156 = arith.constant 0 : index
    %148 = vector.load %arg22[%c72, %c0_156] : memref<288x2560xf32, #tpu.memory_space<vmem>>, vector<8x768xf32>
    tpu.vector_store %arg22[%c72, %c0_156], %147 {strides = array<i32>} : memref<288x2560xf32, #tpu.memory_space<vmem>>, vector<8x768xf32>,
    %c18_i32 = arith.constant 18 : i32
    %149 = tpu.dynamic_rotate %142 by %c18_i32 dim 1 : vector<8x768xf32>, i32 -> vector<8x768xf32>
    %c80_157 = arith.constant 80 : index
    %c0_158 = arith.constant 0 : index
    %150 = vector.load %arg22[%c80_157, %c0_158] : memref<288x2560xf32, #tpu.memory_space<vmem>>, vector<8x768xf32>
    tpu.vector_store %arg22[%c80_157, %c0_158], %149 {strides = array<i32>} : memref<288x2560xf32, #tpu.memory_space<vmem>>, vector<8x768xf32>,
    %c17_i32 = arith.constant 17 : i32
    %151 = tpu.dynamic_rotate %142 by %c17_i32 dim 1 : vector<8x768xf32>, i32 -> vector<8x768xf32>
    %c88 = arith.constant 88 : index
    %c0_159 = arith.constant 0 : index
    %152 = vector.load %arg22[%c88, %c0_159] : memref<288x2560xf32, #tpu.memory_space<vmem>>, vector<8x768xf32>
    tpu.vector_store %arg22[%c88, %c0_159], %151 {strides = array<i32>} : memref<288x2560xf32, #tpu.memory_space<vmem>>, vector<8x768xf32>,
    %c1_i32_160 = arith.constant 1 : i32
    %153 = tpu.dynamic_rotate %142 by %c1_i32_160 dim 1 : vector<8x768xf32>, i32 -> vector<8x768xf32>
    %c96_161 = arith.constant 96 : index
    %c0_162 = arith.constant 0 : index
    %154 = vector.load %arg22[%c96_161, %c0_162] : memref<288x2560xf32, #tpu.memory_space<vmem>>, vector<8x768xf32>
    tpu.vector_store %arg22[%c96_161, %c0_162], %153 {strides = array<i32>} : memref<288x2560xf32, #tpu.memory_space<vmem>>, vector<8x768xf32>,
    %c104 = arith.constant 104 : index
    %c0_163 = arith.constant 0 : index
    %155 = vector.load %arg22[%c104, %c0_163] : memref<288x2560xf32, #tpu.memory_space<vmem>>, vector<8x768xf32>
    tpu.vector_store %arg22[%c104, %c0_163], %142 {strides = array<i32>} : memref<288x2560xf32, #tpu.memory_space<vmem>>, vector<8x768xf32>,
    %c767_i32 = arith.constant 767 : i32
    %156 = tpu.dynamic_rotate %142 by %c767_i32 dim 1 : vector<8x768xf32>, i32 -> vector<8x768xf32>
    %c112_164 = arith.constant 112 : index
    %c0_165 = arith.constant 0 : index
    %157 = vector.load %arg22[%c112_164, %c0_165] : memref<288x2560xf32, #tpu.memory_space<vmem>>, vector<8x768xf32>
    tpu.vector_store %arg22[%c112_164, %c0_165], %156 {strides = array<i32>} : memref<288x2560xf32, #tpu.memory_space<vmem>>, vector<8x768xf32>,
    %c751_i32 = arith.constant 751 : i32
    %158 = tpu.dynamic_rotate %142 by %c751_i32 dim 1 : vector<8x768xf32>, i32 -> vector<8x768xf32>
    %c120 = arith.constant 120 : index
    %c0_166 = arith.constant 0 : index
    %159 = vector.load %arg22[%c120, %c0_166] : memref<288x2560xf32, #tpu.memory_space<vmem>>, vector<8x768xf32>
    tpu.vector_store %arg22[%c120, %c0_166], %158 {strides = array<i32>} : memref<288x2560xf32, #tpu.memory_space<vmem>>, vector<8x768xf32>,
    %c750_i32 = arith.constant 750 : i32
    %160 = tpu.dynamic_rotate %142 by %c750_i32 dim 1 : vector<8x768xf32>, i32 -> vector<8x768xf32>
    %c128_167 = arith.constant 128 : index
    %c0_168 = arith.constant 0 : index
    %161 = vector.load %arg22[%c128_167, %c0_168] : memref<288x2560xf32, #tpu.memory_space<vmem>>, vector<8x768xf32>
    tpu.vector_store %arg22[%c128_167, %c0_168], %160 {strides = array<i32>} : memref<288x2560xf32, #tpu.memory_space<vmem>>, vector<8x768xf32>,
    %c749_i32 = arith.constant 749 : i32
    %162 = tpu.dynamic_rotate %142 by %c749_i32 dim 1 : vector<8x768xf32>, i32 -> vector<8x768xf32>
    %c136 = arith.constant 136 : index
    %c0_169 = arith.constant 0 : index
    %163 = vector.load %arg22[%c136, %c0_169] : memref<288x2560xf32, #tpu.memory_space<vmem>>, vector<8x768xf32>
    tpu.vector_store %arg22[%c136, %c0_169], %162 {strides = array<i32>} : memref<288x2560xf32, #tpu.memory_space<vmem>>, vector<8x768xf32>,
    %164 = vector.extract_strided_slice %140 {offsets = [0, 0], sizes = [8, 128], strides = [1, 1]} : vector<8x256xf32> to vector<8x128xf32>
    %cst_170 = arith.constant dense<0.000000e+00> : vector<8x384xf32>
    %165 = tpu.matmul %164, %146, %cst_170 {dimension_numbers = #tpu.dot_dimension_numbers<[1], [0], [0], [1], [0, 0, 1, 1], [], []>} : vector<8x128xf32>, vector<128x384xf32>, vector<8x384xf32> -> vector<8x384xf32>
    %c19_i32_171 = arith.constant 19 : i32
    %166 = tpu.dynamic_rotate %165 by %c19_i32_171 dim 1 : vector<8x384xf32>, i32 -> vector<8x384xf32>
    %c0_172 = arith.constant 0 : index
    %c0_173 = arith.constant 0 : index
    %167 = vector.load %arg22[%c0_172, %c0_173] : memref<288x2560xf32, #tpu.memory_space<vmem>>, vector<8x384xf32>
    tpu.vector_store %arg22[%c0_172, %c0_173], %166 {strides = array<i32>} : memref<288x2560xf32, #tpu.memory_space<vmem>>, vector<8x384xf32>,
    %c18_i32_174 = arith.constant 18 : i32
    %168 = tpu.dynamic_rotate %165 by %c18_i32_174 dim 1 : vector<8x384xf32>, i32 -> vector<8x384xf32>
    %c8 = arith.constant 8 : index
    %c0_175 = arith.constant 0 : index
    %169 = vector.load %arg22[%c8, %c0_175] : memref<288x2560xf32, #tpu.memory_space<vmem>>, vector<8x384xf32>
    tpu.vector_store %arg22[%c8, %c0_175], %168 {strides = array<i32>} : memref<288x2560xf32, #tpu.memory_space<vmem>>, vector<8x384xf32>,
    %c17_i32_176 = arith.constant 17 : i32
    %170 = tpu.dynamic_rotate %165 by %c17_i32_176 dim 1 : vector<8x384xf32>, i32 -> vector<8x384xf32>
    %c16_177 = arith.constant 16 : index
    %c0_178 = arith.constant 0 : index
    %171 = vector.load %arg22[%c16_177, %c0_178] : memref<288x2560xf32, #tpu.memory_space<vmem>>, vector<8x384xf32>
    tpu.vector_store %arg22[%c16_177, %c0_178], %170 {strides = array<i32>} : memref<288x2560xf32, #tpu.memory_space<vmem>>, vector<8x384xf32>,
    %c1_i32_179 = arith.constant 1 : i32
    %172 = tpu.dynamic_rotate %165 by %c1_i32_179 dim 1 : vector<8x384xf32>, i32 -> vector<8x384xf32>
    %c24 = arith.constant 24 : index
    %c0_180 = arith.constant 0 : index
    %173 = vector.load %arg22[%c24, %c0_180] : memref<288x2560xf32, #tpu.memory_space<vmem>>, vector<8x384xf32>
    tpu.vector_store %arg22[%c24, %c0_180], %172 {strides = array<i32>} : memref<288x2560xf32, #tpu.memory_space<vmem>>, vector<8x384xf32>,
    %c32_181 = arith.constant 32 : index
    %c0_182 = arith.constant 0 : index
    %174 = vector.load %arg22[%c32_181, %c0_182] : memref<288x2560xf32, #tpu.memory_space<vmem>>, vector<8x384xf32>
    tpu.vector_store %arg22[%c32_181, %c0_182], %165 {strides = array<i32>} : memref<288x2560xf32, #tpu.memory_space<vmem>>, vector<8x384xf32>,
    %c383_i32 = arith.constant 383 : i32
    %175 = tpu.dynamic_rotate %165 by %c383_i32 dim 1 : vector<8x384xf32>, i32 -> vector<8x384xf32>
    %c40 = arith.constant 40 : index
    %c0_183 = arith.constant 0 : index
    %176 = vector.load %arg22[%c40, %c0_183] : memref<288x2560xf32, #tpu.memory_space<vmem>>, vector<8x384xf32>
    tpu.vector_store %arg22[%c40, %c0_183], %175 {strides = array<i32>} : memref<288x2560xf32, #tpu.memory_space<vmem>>, vector<8x384xf32>,
    %c367_i32 = arith.constant 367 : i32
    %177 = tpu.dynamic_rotate %165 by %c367_i32 dim 1 : vector<8x384xf32>, i32 -> vector<8x384xf32>
    %c48_184 = arith.constant 48 : index
    %c0_185 = arith.constant 0 : index
    %178 = vector.load %arg22[%c48_184, %c0_185] : memref<288x2560xf32, #tpu.memory_space<vmem>>, vector<8x384xf32>
    tpu.vector_store %arg22[%c48_184, %c0_185], %177 {strides = array<i32>} : memref<288x2560xf32, #tpu.memory_space<vmem>>, vector<8x384xf32>,
    %c366_i32 = arith.constant 366 : i32
    %179 = tpu.dynamic_rotate %165 by %c366_i32 dim 1 : vector<8x384xf32>, i32 -> vector<8x384xf32>
    %c56 = arith.constant 56 : index
    %c0_186 = arith.constant 0 : index
    %180 = vector.load %arg22[%c56, %c0_186] : memref<288x2560xf32, #tpu.memory_space<vmem>>, vector<8x384xf32>
    tpu.vector_store %arg22[%c56, %c0_186], %179 {strides = array<i32>} : memref<288x2560xf32, #tpu.memory_space<vmem>>, vector<8x384xf32>,
    %c365_i32 = arith.constant 365 : i32
    %181 = tpu.dynamic_rotate %165 by %c365_i32 dim 1 : vector<8x384xf32>, i32 -> vector<8x384xf32>
    %c64_187 = arith.constant 64 : index
    %c0_188 = arith.constant 0 : index
    %182 = vector.load %arg22[%c64_187, %c0_188] : memref<288x2560xf32, #tpu.memory_space<vmem>>, vector<8x384xf32>
    tpu.vector_store %arg22[%c64_187, %c0_188], %181 {strides = array<i32>} : memref<288x2560xf32, #tpu.memory_space<vmem>>, vector<8x384xf32>,
    %183 = vector.extract_strided_slice %140 {offsets = [0, 128], sizes = [8, 128], strides = [1, 1]} : vector<8x256xf32> to vector<8x128xf32>
    %cst_189 = arith.constant dense<0.000000e+00> : vector<8x384xf32>
    %184 = tpu.matmul %183, %146, %cst_189 {dimension_numbers = #tpu.dot_dimension_numbers<[1], [0], [0], [1], [0, 0, 1, 1], [], []>} : vector<8x128xf32>, vector<128x384xf32>, vector<8x384xf32> -> vector<8x384xf32>
    %c19_i32_190 = arith.constant 19 : i32
    %185 = tpu.dynamic_rotate %184 by %c19_i32_190 dim 1 : vector<8x384xf32>, i32 -> vector<8x384xf32>
    %c0_191 = arith.constant 0 : index
    %c384 = arith.constant 384 : index
    %186 = vector.load %arg22[%c0_191, %c384] : memref<288x2560xf32, #tpu.memory_space<vmem>>, vector<8x384xf32>
    tpu.vector_store %arg22[%c0_191, %c384], %185 {strides = array<i32>} : memref<288x2560xf32, #tpu.memory_space<vmem>>, vector<8x384xf32>,
    %c18_i32_192 = arith.constant 18 : i32
    %187 = tpu.dynamic_rotate %184 by %c18_i32_192 dim 1 : vector<8x384xf32>, i32 -> vector<8x384xf32>
    %c8_193 = arith.constant 8 : index
    %c384_194 = arith.constant 384 : index
    %188 = vector.load %arg22[%c8_193, %c384_194] : memref<288x2560xf32, #tpu.memory_space<vmem>>, vector<8x384xf32>
    tpu.vector_store %arg22[%c8_193, %c384_194], %187 {strides = array<i32>} : memref<288x2560xf32, #tpu.memory_space<vmem>>, vector<8x384xf32>,
    %c17_i32_195 = arith.constant 17 : i32
    %189 = tpu.dynamic_rotate %184 by %c17_i32_195 dim 1 : vector<8x384xf32>, i32 -> vector<8x384xf32>
    %c16_196 = arith.constant 16 : index
    %c384_197 = arith.constant 384 : index
    %190 = vector.load %arg22[%c16_196, %c384_197] : memref<288x2560xf32, #tpu.memory_space<vmem>>, vector<8x384xf32>
    tpu.vector_store %arg22[%c16_196, %c384_197], %189 {strides = array<i32>} : memref<288x2560xf32, #tpu.memory_space<vmem>>, vector<8x384xf32>,
    %c1_i32_198 = arith.constant 1 : i32
    %191 = tpu.dynamic_rotate %184 by %c1_i32_198 dim 1 : vector<8x384xf32>, i32 -> vector<8x384xf32>
    %c24_199 = arith.constant 24 : index
    %c384_200 = arith.constant 384 : index
    %192 = vector.load %arg22[%c24_199, %c384_200] : memref<288x2560xf32, #tpu.memory_space<vmem>>, vector<8x384xf32>
    tpu.vector_store %arg22[%c24_199, %c384_200], %191 {strides = array<i32>} : memref<288x2560xf32, #tpu.memory_space<vmem>>, vector<8x384xf32>,
    %c32_201 = arith.constant 32 : index
    %c384_202 = arith.constant 384 : index
    %193 = vector.load %arg22[%c32_201, %c384_202] : memref<288x2560xf32, #tpu.memory_space<vmem>>, vector<8x384xf32>
    tpu.vector_store %arg22[%c32_201, %c384_202], %184 {strides = array<i32>} : memref<288x2560xf32, #tpu.memory_space<vmem>>, vector<8x384xf32>,
    %c383_i32_203 = arith.constant 383 : i32
    %194 = tpu.dynamic_rotate %184 by %c383_i32_203 dim 1 : vector<8x384xf32>, i32 -> vector<8x384xf32>
    %c40_204 = arith.constant 40 : index
    %c384_205 = arith.constant 384 : index
    %195 = vector.load %arg22[%c40_204, %c384_205] : memref<288x2560xf32, #tpu.memory_space<vmem>>, vector<8x384xf32>
    tpu.vector_store %arg22[%c40_204, %c384_205], %194 {strides = array<i32>} : memref<288x2560xf32, #tpu.memory_space<vmem>>, vector<8x384xf32>,
    %c367_i32_206 = arith.constant 367 : i32
    %196 = tpu.dynamic_rotate %184 by %c367_i32_206 dim 1 : vector<8x384xf32>, i32 -> vector<8x384xf32>
    %c48_207 = arith.constant 48 : index
    %c384_208 = arith.constant 384 : index
    %197 = vector.load %arg22[%c48_207, %c384_208] : memref<288x2560xf32, #tpu.memory_space<vmem>>, vector<8x384xf32>
    tpu.vector_store %arg22[%c48_207, %c384_208], %196 {strides = array<i32>} : memref<288x2560xf32, #tpu.memory_space<vmem>>, vector<8x384xf32>,
    %c366_i32_209 = arith.constant 366 : i32
    %198 = tpu.dynamic_rotate %184 by %c366_i32_209 dim 1 : vector<8x384xf32>, i32 -> vector<8x384xf32>
    %c56_210 = arith.constant 56 : index
    %c384_211 = arith.constant 384 : index
    %199 = vector.load %arg22[%c56_210, %c384_211] : memref<288x2560xf32, #tpu.memory_space<vmem>>, vector<8x384xf32>
    tpu.vector_store %arg22[%c56_210, %c384_211], %198 {strides = array<i32>} : memref<288x2560xf32, #tpu.memory_space<vmem>>, vector<8x384xf32>,
    %c365_i32_212 = arith.constant 365 : i32
    %200 = tpu.dynamic_rotate %184 by %c365_i32_212 dim 1 : vector<8x384xf32>, i32 -> vector<8x384xf32>
    %c64_213 = arith.constant 64 : index
    %c384_214 = arith.constant 384 : index
    %201 = vector.load %arg22[%c64_213, %c384_214] : memref<288x2560xf32, #tpu.memory_space<vmem>>, vector<8x384xf32>
    tpu.vector_store %arg22[%c64_213, %c384_214], %200 {strides = array<i32>} : memref<288x2560xf32, #tpu.memory_space<vmem>>, vector<8x384xf32>,
    %202 = arith.extf %143 : vector<8x144xbf16> to vector<8x144xf32>
    %c0_215 = arith.constant 0 : index
    %c0_216 = arith.constant 0 : index
    %203 = vector.load %arg22[%c0_215, %c0_216] : memref<288x2560xf32, #tpu.memory_space<vmem>>, vector<144x768xf32>
    %cst_217 = arith.constant dense<0.000000e+00> : vector<8x768xf32>
    %204 = tpu.matmul %202, %203, %cst_217 {dimension_numbers = #tpu.dot_dimension_numbers<[1], [0], [0], [1], [0, 0, 1, 1], [], []>} : vector<8x144xf32>, vector<144x768xf32>, vector<8x768xf32> -> vector<8x768xf32>
    %205 = vector.broadcast %144 : vector<8x1xf32> to vector<8x768xf32>
    %206 = arith.mulf %204, %205 : vector<8x768xf32>
    %207 = vector.broadcast %145 : vector<8x1xf32> to vector<8x768xf32>
    %208 = arith.addf %206, %207 : vector<8x768xf32>
    %cst_218 = arith.constant 0.000000e+00 : f32
    %209 = vector.broadcast %cst_218 : f32 to vector<8x768xf32>
    %210 = arith.maximumf %208, %209 : vector<8x768xf32>
    tpu.wait_dma2 semaphore(%arg21 : memref<!tpu.dma_semaphore, #tpu.memory_space<semaphore_mem>>) src(%arg8 : memref<384x1280xbf16, #tpu.memory_space<any>>) dst(%arg20 : memref<384x1280xbf16, #tpu.memory_space<vmem>>)
    %c0_219 = arith.constant 0 : index
    %c0_220 = arith.constant 0 : index
    %211 = vector.load %arg20[%c0_219, %c0_220] : memref<384x1280xbf16, #tpu.memory_space<vmem>>, vector<384x1280xbf16>
    %c0_221 = arith.constant 0 : index
    %c0_222 = arith.constant 0 : index
    %212 = vector.load %arg4[%c0_221, %c0_222] : memref<8x2560xf32, #tpu.memory_space<vmem>>, vector<8x2560xf32>
    %c0_223 = arith.constant 0 : index
    %c0_224 = arith.constant 0 : index
    %213 = vector.load %arg12[%c0_223, %c0_224] : memref<8x144xbf16, #tpu.memory_space<vmem>>, vector<8x144xbf16>
    %214 = arith.extf %211 : vector<384x1280xbf16> to vector<384x1280xf32>
    %c35_i32 = arith.constant 35 : i32
    %215 = tpu.dynamic_rotate %212 by %c35_i32 dim 1 : vector<8x2560xf32>, i32 -> vector<8x2560xf32>
    %c72_225 = arith.constant 72 : index
    %c0_226 = arith.constant 0 : index
    %216 = vector.load %arg22[%c72_225, %c0_226] : memref<288x2560xf32, #tpu.memory_space<vmem>>, vector<8x2560xf32>
    tpu.vector_store %arg22[%c72_225, %c0_226], %215 {strides = array<i32>} : memref<288x2560xf32, #tpu.memory_space<vmem>>, vector<8x2560xf32>,
    %c34_i32 = arith.constant 34 : i32
    %217 = tpu.dynamic_rotate %212 by %c34_i32 dim 1 : vector<8x2560xf32>, i32 -> vector<8x2560xf32>
    %c80_227 = arith.constant 80 : index
    %c0_228 = arith.constant 0 : index
    %218 = vector.load %arg22[%c80_227, %c0_228] : memref<288x2560xf32, #tpu.memory_space<vmem>>, vector<8x2560xf32>
    tpu.vector_store %arg22[%c80_227, %c0_228], %217 {strides = array<i32>} : memref<288x2560xf32, #tpu.memory_space<vmem>>, vector<8x2560xf32>,
    %c33_i32 = arith.constant 33 : i32
    %219 = tpu.dynamic_rotate %212 by %c33_i32 dim 1 : vector<8x2560xf32>, i32 -> vector<8x2560xf32>
    %c88_229 = arith.constant 88 : index
    %c0_230 = arith.constant 0 : index
    %220 = vector.load %arg22[%c88_229, %c0_230] : memref<288x2560xf32, #tpu.memory_space<vmem>>, vector<8x2560xf32>
    tpu.vector_store %arg22[%c88_229, %c0_230], %219 {strides = array<i32>} : memref<288x2560xf32, #tpu.memory_space<vmem>>, vector<8x2560xf32>,
    %c1_i32_231 = arith.constant 1 : i32
    %221 = tpu.dynamic_rotate %212 by %c1_i32_231 dim 1 : vector<8x2560xf32>, i32 -> vector<8x2560xf32>
    %c96_232 = arith.constant 96 : index
    %c0_233 = arith.constant 0 : index
    %222 = vector.load %arg22[%c96_232, %c0_233] : memref<288x2560xf32, #tpu.memory_space<vmem>>, vector<8x2560xf32>
    tpu.vector_store %arg22[%c96_232, %c0_233], %221 {strides = array<i32>} : memref<288x2560xf32, #tpu.memory_space<vmem>>, vector<8x2560xf32>,
    %c104_234 = arith.constant 104 : index
    %c0_235 = arith.constant 0 : index
    %223 = vector.load %arg22[%c104_234, %c0_235] : memref<288x2560xf32, #tpu.memory_space<vmem>>, vector<8x2560xf32>
    tpu.vector_store %arg22[%c104_234, %c0_235], %212 {strides = array<i32>} : memref<288x2560xf32, #tpu.memory_space<vmem>>, vector<8x2560xf32>,
    %c2559_i32 = arith.constant 2559 : i32
    %224 = tpu.dynamic_rotate %212 by %c2559_i32 dim 1 : vector<8x2560xf32>, i32 -> vector<8x2560xf32>
    %c112_236 = arith.constant 112 : index
    %c0_237 = arith.constant 0 : index
    %225 = vector.load %arg22[%c112_236, %c0_237] : memref<288x2560xf32, #tpu.memory_space<vmem>>, vector<8x2560xf32>
    tpu.vector_store %arg22[%c112_236, %c0_237], %224 {strides = array<i32>} : memref<288x2560xf32, #tpu.memory_space<vmem>>, vector<8x2560xf32>,
    %c2527_i32 = arith.constant 2527 : i32
    %226 = tpu.dynamic_rotate %212 by %c2527_i32 dim 1 : vector<8x2560xf32>, i32 -> vector<8x2560xf32>
    %c120_238 = arith.constant 120 : index
    %c0_239 = arith.constant 0 : index
    %227 = vector.load %arg22[%c120_238, %c0_239] : memref<288x2560xf32, #tpu.memory_space<vmem>>, vector<8x2560xf32>
    tpu.vector_store %arg22[%c120_238, %c0_239], %226 {strides = array<i32>} : memref<288x2560xf32, #tpu.memory_space<vmem>>, vector<8x2560xf32>,
    %c2526_i32 = arith.constant 2526 : i32
    %228 = tpu.dynamic_rotate %212 by %c2526_i32 dim 1 : vector<8x2560xf32>, i32 -> vector<8x2560xf32>
    %c128_240 = arith.constant 128 : index
    %c0_241 = arith.constant 0 : index
    %229 = vector.load %arg22[%c128_240, %c0_241] : memref<288x2560xf32, #tpu.memory_space<vmem>>, vector<8x2560xf32>
    tpu.vector_store %arg22[%c128_240, %c0_241], %228 {strides = array<i32>} : memref<288x2560xf32, #tpu.memory_space<vmem>>, vector<8x2560xf32>,
    %c2525_i32 = arith.constant 2525 : i32
    %230 = tpu.dynamic_rotate %212 by %c2525_i32 dim 1 : vector<8x2560xf32>, i32 -> vector<8x2560xf32>
    %c136_242 = arith.constant 136 : index
    %c0_243 = arith.constant 0 : index
    %231 = vector.load %arg22[%c136_242, %c0_243] : memref<288x2560xf32, #tpu.memory_space<vmem>>, vector<8x2560xf32>
    tpu.vector_store %arg22[%c136_242, %c0_243], %230 {strides = array<i32>} : memref<288x2560xf32, #tpu.memory_space<vmem>>, vector<8x2560xf32>,
    %232 = vector.extract_strided_slice %210 {offsets = [0, 0], sizes = [8, 384], strides = [1, 1]} : vector<8x768xf32> to vector<8x384xf32>
    %cst_244 = arith.constant dense<0.000000e+00> : vector<8x1280xf32>
    %233 = tpu.matmul %232, %214, %cst_244 {dimension_numbers = #tpu.dot_dimension_numbers<[1], [0], [0], [1], [0, 0, 1, 1], [], []>} : vector<8x384xf32>, vector<384x1280xf32>, vector<8x1280xf32> -> vector<8x1280xf32>
    %c35_i32_245 = arith.constant 35 : i32
    %234 = tpu.dynamic_rotate %233 by %c35_i32_245 dim 1 : vector<8x1280xf32>, i32 -> vector<8x1280xf32>
    %c0_246 = arith.constant 0 : index
    %c0_247 = arith.constant 0 : index
    %235 = vector.load %arg22[%c0_246, %c0_247] : memref<288x2560xf32, #tpu.memory_space<vmem>>, vector<8x1280xf32>
    tpu.vector_store %arg22[%c0_246, %c0_247], %234 {strides = array<i32>} : memref<288x2560xf32, #tpu.memory_space<vmem>>, vector<8x1280xf32>,
    %c34_i32_248 = arith.constant 34 : i32
    %236 = tpu.dynamic_rotate %233 by %c34_i32_248 dim 1 : vector<8x1280xf32>, i32 -> vector<8x1280xf32>
    %c8_249 = arith.constant 8 : index
    %c0_250 = arith.constant 0 : index
    %237 = vector.load %arg22[%c8_249, %c0_250] : memref<288x2560xf32, #tpu.memory_space<vmem>>, vector<8x1280xf32>
    tpu.vector_store %arg22[%c8_249, %c0_250], %236 {strides = array<i32>} : memref<288x2560xf32, #tpu.memory_space<vmem>>, vector<8x1280xf32>,
    %c33_i32_251 = arith.constant 33 : i32
    %238 = tpu.dynamic_rotate %233 by %c33_i32_251 dim 1 : vector<8x1280xf32>, i32 -> vector<8x1280xf32>
    %c16_252 = arith.constant 16 : index
    %c0_253 = arith.constant 0 : index
    %239 = vector.load %arg22[%c16_252, %c0_253] : memref<288x2560xf32, #tpu.memory_space<vmem>>, vector<8x1280xf32>
    tpu.vector_store %arg22[%c16_252, %c0_253], %238 {strides = array<i32>} : memref<288x2560xf32, #tpu.memory_space<vmem>>, vector<8x1280xf32>,
    %c1_i32_254 = arith.constant 1 : i32
    %240 = tpu.dynamic_rotate %233 by %c1_i32_254 dim 1 : vector<8x1280xf32>, i32 -> vector<8x1280xf32>
    %c24_255 = arith.constant 24 : index
    %c0_256 = arith.constant 0 : index
    %241 = vector.load %arg22[%c24_255, %c0_256] : memref<288x2560xf32, #tpu.memory_space<vmem>>, vector<8x1280xf32>
    tpu.vector_store %arg22[%c24_255, %c0_256], %240 {strides = array<i32>} : memref<288x2560xf32, #tpu.memory_space<vmem>>, vector<8x1280xf32>,
    %c32_257 = arith.constant 32 : index
    %c0_258 = arith.constant 0 : index
    %242 = vector.load %arg22[%c32_257, %c0_258] : memref<288x2560xf32, #tpu.memory_space<vmem>>, vector<8x1280xf32>
    tpu.vector_store %arg22[%c32_257, %c0_258], %233 {strides = array<i32>} : memref<288x2560xf32, #tpu.memory_space<vmem>>, vector<8x1280xf32>,
    %c1279_i32 = arith.constant 1279 : i32
    %243 = tpu.dynamic_rotate %233 by %c1279_i32 dim 1 : vector<8x1280xf32>, i32 -> vector<8x1280xf32>
    %c40_259 = arith.constant 40 : index
    %c0_260 = arith.constant 0 : index
    %244 = vector.load %arg22[%c40_259, %c0_260] : memref<288x2560xf32, #tpu.memory_space<vmem>>, vector<8x1280xf32>
    tpu.vector_store %arg22[%c40_259, %c0_260], %243 {strides = array<i32>} : memref<288x2560xf32, #tpu.memory_space<vmem>>, vector<8x1280xf32>,
    %c1247_i32 = arith.constant 1247 : i32
    %245 = tpu.dynamic_rotate %233 by %c1247_i32 dim 1 : vector<8x1280xf32>, i32 -> vector<8x1280xf32>
    %c48_261 = arith.constant 48 : index
    %c0_262 = arith.constant 0 : index
    %246 = vector.load %arg22[%c48_261, %c0_262] : memref<288x2560xf32, #tpu.memory_space<vmem>>, vector<8x1280xf32>
    tpu.vector_store %arg22[%c48_261, %c0_262], %245 {strides = array<i32>} : memref<288x2560xf32, #tpu.memory_space<vmem>>, vector<8x1280xf32>,
    %c1246_i32 = arith.constant 1246 : i32
    %247 = tpu.dynamic_rotate %233 by %c1246_i32 dim 1 : vector<8x1280xf32>, i32 -> vector<8x1280xf32>
    %c56_263 = arith.constant 56 : index
    %c0_264 = arith.constant 0 : index
    %248 = vector.load %arg22[%c56_263, %c0_264] : memref<288x2560xf32, #tpu.memory_space<vmem>>, vector<8x1280xf32>
    tpu.vector_store %arg22[%c56_263, %c0_264], %247 {strides = array<i32>} : memref<288x2560xf32, #tpu.memory_space<vmem>>, vector<8x1280xf32>,
    %c1245_i32 = arith.constant 1245 : i32
    %249 = tpu.dynamic_rotate %233 by %c1245_i32 dim 1 : vector<8x1280xf32>, i32 -> vector<8x1280xf32>
    %c64_265 = arith.constant 64 : index
    %c0_266 = arith.constant 0 : index
    %250 = vector.load %arg22[%c64_265, %c0_266] : memref<288x2560xf32, #tpu.memory_space<vmem>>, vector<8x1280xf32>
    tpu.vector_store %arg22[%c64_265, %c0_266], %249 {strides = array<i32>} : memref<288x2560xf32, #tpu.memory_space<vmem>>, vector<8x1280xf32>,
    %251 = vector.extract_strided_slice %210 {offsets = [0, 384], sizes = [8, 384], strides = [1, 1]} : vector<8x768xf32> to vector<8x384xf32>
    %cst_267 = arith.constant dense<0.000000e+00> : vector<8x1280xf32>
    %252 = tpu.matmul %251, %214, %cst_267 {dimension_numbers = #tpu.dot_dimension_numbers<[1], [0], [0], [1], [0, 0, 1, 1], [], []>} : vector<8x384xf32>, vector<384x1280xf32>, vector<8x1280xf32> -> vector<8x1280xf32>
    %c35_i32_268 = arith.constant 35 : i32
    %253 = tpu.dynamic_rotate %252 by %c35_i32_268 dim 1 : vector<8x1280xf32>, i32 -> vector<8x1280xf32>
    %c0_269 = arith.constant 0 : index
    %c1280 = arith.constant 1280 : index
    %254 = vector.load %arg22[%c0_269, %c1280] : memref<288x2560xf32, #tpu.memory_space<vmem>>, vector<8x1280xf32>
    tpu.vector_store %arg22[%c0_269, %c1280], %253 {strides = array<i32>} : memref<288x2560xf32, #tpu.memory_space<vmem>>, vector<8x1280xf32>,
    %c34_i32_270 = arith.constant 34 : i32
    %255 = tpu.dynamic_rotate %252 by %c34_i32_270 dim 1 : vector<8x1280xf32>, i32 -> vector<8x1280xf32>
    %c8_271 = arith.constant 8 : index
    %c1280_272 = arith.constant 1280 : index
    %256 = vector.load %arg22[%c8_271, %c1280_272] : memref<288x2560xf32, #tpu.memory_space<vmem>>, vector<8x1280xf32>
    tpu.vector_store %arg22[%c8_271, %c1280_272], %255 {strides = array<i32>} : memref<288x2560xf32, #tpu.memory_space<vmem>>, vector<8x1280xf32>,
    %c33_i32_273 = arith.constant 33 : i32
    %257 = tpu.dynamic_rotate %252 by %c33_i32_273 dim 1 : vector<8x1280xf32>, i32 -> vector<8x1280xf32>
    %c16_274 = arith.constant 16 : index
    %c1280_275 = arith.constant 1280 : index
    %258 = vector.load %arg22[%c16_274, %c1280_275] : memref<288x2560xf32, #tpu.memory_space<vmem>>, vector<8x1280xf32>
    tpu.vector_store %arg22[%c16_274, %c1280_275], %257 {strides = array<i32>} : memref<288x2560xf32, #tpu.memory_space<vmem>>, vector<8x1280xf32>,
    %c1_i32_276 = arith.constant 1 : i32
    %259 = tpu.dynamic_rotate %252 by %c1_i32_276 dim 1 : vector<8x1280xf32>, i32 -> vector<8x1280xf32>
    %c24_277 = arith.constant 24 : index
    %c1280_278 = arith.constant 1280 : index
    %260 = vector.load %arg22[%c24_277, %c1280_278] : memref<288x2560xf32, #tpu.memory_space<vmem>>, vector<8x1280xf32>
    tpu.vector_store %arg22[%c24_277, %c1280_278], %259 {strides = array<i32>} : memref<288x2560xf32, #tpu.memory_space<vmem>>, vector<8x1280xf32>,
    %c32_279 = arith.constant 32 : index
    %c1280_280 = arith.constant 1280 : index
    %261 = vector.load %arg22[%c32_279, %c1280_280] : memref<288x2560xf32, #tpu.memory_space<vmem>>, vector<8x1280xf32>
    tpu.vector_store %arg22[%c32_279, %c1280_280], %252 {strides = array<i32>} : memref<288x2560xf32, #tpu.memory_space<vmem>>, vector<8x1280xf32>,
    %c1279_i32_281 = arith.constant 1279 : i32
    %262 = tpu.dynamic_rotate %252 by %c1279_i32_281 dim 1 : vector<8x1280xf32>, i32 -> vector<8x1280xf32>
    %c40_282 = arith.constant 40 : index
    %c1280_283 = arith.constant 1280 : index
    %263 = vector.load %arg22[%c40_282, %c1280_283] : memref<288x2560xf32, #tpu.memory_space<vmem>>, vector<8x1280xf32>
    tpu.vector_store %arg22[%c40_282, %c1280_283], %262 {strides = array<i32>} : memref<288x2560xf32, #tpu.memory_space<vmem>>, vector<8x1280xf32>,
    %c1247_i32_284 = arith.constant 1247 : i32
    %264 = tpu.dynamic_rotate %252 by %c1247_i32_284 dim 1 : vector<8x1280xf32>, i32 -> vector<8x1280xf32>
    %c48_285 = arith.constant 48 : index
    %c1280_286 = arith.constant 1280 : index
    %265 = vector.load %arg22[%c48_285, %c1280_286] : memref<288x2560xf32, #tpu.memory_space<vmem>>, vector<8x1280xf32>
    tpu.vector_store %arg22[%c48_285, %c1280_286], %264 {strides = array<i32>} : memref<288x2560xf32, #tpu.memory_space<vmem>>, vector<8x1280xf32>,
    %c1246_i32_287 = arith.constant 1246 : i32
    %266 = tpu.dynamic_rotate %252 by %c1246_i32_287 dim 1 : vector<8x1280xf32>, i32 -> vector<8x1280xf32>
    %c56_288 = arith.constant 56 : index
    %c1280_289 = arith.constant 1280 : index
    %267 = vector.load %arg22[%c56_288, %c1280_289] : memref<288x2560xf32, #tpu.memory_space<vmem>>, vector<8x1280xf32>
    tpu.vector_store %arg22[%c56_288, %c1280_289], %266 {strides = array<i32>} : memref<288x2560xf32, #tpu.memory_space<vmem>>, vector<8x1280xf32>,
    %c1245_i32_290 = arith.constant 1245 : i32
    %268 = tpu.dynamic_rotate %252 by %c1245_i32_290 dim 1 : vector<8x1280xf32>, i32 -> vector<8x1280xf32>
    %c64_291 = arith.constant 64 : index
    %c1280_292 = arith.constant 1280 : index
    %269 = vector.load %arg22[%c64_291, %c1280_292] : memref<288x2560xf32, #tpu.memory_space<vmem>>, vector<8x1280xf32>
    tpu.vector_store %arg22[%c64_291, %c1280_292], %268 {strides = array<i32>} : memref<288x2560xf32, #tpu.memory_space<vmem>>, vector<8x1280xf32>,
    %270 = arith.extf %213 : vector<8x144xbf16> to vector<8x144xf32>
    %c0_293 = arith.constant 0 : index
    %c0_294 = arith.constant 0 : index
    %271 = vector.load %arg22[%c0_293, %c0_294] : memref<288x2560xf32, #tpu.memory_space<vmem>>, vector<144x2560xf32>
    %cst_295 = arith.constant dense<0.000000e+00> : vector<8x2560xf32>
    %272 = tpu.matmul %270, %271, %cst_295 {dimension_numbers = #tpu.dot_dimension_numbers<[1], [0], [0], [1], [0, 0, 1, 1], [], []>} : vector<8x144xf32>, vector<144x2560xf32>, vector<8x2560xf32> -> vector<8x2560xf32>
    %c0_296 = arith.constant 0 : index
    %c0_297 = arith.constant 0 : index
    %273 = vector.load %arg19[%c0_296, %c0_297] : memref<8x2560xf32, #tpu.memory_space<vmem>>, vector<8x2560xf32>
    tpu.vector_store %arg19[%c0_296, %c0_297], %272 {strides = array<i32>} : memref<8x2560xf32, #tpu.memory_space<vmem>>, vector<8x2560xf32>,
    return
  }
}

</mosaic_0001>

<llo_original>
// kernel: tpu_custom_call.1
$region0: #{tpu_custom_call.1}
  #allocation0 [shape = 'u32[]', space=smem, size = 0x4, offset = 0x4, fixed_abs, tag = 'smem constant byte address 0x4 - core index']
  #allocation1 [shape = 'u32[144,128]{1,0:T(1,128)}', space=vmem, size = 0x12000, scoped, tag = 'internal scratch']
  #allocation2 [shape = 'bf16[384,1280]{1,0:T(16,128)(2,1)}', space=vmem, size = 0xf0000, scoped, tag = 'scratch operand']
  #allocation3 [shape = 's32[1]{0}', space=sflag, size = 0x4, scoped, tag = 'scratch operand']
  #allocation4 [shape = 'f32[288,2560]{1,0:T(8,128)}', space=vmem, size = 0x2d0000, scoped, tag = 'scratch operand']
  #allocation18 [shape = 's32[]', space=sflag, size = 0x4, offset = 0, fixed_abs, tag = 'sflag constant byte address 0x0 - dummy sync flag']
  %s0 = inlined_call_operand.hbm [shape: f32[16,256], index: 0, kind: input, shape index: {}]
  %s1 = inlined_call_operand.hbm [shape: f32[16,256], index: 1, kind: input, shape index: {}]
  %s2 = inlined_call_operand.hbm [shape: f32[8,256], index: 2, kind: input, shape index: {}]
  %s3 = inlined_call_operand.hbm [shape: f32[8,768], index: 3, kind: input, shape index: {}]
  %s4 = inlined_call_operand.hbm [shape: f32[8,2560], index: 4, kind: input, shape index: {}]
  %s5 = inlined_call_operand.vmem [shape: bf16[128,128], index: 5, kind: input, shape index: {}]
  %s6 = inlined_call_operand.hbm [shape: bf16[128,128], index: 6, kind: input, shape index: {}]
  %s7 = inlined_call_operand.hbm [shape: bf16[128,384], index: 7, kind: input, shape index: {}]
  %s8 = inlined_call_operand.hbm [shape: bf16[384,1280], index: 8, kind: input, shape index: {}]
  %s9 = inlined_call_operand.vmem [shape: bf16[16,288], index: 9, kind: input, shape index: {}]
  %s10 = inlined_call_operand.vmem [shape: bf16[8,216], index: 10, kind: input, shape index: {}]
  %s11 = inlined_call_operand.vmem [shape: bf16[8,144], index: 11, kind: input, shape index: {}]
  %s12 = inlined_call_operand.vmem [shape: bf16[8,144], index: 12, kind: input, shape index: {}]
  %s13 = inlined_call_operand.vmem [shape: f32[16,1], index: 13, kind: input, shape index: {}]
  %s14 = inlined_call_operand.vmem [shape: f32[16,1], index: 14, kind: input, shape index: {}]
  %s15 = inlined_call_operand.vmem [shape: f32[8,1], index: 15, kind: input, shape index: {}]
  %s16 = inlined_call_operand.vmem [shape: f32[8,1], index: 16, kind: input, shape index: {}]
  %s17 = inlined_call_operand.vmem [shape: f32[8,1], index: 17, kind: input, shape index: {}]
  %s18 = inlined_call_operand.vmem [shape: f32[8,1], index: 18, kind: input, shape index: {}]
  %s19 = inlined_call_operand.hbm [shape: f32[8,2560], index: 19, kind: output, shape index: {}]
  %s20 = sld [smem:[#allocation0]]
  $region110: #{tpu_custom_call.1} parent=0
    _
  %s22 = ssub.s32 1, %s20
  %s23 = scalar_select 0, %s22, %s20
  $region1: #{tpu_custom_call.1} parent=0
    #allocation5 [shape = 'u8[16384]{0}', space=vmem, size = 0x4000, scoped, tag = 'input window, operand 0, single buffered']
    #allocation6 [shape = 's32[1]{0}', space=sflag, size = 0x4, scoped, tag = 'scoped memory for tpu_custom_call.1']
    #allocation7 [shape = 's32[1]{0}', space=sflag, size = 0x4, scoped, tag = 'scoped memory for tpu_custom_call.1']
    #allocation8 [shape = 'u8[16384]{0}', space=vmem, size = 0x4000, scoped, tag = 'input window, operand 1, single buffered']
    #allocation9 [shape = 's32[1]{0}', space=sflag, size = 0x4, scoped, tag = 'scoped memory for tpu_custom_call.1']
    #allocation10 [shape = 'u8[8192]{0}', space=vmem, size = 0x2000, scoped, tag = 'input window, operand 2, single buffered']
    #allocation11 [shape = 'u8[24576]{0}', space=vmem, size = 0x6000, scoped, tag = 'input window, operand 3, single buffered']
    #allocation12 [shape = 's32[1]{0}', space=sflag, size = 0x4, scoped, tag = 'scoped memory for tpu_custom_call.1']
    #allocation13 [shape = 'u8[81920]{0}', space=vmem, size = 0x14000, scoped, tag = 'input window, operand 4, single buffered']
    #allocation14 [shape = 'u8[32768]{0}', space=vmem, size = 0x8000, scoped, tag = 'input window, operand 6, single buffered']
    #allocation15 [shape = 's32[1]{0}', space=sflag, size = 0x4, scoped, tag = 'scoped memory for tpu_custom_call.1']
    #allocation16 [shape = 'u8[98304]{0}', space=vmem, size = 0x18000, scoped, tag = 'input window, operand 7, single buffered']
    #allocation17 [shape = 'u8[81920]{0}', space=vmem, size = 0x14000, scoped, tag = 'output window, operand 0, single buffered']
    #allocation19 [shape = 'u32[9]{0}', space=smem, size = 0x24, scoped, tag = 'DMA stride descriptor']
    %24 = vsyncpa [#allocation6], 0
    %25 = vsyncpa [#allocation9], 0
    %26 = vsyncpa [#allocation12], 0
    %27 = vsyncpa [#allocation15], 0
    %28 = vsyncpa [#allocation7], 0
    // Predicated region
    $region2: #{tpu_custom_call.1} parent=1 // pred_check
      _
    $region3: #{tpu_custom_call.1} parent=1 // pred_check_branch
      %30 = sbr.rel (0) target = $region5
    $region4: #{tpu_custom_call.1} parent=1 // pred_region
      %s32 = ssub.s32 512, 512
      %33 = vsyncadd [#allocation6], %s32
      %s34 = sshll.u32 [#allocation5], 4
      %s35 = int_to_ptr.vmem [resolvable:$true] %s34
      %40 = dma.hbm_to_vmem [thread:$0]  %s0, 512, %s35, [#allocation6], 256, 256, 16
    $region5: #{tpu_custom_call.1} parent=1 // pred_fallthru
      _
    // Predicated region
    $region6: #{tpu_custom_call.1} parent=1 // pred_check
      _
    $region7: #{tpu_custom_call.1} parent=1 // pred_check_branch
      %42 = sbr.rel (0) target = $region9
    $region8: #{tpu_custom_call.1} parent=1 // pred_region
      %s44 = ssub.s32 512, 512
      %45 = vsyncadd [#allocation9], %s44
      %s46 = sshll.u32 [#allocation8], 4
      %s47 = int_to_ptr.vmem [resolvable:$true] %s46
      %52 = dma.hbm_to_vmem [thread:$0]  %s1, 512, %s47, [#allocation9], 256, 256, 16
    $region9: #{tpu_custom_call.1} parent=1 // pred_fallthru
      _
    // Predicated region
    $region10: #{tpu_custom_call.1} parent=1 // pred_check
      _
    $region11: #{tpu_custom_call.1} parent=1 // pred_check_branch
      %54 = sbr.rel (0) target = $region13
    $region12: #{tpu_custom_call.1} parent=1 // pred_region
      %s56 = ssub.s32 256, 256
      %57 = vsyncadd [#allocation9], %s56
      %s59 = sshll.u32 [#allocation10], 4
      %s60 = int_to_ptr.vmem [resolvable:$true] %s59
      %62 = dma.hbm_to_vmem [thread:$0]  %s2, 256, %s60, [#allocation9]
    $region13: #{tpu_custom_call.1} parent=1 // pred_fallthru
      _
    // Predicated region
    $region14: #{tpu_custom_call.1} parent=1 // pred_check
      _
    $region15: #{tpu_custom_call.1} parent=1 // pred_check_branch
      %64 = sbr.rel (0) target = $region17
    $region16: #{tpu_custom_call.1} parent=1 // pred_region
      %s66 = ssub.s32 768, 768
      %67 = vsyncadd [#allocation12], %s66
      %s69 = sshll.u32 [#allocation11], 4
      %s70 = int_to_ptr.vmem [resolvable:$true] %s69
      %72 = dma.hbm_to_vmem [thread:$0]  %s3, 768, %s70, [#allocation12]
    $region17: #{tpu_custom_call.1} parent=1 // pred_fallthru
      _
    // Predicated region
    $region18: #{tpu_custom_call.1} parent=1 // pred_check
      _
    $region19: #{tpu_custom_call.1} parent=1 // pred_check_branch
      %74 = sbr.rel (0) target = $region21
    $region20: #{tpu_custom_call.1} parent=1 // pred_region
      %s76 = ssub.s32 2560, 2560
      %77 = vsyncadd [#allocation12], %s76
      %s79 = sshll.u32 [#allocation13], 4
      %s80 = int_to_ptr.vmem [resolvable:$true] %s79
      %82 = dma.hbm_to_vmem [thread:$0]  %s4, 2560, %s80, [#allocation12]
    $region21: #{tpu_custom_call.1} parent=1 // pred_fallthru
      _
    // Predicated region
    $region22: #{tpu_custom_call.1} parent=1 // pred_check
      _
    $region23: #{tpu_custom_call.1} parent=1 // pred_check_branch
      %84 = sbr.rel (0) target = $region25
    $region24: #{tpu_custom_call.1} parent=1 // pred_region
      _
    $region25: #{tpu_custom_call.1} parent=1 // pred_fallthru
      _
    // Predicated region
    $region26: #{tpu_custom_call.1} parent=1 // pred_check
      _
    $region27: #{tpu_custom_call.1} parent=1 // pred_check_branch
      %86 = sbr.rel (0) target = $region29
    $region28: #{tpu_custom_call.1} parent=1 // pred_region
      %s88 = ssub.s32 1024, 1024
      %89 = vsyncadd [#allocation15], %s88
      %s90 = sshll.u32 [#allocation14], 4
      %s91 = int_to_ptr.vmem [resolvable:$true] %s90
      %96 = dma.hbm_to_vmem [thread:$0]  %s6, 1024, %s91, [#allocation15], 64, 64, 4
    $region29: #{tpu_custom_call.1} parent=1 // pred_fallthru
      _
    // Predicated region
    $region30: #{tpu_custom_call.1} parent=1 // pred_check
      _
    $region31: #{tpu_custom_call.1} parent=1 // pred_check_branch
      %98 = sbr.rel (0) target = $region33
    $region32: #{tpu_custom_call.1} parent=1 // pred_region
      %s100 = ssub.s32 3072, 3072
      %101 = vsyncadd [#allocation15], %s100
      %s102 = sshll.u32 [#allocation16], 4
      %s103 = int_to_ptr.vmem [resolvable:$true] %s102
      %108 = dma.hbm_to_vmem [thread:$0]  %s7, 3072, %s103, [#allocation15], 192, 192, 12
    $region33: #{tpu_custom_call.1} parent=1 // pred_fallthru
      _
    // Predicated region
    $region34: #{tpu_custom_call.1} parent=1 // pred_check
      _
    $region35: #{tpu_custom_call.1} parent=1 // pred_check_branch
      %110 = sbr.rel (0) target = $region37
    $region36: #{tpu_custom_call.1} parent=1 // pred_region
      _
    $region37: #{tpu_custom_call.1} parent=1 // pred_fallthru
      _
    // Predicated region
    $region38: #{tpu_custom_call.1} parent=1 // pred_check
      _
    $region39: #{tpu_custom_call.1} parent=1 // pred_check_branch
      %112 = sbr.rel (0) target = $region41
    $region40: #{tpu_custom_call.1} parent=1 // pred_region
      _
    $region41: #{tpu_custom_call.1} parent=1 // pred_fallthru
      _
    // Predicated region
    $region42: #{tpu_custom_call.1} parent=1 // pred_check
      _
    $region43: #{tpu_custom_call.1} parent=1 // pred_check_branch
      %114 = sbr.rel (0) target = $region45
    $region44: #{tpu_custom_call.1} parent=1 // pred_region
      _
    $region45: #{tpu_custom_call.1} parent=1 // pred_fallthru
      _
    // Predicated region
    $region46: #{tpu_custom_call.1} parent=1 // pred_check
      _
    $region47: #{tpu_custom_call.1} parent=1 // pred_check_branch
      %116 = sbr.rel (0) target = $region49
    $region48: #{tpu_custom_call.1} parent=1 // pred_region
      _
    $region49: #{tpu_custom_call.1} parent=1 // pred_fallthru
      _
    // Predicated region
    $region50: #{tpu_custom_call.1} parent=1 // pred_check
      _
    $region51: #{tpu_custom_call.1} parent=1 // pred_check_branch
      %118 = sbr.rel (0) target = $region53
    $region52: #{tpu_custom_call.1} parent=1 // pred_region
      _
    $region53: #{tpu_custom_call.1} parent=1 // pred_fallthru
      _
    // Predicated region
    $region54: #{tpu_custom_call.1} parent=1 // pred_check
      _
    $region55: #{tpu_custom_call.1} parent=1 // pred_check_branch
      %120 = sbr.rel (0) target = $region57
    $region56: #{tpu_custom_call.1} parent=1 // pred_region
      _
    $region57: #{tpu_custom_call.1} parent=1 // pred_fallthru
      _
    // Predicated region
    $region58: #{tpu_custom_call.1} parent=1 // pred_check
      _
    $region59: #{tpu_custom_call.1} parent=1 // pred_check_branch
      %122 = sbr.rel (0) target = $region61
    $region60: #{tpu_custom_call.1} parent=1 // pred_region
      _
    $region61: #{tpu_custom_call.1} parent=1 // pred_fallthru
      _
    // Predicated region
    $region62: #{tpu_custom_call.1} parent=1 // pred_check
      _
    $region63: #{tpu_custom_call.1} parent=1 // pred_check_branch
      %124 = sbr.rel (0) target = $region65
    $region64: #{tpu_custom_call.1} parent=1 // pred_region
      _
    $region65: #{tpu_custom_call.1} parent=1 // pred_fallthru
      _
    // Predicated region
    $region66: #{tpu_custom_call.1} parent=1 // pred_check
      _
    $region67: #{tpu_custom_call.1} parent=1 // pred_check_branch
      %126 = sbr.rel (0) target = $region69
    $region68: #{tpu_custom_call.1} parent=1 // pred_region
      _
    $region69: #{tpu_custom_call.1} parent=1 // pred_fallthru
      _
    // Predicated region
    $region70: #{tpu_custom_call.1} parent=1 // pred_check
      _
    $region71: #{tpu_custom_call.1} parent=1 // pred_check_branch
      %128 = sbr.rel (0) target = $region73
    $region72: #{tpu_custom_call.1} parent=1 // pred_region
      _
    $region73: #{tpu_custom_call.1} parent=1 // pred_fallthru
      _
    // Predicated region
    $region74: #{tpu_custom_call.1} parent=1 // pred_check
      _
    $region75: #{tpu_custom_call.1} parent=1 // pred_check_branch
      %130 = sbr.rel (0) target = $region77
    $region76: #{tpu_custom_call.1} parent=1 // pred_region
      %131 = dma.done [#allocation6], 512
    $region77: #{tpu_custom_call.1} parent=1 // pred_fallthru
      _
    // Predicated region
    $region78: #{tpu_custom_call.1} parent=1 // pred_check
      _
    $region79: #{tpu_custom_call.1} parent=1 // pred_check_branch
      %133 = sbr.rel (0) target = $region81
    $region80: #{tpu_custom_call.1} parent=1 // pred_region
      %134 = dma.done [#allocation9], 512
    $region81: #{tpu_custom_call.1} parent=1 // pred_fallthru
      _
    // Predicated region
    $region82: #{tpu_custom_call.1} parent=1 // pred_check
      _
    $region83: #{tpu_custom_call.1} parent=1 // pred_check_branch
      %136 = sbr.rel (0) target = $region85
    $region84: #{tpu_custom_call.1} parent=1 // pred_region
      %137 = dma.done [#allocation9], 256
    $region85: #{tpu_custom_call.1} parent=1 // pred_fallthru
      _
    // Predicated region
    $region86: #{tpu_custom_call.1} parent=1 // pred_check
      _
    $region87: #{tpu_custom_call.1} parent=1 // pred_check_branch
      %139 = sbr.rel (0) target = $region89
    $region88: #{tpu_custom_call.1} parent=1 // pred_region
      %140 = dma.done [#allocation12], 768
    $region89: #{tpu_custom_call.1} parent=1 // pred_fallthru
      _
    // Predicated region
    $region90: #{tpu_custom_call.1} parent=1 // pred_check
      _
    $region91: #{tpu_custom_call.1} parent=1 // pred_check_branch
      %142 = sbr.rel (0) target = $region93
    $region92: #{tpu_custom_call.1} parent=1 // pred_region
      %143 = dma.done [#allocation12], 2560
    $region93: #{tpu_custom_call.1} parent=1 // pred_fallthru
      _
    // Predicated region
    $region94: #{tpu_custom_call.1} parent=1 // pred_check
      _
    $region95: #{tpu_custom_call.1} parent=1 // pred_check_branch
      %145 = sbr.rel (0) target = $region97
    $region96: #{tpu_custom_call.1} parent=1 // pred_region
      %146 = dma.done [#allocation15], 1024
    $region97: #{tpu_custom_call.1} parent=1 // pred_fallthru
      _
    // Predicated region
    $region98: #{tpu_custom_call.1} parent=1 // pred_check
      _
    $region99: #{tpu_custom_call.1} parent=1 // pred_check_branch
      %148 = sbr.rel (0) target = $region101
    $region100: #{tpu_custom_call.1} parent=1 // pred_region
      %149 = dma.done [#allocation15], 3072
    $region101: #{tpu_custom_call.1} parent=1 // pred_fallthru
      _
    %s151 = sshll.u32 1, 14
    %s152 = sxor.u32 4294967295, %s151
    %s154 = sld [smem:[#allocation0]]
    %s155 = sadd.s32 2, %s154
    %s157 = sshll.u32 7, 26
    %s158 = sxor.u32 4294967295, %s157
    %s159 = sand.u32 0, %s158
    %s160 = sshll.u32 %s155, 26
    %s161 = sor.u32 %s159, %s160
    %s162 = sshll.u32 [#allocation2], 4
    %s163 = int_to_ptr.vmem [resolvable:$true] %s162
    %166 = sst [smem:[#allocation19]] 1280
    %s167 = scalar_lea.smem [#allocation19], 1
    %168 = sst [smem:[%s167]] 1280
    %s169 = scalar_lea.smem [#allocation19], 2
    %170 = sst [smem:[%s169]] 10
    %s171 = scalar_lea.smem [#allocation19], 3
    %172 = sst [smem:[%s171]] 64
    %s173 = scalar_lea.smem [#allocation19], 4
    %174 = sst [smem:[%s173]] 128
    %s175 = scalar_lea.smem [#allocation19], 5
    %176 = sst [smem:[%s175]] 2
    %s177 = scalar_lea.smem [#allocation19], 6
    %178 = sst [smem:[%s177]] 640
    %s179 = scalar_lea.smem [#allocation19], 7
    %180 = sst [smem:[%s179]] 64
    %s181 = scalar_lea.smem [#allocation19], 8
    %182 = sst [smem:[%s181]] 4
    %184 = dma.general %s8, 30720, %s163, [#allocation3], [#allocation18], [#allocation19], %s161, 0
    %v185 = vld [vmem:[#allocation5] sm:$0xff]
    %v186 = vld [vmem:[#allocation5 + $0x8] sm:$0xff]
    %v187 = vld [vmem:[#allocation5 + $0x10] sm:$0xff]
    %v188 = vld [vmem:[#allocation5 + $0x18] sm:$0xff]
    %v189 = vld [vmem:[%s5] sm:$0xf]
    %v190 = vld [vmem:[%s5 + $0x4] sm:$0xf]
    %v191 = vld [vmem:[%s5 + $0x8] sm:$0xf]
    %v192 = vld [vmem:[%s5 + $0xc] sm:$0xf]
    %v193 = vld [vmem:[%s5 + $0x10] sm:$0xf]
    %v194 = vld [vmem:[%s5 + $0x14] sm:$0xf]
    %v195 = vld [vmem:[%s5 + $0x18] sm:$0xf]
    %v196 = vld [vmem:[%s5 + $0x1c] sm:$0xf]
    %v197 = vld [vmem:[%s5 + $0x20] sm:$0xf]
    %v198 = vld [vmem:[%s5 + $0x24] sm:$0xf]
    %v199 = vld [vmem:[%s5 + $0x28] sm:$0xf]
    %v200 = vld [vmem:[%s5 + $0x2c] sm:$0xf]
    %v201 = vld [vmem:[%s5 + $0x30] sm:$0xf]
    %v202 = vld [vmem:[%s5 + $0x34] sm:$0xf]
    %v203 = vld [vmem:[%s5 + $0x38] sm:$0xf]
    %v204 = vld [vmem:[%s5 + $0x3c] sm:$0xf]
    %v205 = vld [vmem:[#allocation8] sm:$0xff]
    %v206 = vld [vmem:[#allocation8 + $0x8] sm:$0xff]
    %v207 = vld [vmem:[#allocation8 + $0x10] sm:$0xff]
    %v208 = vld [vmem:[#allocation8 + $0x18] sm:$0xff]
    %v209 = vld [vmem:[%s9] sm:$0xff]
    %v210 = vld [vmem:[%s9 + $0x8] sm:$0xf]
    %v211 = vld [vmem:[%s9 + $0xc] sm:$0xff]
    %v212 = vld [vmem:[%s9 + $0x14] sm:$0xf]
    %v213 = vld [vmem:[%s13] sm:$0xff]
    %v214 = vld [vmem:[%s13 + $0x8] sm:$0xff]
    %v215 = vld [vmem:[%s14] sm:$0xff]
    %v216 = vld [vmem:[%s14 + $0x8] sm:$0xff]
    %v217 = vunpack.c.l.bf16 %v189
    %v218 = vunpack.c.l.bf16 %v190
    %v219 = vunpack.c.l.bf16 %v191
    %v220 = vunpack.c.l.bf16 %v192
    %v221 = vunpack.c.l.bf16 %v193
    %v222 = vunpack.c.l.bf16 %v194
    %v223 = vunpack.c.l.bf16 %v195
    %v224 = vunpack.c.l.bf16 %v196
    %v225 = vunpack.c.l.bf16 %v197
    %v226 = vunpack.c.l.bf16 %v198
    %v227 = vunpack.c.l.bf16 %v199
    %v228 = vunpack.c.l.bf16 %v200
    %v229 = vunpack.c.l.bf16 %v201
    %v230 = vunpack.c.l.bf16 %v202
    %v231 = vunpack.c.l.bf16 %v203
    %v232 = vunpack.c.l.bf16 %v204
    %233 = vrot.lane.b32.xlu0 %v205, 7
    %v234 = vpop.permute.xlu0 %233
    %235 = vrot.lane.b32.xlu0 %v207, 7
    %v236 = vpop.permute.xlu0 %235
    %237 = vrot.lane.b32.xlu0 %v206, 7
    %v238 = vpop.permute.xlu0 %237
    %239 = vrot.lane.b32.xlu0 %v208, 7
    %v240 = vpop.permute.xlu0 %239
    %v241 = vlaneseq
    %v242 = vand.u32 %v241, 127
    %vm243 = vcmp.lt.s32.totalorder %v242, 7
    %v244 = vsel %vm243, %v234, %v238
    %v245 = vsel %vm243, %v236, %v240
    %v246 = vsel %vm243, %v238, %v234
    %v247 = vsel %vm243, %v240, %v236
    %248 = vst [vmem:[#allocation4 + $0xb40] sm:$0xff] %v246
    %249 = vst [vmem:[#allocation4 + $0xb48] sm:$0xff] %v244
    %250 = vst [vmem:[#allocation4 + $0xbe0] sm:$0xff] %v247
    %251 = vst [vmem:[#allocation4 + $0xbe8] sm:$0xff] %v245
    %252 = vrot.lane.b32.xlu0 %v205, 6
    %v253 = vpop.permute.xlu0 %252
    %254 = vrot.lane.b32.xlu0 %v207, 6
    %v255 = vpop.permute.xlu0 %254
    %256 = vrot.lane.b32.xlu0 %v206, 6
    %v257 = vpop.permute.xlu0 %256
    %258 = vrot.lane.b32.xlu0 %v208, 6
    %v259 = vpop.permute.xlu0 %258
    %vm260 = vcmp.lt.s32.totalorder %v242, 6
    %v261 = vsel %vm260, %v253, %v257
    %v262 = vsel %vm260, %v255, %v259
    %v263 = vsel %vm260, %v257, %v253
    %v264 = vsel %vm260, %v259, %v255
    %265 = vst [vmem:[#allocation4 + $0xc80] sm:$0xff] %v263
    %266 = vst [vmem:[#allocation4 + $0xc88] sm:$0xff] %v261
    %267 = vst [vmem:[#allocation4 + $0xd20] sm:$0xff] %v264
    %268 = vst [vmem:[#allocation4 + $0xd28] sm:$0xff] %v262
    %269 = vrot.lane.b32.xlu0 %v205, 5
    %v270 = vpop.permute.xlu0 %269
    %271 = vrot.lane.b32.xlu0 %v207, 5
    %v272 = vpop.permute.xlu0 %271
    %273 = vrot.lane.b32.xlu0 %v206, 5
    %v274 = vpop.permute.xlu0 %273
    %275 = vrot.lane.b32.xlu0 %v208, 5
    %v276 = vpop.permute.xlu0 %275
    %vm277 = vcmp.lt.s32.totalorder %v242, 5
    %v278 = vsel %vm277, %v270, %v274
    %v279 = vsel %vm277, %v272, %v276
    %v280 = vsel %vm277, %v274, %v270
    %v281 = vsel %vm277, %v276, %v272
    %282 = vst [vmem:[#allocation4 + $0xdc0] sm:$0xff] %v280
    %283 = vst [vmem:[#allocation4 + $0xdc8] sm:$0xff] %v278
    %284 = vst [vmem:[#allocation4 + $0xe60] sm:$0xff] %v281
    %285 = vst [vmem:[#allocation4 + $0xe68] sm:$0xff] %v279
    %286 = vrot.lane.b32.xlu0 %v205, 1
    %v287 = vpop.permute.xlu0 %286
    %288 = vrot.lane.b32.xlu0 %v207, 1
    %v289 = vpop.permute.xlu0 %288
    %290 = vrot.lane.b32.xlu0 %v206, 1
    %v291 = vpop.permute.xlu0 %290
    %292 = vrot.lane.b32.xlu0 %v208, 1
    %v293 = vpop.permute.xlu0 %292
    %vm294 = vcmp.lt.s32.totalorder %v242, 1
    %v295 = vsel %vm294, %v287, %v291
    %v296 = vsel %vm294, %v289, %v293
    %v297 = vsel %vm294, %v291, %v287
    %v298 = vsel %vm294, %v293, %v289
    %299 = vst [vmem:[#allocation4 + $0xf00] sm:$0xff] %v297
    %300 = vst [vmem:[#allocation4 + $0xf08] sm:$0xff] %v295
    %301 = vst [vmem:[#allocation4 + $0xfa0] sm:$0xff] %v298
    %302 = vst [vmem:[#allocation4 + $0xfa8] sm:$0xff] %v296
    %303 = vst [vmem:[#allocation4 + $0x1040] sm:$0xff] %v205
    %304 = vst [vmem:[#allocation4 + $0x1048] sm:$0xff] %v206
    %305 = vst [vmem:[#allocation4 + $0x10e0] sm:$0xff] %v207
    %306 = vst [vmem:[#allocation4 + $0x10e8] sm:$0xff] %v208
    %307 = vrot.lane.b32.xlu0 %v205, 127
    %v308 = vpop.permute.xlu0 %307
    %309 = vrot.lane.b32.xlu0 %v207, 127
    %v310 = vpop.permute.xlu0 %309
    %311 = vrot.lane.b32.xlu0 %v206, 127
    %v312 = vpop.permute.xlu0 %311
    %313 = vrot.lane.b32.xlu0 %v208, 127
    %v314 = vpop.permute.xlu0 %313
    %vm315 = vcmp.lt.s32.totalorder %v242, 127
    %v316 = vsel %vm315, %v308, %v312
    %v317 = vsel %vm315, %v310, %v314
    %v318 = vsel %vm315, %v312, %v308
    %v319 = vsel %vm315, %v314, %v310
    %320 = vst [vmem:[#allocation4 + $0x1180] sm:$0xff] %v316
    %321 = vst [vmem:[#allocation4 + $0x1188] sm:$0xff] %v318
    %322 = vst [vmem:[#allocation4 + $0x1220] sm:$0xff] %v317
    %323 = vst [vmem:[#allocation4 + $0x1228] sm:$0xff] %v319
    %324 = vrot.lane.b32.xlu0 %v205, 123
    %v325 = vpop.permute.xlu0 %324
    %326 = vrot.lane.b32.xlu0 %v207, 123
    %v327 = vpop.permute.xlu0 %326
    %328 = vrot.lane.b32.xlu0 %v206, 123
    %v329 = vpop.permute.xlu0 %328
    %330 = vrot.lane.b32.xlu0 %v208, 123
    %v331 = vpop.permute.xlu0 %330
    %vm332 = vcmp.lt.s32.totalorder %v242, 123
    %v333 = vsel %vm332, %v325, %v329
    %v334 = vsel %vm332, %v327, %v331
    %v335 = vsel %vm332, %v329, %v325
    %v336 = vsel %vm332, %v331, %v327
    %337 = vst [vmem:[#allocation4 + $0x12c0] sm:$0xff] %v333
    %338 = vst [vmem:[#allocation4 + $0x12c8] sm:$0xff] %v335
    %339 = vst [vmem:[#allocation4 + $0x1360] sm:$0xff] %v334
    %340 = vst [vmem:[#allocation4 + $0x1368] sm:$0xff] %v336
    %341 = vrot.lane.b32.xlu0 %v205, 122
    %v342 = vpop.permute.xlu0 %341
    %343 = vrot.lane.b32.xlu0 %v207, 122
    %v344 = vpop.permute.xlu0 %343
    %345 = vrot.lane.b32.xlu0 %v206, 122
    %v346 = vpop.permute.xlu0 %345
    %347 = vrot.lane.b32.xlu0 %v208, 122
    %v348 = vpop.permute.xlu0 %347
    %vm349 = vcmp.lt.s32.totalorder %v242, 122
    %v350 = vsel %vm349, %v342, %v346
    %v351 = vsel %vm349, %v344, %v348
    %v352 = vsel %vm349, %v346, %v342
    %v353 = vsel %vm349, %v348, %v344
    %354 = vst [vmem:[#allocation4 + $0x1400] sm:$0xff] %v350
    %355 = vst [vmem:[#allocation4 + $0x1408] sm:$0xff] %v352
    %356 = vst [vmem:[#allocation4 + $0x14a0] sm:$0xff] %v351
    %357 = vst [vmem:[#allocation4 + $0x14a8] sm:$0xff] %v353
    %358 = vrot.lane.b32.xlu0 %v205, 121
    %v359 = vpop.permute.xlu0 %358
    %360 = vrot.lane.b32.xlu0 %v207, 121
    %v361 = vpop.permute.xlu0 %360
    %362 = vrot.lane.b32.xlu0 %v206, 121
    %v363 = vpop.permute.xlu0 %362
    %364 = vrot.lane.b32.xlu0 %v208, 121
    %v365 = vpop.permute.xlu0 %364
    %vm366 = vcmp.lt.s32.totalorder %v242, 121
    %v367 = vsel %vm366, %v359, %v363
    %v368 = vsel %vm366, %v361, %v365
    %v369 = vsel %vm366, %v363, %v359
    %v370 = vsel %vm366, %v365, %v361
    %371 = vst [vmem:[#allocation4 + $0x1540] sm:$0xff] %v367
    %372 = vst [vmem:[#allocation4 + $0x1548] sm:$0xff] %v369
    %373 = vst [vmem:[#allocation4 + $0x15e0] sm:$0xff] %v368
    %374 = vst [vmem:[#allocation4 + $0x15e8] sm:$0xff] %v370
    %375 = vmatprep.subr.mxu0 0.0
    %376 = vmatpush1.msra.mxu0 %v217
    %377 = vmatprep.subr.mxu0 0.0
    %378 = vmatpush1.msra.mxu0 %v218
    %379 = vmatprep.subr.mxu0 0.0
    %380 = vmatpush1.msra.mxu0 %v219
    %381 = vmatprep.subr.mxu0 0.0
    %382 = vmatpush1.msra.mxu0 %v220
    %383 = vmatprep.subr.mxu0 0.0
    %384 = vmatpush1.msra.mxu0 %v221
    %385 = vmatprep.subr.mxu0 0.0
    %386 = vmatpush1.msra.mxu0 %v222
    %387 = vmatprep.subr.mxu0 0.0
    %388 = vmatpush1.msra.mxu0 %v223
    %389 = vmatprep.subr.mxu0 0.0
    %390 = vmatpush1.msra.mxu0 %v224
    %391 = vmatprep.subr.mxu0 0.0
    %392 = vmatpush1.msra.mxu0 %v225
    %393 = vmatprep.subr.mxu0 0.0
    %394 = vmatpush1.msra.mxu0 %v226
    %395 = vmatprep.subr.mxu0 0.0
    %396 = vmatpush1.msra.mxu0 %v227
    %397 = vmatprep.subr.mxu0 0.0
    %398 = vmatpush1.msra.mxu0 %v228
    %399 = vmatprep.subr.mxu0 0.0
    %400 = vmatpush1.msra.mxu0 %v229
    %401 = vmatprep.subr.mxu0 0.0
    %402 = vmatpush1.msra.mxu0 %v230
    %403 = vmatprep.subr.mxu0 0.0
    %404 = vmatpush1.msra.mxu0 %v231
    %405 = vmatprep.subr.mxu0 0.0
    %406 = vmatpush1.msra.mxu0 %v232
    %407 = vmatprep.subr.mxu0 0.0
    %408 = vmatpush1.msra.mxu0 0.0
    %409 = vmatprep.subr.mxu0 0.0
    %410 = vmatpush1.msra.mxu0 0.0
    %411 = vmatprep.subr.mxu0 0.0
    %412 = vmatpush1.msra.mxu0 0.0
    %413 = vmatprep.subr.mxu0 0.0
    %414 = vmatpush1.msra.mxu0 0.0
    %415 = vmatprep.subr.mxu0 0.0
    %416 = vmatpush1.msra.mxu0 0.0
    %417 = vmatprep.subr.mxu0 0.0
    %418 = vmatpush1.msra.mxu0 0.0
    %419 = vmatprep.subr.mxu0 0.0
    %420 = vmatpush1.msra.mxu0 0.0
    %421 = vmatprep.subr.mxu0 0.0
    %422 = vmatpush1.msra.mxu0 0.0
    %423 = vmatprep.subr.mxu0 0.0
    %424 = vmatpush1.msra.mxu0 0.0
    %425 = vmatprep.subr.mxu0 0.0
    %426 = vmatpush1.msra.mxu0 0.0
    %427 = vmatprep.subr.mxu0 0.0
    %428 = vmatpush1.msra.mxu0 0.0
    %429 = vmatprep.subr.mxu0 0.0
    %430 = vmatpush1.msra.mxu0 0.0
    %431 = vmatprep.subr.mxu0 0.0
    %432 = vmatpush1.msra.mxu0 0.0
    %433 = vmatprep.subr.mxu0 0.0
    %434 = vmatpush1.msra.mxu0 0.0
    %435 = vmatprep.subr.mxu0 0.0
    %436 = vmatpush1.msra.mxu0 0.0
    %437 = vmatprep.subr.mxu0 0.0
    %438 = vmatpush1.msra.mxu0 0.0
    %439 = vmatprep.mubr.f32.mxu0 0.0
    %440 = vmatmul.mubr.f32.gmra.mrb[0].mxu0 %v185
    %v441 = vpop.f32.mrb[0].mxu0
    %v442 = vadd.f32 0.0, %v441
    %v443 = vpop.f32.mrb[0].mxu0
    %444 = vmatprep.mubr.f32.mxu0 0.0
    %445 = vmatmul.mubr.f32.gmra.mrb[0].mxu0 %v187
    %v446 = vpop.f32.mrb[0].mxu0
    %v447 = vadd.f32 0.0, %v446
    %v448 = vpop.f32.mrb[0].mxu0
    %449 = vdwg.mxu0
    %450 = vrot.lane.b32.xlu0 %v442, 7
    %v451 = vpop.permute.xlu0 %450
    %452 = vrot.lane.b32.xlu0 %v447, 7
    %v453 = vpop.permute.xlu0 %452
    %454 = vst [vmem:[#allocation4] sm:$0xff] %v451
    %455 = vst [vmem:[#allocation4 + $0xa0] sm:$0xff] %v453
    %456 = vrot.lane.b32.xlu0 %v442, 6
    %v457 = vpop.permute.xlu0 %456
    %458 = vrot.lane.b32.xlu0 %v447, 6
    %v459 = vpop.permute.xlu0 %458
    %460 = vst [vmem:[#allocation4 + $0x140] sm:$0xff] %v457
    %461 = vst [vmem:[#allocation4 + $0x1e0] sm:$0xff] %v459
    %462 = vrot.lane.b32.xlu0 %v442, 5
    %v463 = vpop.permute.xlu0 %462
    %464 = vrot.lane.b32.xlu0 %v447, 5
    %v465 = vpop.permute.xlu0 %464
    %466 = vst [vmem:[#allocation4 + $0x280] sm:$0xff] %v463
    %467 = vst [vmem:[#allocation4 + $0x320] sm:$0xff] %v465
    %468 = vrot.lane.b32.xlu0 %v442, 1
    %v469 = vpop.permute.xlu0 %468
    %470 = vrot.lane.b32.xlu0 %v447, 1
    %v471 = vpop.permute.xlu0 %470
    %472 = vst [vmem:[#allocation4 + $0x3c0] sm:$0xff] %v469
    %473 = vst [vmem:[#allocation4 + $0x460] sm:$0xff] %v471
    %474 = vst [vmem:[#allocation4 + $0x500] sm:$0xff] %v442
    %475 = vst [vmem:[#allocation4 + $0x5a0] sm:$0xff] %v447
    %476 = vrot.lane.b32.xlu0 %v442, 127
    %v477 = vpop.permute.xlu0 %476
    %478 = vrot.lane.b32.xlu0 %v447, 127
    %v479 = vpop.permute.xlu0 %478
    %480 = vst [vmem:[#allocation4 + $0x640] sm:$0xff] %v477
    %481 = vst [vmem:[#allocation4 + $0x6e0] sm:$0xff] %v479
    %482 = vrot.lane.b32.xlu0 %v442, 123
    %v483 = vpop.permute.xlu0 %482
    %484 = vrot.lane.b32.xlu0 %v447, 123
    %v485 = vpop.permute.xlu0 %484
    %486 = vst [vmem:[#allocation4 + $0x780] sm:$0xff] %v483
    %487 = vst [vmem:[#allocation4 + $0x820] sm:$0xff] %v485
    %488 = vrot.lane.b32.xlu0 %v442, 122
    %v489 = vpop.permute.xlu0 %488
    %490 = vrot.lane.b32.xlu0 %v447, 122
    %v491 = vpop.permute.xlu0 %490
    %492 = vst [vmem:[#allocation4 + $0x8c0] sm:$0xff] %v489
    %493 = vst [vmem:[#allocation4 + $0x960] sm:$0xff] %v491
    %494 = vrot.lane.b32.xlu0 %v442, 121
    %v495 = vpop.permute.xlu0 %494
    %496 = vrot.lane.b32.xlu0 %v447, 121
    %v497 = vpop.permute.xlu0 %496
    %498 = vst [vmem:[#allocation4 + $0xa00] sm:$0xff] %v495
    %499 = vst [vmem:[#allocation4 + $0xaa0] sm:$0xff] %v497
    %500 = vmatprep.subr.mxu0 0.0
    %501 = vmatpush1.msra.mxu0 %v217
    %502 = vmatprep.subr.mxu0 0.0
    %503 = vmatpush1.msra.mxu0 %v218
    %504 = vmatprep.subr.mxu0 0.0
    %505 = vmatpush1.msra.mxu0 %v219
    %506 = vmatprep.subr.mxu0 0.0
    %507 = vmatpush1.msra.mxu0 %v220
    %508 = vmatprep.subr.mxu0 0.0
    %509 = vmatpush1.msra.mxu0 %v221
    %510 = vmatprep.subr.mxu0 0.0
    %511 = vmatpush1.msra.mxu0 %v222
    %512 = vmatprep.subr.mxu0 0.0
    %513 = vmatpush1.msra.mxu0 %v223
    %514 = vmatprep.subr.mxu0 0.0
    %515 = vmatpush1.msra.mxu0 %v224
    %516 = vmatprep.subr.mxu0 0.0
    %517 = vmatpush1.msra.mxu0 %v225
    %518 = vmatprep.subr.mxu0 0.0
    %519 = vmatpush1.msra.mxu0 %v226
    %520 = vmatprep.subr.mxu0 0.0
    %521 = vmatpush1.msra.mxu0 %v227
    %522 = vmatprep.subr.mxu0 0.0
    %523 = vmatpush1.msra.mxu0 %v228
    %524 = vmatprep.subr.mxu0 0.0
    %525 = vmatpush1.msra.mxu0 %v229
    %526 = vmatprep.subr.mxu0 0.0
    %527 = vmatpush1.msra.mxu0 %v230
    %528 = vmatprep.subr.mxu0 0.0
    %529 = vmatpush1.msra.mxu0 %v231
    %530 = vmatprep.subr.mxu0 0.0
    %531 = vmatpush1.msra.mxu0 %v232
    %532 = vmatprep.subr.mxu0 0.0
    %533 = vmatpush1.msra.mxu0 0.0
    %534 = vmatprep.subr.mxu0 0.0
    %535 = vmatpush1.msra.mxu0 0.0
    %536 = vmatprep.subr.mxu0 0.0
    %537 = vmatpush1.msra.mxu0 0.0
    %538 = vmatprep.subr.mxu0 0.0
    %539 = vmatpush1.msra.mxu0 0.0
    %540 = vmatprep.subr.mxu0 0.0
    %541 = vmatpush1.msra.mxu0 0.0
    %542 = vmatprep.subr.mxu0 0.0
    %543 = vmatpush1.msra.mxu0 0.0
    %544 = vmatprep.subr.mxu0 0.0
    %545 = vmatpush1.msra.mxu0 0.0
    %546 = vmatprep.subr.mxu0 0.0
    %547 = vmatpush1.msra.mxu0 0.0
    %548 = vmatprep.subr.mxu0 0.0
    %549 = vmatpush1.msra.mxu0 0.0
    %550 = vmatprep.subr.mxu0 0.0
    %551 = vmatpush1.msra.mxu0 0.0
    %552 = vmatprep.subr.mxu0 0.0
    %553 = vmatpush1.msra.mxu0 0.0
    %554 = vmatprep.subr.mxu0 0.0
    %555 = vmatpush1.msra.mxu0 0.0
    %556 = vmatprep.subr.mxu0 0.0
    %557 = vmatpush1.msra.mxu0 0.0
    %558 = vmatprep.subr.mxu0 0.0
    %559 = vmatpush1.msra.mxu0 0.0
    %560 = vmatprep.subr.mxu0 0.0
    %561 = vmatpush1.msra.mxu0 0.0
    %562 = vmatprep.subr.mxu0 0.0
    %563 = vmatpush1.msra.mxu0 0.0
    %564 = vmatprep.mubr.f32.mxu0 0.0
    %565 = vmatmul.mubr.f32.gmra.mrb[0].mxu0 %v186
    %v566 = vpop.f32.mrb[0].mxu0
    %v567 = vadd.f32 0.0, %v566
    %v568 = vpop.f32.mrb[0].mxu0
    %569 = vmatprep.mubr.f32.mxu0 0.0
    %570 = vmatmul.mubr.f32.gmra.mrb[0].mxu0 %v188
    %v571 = vpop.f32.mrb[0].mxu0
    %v572 = vadd.f32 0.0, %v571
    %v573 = vpop.f32.mrb[0].mxu0
    %574 = vdwg.mxu0
    %575 = vrot.lane.b32.xlu0 %v567, 7
    %v576 = vpop.permute.xlu0 %575
    %577 = vrot.lane.b32.xlu0 %v572, 7
    %v578 = vpop.permute.xlu0 %577
    %579 = vst [vmem:[#allocation4 + $0x8] sm:$0xff] %v576
    %580 = vst [vmem:[#allocation4 + $0xa8] sm:$0xff] %v578
    %581 = vrot.lane.b32.xlu0 %v567, 6
    %v582 = vpop.permute.xlu0 %581
    %583 = vrot.lane.b32.xlu0 %v572, 6
    %v584 = vpop.permute.xlu0 %583
    %585 = vst [vmem:[#allocation4 + $0x148] sm:$0xff] %v582
    %586 = vst [vmem:[#allocation4 + $0x1e8] sm:$0xff] %v584
    %587 = vrot.lane.b32.xlu0 %v567, 5
    %v588 = vpop.permute.xlu0 %587
    %589 = vrot.lane.b32.xlu0 %v572, 5
    %v590 = vpop.permute.xlu0 %589
    %591 = vst [vmem:[#allocation4 + $0x288] sm:$0xff] %v588
    %592 = vst [vmem:[#allocation4 + $0x328] sm:$0xff] %v590
    %593 = vrot.lane.b32.xlu0 %v567, 1
    %v594 = vpop.permute.xlu0 %593
    %595 = vrot.lane.b32.xlu0 %v572, 1
    %v596 = vpop.permute.xlu0 %595
    %597 = vst [vmem:[#allocation4 + $0x3c8] sm:$0xff] %v594
    %598 = vst [vmem:[#allocation4 + $0x468] sm:$0xff] %v596
    %599 = vst [vmem:[#allocation4 + $0x508] sm:$0xff] %v567
    %600 = vst [vmem:[#allocation4 + $0x5a8] sm:$0xff] %v572
    %601 = vrot.lane.b32.xlu0 %v567, 127
    %v602 = vpop.permute.xlu0 %601
    %603 = vrot.lane.b32.xlu0 %v572, 127
    %v604 = vpop.permute.xlu0 %603
    %605 = vst [vmem:[#allocation4 + $0x648] sm:$0xff] %v602
    %606 = vst [vmem:[#allocation4 + $0x6e8] sm:$0xff] %v604
    %607 = vrot.lane.b32.xlu0 %v567, 123
    %v608 = vpop.permute.xlu0 %607
    %609 = vrot.lane.b32.xlu0 %v572, 123
    %v610 = vpop.permute.xlu0 %609
    %611 = vst [vmem:[#allocation4 + $0x788] sm:$0xff] %v608
    %612 = vst [vmem:[#allocation4 + $0x828] sm:$0xff] %v610
    %613 = vrot.lane.b32.xlu0 %v567, 122
    %v614 = vpop.permute.xlu0 %613
    %615 = vrot.lane.b32.xlu0 %v572, 122
    %v616 = vpop.permute.xlu0 %615
    %617 = vst [vmem:[#allocation4 + $0x8c8] sm:$0xff] %v614
    %618 = vst [vmem:[#allocation4 + $0x968] sm:$0xff] %v616
    %619 = vrot.lane.b32.xlu0 %v567, 121
    %v620 = vpop.permute.xlu0 %619
    %621 = vrot.lane.b32.xlu0 %v572, 121
    %v622 = vpop.permute.xlu0 %621
    %623 = vst [vmem:[#allocation4 + $0xa08] sm:$0xff] %v620
    %624 = vst [vmem:[#allocation4 + $0xaa8] sm:$0xff] %v622
    %v625 = vunpack.c.l.bf16 %v209
    %v626 = vunpack.c.h.bf16 %v209
    %v627 = vunpack.c.l.bf16 %v210
    %v628 = vunpack.c.l.bf16 %v211
    %v629 = vunpack.c.h.bf16 %v211
    %v630 = vunpack.c.l.bf16 %v212
    %v631 = vld [vmem:[#allocation4] sm:$0xff]
    %v632 = vld [vmem:[#allocation4 + $0x8] sm:$0xff]
    %v633 = vld [vmem:[#allocation4 + $0xa0] sm:$0xff]
    %v634 = vld [vmem:[#allocation4 + $0xa8] sm:$0xff]
    %v635 = vld [vmem:[#allocation4 + $0x140] sm:$0xff]
    %v636 = vld [vmem:[#allocation4 + $0x148] sm:$0xff]
    %v637 = vld [vmem:[#allocation4 + $0x1e0] sm:$0xff]
    %v638 = vld [vmem:[#allocation4 + $0x1e8] sm:$0xff]
    %v639 = vld [vmem:[#allocation4 + $0x280] sm:$0xff]
    %v640 = vld [vmem:[#allocation4 + $0x288] sm:$0xff]
    %v641 = vld [vmem:[#allocation4 + $0x320] sm:$0xff]
    %v642 = vld [vmem:[#allocation4 + $0x328] sm:$0xff]
    %v643 = vld [vmem:[#allocation4 + $0x3c0] sm:$0xff]
    %v644 = vld [vmem:[#allocation4 + $0x3c8] sm:$0xff]
    %v645 = vld [vmem:[#allocation4 + $0x460] sm:$0xff]
    %v646 = vld [vmem:[#allocation4 + $0x468] sm:$0xff]
    %v647 = vld [vmem:[#allocation4 + $0x500] sm:$0xff]
    %v648 = vld [vmem:[#allocation4 + $0x508] sm:$0xff]
    %v649 = vld [vmem:[#allocation4 + $0x5a0] sm:$0xff]
    %v650 = vld [vmem:[#allocation4 + $0x5a8] sm:$0xff]
    %v651 = vld [vmem:[#allocation4 + $0x640] sm:$0xff]
    %v652 = vld [vmem:[#allocation4 + $0x648] sm:$0xff]
    %v653 = vld [vmem:[#allocation4 + $0x6e0] sm:$0xff]
    %v654 = vld [vmem:[#allocation4 + $0x6e8] sm:$0xff]
    %v655 = vld [vmem:[#allocation4 + $0x780] sm:$0xff]
    %v656 = vld [vmem:[#allocation4 + $0x788] sm:$0xff]
    %v657 = vld [vmem:[#allocation4 + $0x820] sm:$0xff]
    %v658 = vld [vmem:[#allocation4 + $0x828] sm:$0xff]
    %v659 = vld [vmem:[#allocation4 + $0x8c0] sm:$0xff]
    %v660 = vld [vmem:[#allocation4 + $0x8c8] sm:$0xff]
    %v661 = vld [vmem:[#allocation4 + $0x960] sm:$0xff]
    %v662 = vld [vmem:[#allocation4 + $0x968] sm:$0xff]
    %v663 = vld [vmem:[#allocation4 + $0xa00] sm:$0xff]
    %v664 = vld [vmem:[#allocation4 + $0xa08] sm:$0xff]
    %v665 = vld [vmem:[#allocation4 + $0xaa0] sm:$0xff]
    %v666 = vld [vmem:[#allocation4 + $0xaa8] sm:$0xff]
    %v667 = vld [vmem:[#allocation4 + $0xb40] sm:$0xff]
    %v668 = vld [vmem:[#allocation4 + $0xb48] sm:$0xff]
    %v669 = vld [vmem:[#allocation4 + $0xbe0] sm:$0xff]
    %v670 = vld [vmem:[#allocation4 + $0xbe8] sm:$0xff]
    %v671 = vld [vmem:[#allocation4 + $0xc80] sm:$0xff]
    %v672 = vld [vmem:[#allocation4 + $0xc88] sm:$0xff]
    %v673 = vld [vmem:[#allocation4 + $0xd20] sm:$0xff]
    %v674 = vld [vmem:[#allocation4 + $0xd28] sm:$0xff]
    %v675 = vld [vmem:[#allocation4 + $0xdc0] sm:$0xff]
    %v676 = vld [vmem:[#allocation4 + $0xdc8] sm:$0xff]
    %v677 = vld [vmem:[#allocation4 + $0xe60] sm:$0xff]
    %v678 = vld [vmem:[#allocation4 + $0xe68] sm:$0xff]
    %v679 = vld [vmem:[#allocation4 + $0xf00] sm:$0xff]
    %v680 = vld [vmem:[#allocation4 + $0xf08] sm:$0xff]
    %v681 = vld [vmem:[#allocation4 + $0xfa0] sm:$0xff]
    %v682 = vld [vmem:[#allocation4 + $0xfa8] sm:$0xff]
    %v683 = vld [vmem:[#allocation4 + $0x1040] sm:$0xff]
    %v684 = vld [vmem:[#allocation4 + $0x1048] sm:$0xff]
    %v685 = vld [vmem:[#allocation4 + $0x10e0] sm:$0xff]
    %v686 = vld [vmem:[#allocation4 + $0x10e8] sm:$0xff]
    %v687 = vld [vmem:[#allocation4 + $0x1180] sm:$0xff]
    %v688 = vld [vmem:[#allocation4 + $0x1188] sm:$0xff]
    %v689 = vld [vmem:[#allocation4 + $0x1220] sm:$0xff]
    %v690 = vld [vmem:[#allocation4 + $0x1228] sm:$0xff]
    %v691 = vld [vmem:[#allocation4 + $0x12c0] sm:$0xff]
    %v692 = vld [vmem:[#allocation4 + $0x12c8] sm:$0xff]
    %v693 = vld [vmem:[#allocation4 + $0x1360] sm:$0xff]
    %v694 = vld [vmem:[#allocation4 + $0x1368] sm:$0xff]
    %v695 = vld [vmem:[#allocation4 + $0x1400] sm:$0xff]
    %v696 = vld [vmem:[#allocation4 + $0x1408] sm:$0xff]
    %v697 = vld [vmem:[#allocation4 + $0x14a0] sm:$0xff]
    %v698 = vld [vmem:[#allocation4 + $0x14a8] sm:$0xff]
    %v699 = vld [vmem:[#allocation4 + $0x1540] sm:$0xff]
    %v700 = vld [vmem:[#allocation4 + $0x1548] sm:$0xff]
    %v701 = vld [vmem:[#allocation4 + $0x15e0] sm:$0xff]
    %v702 = vld [vmem:[#allocation4 + $0x15e8] sm:$0xff]
    %vm703 = vcmask 261120
    %v705 = vsel %vm703, %v627, 0
    %v708 = vsel %vm703, %v630, 0
    %710 = vmatprep.subr.mxu0 %v632
    %711 = vmatpush1.msra.mxu0 %v631
    %712 = vmatprep.subr.mxu0 %v634
    %713 = vmatpush1.msra.mxu0 %v633
    %714 = vmatprep.subr.mxu0 %v636
    %715 = vmatpush1.msra.mxu0 %v635
    %716 = vmatprep.subr.mxu0 %v638
    %717 = vmatpush1.msra.mxu0 %v637
    %718 = vmatprep.subr.mxu0 %v640
    %719 = vmatpush1.msra.mxu0 %v639
    %720 = vmatprep.subr.mxu0 %v642
    %721 = vmatpush1.msra.mxu0 %v641
    %722 = vmatprep.subr.mxu0 %v644
    %723 = vmatpush1.msra.mxu0 %v643
    %724 = vmatprep.subr.mxu0 %v646
    %725 = vmatpush1.msra.mxu0 %v645
    %726 = vmatprep.subr.mxu0 %v648
    %727 = vmatpush1.msra.mxu0 %v647
    %728 = vmatprep.subr.mxu0 %v650
    %729 = vmatpush1.msra.mxu0 %v649
    %730 = vmatprep.subr.mxu0 %v652
    %731 = vmatpush1.msra.mxu0 %v651
    %732 = vmatprep.subr.mxu0 %v654
    %733 = vmatpush1.msra.mxu0 %v653
    %734 = vmatprep.subr.mxu0 %v656
    %735 = vmatpush1.msra.mxu0 %v655
    %736 = vmatprep.subr.mxu0 %v658
    %737 = vmatpush1.msra.mxu0 %v657
    %738 = vmatprep.subr.mxu0 %v660
    %739 = vmatpush1.msra.mxu0 %v659
    %740 = vmatprep.subr.mxu0 %v662
    %741 = vmatpush1.msra.mxu0 %v661
    %742 = vmatprep.subr.mxu0 %v664
    %743 = vmatpush1.msra.mxu0 %v663
    %744 = vmatprep.subr.mxu0 %v666
    %745 = vmatpush1.msra.mxu0 %v665
    %746 = vmatprep.subr.mxu0 %v668
    %747 = vmatpush1.msra.mxu0 %v667
    %748 = vmatprep.subr.mxu0 %v670
    %749 = vmatpush1.msra.mxu0 %v669
    %750 = vmatprep.subr.mxu0 %v672
    %751 = vmatpush1.msra.mxu0 %v671
    %752 = vmatprep.subr.mxu0 %v674
    %753 = vmatpush1.msra.mxu0 %v673
    %754 = vmatprep.subr.mxu0 %v676
    %755 = vmatpush1.msra.mxu0 %v675
    %756 = vmatprep.subr.mxu0 %v678
    %757 = vmatpush1.msra.mxu0 %v677
    %758 = vmatprep.subr.mxu0 %v680
    %759 = vmatpush1.msra.mxu0 %v679
    %760 = vmatprep.subr.mxu0 %v682
    %761 = vmatpush1.msra.mxu0 %v681
    %762 = vmatprep.subr.mxu0 %v684
    %763 = vmatpush1.msra.mxu0 %v683
    %764 = vmatprep.subr.mxu0 %v686
    %765 = vmatpush1.msra.mxu0 %v685
    %766 = vmatprep.subr.mxu0 %v688
    %767 = vmatpush1.msra.mxu0 %v687
    %768 = vmatprep.subr.mxu0 %v690
    %769 = vmatpush1.msra.mxu0 %v689
    %770 = vmatprep.subr.mxu0 %v692
    %771 = vmatpush1.msra.mxu0 %v691
    %772 = vmatprep.subr.mxu0 %v694
    %773 = vmatpush1.msra.mxu0 %v693
    %774 = vmatprep.mubr.f32.mxu0 %v626
    %775 = vmatmul.mubr.f32.gmra.mrb[0].mxu0 %v625
    %v776 = vpop.f32.mrb[0].mxu0
    %v777 = vadd.f32 0.0, %v776
    %v778 = vpop.f32.mrb[0].mxu0
    %v779 = vadd.f32 0.0, %v778
    %780 = vmatprep.mubr.f32.mxu0 %v629
    %781 = vmatmul.mubr.f32.gmra.mrb[0].mxu0 %v628
    %v782 = vpop.f32.mrb[0].mxu0
    %v783 = vadd.f32 0.0, %v782
    %v784 = vpop.f32.mrb[0].mxu0
    %v785 = vadd.f32 0.0, %v784
    %786 = vdwg.mxu0
    %787 = vmatprep.subr.mxu0 %v696
    %788 = vmatpush1.msra.mxu0 %v695
    %789 = vmatprep.subr.mxu0 %v698
    %790 = vmatpush1.msra.mxu0 %v697
    %791 = vmatprep.subr.mxu0 %v700
    %792 = vmatpush1.msra.mxu0 %v699
    %793 = vmatprep.subr.mxu0 %v702
    %794 = vmatpush1.msra.mxu0 %v701
    %795 = vmatprep.subr.mxu0 0.0
    %796 = vmatpush1.msra.mxu0 0.0
    %797 = vmatprep.subr.mxu0 0.0
    %798 = vmatpush1.msra.mxu0 0.0
    %799 = vmatprep.subr.mxu0 0.0
    %800 = vmatpush1.msra.mxu0 0.0
    %801 = vmatprep.subr.mxu0 0.0
    %802 = vmatpush1.msra.mxu0 0.0
    %803 = vmatprep.subr.mxu0 0.0
    %804 = vmatpush1.msra.mxu0 0.0
    %805 = vmatprep.subr.mxu0 0.0
    %806 = vmatpush1.msra.mxu0 0.0
    %807 = vmatprep.subr.mxu0 0.0
    %808 = vmatpush1.msra.mxu0 0.0
    %809 = vmatprep.subr.mxu0 0.0
    %810 = vmatpush1.msra.mxu0 0.0
    %811 = vmatprep.subr.mxu0 0.0
    %812 = vmatpush1.msra.mxu0 0.0
    %813 = vmatprep.subr.mxu0 0.0
    %814 = vmatpush1.msra.mxu0 0.0
    %815 = vmatprep.subr.mxu0 0.0
    %816 = vmatpush1.msra.mxu0 0.0
    %817 = vmatprep.subr.mxu0 0.0
    %818 = vmatpush1.msra.mxu0 0.0
    %819 = vmatprep.subr.mxu0 0.0
    %820 = vmatpush1.msra.mxu0 0.0
    %821 = vmatprep.subr.mxu0 0.0
    %822 = vmatpush1.msra.mxu0 0.0
    %823 = vmatprep.subr.mxu0 0.0
    %824 = vmatpush1.msra.mxu0 0.0
    %825 = vmatprep.subr.mxu0 0.0
    %826 = vmatpush1.msra.mxu0 0.0
    %827 = vmatprep.subr.mxu0 0.0
    %828 = vmatpush1.msra.mxu0 0.0
    %829 = vmatprep.subr.mxu0 0.0
    %830 = vmatpush1.msra.mxu0 0.0
    %831 = vmatprep.subr.mxu0 0.0
    %832 = vmatpush1.msra.mxu0 0.0
    %833 = vmatprep.subr.mxu0 0.0
    %834 = vmatpush1.msra.mxu0 0.0
    %835 = vmatprep.subr.mxu0 0.0
    %836 = vmatpush1.msra.mxu0 0.0
    %837 = vmatprep.subr.mxu0 0.0
    %838 = vmatpush1.msra.mxu0 0.0
    %839 = vmatprep.subr.mxu0 0.0
    %840 = vmatpush1.msra.mxu0 0.0
    %841 = vmatprep.subr.mxu0 0.0
    %842 = vmatpush1.msra.mxu0 0.0
    %843 = vmatprep.subr.mxu0 0.0
    %844 = vmatpush1.msra.mxu0 0.0
    %845 = vmatprep.subr.mxu0 0.0
    %846 = vmatpush1.msra.mxu0 0.0
    %847 = vmatprep.subr.mxu0 0.0
    %848 = vmatpush1.msra.mxu0 0.0
    %849 = vmatprep.subr.mxu0 0.0
    %850 = vmatpush1.msra.mxu0 0.0
    %851 = vmatprep.mubr.f32.mxu0 0.0
    %852 = vmatmul.mubr.f32.gmra.mrb[0].mxu0 %v705
    %v853 = vpop.f32.mrb[0].mxu0
    %v854 = vadd.f32 %v777, %v853
    %v855 = vpop.f32.mrb[0].mxu0
    %v856 = vadd.f32 %v779, %v855
    %857 = vmatprep.mubr.f32.mxu0 0.0
    %858 = vmatmul.mubr.f32.gmra.mrb[0].mxu0 %v708
    %v859 = vpop.f32.mrb[0].mxu0
    %v860 = vadd.f32 %v783, %v859
    %v861 = vpop.f32.mrb[0].mxu0
    %v862 = vadd.f32 %v785, %v861
    %863 = vdwg.mxu0
    %865 = vset.pattern.permute.xlu0 0
    %866 = vperm.xlu0 %865, %v213
    %v867 = vpop.permute.xlu0 %866
    %870 = vset.pattern.permute.xlu0 0
    %871 = vperm.xlu0 %870, %v214
    %v872 = vpop.permute.xlu0 %871
    %v874 = vmul.f32 %v854, %v867
    %v875 = vmul.f32 %v856, %v867
    %v876 = vmul.f32 %v860, %v872
    %v877 = vmul.f32 %v862, %v872
    %879 = vset.pattern.permute.xlu0 0
    %880 = vperm.xlu0 %879, %v215
    %v881 = vpop.permute.xlu0 %880
    %884 = vset.pattern.permute.xlu0 0
    %885 = vperm.xlu0 %884, %v216
    %v886 = vpop.permute.xlu0 %885
    %v888 = vadd.f32 %v874, %v881
    %v889 = vadd.f32 %v875, %v881
    %v890 = vadd.f32 %v876, %v886
    %v891 = vadd.f32 %v877, %v886
    %v892 = vmax.f32 %v888, 0.0
    %v893 = vmax.f32 %v889, 0.0
    %v894 = vmax.f32 %v890, 0.0
    %v895 = vmax.f32 %v891, 0.0
    %v896 = vld [vmem:[#allocation14] sm:$0xf]
    %v897 = vld [vmem:[#allocation14 + $0x4] sm:$0xf]
    %v898 = vld [vmem:[#allocation14 + $0x8] sm:$0xf]
    %v899 = vld [vmem:[#allocation14 + $0xc] sm:$0xf]
    %v900 = vld [vmem:[#allocation14 + $0x10] sm:$0xf]
    %v901 = vld [vmem:[#allocation14 + $0x14] sm:$0xf]
    %v902 = vld [vmem:[#allocation14 + $0x18] sm:$0xf]
    %v903 = vld [vmem:[#allocation14 + $0x1c] sm:$0xf]
    %v904 = vld [vmem:[#allocation14 + $0x20] sm:$0xf]
    %v905 = vld [vmem:[#allocation14 + $0x24] sm:$0xf]
    %v906 = vld [vmem:[#allocation14 + $0x28] sm:$0xf]
    %v907 = vld [vmem:[#allocation14 + $0x2c] sm:$0xf]
    %v908 = vld [vmem:[#allocation14 + $0x30] sm:$0xf]
    %v909 = vld [vmem:[#allocation14 + $0x34] sm:$0xf]
    %v910 = vld [vmem:[#allocation14 + $0x38] sm:$0xf]
    %v911 = vld [vmem:[#allocation14 + $0x3c] sm:$0xf]
    %v912 = vld [vmem:[#allocation10] sm:$0xff]
    %v913 = vld [vmem:[#allocation10 + $0x8] sm:$0xff]
    %v914 = vld [vmem:[%s10] sm:$0xff]
    %v915 = vld [vmem:[%s15] sm:$0xff]
    %v916 = vld [vmem:[%s16] sm:$0xff]
    %v917 = vunpack.c.l.bf16 %v896
    %v918 = vunpack.c.l.bf16 %v897
    %v919 = vunpack.c.l.bf16 %v898
    %v920 = vunpack.c.l.bf16 %v899
    %v921 = vunpack.c.l.bf16 %v900
    %v922 = vunpack.c.l.bf16 %v901
    %v923 = vunpack.c.l.bf16 %v902
    %v924 = vunpack.c.l.bf16 %v903
    %v925 = vunpack.c.l.bf16 %v904
    %v926 = vunpack.c.l.bf16 %v905
    %v927 = vunpack.c.l.bf16 %v906
    %v928 = vunpack.c.l.bf16 %v907
    %v929 = vunpack.c.l.bf16 %v908
    %v930 = vunpack.c.l.bf16 %v909
    %v931 = vunpack.c.l.bf16 %v910
    %v932 = vunpack.c.l.bf16 %v911
    %933 = vrot.lane.b32.xlu0 %v912, 11
    %v934 = vpop.permute.xlu0 %933
    %935 = vrot.lane.b32.xlu0 %v913, 11
    %v936 = vpop.permute.xlu0 %935
    %vm937 = vcmp.lt.s32.totalorder %v242, 11
    %v938 = vsel %vm937, %v934, %v936
    %v939 = vsel %vm937, %v936, %v934
    %940 = vst [vmem:[#allocation4 + $0xb40] sm:$0xff] %v939
    %941 = vst [vmem:[#allocation4 + $0xb48] sm:$0xff] %v938
    %942 = vrot.lane.b32.xlu0 %v912, 10
    %v943 = vpop.permute.xlu0 %942
    %944 = vrot.lane.b32.xlu0 %v913, 10
    %v945 = vpop.permute.xlu0 %944
    %vm946 = vcmp.lt.s32.totalorder %v242, 10
    %v947 = vsel %vm946, %v943, %v945
    %v948 = vsel %vm946, %v945, %v943
    %949 = vst [vmem:[#allocation4 + $0xbe0] sm:$0xff] %v948
    %950 = vst [vmem:[#allocation4 + $0xbe8] sm:$0xff] %v947
    %951 = vrot.lane.b32.xlu0 %v912, 9
    %v952 = vpop.permute.xlu0 %951
    %953 = vrot.lane.b32.xlu0 %v913, 9
    %v954 = vpop.permute.xlu0 %953
    %vm955 = vcmp.lt.s32.totalorder %v242, 9
    %v956 = vsel %vm955, %v952, %v954
    %v957 = vsel %vm955, %v954, %v952
    %958 = vst [vmem:[#allocation4 + $0xc80] sm:$0xff] %v957
    %959 = vst [vmem:[#allocation4 + $0xc88] sm:$0xff] %v956
    %960 = vrot.lane.b32.xlu0 %v912, 1
    %v961 = vpop.permute.xlu0 %960
    %962 = vrot.lane.b32.xlu0 %v913, 1
    %v963 = vpop.permute.xlu0 %962
    %v964 = vsel %vm294, %v961, %v963
    %v965 = vsel %vm294, %v963, %v961
    %966 = vst [vmem:[#allocation4 + $0xd20] sm:$0xff] %v965
    %967 = vst [vmem:[#allocation4 + $0xd28] sm:$0xff] %v964
    %968 = vst [vmem:[#allocation4 + $0xdc0] sm:$0xff] %v912
    %969 = vst [vmem:[#allocation4 + $0xdc8] sm:$0xff] %v913
    %970 = vrot.lane.b32.xlu0 %v912, 127
    %v971 = vpop.permute.xlu0 %970
    %972 = vrot.lane.b32.xlu0 %v913, 127
    %v973 = vpop.permute.xlu0 %972
    %v974 = vsel %vm315, %v971, %v973
    %v975 = vsel %vm315, %v973, %v971
    %976 = vst [vmem:[#allocation4 + $0xe60] sm:$0xff] %v974
    %977 = vst [vmem:[#allocation4 + $0xe68] sm:$0xff] %v975
    %978 = vrot.lane.b32.xlu0 %v912, 119
    %v979 = vpop.permute.xlu0 %978
    %980 = vrot.lane.b32.xlu0 %v913, 119
    %v981 = vpop.permute.xlu0 %980
    %vm982 = vcmp.lt.s32.totalorder %v242, 119
    %v983 = vsel %vm982, %v979, %v981
    %v984 = vsel %vm982, %v981, %v979
    %985 = vst [vmem:[#allocation4 + $0xf00] sm:$0xff] %v983
    %986 = vst [vmem:[#allocation4 + $0xf08] sm:$0xff] %v984
    %987 = vrot.lane.b32.xlu0 %v912, 118
    %v988 = vpop.permute.xlu0 %987
    %989 = vrot.lane.b32.xlu0 %v913, 118
    %v990 = vpop.permute.xlu0 %989
    %vm991 = vcmp.lt.s32.totalorder %v242, 118
    %v992 = vsel %vm991, %v988, %v990
    %v993 = vsel %vm991, %v990, %v988
    %994 = vst [vmem:[#allocation4 + $0xfa0] sm:$0xff] %v992
    %995 = vst [vmem:[#allocation4 + $0xfa8] sm:$0xff] %v993
    %996 = vrot.lane.b32.xlu0 %v912, 117
    %v997 = vpop.permute.xlu0 %996
    %998 = vrot.lane.b32.xlu0 %v913, 117
    %v999 = vpop.permute.xlu0 %998
    %vm1000 = vcmp.lt.s32.totalorder %v242, 117
    %v1001 = vsel %vm1000, %v997, %v999
    %v1002 = vsel %vm1000, %v999, %v997
    %1003 = vst [vmem:[#allocation4 + $0x1040] sm:$0xff] %v1001
    %1004 = vst [vmem:[#allocation4 + $0x1048] sm:$0xff] %v1002
    %1005 = vmatprep.subr.mxu0 0.0
    %1006 = vmatpush1.msra.mxu0 %v917
    %1007 = vmatprep.subr.mxu0 0.0
    %1008 = vmatpush1.msra.mxu0 %v918
    %1009 = vmatprep.subr.mxu0 0.0
    %1010 = vmatpush1.msra.mxu0 %v919
    %1011 = vmatprep.subr.mxu0 0.0
    %1012 = vmatpush1.msra.mxu0 %v920
    %1013 = vmatprep.subr.mxu0 0.0
    %1014 = vmatpush1.msra.mxu0 %v921
    %1015 = vmatprep.subr.mxu0 0.0
    %1016 = vmatpush1.msra.mxu0 %v922
    %1017 = vmatprep.subr.mxu0 0.0
    %1018 = vmatpush1.msra.mxu0 %v923
    %1019 = vmatprep.subr.mxu0 0.0
    %1020 = vmatpush1.msra.mxu0 %v924
    %1021 = vmatprep.subr.mxu0 0.0
    %1022 = vmatpush1.msra.mxu0 %v925
    %1023 = vmatprep.subr.mxu0 0.0
    %1024 = vmatpush1.msra.mxu0 %v926
    %1025 = vmatprep.subr.mxu0 0.0
    %1026 = vmatpush1.msra.mxu0 %v927
    %1027 = vmatprep.subr.mxu0 0.0
    %1028 = vmatpush1.msra.mxu0 %v928
    %1029 = vmatprep.subr.mxu0 0.0
    %1030 = vmatpush1.msra.mxu0 %v929
    %1031 = vmatprep.subr.mxu0 0.0
    %1032 = vmatpush1.msra.mxu0 %v930
    %1033 = vmatprep.subr.mxu0 0.0
    %1034 = vmatpush1.msra.mxu0 %v931
    %1035 = vmatprep.subr.mxu0 0.0
    %1036 = vmatpush1.msra.mxu0 %v932
    %1037 = vmatprep.subr.mxu0 0.0
    %1038 = vmatpush1.msra.mxu0 0.0
    %1039 = vmatprep.subr.mxu0 0.0
    %1040 = vmatpush1.msra.mxu0 0.0
    %1041 = vmatprep.subr.mxu0 0.0
    %1042 = vmatpush1.msra.mxu0 0.0
    %1043 = vmatprep.subr.mxu0 0.0
    %1044 = vmatpush1.msra.mxu0 0.0
    %1045 = vmatprep.subr.mxu0 0.0
    %1046 = vmatpush1.msra.mxu0 0.0
    %1047 = vmatprep.subr.mxu0 0.0
    %1048 = vmatpush1.msra.mxu0 0.0
    %1049 = vmatprep.subr.mxu0 0.0
    %1050 = vmatpush1.msra.mxu0 0.0
    %1051 = vmatprep.subr.mxu0 0.0
    %1052 = vmatpush1.msra.mxu0 0.0
    %1053 = vmatprep.subr.mxu0 0.0
    %1054 = vmatpush1.msra.mxu0 0.0
    %1055 = vmatprep.subr.mxu0 0.0
    %1056 = vmatpush1.msra.mxu0 0.0
    %1057 = vmatprep.subr.mxu0 0.0
    %1058 = vmatpush1.msra.mxu0 0.0
    %1059 = vmatprep.subr.mxu0 0.0
    %1060 = vmatpush1.msra.mxu0 0.0
    %1061 = vmatprep.subr.mxu0 0.0
    %1062 = vmatpush1.msra.mxu0 0.0
    %1063 = vmatprep.subr.mxu0 0.0
    %1064 = vmatpush1.msra.mxu0 0.0
    %1065 = vmatprep.subr.mxu0 0.0
    %1066 = vmatpush1.msra.mxu0 0.0
    %1067 = vmatprep.subr.mxu0 0.0
    %1068 = vmatpush1.msra.mxu0 0.0
    %1069 = vmatprep.mubr.f32.mxu0 0.0
    %1070 = vmatmul.mubr.f32.gmra.mrb[0].mxu0 %v892
    %v1071 = vpop.f32.mrb[0].mxu0
    %v1072 = vadd.f32 0.0, %v1071
    %v1073 = vpop.f32.mrb[0].mxu0
    %1074 = vmatprep.mubr.f32.mxu0 0.0
    %1075 = vmatmul.mubr.f32.gmra.mrb[0].mxu0 %v894
    %v1076 = vpop.f32.mrb[0].mxu0
    %v1077 = vadd.f32 0.0, %v1076
    %v1078 = vpop.f32.mrb[0].mxu0
    %1079 = vdwg.mxu0
    %1080 = vrot.lane.b32.xlu0 %v1072, 11
    %v1081 = vpop.permute.xlu0 %1080
    %1082 = vrot.lane.b32.xlu0 %v1077, 11
    %v1083 = vpop.permute.xlu0 %1082
    %1084 = vst [vmem:[#allocation4] sm:$0xff] %v1081
    %1085 = vst [vmem:[#allocation4 + $0xa0] sm:$0xff] %v1083
    %1086 = vrot.lane.b32.xlu0 %v1072, 10
    %v1087 = vpop.permute.xlu0 %1086
    %1088 = vrot.lane.b32.xlu0 %v1077, 10
    %v1089 = vpop.permute.xlu0 %1088
    %1090 = vst [vmem:[#allocation4 + $0x140] sm:$0xff] %v1087
    %1091 = vst [vmem:[#allocation4 + $0x1e0] sm:$0xff] %v1089
    %1092 = vrot.lane.b32.xlu0 %v1072, 9
    %v1093 = vpop.permute.xlu0 %1092
    %1094 = vrot.lane.b32.xlu0 %v1077, 9
    %v1095 = vpop.permute.xlu0 %1094
    %1096 = vst [vmem:[#allocation4 + $0x280] sm:$0xff] %v1093
    %1097 = vst [vmem:[#allocation4 + $0x320] sm:$0xff] %v1095
    %1098 = vrot.lane.b32.xlu0 %v1072, 1
    %v1099 = vpop.permute.xlu0 %1098
    %1100 = vrot.lane.b32.xlu0 %v1077, 1
    %v1101 = vpop.permute.xlu0 %1100
    %1102 = vst [vmem:[#allocation4 + $0x3c0] sm:$0xff] %v1099
    %1103 = vst [vmem:[#allocation4 + $0x460] sm:$0xff] %v1101
    %1104 = vst [vmem:[#allocation4 + $0x500] sm:$0xff] %v1072
    %1105 = vst [vmem:[#allocation4 + $0x5a0] sm:$0xff] %v1077
    %1106 = vrot.lane.b32.xlu0 %v1072, 127
    %v1107 = vpop.permute.xlu0 %1106
    %1108 = vrot.lane.b32.xlu0 %v1077, 127
    %v1109 = vpop.permute.xlu0 %1108
    %1110 = vst [vmem:[#allocation4 + $0x640] sm:$0xff] %v1107
    %1111 = vst [vmem:[#allocation4 + $0x6e0] sm:$0xff] %v1109
    %1112 = vrot.lane.b32.xlu0 %v1072, 119
    %v1113 = vpop.permute.xlu0 %1112
    %1114 = vrot.lane.b32.xlu0 %v1077, 119
    %v1115 = vpop.permute.xlu0 %1114
    %1116 = vst [vmem:[#allocation4 + $0x780] sm:$0xff] %v1113
    %1117 = vst [vmem:[#allocation4 + $0x820] sm:$0xff] %v1115
    %1118 = vrot.lane.b32.xlu0 %v1072, 118
    %v1119 = vpop.permute.xlu0 %1118
    %1120 = vrot.lane.b32.xlu0 %v1077, 118
    %v1121 = vpop.permute.xlu0 %1120
    %1122 = vst [vmem:[#allocation4 + $0x8c0] sm:$0xff] %v1119
    %1123 = vst [vmem:[#allocation4 + $0x960] sm:$0xff] %v1121
    %1124 = vrot.lane.b32.xlu0 %v1072, 117
    %v1125 = vpop.permute.xlu0 %1124
    %1126 = vrot.lane.b32.xlu0 %v1077, 117
    %v1127 = vpop.permute.xlu0 %1126
    %1128 = vst [vmem:[#allocation4 + $0xa00] sm:$0xff] %v1125
    %1129 = vst [vmem:[#allocation4 + $0xaa0] sm:$0xff] %v1127
    %1130 = vmatprep.subr.mxu0 0.0
    %1131 = vmatpush1.msra.mxu0 %v917
    %1132 = vmatprep.subr.mxu0 0.0
    %1133 = vmatpush1.msra.mxu0 %v918
    %1134 = vmatprep.subr.mxu0 0.0
    %1135 = vmatpush1.msra.mxu0 %v919
    %1136 = vmatprep.subr.mxu0 0.0
    %1137 = vmatpush1.msra.mxu0 %v920
    %1138 = vmatprep.subr.mxu0 0.0
    %1139 = vmatpush1.msra.mxu0 %v921
    %1140 = vmatprep.subr.mxu0 0.0
    %1141 = vmatpush1.msra.mxu0 %v922
    %1142 = vmatprep.subr.mxu0 0.0
    %1143 = vmatpush1.msra.mxu0 %v923
    %1144 = vmatprep.subr.mxu0 0.0
    %1145 = vmatpush1.msra.mxu0 %v924
    %1146 = vmatprep.subr.mxu0 0.0
    %1147 = vmatpush1.msra.mxu0 %v925
    %1148 = vmatprep.subr.mxu0 0.0
    %1149 = vmatpush1.msra.mxu0 %v926
    %1150 = vmatprep.subr.mxu0 0.0
    %1151 = vmatpush1.msra.mxu0 %v927
    %1152 = vmatprep.subr.mxu0 0.0
    %1153 = vmatpush1.msra.mxu0 %v928
    %1154 = vmatprep.subr.mxu0 0.0
    %1155 = vmatpush1.msra.mxu0 %v929
    %1156 = vmatprep.subr.mxu0 0.0
    %1157 = vmatpush1.msra.mxu0 %v930
    %1158 = vmatprep.subr.mxu0 0.0
    %1159 = vmatpush1.msra.mxu0 %v931
    %1160 = vmatprep.subr.mxu0 0.0
    %1161 = vmatpush1.msra.mxu0 %v932
    %1162 = vmatprep.subr.mxu0 0.0
    %1163 = vmatpush1.msra.mxu0 0.0
    %1164 = vmatprep.subr.mxu0 0.0
    %1165 = vmatpush1.msra.mxu0 0.0
    %1166 = vmatprep.subr.mxu0 0.0
    %1167 = vmatpush1.msra.mxu0 0.0
    %1168 = vmatprep.subr.mxu0 0.0
    %1169 = vmatpush1.msra.mxu0 0.0
    %1170 = vmatprep.subr.mxu0 0.0
    %1171 = vmatpush1.msra.mxu0 0.0
    %1172 = vmatprep.subr.mxu0 0.0
    %1173 = vmatpush1.msra.mxu0 0.0
    %1174 = vmatprep.subr.mxu0 0.0
    %1175 = vmatpush1.msra.mxu0 0.0
    %1176 = vmatprep.subr.mxu0 0.0
    %1177 = vmatpush1.msra.mxu0 0.0
    %1178 = vmatprep.subr.mxu0 0.0
    %1179 = vmatpush1.msra.mxu0 0.0
    %1180 = vmatprep.subr.mxu0 0.0
    %1181 = vmatpush1.msra.mxu0 0.0
    %1182 = vmatprep.subr.mxu0 0.0
    %1183 = vmatpush1.msra.mxu0 0.0
    %1184 = vmatprep.subr.mxu0 0.0
    %1185 = vmatpush1.msra.mxu0 0.0
    %1186 = vmatprep.subr.mxu0 0.0
    %1187 = vmatpush1.msra.mxu0 0.0
    %1188 = vmatprep.subr.mxu0 0.0
    %1189 = vmatpush1.msra.mxu0 0.0
    %1190 = vmatprep.subr.mxu0 0.0
    %1191 = vmatpush1.msra.mxu0 0.0
    %1192 = vmatprep.subr.mxu0 0.0
    %1193 = vmatpush1.msra.mxu0 0.0
    %1194 = vmatprep.mubr.f32.mxu0 0.0
    %1195 = vmatmul.mubr.f32.gmra.mrb[0].mxu0 %v893
    %v1196 = vpop.f32.mrb[0].mxu0
    %v1197 = vadd.f32 0.0, %v1196
    %v1198 = vpop.f32.mrb[0].mxu0
    %1199 = vmatprep.mubr.f32.mxu0 0.0
    %1200 = vmatmul.mubr.f32.gmra.mrb[0].mxu0 %v895
    %v1201 = vpop.f32.mrb[0].mxu0
    %v1202 = vadd.f32 0.0, %v1201
    %v1203 = vpop.f32.mrb[0].mxu0
    %1204 = vdwg.mxu0
    %1205 = vrot.lane.b32.xlu0 %v1197, 11
    %v1206 = vpop.permute.xlu0 %1205
    %1207 = vrot.lane.b32.xlu0 %v1202, 11
    %v1208 = vpop.permute.xlu0 %1207
    %1209 = vst [vmem:[#allocation4 + $0x8] sm:$0xff] %v1206
    %1210 = vst [vmem:[#allocation4 + $0xa8] sm:$0xff] %v1208
    %1211 = vrot.lane.b32.xlu0 %v1197, 10
    %v1212 = vpop.permute.xlu0 %1211
    %1213 = vrot.lane.b32.xlu0 %v1202, 10
    %v1214 = vpop.permute.xlu0 %1213
    %1215 = vst [vmem:[#allocation4 + $0x148] sm:$0xff] %v1212
    %1216 = vst [vmem:[#allocation4 + $0x1e8] sm:$0xff] %v1214
    %1217 = vrot.lane.b32.xlu0 %v1197, 9
    %v1218 = vpop.permute.xlu0 %1217
    %1219 = vrot.lane.b32.xlu0 %v1202, 9
    %v1220 = vpop.permute.xlu0 %1219
    %1221 = vst [vmem:[#allocation4 + $0x288] sm:$0xff] %v1218
    %1222 = vst [vmem:[#allocation4 + $0x328] sm:$0xff] %v1220
    %1223 = vrot.lane.b32.xlu0 %v1197, 1
    %v1224 = vpop.permute.xlu0 %1223
    %1225 = vrot.lane.b32.xlu0 %v1202, 1
    %v1226 = vpop.permute.xlu0 %1225
    %1227 = vst [vmem:[#allocation4 + $0x3c8] sm:$0xff] %v1224
    %1228 = vst [vmem:[#allocation4 + $0x468] sm:$0xff] %v1226
    %1229 = vst [vmem:[#allocation4 + $0x508] sm:$0xff] %v1197
    %1230 = vst [vmem:[#allocation4 + $0x5a8] sm:$0xff] %v1202
    %1231 = vrot.lane.b32.xlu0 %v1197, 127
    %v1232 = vpop.permute.xlu0 %1231
    %1233 = vrot.lane.b32.xlu0 %v1202, 127
    %v1234 = vpop.permute.xlu0 %1233
    %1235 = vst [vmem:[#allocation4 + $0x648] sm:$0xff] %v1232
    %1236 = vst [vmem:[#allocation4 + $0x6e8] sm:$0xff] %v1234
    %1237 = vrot.lane.b32.xlu0 %v1197, 119
    %v1238 = vpop.permute.xlu0 %1237
    %1239 = vrot.lane.b32.xlu0 %v1202, 119
    %v1240 = vpop.permute.xlu0 %1239
    %1241 = vst [vmem:[#allocation4 + $0x788] sm:$0xff] %v1238
    %1242 = vst [vmem:[#allocation4 + $0x828] sm:$0xff] %v1240
    %1243 = vrot.lane.b32.xlu0 %v1197, 118
    %v1244 = vpop.permute.xlu0 %1243
    %1245 = vrot.lane.b32.xlu0 %v1202, 118
    %v1246 = vpop.permute.xlu0 %1245
    %1247 = vst [vmem:[#allocation4 + $0x8c8] sm:$0xff] %v1244
    %1248 = vst [vmem:[#allocation4 + $0x968] sm:$0xff] %v1246
    %1249 = vrot.lane.b32.xlu0 %v1197, 117
    %v1250 = vpop.permute.xlu0 %1249
    %1251 = vrot.lane.b32.xlu0 %v1202, 117
    %v1252 = vpop.permute.xlu0 %1251
    %1253 = vst [vmem:[#allocation4 + $0xa08] sm:$0xff] %v1250
    %1254 = vst [vmem:[#allocation4 + $0xaa8] sm:$0xff] %v1252
    %v1255 = vunpack.c.l.bf16 %v914
    %v1256 = vunpack.c.h.bf16 %v914
    %v1257 = vld [vmem:[#allocation4] sm:$0xff]
    %v1258 = vld [vmem:[#allocation4 + $0x8] sm:$0xff]
    %v1259 = vld [vmem:[#allocation4 + $0xa0] sm:$0xff]
    %v1260 = vld [vmem:[#allocation4 + $0xa8] sm:$0xff]
    %v1261 = vld [vmem:[#allocation4 + $0x140] sm:$0xff]
    %v1262 = vld [vmem:[#allocation4 + $0x148] sm:$0xff]
    %v1263 = vld [vmem:[#allocation4 + $0x1e0] sm:$0xff]
    %v1264 = vld [vmem:[#allocation4 + $0x1e8] sm:$0xff]
    %v1265 = vld [vmem:[#allocation4 + $0x280] sm:$0xff]
    %v1266 = vld [vmem:[#allocation4 + $0x288] sm:$0xff]
    %v1267 = vld [vmem:[#allocation4 + $0x320] sm:$0xff]
    %v1268 = vld [vmem:[#allocation4 + $0x328] sm:$0xff]
    %v1269 = vld [vmem:[#allocation4 + $0x3c0] sm:$0xff]
    %v1270 = vld [vmem:[#allocation4 + $0x3c8] sm:$0xff]
    %v1271 = vld [vmem:[#allocation4 + $0x460] sm:$0xff]
    %v1272 = vld [vmem:[#allocation4 + $0x468] sm:$0xff]
    %v1273 = vld [vmem:[#allocation4 + $0x500] sm:$0xff]
    %v1274 = vld [vmem:[#allocation4 + $0x508] sm:$0xff]
    %v1275 = vld [vmem:[#allocation4 + $0x5a0] sm:$0xff]
    %v1276 = vld [vmem:[#allocation4 + $0x5a8] sm:$0xff]
    %v1277 = vld [vmem:[#allocation4 + $0x640] sm:$0xff]
    %v1278 = vld [vmem:[#allocation4 + $0x648] sm:$0xff]
    %v1279 = vld [vmem:[#allocation4 + $0x6e0] sm:$0xff]
    %v1280 = vld [vmem:[#allocation4 + $0x6e8] sm:$0xff]
    %v1281 = vld [vmem:[#allocation4 + $0x780] sm:$0xff]
    %v1282 = vld [vmem:[#allocation4 + $0x788] sm:$0xff]
    %v1283 = vld [vmem:[#allocation4 + $0x820] sm:$0xff]
    %v1284 = vld [vmem:[#allocation4 + $0x828] sm:$0xff]
    %v1285 = vld [vmem:[#allocation4 + $0x8c0] sm:$0xff]
    %v1286 = vld [vmem:[#allocation4 + $0x8c8] sm:$0xff]
    %v1287 = vld [vmem:[#allocation4 + $0x960] sm:$0xff]
    %v1288 = vld [vmem:[#allocation4 + $0x968] sm:$0xff]
    %v1289 = vld [vmem:[#allocation4 + $0xa00] sm:$0xff]
    %v1290 = vld [vmem:[#allocation4 + $0xa08] sm:$0xff]
    %v1291 = vld [vmem:[#allocation4 + $0xaa0] sm:$0xff]
    %v1292 = vld [vmem:[#allocation4 + $0xaa8] sm:$0xff]
    %v1293 = vld [vmem:[#allocation4 + $0xb40] sm:$0xff]
    %v1294 = vld [vmem:[#allocation4 + $0xb48] sm:$0xff]
    %v1295 = vld [vmem:[#allocation4 + $0xbe0] sm:$0xff]
    %v1296 = vld [vmem:[#allocation4 + $0xbe8] sm:$0xff]
    %v1297 = vld [vmem:[#allocation4 + $0xc80] sm:$0xff]
    %v1298 = vld [vmem:[#allocation4 + $0xc88] sm:$0xff]
    %v1299 = vld [vmem:[#allocation4 + $0xd20] sm:$0xff]
    %v1300 = vld [vmem:[#allocation4 + $0xd28] sm:$0xff]
    %v1301 = vld [vmem:[#allocation4 + $0xdc0] sm:$0xff]
    %v1302 = vld [vmem:[#allocation4 + $0xdc8] sm:$0xff]
    %v1303 = vld [vmem:[#allocation4 + $0xe60] sm:$0xff]
    %v1304 = vld [vmem:[#allocation4 + $0xe68] sm:$0xff]
    %v1305 = vld [vmem:[#allocation4 + $0xf00] sm:$0xff]
    %v1306 = vld [vmem:[#allocation4 + $0xf08] sm:$0xff]
    %v1307 = vld [vmem:[#allocation4 + $0xfa0] sm:$0xff]
    %v1308 = vld [vmem:[#allocation4 + $0xfa8] sm:$0xff]
    %v1309 = vld [vmem:[#allocation4 + $0x1040] sm:$0xff]
    %v1310 = vld [vmem:[#allocation4 + $0x1048] sm:$0xff]
    %vm1311 = vcmask 719872
    %v1313 = vsel %vm1311, %v1256, 0
    %1315 = vmatprep.subr.mxu0 %v1258
    %1316 = vmatpush1.msra.mxu0 %v1257
    %1317 = vmatprep.subr.mxu0 %v1260
    %1318 = vmatpush1.msra.mxu0 %v1259
    %1319 = vmatprep.subr.mxu0 %v1262
    %1320 = vmatpush1.msra.mxu0 %v1261
    %1321 = vmatprep.subr.mxu0 %v1264
    %1322 = vmatpush1.msra.mxu0 %v1263
    %1323 = vmatprep.subr.mxu0 %v1266
    %1324 = vmatpush1.msra.mxu0 %v1265
    %1325 = vmatprep.subr.mxu0 %v1268
    %1326 = vmatpush1.msra.mxu0 %v1267
    %1327 = vmatprep.subr.mxu0 %v1270
    %1328 = vmatpush1.msra.mxu0 %v1269
    %1329 = vmatprep.subr.mxu0 %v1272
    %1330 = vmatpush1.msra.mxu0 %v1271
    %1331 = vmatprep.subr.mxu0 %v1274
    %1332 = vmatpush1.msra.mxu0 %v1273
    %1333 = vmatprep.subr.mxu0 %v1276
    %1334 = vmatpush1.msra.mxu0 %v1275
    %1335 = vmatprep.subr.mxu0 %v1278
    %1336 = vmatpush1.msra.mxu0 %v1277
    %1337 = vmatprep.subr.mxu0 %v1280
    %1338 = vmatpush1.msra.mxu0 %v1279
    %1339 = vmatprep.subr.mxu0 %v1282
    %1340 = vmatpush1.msra.mxu0 %v1281
    %1341 = vmatprep.subr.mxu0 %v1284
    %1342 = vmatpush1.msra.mxu0 %v1283
    %1343 = vmatprep.subr.mxu0 %v1286
    %1344 = vmatpush1.msra.mxu0 %v1285
    %1345 = vmatprep.subr.mxu0 %v1288
    %1346 = vmatpush1.msra.mxu0 %v1287
    %1347 = vmatprep.subr.mxu0 %v1290
    %1348 = vmatpush1.msra.mxu0 %v1289
    %1349 = vmatprep.subr.mxu0 %v1292
    %1350 = vmatpush1.msra.mxu0 %v1291
    %1351 = vmatprep.subr.mxu0 %v1294
    %1352 = vmatpush1.msra.mxu0 %v1293
    %1353 = vmatprep.subr.mxu0 %v1296
    %1354 = vmatpush1.msra.mxu0 %v1295
    %1355 = vmatprep.subr.mxu0 %v1298
    %1356 = vmatpush1.msra.mxu0 %v1297
    %1357 = vmatprep.subr.mxu0 %v1300
    %1358 = vmatpush1.msra.mxu0 %v1299
    %1359 = vmatprep.subr.mxu0 %v1302
    %1360 = vmatpush1.msra.mxu0 %v1301
    %1361 = vmatprep.subr.mxu0 %v1304
    %1362 = vmatpush1.msra.mxu0 %v1303
    %1363 = vmatprep.subr.mxu0 %v1306
    %1364 = vmatpush1.msra.mxu0 %v1305
    %1365 = vmatprep.subr.mxu0 %v1308
    %1366 = vmatpush1.msra.mxu0 %v1307
    %1367 = vmatprep.subr.mxu0 %v1310
    %1368 = vmatpush1.msra.mxu0 %v1309
    %1369 = vmatprep.subr.mxu0 0.0
    %1370 = vmatpush1.msra.mxu0 0.0
    %1371 = vmatprep.subr.mxu0 0.0
    %1372 = vmatpush1.msra.mxu0 0.0
    %1373 = vmatprep.subr.mxu0 0.0
    %1374 = vmatpush1.msra.mxu0 0.0
    %1375 = vmatprep.subr.mxu0 0.0
    %1376 = vmatpush1.msra.mxu0 0.0
    %1377 = vmatprep.subr.mxu0 0.0
    %1378 = vmatpush1.msra.mxu0 0.0
    %1379 = vmatprep.mubr.f32.mxu0 %v1313
    %1380 = vmatmul.mubr.f32.gmra.mrb[0].mxu0 %v1255
    %v1381 = vpop.f32.mrb[0].mxu0
    %v1382 = vadd.f32 0.0, %v1381
    %v1383 = vpop.f32.mrb[0].mxu0
    %v1384 = vadd.f32 0.0, %v1383
    %1385 = vdwg.mxu0
    %1387 = vset.pattern.permute.xlu0 0
    %1388 = vperm.xlu0 %1387, %v915
    %v1389 = vpop.permute.xlu0 %1388
    %v1391 = vmul.f32 %v1382, %v1389
    %v1392 = vmul.f32 %v1384, %v1389
    %1394 = vset.pattern.permute.xlu0 0
    %1395 = vperm.xlu0 %1394, %v916
    %v1396 = vpop.permute.xlu0 %1395
    %v1398 = vadd.f32 %v1391, %v1396
    %v1399 = vadd.f32 %v1392, %v1396
    %v1400 = vmax.f32 %v1398, 0.0
    %v1401 = vmax.f32 %v1399, 0.0
    %v1402 = vld [vmem:[#allocation16] sm:$0xff]
    %v1403 = vld [vmem:[#allocation16 + $0x8] sm:$0xf]
    %v1404 = vld [vmem:[#allocation16 + $0xc] sm:$0xff]
    %v1405 = vld [vmem:[#allocation16 + $0x14] sm:$0xf]
    %v1406 = vld [vmem:[#allocation16 + $0x18] sm:$0xff]
    %v1407 = vld [vmem:[#allocation16 + $0x20] sm:$0xf]
    %v1408 = vld [vmem:[#allocation16 + $0x24] sm:$0xff]
    %v1409 = vld [vmem:[#allocation16 + $0x2c] sm:$0xf]
    %v1410 = vld [vmem:[#allocation16 + $0x30] sm:$0xff]
    %v1411 = vld [vmem:[#allocation16 + $0x38] sm:$0xf]
    %v1412 = vld [vmem:[#allocation16 + $0x3c] sm:$0xff]
    %v1413 = vld [vmem:[#allocation16 + $0x44] sm:$0xf]
    %v1414 = vld [vmem:[#allocation16 + $0x48] sm:$0xff]
    %v1415 = vld [vmem:[#allocation16 + $0x50] sm:$0xf]
    %v1416 = vld [vmem:[#allocation16 + $0x54] sm:$0xff]
    %v1417 = vld [vmem:[#allocation16 + $0x5c] sm:$0xf]
    %v1418 = vld [vmem:[#allocation16 + $0x60] sm:$0xff]
    %v1419 = vld [vmem:[#allocation16 + $0x68] sm:$0xf]
    %v1420 = vld [vmem:[#allocation16 + $0x6c] sm:$0xff]
    %v1421 = vld [vmem:[#allocation16 + $0x74] sm:$0xf]
    %v1422 = vld [vmem:[#allocation16 + $0x78] sm:$0xff]
    %v1423 = vld [vmem:[#allocation16 + $0x80] sm:$0xf]
    %v1424 = vld [vmem:[#allocation16 + $0x84] sm:$0xff]
    %v1425 = vld [vmem:[#allocation16 + $0x8c] sm:$0xf]
    %v1426 = vld [vmem:[#allocation16 + $0x90] sm:$0xff]
    %v1427 = vld [vmem:[#allocation16 + $0x98] sm:$0xf]
    %v1428 = vld [vmem:[#allocation16 + $0x9c] sm:$0xff]
    %v1429 = vld [vmem:[#allocation16 + $0xa4] sm:$0xf]
    %v1430 = vld [vmem:[#allocation16 + $0xa8] sm:$0xff]
    %v1431 = vld [vmem:[#allocation16 + $0xb0] sm:$0xf]
    %v1432 = vld [vmem:[#allocation16 + $0xb4] sm:$0xff]
    %v1433 = vld [vmem:[#allocation16 + $0xbc] sm:$0xf]
    %v1434 = vld [vmem:[#allocation11] sm:$0xff]
    %v1435 = vld [vmem:[#allocation11 + $0x8] sm:$0xff]
    %v1436 = vld [vmem:[#allocation11 + $0x10] sm:$0xff]
    %v1437 = vld [vmem:[#allocation11 + $0x18] sm:$0xff]
    %v1438 = vld [vmem:[#allocation11 + $0x20] sm:$0xff]
    %v1439 = vld [vmem:[#allocation11 + $0x28] sm:$0xff]
    %v1440 = vld [vmem:[%s11] sm:$0xff]
    %v1441 = vld [vmem:[%s17] sm:$0xff]
    %v1442 = vld [vmem:[%s18] sm:$0xff]
    %v1443 = vunpack.c.l.bf16 %v1402
    %v1444 = vunpack.c.h.bf16 %v1402
    %v1445 = vunpack.c.l.bf16 %v1403
    %v1446 = vunpack.c.l.bf16 %v1404
    %v1447 = vunpack.c.h.bf16 %v1404
    %v1448 = vunpack.c.l.bf16 %v1405
    %v1449 = vunpack.c.l.bf16 %v1406
    %v1450 = vunpack.c.h.bf16 %v1406
    %v1451 = vunpack.c.l.bf16 %v1407
    %v1452 = vunpack.c.l.bf16 %v1408
    %v1453 = vunpack.c.h.bf16 %v1408
    %v1454 = vunpack.c.l.bf16 %v1409
    %v1455 = vunpack.c.l.bf16 %v1410
    %v1456 = vunpack.c.h.bf16 %v1410
    %v1457 = vunpack.c.l.bf16 %v1411
    %v1458 = vunpack.c.l.bf16 %v1412
    %v1459 = vunpack.c.h.bf16 %v1412
    %v1460 = vunpack.c.l.bf16 %v1413
    %v1461 = vunpack.c.l.bf16 %v1414
    %v1462 = vunpack.c.h.bf16 %v1414
    %v1463 = vunpack.c.l.bf16 %v1415
    %v1464 = vunpack.c.l.bf16 %v1416
    %v1465 = vunpack.c.h.bf16 %v1416
    %v1466 = vunpack.c.l.bf16 %v1417
    %v1467 = vunpack.c.l.bf16 %v1418
    %v1468 = vunpack.c.h.bf16 %v1418
    %v1469 = vunpack.c.l.bf16 %v1419
    %v1470 = vunpack.c.l.bf16 %v1420
    %v1471 = vunpack.c.h.bf16 %v1420
    %v1472 = vunpack.c.l.bf16 %v1421
    %v1473 = vunpack.c.l.bf16 %v1422
    %v1474 = vunpack.c.h.bf16 %v1422
    %v1475 = vunpack.c.l.bf16 %v1423
    %v1476 = vunpack.c.l.bf16 %v1424
    %v1477 = vunpack.c.h.bf16 %v1424
    %v1478 = vunpack.c.l.bf16 %v1425
    %v1479 = vunpack.c.l.bf16 %v1426
    %v1480 = vunpack.c.h.bf16 %v1426
    %v1481 = vunpack.c.l.bf16 %v1427
    %v1482 = vunpack.c.l.bf16 %v1428
    %v1483 = vunpack.c.h.bf16 %v1428
    %v1484 = vunpack.c.l.bf16 %v1429
    %v1485 = vunpack.c.l.bf16 %v1430
    %v1486 = vunpack.c.h.bf16 %v1430
    %v1487 = vunpack.c.l.bf16 %v1431
    %v1488 = vunpack.c.l.bf16 %v1432
    %v1489 = vunpack.c.h.bf16 %v1432
    %v1490 = vunpack.c.l.bf16 %v1433
    %1491 = vrot.lane.b32.xlu0 %v1434, 19
    %v1492 = vpop.permute.xlu0 %1491
    %1493 = vrot.lane.b32.xlu0 %v1435, 19
    %v1494 = vpop.permute.xlu0 %1493
    %1495 = vrot.lane.b32.xlu0 %v1436, 19
    %v1496 = vpop.permute.xlu0 %1495
    %1497 = vrot.lane.b32.xlu0 %v1437, 19
    %v1498 = vpop.permute.xlu0 %1497
    %1499 = vrot.lane.b32.xlu0 %v1438, 19
    %v1500 = vpop.permute.xlu0 %1499
    %1501 = vrot.lane.b32.xlu0 %v1439, 19
    %v1502 = vpop.permute.xlu0 %1501
    %vm1503 = vcmp.lt.s32.totalorder %v242, 19
    %v1504 = vsel %vm1503, %v1500, %v1502
    %v1505 = vsel %vm1503, %v1498, %v1500
    %v1506 = vsel %vm1503, %v1496, %v1498
    %v1507 = vsel %vm1503, %v1494, %v1496
    %v1508 = vsel %vm1503, %v1492, %v1494
    %v1509 = vsel %vm1503, %v1502, %v1492
    %1510 = vst [vmem:[#allocation4 + $0x5a0] sm:$0xff] %v1509
    %1511 = vst [vmem:[#allocation4 + $0x5a8] sm:$0xff] %v1508
    %1512 = vst [vmem:[#allocation4 + $0x5b0] sm:$0xff] %v1507
    %1513 = vst [vmem:[#allocation4 + $0x5b8] sm:$0xff] %v1506
    %1514 = vst [vmem:[#allocation4 + $0x5c0] sm:$0xff] %v1505
    %1515 = vst [vmem:[#allocation4 + $0x5c8] sm:$0xff] %v1504
    %1516 = vrot.lane.b32.xlu0 %v1434, 18
    %v1517 = vpop.permute.xlu0 %1516
    %1518 = vrot.lane.b32.xlu0 %v1435, 18
    %v1519 = vpop.permute.xlu0 %1518
    %1520 = vrot.lane.b32.xlu0 %v1436, 18
    %v1521 = vpop.permute.xlu0 %1520
    %1522 = vrot.lane.b32.xlu0 %v1437, 18
    %v1523 = vpop.permute.xlu0 %1522
    %1524 = vrot.lane.b32.xlu0 %v1438, 18
    %v1525 = vpop.permute.xlu0 %1524
    %1526 = vrot.lane.b32.xlu0 %v1439, 18
    %v1527 = vpop.permute.xlu0 %1526
    %vm1528 = vcmp.lt.s32.totalorder %v242, 18
    %v1529 = vsel %vm1528, %v1525, %v1527
    %v1530 = vsel %vm1528, %v1523, %v1525
    %v1531 = vsel %vm1528, %v1521, %v1523
    %v1532 = vsel %vm1528, %v1519, %v1521
    %v1533 = vsel %vm1528, %v1517, %v1519
    %v1534 = vsel %vm1528, %v1527, %v1517
    %1535 = vst [vmem:[#allocation4 + $0x640] sm:$0xff] %v1534
    %1536 = vst [vmem:[#allocation4 + $0x648] sm:$0xff] %v1533
    %1537 = vst [vmem:[#allocation4 + $0x650] sm:$0xff] %v1532
    %1538 = vst [vmem:[#allocation4 + $0x658] sm:$0xff] %v1531
    %1539 = vst [vmem:[#allocation4 + $0x660] sm:$0xff] %v1530
    %1540 = vst [vmem:[#allocation4 + $0x668] sm:$0xff] %v1529
    %1541 = vrot.lane.b32.xlu0 %v1434, 17
    %v1542 = vpop.permute.xlu0 %1541
    %1543 = vrot.lane.b32.xlu0 %v1435, 17
    %v1544 = vpop.permute.xlu0 %1543
    %1545 = vrot.lane.b32.xlu0 %v1436, 17
    %v1546 = vpop.permute.xlu0 %1545
    %1547 = vrot.lane.b32.xlu0 %v1437, 17
    %v1548 = vpop.permute.xlu0 %1547
    %1549 = vrot.lane.b32.xlu0 %v1438, 17
    %v1550 = vpop.permute.xlu0 %1549
    %1551 = vrot.lane.b32.xlu0 %v1439, 17
    %v1552 = vpop.permute.xlu0 %1551
    %vm1553 = vcmp.lt.s32.totalorder %v242, 17
    %v1554 = vsel %vm1553, %v1550, %v1552
    %v1555 = vsel %vm1553, %v1548, %v1550
    %v1556 = vsel %vm1553, %v1546, %v1548
    %v1557 = vsel %vm1553, %v1544, %v1546
    %v1558 = vsel %vm1553, %v1542, %v1544
    %v1559 = vsel %vm1553, %v1552, %v1542
    %1560 = vst [vmem:[#allocation4 + $0x6e0] sm:$0xff] %v1559
    %1561 = vst [vmem:[#allocation4 + $0x6e8] sm:$0xff] %v1558
    %1562 = vst [vmem:[#allocation4 + $0x6f0] sm:$0xff] %v1557
    %1563 = vst [vmem:[#allocation4 + $0x6f8] sm:$0xff] %v1556
    %1564 = vst [vmem:[#allocation4 + $0x700] sm:$0xff] %v1555
    %1565 = vst [vmem:[#allocation4 + $0x708] sm:$0xff] %v1554
    %1566 = vrot.lane.b32.xlu0 %v1434, 1
    %v1567 = vpop.permute.xlu0 %1566
    %1568 = vrot.lane.b32.xlu0 %v1435, 1
    %v1569 = vpop.permute.xlu0 %1568
    %1570 = vrot.lane.b32.xlu0 %v1436, 1
    %v1571 = vpop.permute.xlu0 %1570
    %1572 = vrot.lane.b32.xlu0 %v1437, 1
    %v1573 = vpop.permute.xlu0 %1572
    %1574 = vrot.lane.b32.xlu0 %v1438, 1
    %v1575 = vpop.permute.xlu0 %1574
    %1576 = vrot.lane.b32.xlu0 %v1439, 1
    %v1577 = vpop.permute.xlu0 %1576
    %v1578 = vsel %vm294, %v1575, %v1577
    %v1579 = vsel %vm294, %v1573, %v1575
    %v1580 = vsel %vm294, %v1571, %v1573
    %v1581 = vsel %vm294, %v1569, %v1571
    %v1582 = vsel %vm294, %v1567, %v1569
    %v1583 = vsel %vm294, %v1577, %v1567
    %1584 = vst [vmem:[#allocation4 + $0x780] sm:$0xff] %v1583
    %1585 = vst [vmem:[#allocation4 + $0x788] sm:$0xff] %v1582
    %1586 = vst [vmem:[#allocation4 + $0x790] sm:$0xff] %v1581
    %1587 = vst [vmem:[#allocation4 + $0x798] sm:$0xff] %v1580
    %1588 = vst [vmem:[#allocation4 + $0x7a0] sm:$0xff] %v1579
    %1589 = vst [vmem:[#allocation4 + $0x7a8] sm:$0xff] %v1578
    %1590 = vst [vmem:[#allocation4 + $0x820] sm:$0xff] %v1434
    %1591 = vst [vmem:[#allocation4 + $0x828] sm:$0xff] %v1435
    %1592 = vst [vmem:[#allocation4 + $0x830] sm:$0xff] %v1436
    %1593 = vst [vmem:[#allocation4 + $0x838] sm:$0xff] %v1437
    %1594 = vst [vmem:[#allocation4 + $0x840] sm:$0xff] %v1438
    %1595 = vst [vmem:[#allocation4 + $0x848] sm:$0xff] %v1439
    %1596 = vrot.lane.b32.xlu0 %v1434, 127
    %v1597 = vpop.permute.xlu0 %1596
    %1598 = vrot.lane.b32.xlu0 %v1435, 127
    %v1599 = vpop.permute.xlu0 %1598
    %1600 = vrot.lane.b32.xlu0 %v1436, 127
    %v1601 = vpop.permute.xlu0 %1600
    %1602 = vrot.lane.b32.xlu0 %v1437, 127
    %v1603 = vpop.permute.xlu0 %1602
    %1604 = vrot.lane.b32.xlu0 %v1438, 127
    %v1605 = vpop.permute.xlu0 %1604
    %1606 = vrot.lane.b32.xlu0 %v1439, 127
    %v1607 = vpop.permute.xlu0 %1606
    %v1608 = vsel %vm315, %v1605, %v1607
    %v1609 = vsel %vm315, %v1603, %v1605
    %v1610 = vsel %vm315, %v1601, %v1603
    %v1611 = vsel %vm315, %v1599, %v1601
    %v1612 = vsel %vm315, %v1597, %v1599
    %v1613 = vsel %vm315, %v1607, %v1597
    %1614 = vst [vmem:[#allocation4 + $0x8c0] sm:$0xff] %v1612
    %1615 = vst [vmem:[#allocation4 + $0x8c8] sm:$0xff] %v1611
    %1616 = vst [vmem:[#allocation4 + $0x8d0] sm:$0xff] %v1610
    %1617 = vst [vmem:[#allocation4 + $0x8d8] sm:$0xff] %v1609
    %1618 = vst [vmem:[#allocation4 + $0x8e0] sm:$0xff] %v1608
    %1619 = vst [vmem:[#allocation4 + $0x8e8] sm:$0xff] %v1613
    %1620 = vrot.lane.b32.xlu0 %v1434, 111
    %v1621 = vpop.permute.xlu0 %1620
    %1622 = vrot.lane.b32.xlu0 %v1435, 111
    %v1623 = vpop.permute.xlu0 %1622
    %1624 = vrot.lane.b32.xlu0 %v1436, 111
    %v1625 = vpop.permute.xlu0 %1624
    %1626 = vrot.lane.b32.xlu0 %v1437, 111
    %v1627 = vpop.permute.xlu0 %1626
    %1628 = vrot.lane.b32.xlu0 %v1438, 111
    %v1629 = vpop.permute.xlu0 %1628
    %1630 = vrot.lane.b32.xlu0 %v1439, 111
    %v1631 = vpop.permute.xlu0 %1630
    %vm1632 = vcmp.lt.s32.totalorder %v242, 111
    %v1633 = vsel %vm1632, %v1629, %v1631
    %v1634 = vsel %vm1632, %v1627, %v1629
    %v1635 = vsel %vm1632, %v1625, %v1627
    %v1636 = vsel %vm1632, %v1623, %v1625
    %v1637 = vsel %vm1632, %v1621, %v1623
    %v1638 = vsel %vm1632, %v1631, %v1621
    %1639 = vst [vmem:[#allocation4 + $0x960] sm:$0xff] %v1637
    %1640 = vst [vmem:[#allocation4 + $0x968] sm:$0xff] %v1636
    %1641 = vst [vmem:[#allocation4 + $0x970] sm:$0xff] %v1635
    %1642 = vst [vmem:[#allocation4 + $0x978] sm:$0xff] %v1634
    %1643 = vst [vmem:[#allocation4 + $0x980] sm:$0xff] %v1633
    %1644 = vst [vmem:[#allocation4 + $0x988] sm:$0xff] %v1638
    %1645 = vrot.lane.b32.xlu0 %v1434, 110
    %v1646 = vpop.permute.xlu0 %1645
    %1647 = vrot.lane.b32.xlu0 %v1435, 110
    %v1648 = vpop.permute.xlu0 %1647
    %1649 = vrot.lane.b32.xlu0 %v1436, 110
    %v1650 = vpop.permute.xlu0 %1649
    %1651 = vrot.lane.b32.xlu0 %v1437, 110
    %v1652 = vpop.permute.xlu0 %1651
    %1653 = vrot.lane.b32.xlu0 %v1438, 110
    %v1654 = vpop.permute.xlu0 %1653
    %1655 = vrot.lane.b32.xlu0 %v1439, 110
    %v1656 = vpop.permute.xlu0 %1655
    %vm1657 = vcmp.lt.s32.totalorder %v242, 110
    %v1658 = vsel %vm1657, %v1654, %v1656
    %v1659 = vsel %vm1657, %v1652, %v1654
    %v1660 = vsel %vm1657, %v1650, %v1652
    %v1661 = vsel %vm1657, %v1648, %v1650
    %v1662 = vsel %vm1657, %v1646, %v1648
    %v1663 = vsel %vm1657, %v1656, %v1646
    %1664 = vst [vmem:[#allocation4 + $0xa00] sm:$0xff] %v1662
    %1665 = vst [vmem:[#allocation4 + $0xa08] sm:$0xff] %v1661
    %1666 = vst [vmem:[#allocation4 + $0xa10] sm:$0xff] %v1660
    %1667 = vst [vmem:[#allocation4 + $0xa18] sm:$0xff] %v1659
    %1668 = vst [vmem:[#allocation4 + $0xa20] sm:$0xff] %v1658
    %1669 = vst [vmem:[#allocation4 + $0xa28] sm:$0xff] %v1663
    %1670 = vrot.lane.b32.xlu0 %v1434, 109
    %v1671 = vpop.permute.xlu0 %1670
    %1672 = vrot.lane.b32.xlu0 %v1435, 109
    %v1673 = vpop.permute.xlu0 %1672
    %1674 = vrot.lane.b32.xlu0 %v1436, 109
    %v1675 = vpop.permute.xlu0 %1674
    %1676 = vrot.lane.b32.xlu0 %v1437, 109
    %v1677 = vpop.permute.xlu0 %1676
    %1678 = vrot.lane.b32.xlu0 %v1438, 109
    %v1679 = vpop.permute.xlu0 %1678
    %1680 = vrot.lane.b32.xlu0 %v1439, 109
    %v1681 = vpop.permute.xlu0 %1680
    %vm1682 = vcmp.lt.s32.totalorder %v242, 109
    %v1683 = vsel %vm1682, %v1679, %v1681
    %v1684 = vsel %vm1682, %v1677, %v1679
    %v1685 = vsel %vm1682, %v1675, %v1677
    %v1686 = vsel %vm1682, %v1673, %v1675
    %v1687 = vsel %vm1682, %v1671, %v1673
    %v1688 = vsel %vm1682, %v1681, %v1671
    %1689 = vst [vmem:[#allocation4 + $0xaa0] sm:$0xff] %v1687
    %1690 = vst [vmem:[#allocation4 + $0xaa8] sm:$0xff] %v1686
    %1691 = vst [vmem:[#allocation4 + $0xab0] sm:$0xff] %v1685
    %1692 = vst [vmem:[#allocation4 + $0xab8] sm:$0xff] %v1684
    %1693 = vst [vmem:[#allocation4 + $0xac0] sm:$0xff] %v1683
    %1694 = vst [vmem:[#allocation4 + $0xac8] sm:$0xff] %v1688
    %1695 = vmatprep.subr.mxu0 %v1444
    %1696 = vmatpush1.msra.mxu0 %v1443
    %1697 = vmatprep.subr.mxu0 %v1447
    %1698 = vmatpush1.msra.mxu0 %v1446
    %1699 = vmatprep.subr.mxu0 %v1450
    %1700 = vmatpush1.msra.mxu0 %v1449
    %1701 = vmatprep.subr.mxu0 %v1453
    %1702 = vmatpush1.msra.mxu0 %v1452
    %1703 = vmatprep.subr.mxu0 %v1456
    %1704 = vmatpush1.msra.mxu0 %v1455
    %1705 = vmatprep.subr.mxu0 %v1459
    %1706 = vmatpush1.msra.mxu0 %v1458
    %1707 = vmatprep.subr.mxu0 %v1462
    %1708 = vmatpush1.msra.mxu0 %v1461
    %1709 = vmatprep.subr.mxu0 %v1465
    %1710 = vmatpush1.msra.mxu0 %v1464
    %1711 = vmatprep.subr.mxu0 %v1468
    %1712 = vmatpush1.msra.mxu0 %v1467
    %1713 = vmatprep.subr.mxu0 %v1471
    %1714 = vmatpush1.msra.mxu0 %v1470
    %1715 = vmatprep.subr.mxu0 %v1474
    %1716 = vmatpush1.msra.mxu0 %v1473
    %1717 = vmatprep.subr.mxu0 %v1477
    %1718 = vmatpush1.msra.mxu0 %v1476
    %1719 = vmatprep.subr.mxu0 %v1480
    %1720 = vmatpush1.msra.mxu0 %v1479
    %1721 = vmatprep.subr.mxu0 %v1483
    %1722 = vmatpush1.msra.mxu0 %v1482
    %1723 = vmatprep.subr.mxu0 %v1486
    %1724 = vmatpush1.msra.mxu0 %v1485
    %1725 = vmatprep.subr.mxu0 %v1489
    %1726 = vmatpush1.msra.mxu0 %v1488
    %1727 = vmatprep.subr.mxu0 0.0
    %1728 = vmatpush1.msra.mxu0 0.0
    %1729 = vmatprep.subr.mxu0 0.0
    %1730 = vmatpush1.msra.mxu0 0.0
    %1731 = vmatprep.subr.mxu0 0.0
    %1732 = vmatpush1.msra.mxu0 0.0
    %1733 = vmatprep.subr.mxu0 0.0
    %1734 = vmatpush1.msra.mxu0 0.0
    %1735 = vmatprep.subr.mxu0 0.0
    %1736 = vmatpush1.msra.mxu0 0.0
    %1737 = vmatprep.subr.mxu0 0.0
    %1738 = vmatpush1.msra.mxu0 0.0
    %1739 = vmatprep.subr.mxu0 0.0
    %1740 = vmatpush1.msra.mxu0 0.0
    %1741 = vmatprep.subr.mxu0 0.0
    %1742 = vmatpush1.msra.mxu0 0.0
    %1743 = vmatprep.subr.mxu0 0.0
    %1744 = vmatpush1.msra.mxu0 0.0
    %1745 = vmatprep.subr.mxu0 0.0
    %1746 = vmatpush1.msra.mxu0 0.0
    %1747 = vmatprep.subr.mxu0 0.0
    %1748 = vmatpush1.msra.mxu0 0.0
    %1749 = vmatprep.subr.mxu0 0.0
    %1750 = vmatpush1.msra.mxu0 0.0
    %1751 = vmatprep.subr.mxu0 0.0
    %1752 = vmatpush1.msra.mxu0 0.0
    %1753 = vmatprep.subr.mxu0 0.0
    %1754 = vmatpush1.msra.mxu0 0.0
    %1755 = vmatprep.subr.mxu0 0.0
    %1756 = vmatpush1.msra.mxu0 0.0
    %1757 = vmatprep.subr.mxu0 0.0
    %1758 = vmatpush1.msra.mxu0 0.0
    %1759 = vmatprep.mubr.f32.mxu0 0.0
    %1760 = vmatmul.mubr.f32.gmra.mrb[0].mxu0 %v1400
    %v1761 = vpop.f32.mrb[0].mxu0
    %v1762 = vadd.f32 0.0, %v1761
    %v1763 = vpop.f32.mrb[0].mxu0
    %v1764 = vadd.f32 0.0, %v1763
    %1765 = vdwg.mxu0
    %1766 = vmatprep.subr.mxu0 0.0
    %1767 = vmatpush1.msra.mxu0 %v1445
    %1768 = vmatprep.subr.mxu0 0.0
    %1769 = vmatpush1.msra.mxu0 %v1448
    %1770 = vmatprep.subr.mxu0 0.0
    %1771 = vmatpush1.msra.mxu0 %v1451
    %1772 = vmatprep.subr.mxu0 0.0
    %1773 = vmatpush1.msra.mxu0 %v1454
    %1774 = vmatprep.subr.mxu0 0.0
    %1775 = vmatpush1.msra.mxu0 %v1457
    %1776 = vmatprep.subr.mxu0 0.0
    %1777 = vmatpush1.msra.mxu0 %v1460
    %1778 = vmatprep.subr.mxu0 0.0
    %1779 = vmatpush1.msra.mxu0 %v1463
    %1780 = vmatprep.subr.mxu0 0.0
    %1781 = vmatpush1.msra.mxu0 %v1466
    %1782 = vmatprep.subr.mxu0 0.0
    %1783 = vmatpush1.msra.mxu0 %v1469
    %1784 = vmatprep.subr.mxu0 0.0
    %1785 = vmatpush1.msra.mxu0 %v1472
    %1786 = vmatprep.subr.mxu0 0.0
    %1787 = vmatpush1.msra.mxu0 %v1475
    %1788 = vmatprep.subr.mxu0 0.0
    %1789 = vmatpush1.msra.mxu0 %v1478
    %1790 = vmatprep.subr.mxu0 0.0
    %1791 = vmatpush1.msra.mxu0 %v1481
    %1792 = vmatprep.subr.mxu0 0.0
    %1793 = vmatpush1.msra.mxu0 %v1484
    %1794 = vmatprep.subr.mxu0 0.0
    %1795 = vmatpush1.msra.mxu0 %v1487
    %1796 = vmatprep.subr.mxu0 0.0
    %1797 = vmatpush1.msra.mxu0 %v1490
    %1798 = vmatprep.subr.mxu0 0.0
    %1799 = vmatpush1.msra.mxu0 0.0
    %1800 = vmatprep.subr.mxu0 0.0
    %1801 = vmatpush1.msra.mxu0 0.0
    %1802 = vmatprep.subr.mxu0 0.0
    %1803 = vmatpush1.msra.mxu0 0.0
    %1804 = vmatprep.subr.mxu0 0.0
    %1805 = vmatpush1.msra.mxu0 0.0
    %1806 = vmatprep.subr.mxu0 0.0
    %1807 = vmatpush1.msra.mxu0 0.0
    %1808 = vmatprep.subr.mxu0 0.0
    %1809 = vmatpush1.msra.mxu0 0.0
    %1810 = vmatprep.subr.mxu0 0.0
    %1811 = vmatpush1.msra.mxu0 0.0
    %1812 = vmatprep.subr.mxu0 0.0
    %1813 = vmatpush1.msra.mxu0 0.0
    %1814 = vmatprep.subr.mxu0 0.0
    %1815 = vmatpush1.msra.mxu0 0.0
    %1816 = vmatprep.subr.mxu0 0.0
    %1817 = vmatpush1.msra.mxu0 0.0
    %1818 = vmatprep.subr.mxu0 0.0
    %1819 = vmatpush1.msra.mxu0 0.0
    %1820 = vmatprep.subr.mxu0 0.0
    %1821 = vmatpush1.msra.mxu0 0.0
    %1822 = vmatprep.subr.mxu0 0.0
    %1823 = vmatpush1.msra.mxu0 0.0
    %1824 = vmatprep.subr.mxu0 0.0
    %1825 = vmatpush1.msra.mxu0 0.0
    %1826 = vmatprep.subr.mxu0 0.0
    %1827 = vmatpush1.msra.mxu0 0.0
    %1828 = vmatprep.subr.mxu0 0.0
    %1829 = vmatpush1.msra.mxu0 0.0
    %1830 = vmatprep.mubr.f32.mxu0 0.0
    %1831 = vmatmul.mubr.f32.gmra.mrb[0].mxu0 %v1400
    %v1832 = vpop.f32.mrb[0].mxu0
    %v1833 = vadd.f32 0.0, %v1832
    %v1834 = vpop.f32.mrb[0].mxu0
    %1835 = vdwg.mxu0
    %1836 = vrot.lane.b32.xlu0 %v1762, 19
    %v1837 = vpop.permute.xlu0 %1836
    %1838 = vrot.lane.b32.xlu0 %v1764, 19
    %v1839 = vpop.permute.xlu0 %1838
    %1840 = vrot.lane.b32.xlu0 %v1833, 19
    %v1841 = vpop.permute.xlu0 %1840
    %v1842 = vsel %vm1503, %v1839, %v1841
    %v1843 = vsel %vm1503, %v1837, %v1839
    %v1844 = vsel %vm1503, %v1841, %v1837
    %1845 = vst [vmem:[#allocation4] sm:$0xff] %v1844
    %1846 = vst [vmem:[#allocation4 + $0x8] sm:$0xff] %v1843
    %1847 = vst [vmem:[#allocation4 + $0x10] sm:$0xff] %v1842
    %1848 = vrot.lane.b32.xlu0 %v1762, 18
    %v1849 = vpop.permute.xlu0 %1848
    %1850 = vrot.lane.b32.xlu0 %v1764, 18
    %v1851 = vpop.permute.xlu0 %1850
    %1852 = vrot.lane.b32.xlu0 %v1833, 18
    %v1853 = vpop.permute.xlu0 %1852
    %v1854 = vsel %vm1528, %v1851, %v1853
    %v1855 = vsel %vm1528, %v1849, %v1851
    %v1856 = vsel %vm1528, %v1853, %v1849
    %1857 = vst [vmem:[#allocation4 + $0xa0] sm:$0xff] %v1856
    %1858 = vst [vmem:[#allocation4 + $0xa8] sm:$0xff] %v1855
    %1859 = vst [vmem:[#allocation4 + $0xb0] sm:$0xff] %v1854
    %1860 = vrot.lane.b32.xlu0 %v1762, 17
    %v1861 = vpop.permute.xlu0 %1860
    %1862 = vrot.lane.b32.xlu0 %v1764, 17
    %v1863 = vpop.permute.xlu0 %1862
    %1864 = vrot.lane.b32.xlu0 %v1833, 17
    %v1865 = vpop.permute.xlu0 %1864
    %v1866 = vsel %vm1553, %v1863, %v1865
    %v1867 = vsel %vm1553, %v1861, %v1863
    %v1868 = vsel %vm1553, %v1865, %v1861
    %1869 = vst [vmem:[#allocation4 + $0x140] sm:$0xff] %v1868
    %1870 = vst [vmem:[#allocation4 + $0x148] sm:$0xff] %v1867
    %1871 = vst [vmem:[#allocation4 + $0x150] sm:$0xff] %v1866
    %1872 = vrot.lane.b32.xlu0 %v1762, 1
    %v1873 = vpop.permute.xlu0 %1872
    %1874 = vrot.lane.b32.xlu0 %v1764, 1
    %v1875 = vpop.permute.xlu0 %1874
    %1876 = vrot.lane.b32.xlu0 %v1833, 1
    %v1877 = vpop.permute.xlu0 %1876
    %v1878 = vsel %vm294, %v1875, %v1877
    %v1879 = vsel %vm294, %v1873, %v1875
    %v1880 = vsel %vm294, %v1877, %v1873
    %1881 = vst [vmem:[#allocation4 + $0x1e0] sm:$0xff] %v1880
    %1882 = vst [vmem:[#allocation4 + $0x1e8] sm:$0xff] %v1879
    %1883 = vst [vmem:[#allocation4 + $0x1f0] sm:$0xff] %v1878
    %1884 = vst [vmem:[#allocation4 + $0x280] sm:$0xff] %v1762
    %1885 = vst [vmem:[#allocation4 + $0x288] sm:$0xff] %v1764
    %1886 = vst [vmem:[#allocation4 + $0x290] sm:$0xff] %v1833
    %1887 = vrot.lane.b32.xlu0 %v1762, 127
    %v1888 = vpop.permute.xlu0 %1887
    %1889 = vrot.lane.b32.xlu0 %v1764, 127
    %v1890 = vpop.permute.xlu0 %1889
    %1891 = vrot.lane.b32.xlu0 %v1833, 127
    %v1892 = vpop.permute.xlu0 %1891
    %v1893 = vsel %vm315, %v1890, %v1892
    %v1894 = vsel %vm315, %v1888, %v1890
    %v1895 = vsel %vm315, %v1892, %v1888
    %1896 = vst [vmem:[#allocation4 + $0x320] sm:$0xff] %v1894
    %1897 = vst [vmem:[#allocation4 + $0x328] sm:$0xff] %v1893
    %1898 = vst [vmem:[#allocation4 + $0x330] sm:$0xff] %v1895
    %1899 = vrot.lane.b32.xlu0 %v1762, 111
    %v1900 = vpop.permute.xlu0 %1899
    %1901 = vrot.lane.b32.xlu0 %v1764, 111
    %v1902 = vpop.permute.xlu0 %1901
    %1903 = vrot.lane.b32.xlu0 %v1833, 111
    %v1904 = vpop.permute.xlu0 %1903
    %v1905 = vsel %vm1632, %v1902, %v1904
    %v1906 = vsel %vm1632, %v1900, %v1902
    %v1907 = vsel %vm1632, %v1904, %v1900
    %1908 = vst [vmem:[#allocation4 + $0x3c0] sm:$0xff] %v1906
    %1909 = vst [vmem:[#allocation4 + $0x3c8] sm:$0xff] %v1905
    %1910 = vst [vmem:[#allocation4 + $0x3d0] sm:$0xff] %v1907
    %1911 = vrot.lane.b32.xlu0 %v1762, 110
    %v1912 = vpop.permute.xlu0 %1911
    %1913 = vrot.lane.b32.xlu0 %v1764, 110
    %v1914 = vpop.permute.xlu0 %1913
    %1915 = vrot.lane.b32.xlu0 %v1833, 110
    %v1916 = vpop.permute.xlu0 %1915
    %v1917 = vsel %vm1657, %v1914, %v1916
    %v1918 = vsel %vm1657, %v1912, %v1914
    %v1919 = vsel %vm1657, %v1916, %v1912
    %1920 = vst [vmem:[#allocation4 + $0x460] sm:$0xff] %v1918
    %1921 = vst [vmem:[#allocation4 + $0x468] sm:$0xff] %v1917
    %1922 = vst [vmem:[#allocation4 + $0x470] sm:$0xff] %v1919
    %1923 = vrot.lane.b32.xlu0 %v1762, 109
    %v1924 = vpop.permute.xlu0 %1923
    %1925 = vrot.lane.b32.xlu0 %v1764, 109
    %v1926 = vpop.permute.xlu0 %1925
    %1927 = vrot.lane.b32.xlu0 %v1833, 109
    %v1928 = vpop.permute.xlu0 %1927
    %v1929 = vsel %vm1682, %v1926, %v1928
    %v1930 = vsel %vm1682, %v1924, %v1926
    %v1931 = vsel %vm1682, %v1928, %v1924
    %1932 = vst [vmem:[#allocation4 + $0x500] sm:$0xff] %v1930
    %1933 = vst [vmem:[#allocation4 + $0x508] sm:$0xff] %v1929
    %1934 = vst [vmem:[#allocation4 + $0x510] sm:$0xff] %v1931
    %1935 = vmatprep.subr.mxu0 %v1444
    %1936 = vmatpush1.msra.mxu0 %v1443
    %1937 = vmatprep.subr.mxu0 %v1447
    %1938 = vmatpush1.msra.mxu0 %v1446
    %1939 = vmatprep.subr.mxu0 %v1450
    %1940 = vmatpush1.msra.mxu0 %v1449
    %1941 = vmatprep.subr.mxu0 %v1453
    %1942 = vmatpush1.msra.mxu0 %v1452
    %1943 = vmatprep.subr.mxu0 %v1456
    %1944 = vmatpush1.msra.mxu0 %v1455
    %1945 = vmatprep.subr.mxu0 %v1459
    %1946 = vmatpush1.msra.mxu0 %v1458
    %1947 = vmatprep.subr.mxu0 %v1462
    %1948 = vmatpush1.msra.mxu0 %v1461
    %1949 = vmatprep.subr.mxu0 %v1465
    %1950 = vmatpush1.msra.mxu0 %v1464
    %1951 = vmatprep.subr.mxu0 %v1468
    %1952 = vmatpush1.msra.mxu0 %v1467
    %1953 = vmatprep.subr.mxu0 %v1471
    %1954 = vmatpush1.msra.mxu0 %v1470
    %1955 = vmatprep.subr.mxu0 %v1474
    %1956 = vmatpush1.msra.mxu0 %v1473
    %1957 = vmatprep.subr.mxu0 %v1477
    %1958 = vmatpush1.msra.mxu0 %v1476
    %1959 = vmatprep.subr.mxu0 %v1480
    %1960 = vmatpush1.msra.mxu0 %v1479
    %1961 = vmatprep.subr.mxu0 %v1483
    %1962 = vmatpush1.msra.mxu0 %v1482
    %1963 = vmatprep.subr.mxu0 %v1486
    %1964 = vmatpush1.msra.mxu0 %v1485
    %1965 = vmatprep.subr.mxu0 %v1489
    %1966 = vmatpush1.msra.mxu0 %v1488
    %1967 = vmatprep.subr.mxu0 0.0
    %1968 = vmatpush1.msra.mxu0 0.0
    %1969 = vmatprep.subr.mxu0 0.0
    %1970 = vmatpush1.msra.mxu0 0.0
    %1971 = vmatprep.subr.mxu0 0.0
    %1972 = vmatpush1.msra.mxu0 0.0
    %1973 = vmatprep.subr.mxu0 0.0
    %1974 = vmatpush1.msra.mxu0 0.0
    %1975 = vmatprep.subr.mxu0 0.0
    %1976 = vmatpush1.msra.mxu0 0.0
    %1977 = vmatprep.subr.mxu0 0.0
    %1978 = vmatpush1.msra.mxu0 0.0
    %1979 = vmatprep.subr.mxu0 0.0
    %1980 = vmatpush1.msra.mxu0 0.0
    %1981 = vmatprep.subr.mxu0 0.0
    %1982 = vmatpush1.msra.mxu0 0.0
    %1983 = vmatprep.subr.mxu0 0.0
    %1984 = vmatpush1.msra.mxu0 0.0
    %1985 = vmatprep.subr.mxu0 0.0
    %1986 = vmatpush1.msra.mxu0 0.0
    %1987 = vmatprep.subr.mxu0 0.0
    %1988 = vmatpush1.msra.mxu0 0.0
    %1989 = vmatprep.subr.mxu0 0.0
    %1990 = vmatpush1.msra.mxu0 0.0
    %1991 = vmatprep.subr.mxu0 0.0
    %1992 = vmatpush1.msra.mxu0 0.0
    %1993 = vmatprep.subr.mxu0 0.0
    %1994 = vmatpush1.msra.mxu0 0.0
    %1995 = vmatprep.subr.mxu0 0.0
    %1996 = vmatpush1.msra.mxu0 0.0
    %1997 = vmatprep.subr.mxu0 0.0
    %1998 = vmatpush1.msra.mxu0 0.0
    %1999 = vmatprep.mubr.f32.mxu0 0.0
    %2000 = vmatmul.mubr.f32.gmra.mrb[0].mxu0 %v1401
    %v2001 = vpop.f32.mrb[0].mxu0
    %v2002 = vadd.f32 0.0, %v2001
    %v2003 = vpop.f32.mrb[0].mxu0
    %v2004 = vadd.f32 0.0, %v2003
    %2005 = vdwg.mxu0
    %2006 = vmatprep.subr.mxu0 0.0
    %2007 = vmatpush1.msra.mxu0 %v1445
    %2008 = vmatprep.subr.mxu0 0.0
    %2009 = vmatpush1.msra.mxu0 %v1448
    %2010 = vmatprep.subr.mxu0 0.0
    %2011 = vmatpush1.msra.mxu0 %v1451
    %2012 = vmatprep.subr.mxu0 0.0
    %2013 = vmatpush1.msra.mxu0 %v1454
    %2014 = vmatprep.subr.mxu0 0.0
    %2015 = vmatpush1.msra.mxu0 %v1457
    %2016 = vmatprep.subr.mxu0 0.0
    %2017 = vmatpush1.msra.mxu0 %v1460
    %2018 = vmatprep.subr.mxu0 0.0
    %2019 = vmatpush1.msra.mxu0 %v1463
    %2020 = vmatprep.subr.mxu0 0.0
    %2021 = vmatpush1.msra.mxu0 %v1466
    %2022 = vmatprep.subr.mxu0 0.0
    %2023 = vmatpush1.msra.mxu0 %v1469
    %2024 = vmatprep.subr.mxu0 0.0
    %2025 = vmatpush1.msra.mxu0 %v1472
    %2026 = vmatprep.subr.mxu0 0.0
    %2027 = vmatpush1.msra.mxu0 %v1475
    %2028 = vmatprep.subr.mxu0 0.0
    %2029 = vmatpush1.msra.mxu0 %v1478
    %2030 = vmatprep.subr.mxu0 0.0
    %2031 = vmatpush1.msra.mxu0 %v1481
    %2032 = vmatprep.subr.mxu0 0.0
    %2033 = vmatpush1.msra.mxu0 %v1484
    %2034 = vmatprep.subr.mxu0 0.0
    %2035 = vmatpush1.msra.mxu0 %v1487
    %2036 = vmatprep.subr.mxu0 0.0
    %2037 = vmatpush1.msra.mxu0 %v1490
    %2038 = vmatprep.subr.mxu0 0.0
    %2039 = vmatpush1.msra.mxu0 0.0
    %2040 = vmatprep.subr.mxu0 0.0
    %2041 = vmatpush1.msra.mxu0 0.0
    %2042 = vmatprep.subr.mxu0 0.0
    %2043 = vmatpush1.msra.mxu0 0.0
    %2044 = vmatprep.subr.mxu0 0.0
    %2045 = vmatpush1.msra.mxu0 0.0
    %2046 = vmatprep.subr.mxu0 0.0
    %2047 = vmatpush1.msra.mxu0 0.0
    %2048 = vmatprep.subr.mxu0 0.0
    %2049 = vmatpush1.msra.mxu0 0.0
    %2050 = vmatprep.subr.mxu0 0.0
    %2051 = vmatpush1.msra.mxu0 0.0
    %2052 = vmatprep.subr.mxu0 0.0
    %2053 = vmatpush1.msra.mxu0 0.0
    %2054 = vmatprep.subr.mxu0 0.0
    %2055 = vmatpush1.msra.mxu0 0.0
    %2056 = vmatprep.subr.mxu0 0.0
    %2057 = vmatpush1.msra.mxu0 0.0
    %2058 = vmatprep.subr.mxu0 0.0
    %2059 = vmatpush1.msra.mxu0 0.0
    %2060 = vmatprep.subr.mxu0 0.0
    %2061 = vmatpush1.msra.mxu0 0.0
    %2062 = vmatprep.subr.mxu0 0.0
    %2063 = vmatpush1.msra.mxu0 0.0
    %2064 = vmatprep.subr.mxu0 0.0
    %2065 = vmatpush1.msra.mxu0 0.0
    %2066 = vmatprep.subr.mxu0 0.0
    %2067 = vmatpush1.msra.mxu0 0.0
    %2068 = vmatprep.subr.mxu0 0.0
    %2069 = vmatpush1.msra.mxu0 0.0
    %2070 = vmatprep.mubr.f32.mxu0 0.0
    %2071 = vmatmul.mubr.f32.gmra.mrb[0].mxu0 %v1401
    %v2072 = vpop.f32.mrb[0].mxu0
    %v2073 = vadd.f32 0.0, %v2072
    %v2074 = vpop.f32.mrb[0].mxu0
    %2075 = vdwg.mxu0
    %2076 = vrot.lane.b32.xlu0 %v2002, 19
    %v2077 = vpop.permute.xlu0 %2076
    %2078 = vrot.lane.b32.xlu0 %v2004, 19
    %v2079 = vpop.permute.xlu0 %2078
    %2080 = vrot.lane.b32.xlu0 %v2073, 19
    %v2081 = vpop.permute.xlu0 %2080
    %v2082 = vsel %vm1503, %v2079, %v2081
    %v2083 = vsel %vm1503, %v2077, %v2079
    %v2084 = vsel %vm1503, %v2081, %v2077
    %2085 = vst [vmem:[#allocation4 + $0x18] sm:$0xff] %v2084
    %2086 = vst [vmem:[#allocation4 + $0x20] sm:$0xff] %v2083
    %2087 = vst [vmem:[#allocation4 + $0x28] sm:$0xff] %v2082
    %2088 = vrot.lane.b32.xlu0 %v2002, 18
    %v2089 = vpop.permute.xlu0 %2088
    %2090 = vrot.lane.b32.xlu0 %v2004, 18
    %v2091 = vpop.permute.xlu0 %2090
    %2092 = vrot.lane.b32.xlu0 %v2073, 18
    %v2093 = vpop.permute.xlu0 %2092
    %v2094 = vsel %vm1528, %v2091, %v2093
    %v2095 = vsel %vm1528, %v2089, %v2091
    %v2096 = vsel %vm1528, %v2093, %v2089
    %2097 = vst [vmem:[#allocation4 + $0xb8] sm:$0xff] %v2096
    %2098 = vst [vmem:[#allocation4 + $0xc0] sm:$0xff] %v2095
    %2099 = vst [vmem:[#allocation4 + $0xc8] sm:$0xff] %v2094
    %2100 = vrot.lane.b32.xlu0 %v2002, 17
    %v2101 = vpop.permute.xlu0 %2100
    %2102 = vrot.lane.b32.xlu0 %v2004, 17
    %v2103 = vpop.permute.xlu0 %2102
    %2104 = vrot.lane.b32.xlu0 %v2073, 17
    %v2105 = vpop.permute.xlu0 %2104
    %v2106 = vsel %vm1553, %v2103, %v2105
    %v2107 = vsel %vm1553, %v2101, %v2103
    %v2108 = vsel %vm1553, %v2105, %v2101
    %2109 = vst [vmem:[#allocation4 + $0x158] sm:$0xff] %v2108
    %2110 = vst [vmem:[#allocation4 + $0x160] sm:$0xff] %v2107
    %2111 = vst [vmem:[#allocation4 + $0x168] sm:$0xff] %v2106
    %2112 = vrot.lane.b32.xlu0 %v2002, 1
    %v2113 = vpop.permute.xlu0 %2112
    %2114 = vrot.lane.b32.xlu0 %v2004, 1
    %v2115 = vpop.permute.xlu0 %2114
    %2116 = vrot.lane.b32.xlu0 %v2073, 1
    %v2117 = vpop.permute.xlu0 %2116
    %v2118 = vsel %vm294, %v2115, %v2117
    %v2119 = vsel %vm294, %v2113, %v2115
    %v2120 = vsel %vm294, %v2117, %v2113
    %2121 = vst [vmem:[#allocation4 + $0x1f8] sm:$0xff] %v2120
    %2122 = vst [vmem:[#allocation4 + $0x200] sm:$0xff] %v2119
    %2123 = vst [vmem:[#allocation4 + $0x208] sm:$0xff] %v2118
    %2124 = vst [vmem:[#allocation4 + $0x298] sm:$0xff] %v2002
    %2125 = vst [vmem:[#allocation4 + $0x2a0] sm:$0xff] %v2004
    %2126 = vst [vmem:[#allocation4 + $0x2a8] sm:$0xff] %v2073
    %2127 = vrot.lane.b32.xlu0 %v2002, 127
    %v2128 = vpop.permute.xlu0 %2127
    %2129 = vrot.lane.b32.xlu0 %v2004, 127
    %v2130 = vpop.permute.xlu0 %2129
    %2131 = vrot.lane.b32.xlu0 %v2073, 127
    %v2132 = vpop.permute.xlu0 %2131
    %v2133 = vsel %vm315, %v2130, %v2132
    %v2134 = vsel %vm315, %v2128, %v2130
    %v2135 = vsel %vm315, %v2132, %v2128
    %2136 = vst [vmem:[#allocation4 + $0x338] sm:$0xff] %v2134
    %2137 = vst [vmem:[#allocation4 + $0x340] sm:$0xff] %v2133
    %2138 = vst [vmem:[#allocation4 + $0x348] sm:$0xff] %v2135
    %2139 = vrot.lane.b32.xlu0 %v2002, 111
    %v2140 = vpop.permute.xlu0 %2139
    %2141 = vrot.lane.b32.xlu0 %v2004, 111
    %v2142 = vpop.permute.xlu0 %2141
    %2143 = vrot.lane.b32.xlu0 %v2073, 111
    %v2144 = vpop.permute.xlu0 %2143
    %v2145 = vsel %vm1632, %v2142, %v2144
    %v2146 = vsel %vm1632, %v2140, %v2142
    %v2147 = vsel %vm1632, %v2144, %v2140
    %2148 = vst [vmem:[#allocation4 + $0x3d8] sm:$0xff] %v2146
    %2149 = vst [vmem:[#allocation4 + $0x3e0] sm:$0xff] %v2145
    %2150 = vst [vmem:[#allocation4 + $0x3e8] sm:$0xff] %v2147
    %2151 = vrot.lane.b32.xlu0 %v2002, 110
    %v2152 = vpop.permute.xlu0 %2151
    %2153 = vrot.lane.b32.xlu0 %v2004, 110
    %v2154 = vpop.permute.xlu0 %2153
    %2155 = vrot.lane.b32.xlu0 %v2073, 110
    %v2156 = vpop.permute.xlu0 %2155
    %v2157 = vsel %vm1657, %v2154, %v2156
    %v2158 = vsel %vm1657, %v2152, %v2154
    %v2159 = vsel %vm1657, %v2156, %v2152
    %2160 = vst [vmem:[#allocation4 + $0x478] sm:$0xff] %v2158
    %2161 = vst [vmem:[#allocation4 + $0x480] sm:$0xff] %v2157
    %2162 = vst [vmem:[#allocation4 + $0x488] sm:$0xff] %v2159
    %2163 = vrot.lane.b32.xlu0 %v2002, 109
    %v2164 = vpop.permute.xlu0 %2163
    %2165 = vrot.lane.b32.xlu0 %v2004, 109
    %v2166 = vpop.permute.xlu0 %2165
    %2167 = vrot.lane.b32.xlu0 %v2073, 109
    %v2168 = vpop.permute.xlu0 %2167
    %v2169 = vsel %vm1682, %v2166, %v2168
    %v2170 = vsel %vm1682, %v2164, %v2166
    %v2171 = vsel %vm1682, %v2168, %v2164
    %2172 = vst [vmem:[#allocation4 + $0x518] sm:$0xff] %v2170
    %2173 = vst [vmem:[#allocation4 + $0x520] sm:$0xff] %v2169
    %2174 = vst [vmem:[#allocation4 + $0x528] sm:$0xff] %v2171
    %v2175 = vunpack.c.l.bf16 %v1440
    %v2176 = vunpack.c.h.bf16 %v1440
    %v2177 = vld [vmem:[#allocation4] sm:$0xff]
    %v2178 = vld [vmem:[#allocation4 + $0x8] sm:$0xff]
    %v2179 = vld [vmem:[#allocation4 + $0x10] sm:$0xff]
    %v2180 = vld [vmem:[#allocation4 + $0x18] sm:$0xff]
    %v2181 = vld [vmem:[#allocation4 + $0x20] sm:$0xff]
    %v2182 = vld [vmem:[#allocation4 + $0x28] sm:$0xff]
    %v2183 = vld [vmem:[#allocation4 + $0xa0] sm:$0xff]
    %v2184 = vld [vmem:[#allocation4 + $0xa8] sm:$0xff]
    %v2185 = vld [vmem:[#allocation4 + $0xb0] sm:$0xff]
    %v2186 = vld [vmem:[#allocation4 + $0xb8] sm:$0xff]
    %v2187 = vld [vmem:[#allocation4 + $0xc0] sm:$0xff]
    %v2188 = vld [vmem:[#allocation4 + $0xc8] sm:$0xff]
    %v2189 = vld [vmem:[#allocation4 + $0x140] sm:$0xff]
    %v2190 = vld [vmem:[#allocation4 + $0x148] sm:$0xff]
    %v2191 = vld [vmem:[#allocation4 + $0x150] sm:$0xff]
    %v2192 = vld [vmem:[#allocation4 + $0x158] sm:$0xff]
    %v2193 = vld [vmem:[#allocation4 + $0x160] sm:$0xff]
    %v2194 = vld [vmem:[#allocation4 + $0x168] sm:$0xff]
    %v2195 = vld [vmem:[#allocation4 + $0x1e0] sm:$0xff]
    %v2196 = vld [vmem:[#allocation4 + $0x1e8] sm:$0xff]
    %v2197 = vld [vmem:[#allocation4 + $0x1f0] sm:$0xff]
    %v2198 = vld [vmem:[#allocation4 + $0x1f8] sm:$0xff]
    %v2199 = vld [vmem:[#allocation4 + $0x200] sm:$0xff]
    %v2200 = vld [vmem:[#allocation4 + $0x208] sm:$0xff]
    %v2201 = vld [vmem:[#allocation4 + $0x280] sm:$0xff]
    %v2202 = vld [vmem:[#allocation4 + $0x288] sm:$0xff]
    %v2203 = vld [vmem:[#allocation4 + $0x290] sm:$0xff]
    %v2204 = vld [vmem:[#allocation4 + $0x298] sm:$0xff]
    %v2205 = vld [vmem:[#allocation4 + $0x2a0] sm:$0xff]
    %v2206 = vld [vmem:[#allocation4 + $0x2a8] sm:$0xff]
    %v2207 = vld [vmem:[#allocation4 + $0x320] sm:$0xff]
    %v2208 = vld [vmem:[#allocation4 + $0x328] sm:$0xff]
    %v2209 = vld [vmem:[#allocation4 + $0x330] sm:$0xff]
    %v2210 = vld [vmem:[#allocation4 + $0x338] sm:$0xff]
    %v2211 = vld [vmem:[#allocation4 + $0x340] sm:$0xff]
    %v2212 = vld [vmem:[#allocation4 + $0x348] sm:$0xff]
    %v2213 = vld [vmem:[#allocation4 + $0x3c0] sm:$0xff]
    %v2214 = vld [vmem:[#allocation4 + $0x3c8] sm:$0xff]
    %v2215 = vld [vmem:[#allocation4 + $0x3d0] sm:$0xff]
    %v2216 = vld [vmem:[#allocation4 + $0x3d8] sm:$0xff]
    %v2217 = vld [vmem:[#allocation4 + $0x3e0] sm:$0xff]
    %v2218 = vld [vmem:[#allocation4 + $0x3e8] sm:$0xff]
    %v2219 = vld [vmem:[#allocation4 + $0x460] sm:$0xff]
    %v2220 = vld [vmem:[#allocation4 + $0x468] sm:$0xff]
    %v2221 = vld [vmem:[#allocation4 + $0x470] sm:$0xff]
    %v2222 = vld [vmem:[#allocation4 + $0x478] sm:$0xff]
    %v2223 = vld [vmem:[#allocation4 + $0x480] sm:$0xff]
    %v2224 = vld [vmem:[#allocation4 + $0x488] sm:$0xff]
    %v2225 = vld [vmem:[#allocation4 + $0x500] sm:$0xff]
    %v2226 = vld [vmem:[#allocation4 + $0x508] sm:$0xff]
    %v2227 = vld [vmem:[#allocation4 + $0x510] sm:$0xff]
    %v2228 = vld [vmem:[#allocation4 + $0x518] sm:$0xff]
    %v2229 = vld [vmem:[#allocation4 + $0x520] sm:$0xff]
    %v2230 = vld [vmem:[#allocation4 + $0x528] sm:$0xff]
    %v2231 = vld [vmem:[#allocation4 + $0x5a0] sm:$0xff]
    %v2232 = vld [vmem:[#allocation4 + $0x5a8] sm:$0xff]
    %v2233 = vld [vmem:[#allocation4 + $0x5b0] sm:$0xff]
    %v2234 = vld [vmem:[#allocation4 + $0x5b8] sm:$0xff]
    %v2235 = vld [vmem:[#allocation4 + $0x5c0] sm:$0xff]
    %v2236 = vld [vmem:[#allocation4 + $0x5c8] sm:$0xff]
    %v2237 = vld [vmem:[#allocation4 + $0x640] sm:$0xff]
    %v2238 = vld [vmem:[#allocation4 + $0x648] sm:$0xff]
    %v2239 = vld [vmem:[#allocation4 + $0x650] sm:$0xff]
    %v2240 = vld [vmem:[#allocation4 + $0x658] sm:$0xff]
    %v2241 = vld [vmem:[#allocation4 + $0x660] sm:$0xff]
    %v2242 = vld [vmem:[#allocation4 + $0x668] sm:$0xff]
    %v2243 = vld [vmem:[#allocation4 + $0x6e0] sm:$0xff]
    %v2244 = vld [vmem:[#allocation4 + $0x6e8] sm:$0xff]
    %v2245 = vld [vmem:[#allocation4 + $0x6f0] sm:$0xff]
    %v2246 = vld [vmem:[#allocation4 + $0x6f8] sm:$0xff]
    %v2247 = vld [vmem:[#allocation4 + $0x700] sm:$0xff]
    %v2248 = vld [vmem:[#allocation4 + $0x708] sm:$0xff]
    %v2249 = vld [vmem:[#allocation4 + $0x780] sm:$0xff]
    %v2250 = vld [vmem:[#allocation4 + $0x788] sm:$0xff]
    %v2251 = vld [vmem:[#allocation4 + $0x790] sm:$0xff]
    %v2252 = vld [vmem:[#allocation4 + $0x798] sm:$0xff]
    %v2253 = vld [vmem:[#allocation4 + $0x7a0] sm:$0xff]
    %v2254 = vld [vmem:[#allocation4 + $0x7a8] sm:$0xff]
    %v2255 = vld [vmem:[#allocation4 + $0x820] sm:$0xff]
    %v2256 = vld [vmem:[#allocation4 + $0x828] sm:$0xff]
    %v2257 = vld [vmem:[#allocation4 + $0x830] sm:$0xff]
    %v2258 = vld [vmem:[#allocation4 + $0x838] sm:$0xff]
    %v2259 = vld [vmem:[#allocation4 + $0x840] sm:$0xff]
    %v2260 = vld [vmem:[#allocation4 + $0x848] sm:$0xff]
    %v2261 = vld [vmem:[#allocation4 + $0x8c0] sm:$0xff]
    %v2262 = vld [vmem:[#allocation4 + $0x8c8] sm:$0xff]
    %v2263 = vld [vmem:[#allocation4 + $0x8d0] sm:$0xff]
    %v2264 = vld [vmem:[#allocation4 + $0x8d8] sm:$0xff]
    %v2265 = vld [vmem:[#allocation4 + $0x8e0] sm:$0xff]
    %v2266 = vld [vmem:[#allocation4 + $0x8e8] sm:$0xff]
    %v2267 = vld [vmem:[#allocation4 + $0x960] sm:$0xff]
    %v2268 = vld [vmem:[#allocation4 + $0x968] sm:$0xff]
    %v2269 = vld [vmem:[#allocation4 + $0x970] sm:$0xff]
    %v2270 = vld [vmem:[#allocation4 + $0x978] sm:$0xff]
    %v2271 = vld [vmem:[#allocation4 + $0x980] sm:$0xff]
    %v2272 = vld [vmem:[#allocation4 + $0x988] sm:$0xff]
    %v2273 = vld [vmem:[#allocation4 + $0xa00] sm:$0xff]
    %v2274 = vld [vmem:[#allocation4 + $0xa08] sm:$0xff]
    %v2275 = vld [vmem:[#allocation4 + $0xa10] sm:$0xff]
    %v2276 = vld [vmem:[#allocation4 + $0xa18] sm:$0xff]
    %v2277 = vld [vmem:[#allocation4 + $0xa20] sm:$0xff]
    %v2278 = vld [vmem:[#allocation4 + $0xa28] sm:$0xff]
    %v2279 = vld [vmem:[#allocation4 + $0xaa0] sm:$0xff]
    %v2280 = vld [vmem:[#allocation4 + $0xaa8] sm:$0xff]
    %v2281 = vld [vmem:[#allocation4 + $0xab0] sm:$0xff]
    %v2282 = vld [vmem:[#allocation4 + $0xab8] sm:$0xff]
    %v2283 = vld [vmem:[#allocation4 + $0xac0] sm:$0xff]
    %v2284 = vld [vmem:[#allocation4 + $0xac8] sm:$0xff]
    %vm2285 = vcmask 130048
    %v2287 = vsel %vm2285, %v2176, 0
    %2289 = vmatprep.subr.mxu0 %v2178
    %2290 = vmatpush1.msra.mxu0 %v2177
    %2291 = vmatprep.subr.mxu0 %v2184
    %2292 = vmatpush1.msra.mxu0 %v2183
    %2293 = vmatprep.subr.mxu0 %v2190
    %2294 = vmatpush1.msra.mxu0 %v2189
    %2295 = vmatprep.subr.mxu0 %v2196
    %2296 = vmatpush1.msra.mxu0 %v2195
    %2297 = vmatprep.subr.mxu0 %v2202
    %2298 = vmatpush1.msra.mxu0 %v2201
    %2299 = vmatprep.subr.mxu0 %v2208
    %2300 = vmatpush1.msra.mxu0 %v2207
    %2301 = vmatprep.subr.mxu0 %v2214
    %2302 = vmatpush1.msra.mxu0 %v2213
    %2303 = vmatprep.subr.mxu0 %v2220
    %2304 = vmatpush1.msra.mxu0 %v2219
    %2305 = vmatprep.subr.mxu0 %v2226
    %2306 = vmatpush1.msra.mxu0 %v2225
    %2307 = vmatprep.subr.mxu0 %v2232
    %2308 = vmatpush1.msra.mxu0 %v2231
    %2309 = vmatprep.subr.mxu0 %v2238
    %2310 = vmatpush1.msra.mxu0 %v2237
    %2311 = vmatprep.subr.mxu0 %v2244
    %2312 = vmatpush1.msra.mxu0 %v2243
    %2313 = vmatprep.subr.mxu0 %v2250
    %2314 = vmatpush1.msra.mxu0 %v2249
    %2315 = vmatprep.subr.mxu0 %v2256
    %2316 = vmatpush1.msra.mxu0 %v2255
    %2317 = vmatprep.subr.mxu0 %v2262
    %2318 = vmatpush1.msra.mxu0 %v2261
    %2319 = vmatprep.subr.mxu0 %v2268
    %2320 = vmatpush1.msra.mxu0 %v2267
    %2321 = vmatprep.subr.mxu0 %v2274
    %2322 = vmatpush1.msra.mxu0 %v2273
    %2323 = vmatprep.subr.mxu0 %v2280
    %2324 = vmatpush1.msra.mxu0 %v2279
    %2325 = vmatprep.subr.mxu0 0.0
    %2326 = vmatpush1.msra.mxu0 0.0
    %2327 = vmatprep.subr.mxu0 0.0
    %2328 = vmatpush1.msra.mxu0 0.0
    %2329 = vmatprep.subr.mxu0 0.0
    %2330 = vmatpush1.msra.mxu0 0.0
    %2331 = vmatprep.subr.mxu0 0.0
    %2332 = vmatpush1.msra.mxu0 0.0
    %2333 = vmatprep.subr.mxu0 0.0
    %2334 = vmatpush1.msra.mxu0 0.0
    %2335 = vmatprep.subr.mxu0 0.0
    %2336 = vmatpush1.msra.mxu0 0.0
    %2337 = vmatprep.subr.mxu0 0.0
    %2338 = vmatpush1.msra.mxu0 0.0
    %2339 = vmatprep.subr.mxu0 0.0
    %2340 = vmatpush1.msra.mxu0 0.0
    %2341 = vmatprep.subr.mxu0 0.0
    %2342 = vmatpush1.msra.mxu0 0.0
    %2343 = vmatprep.subr.mxu0 0.0
    %2344 = vmatpush1.msra.mxu0 0.0
    %2345 = vmatprep.subr.mxu0 0.0
    %2346 = vmatpush1.msra.mxu0 0.0
    %2347 = vmatprep.subr.mxu0 0.0
    %2348 = vmatpush1.msra.mxu0 0.0
    %2349 = vmatprep.subr.mxu0 0.0
    %2350 = vmatpush1.msra.mxu0 0.0
    %2351 = vmatprep.subr.mxu0 0.0
    %2352 = vmatpush1.msra.mxu0 0.0
    %2353 = vmatprep.mubr.f32.mxu0 %v2287
    %2354 = vmatmul.mubr.f32.gmra.mrb[0].mxu0 %v2175
    %v2355 = vpop.f32.mrb[0].mxu0
    %v2356 = vadd.f32 0.0, %v2355
    %v2357 = vpop.f32.mrb[0].mxu0
    %v2358 = vadd.f32 0.0, %v2357
    %2359 = vdwg.mxu0
    %2360 = vmatprep.subr.mxu0 %v2180
    %2361 = vmatpush1.msra.mxu0 %v2179
    %2362 = vmatprep.subr.mxu0 %v2186
    %2363 = vmatpush1.msra.mxu0 %v2185
    %2364 = vmatprep.subr.mxu0 %v2192
    %2365 = vmatpush1.msra.mxu0 %v2191
    %2366 = vmatprep.subr.mxu0 %v2198
    %2367 = vmatpush1.msra.mxu0 %v2197
    %2368 = vmatprep.subr.mxu0 %v2204
    %2369 = vmatpush1.msra.mxu0 %v2203
    %2370 = vmatprep.subr.mxu0 %v2210
    %2371 = vmatpush1.msra.mxu0 %v2209
    %2372 = vmatprep.subr.mxu0 %v2216
    %2373 = vmatpush1.msra.mxu0 %v2215
    %2374 = vmatprep.subr.mxu0 %v2222
    %2375 = vmatpush1.msra.mxu0 %v2221
    %2376 = vmatprep.subr.mxu0 %v2228
    %2377 = vmatpush1.msra.mxu0 %v2227
    %2378 = vmatprep.subr.mxu0 %v2234
    %2379 = vmatpush1.msra.mxu0 %v2233
    %2380 = vmatprep.subr.mxu0 %v2240
    %2381 = vmatpush1.msra.mxu0 %v2239
    %2382 = vmatprep.subr.mxu0 %v2246
    %2383 = vmatpush1.msra.mxu0 %v2245
    %2384 = vmatprep.subr.mxu0 %v2252
    %2385 = vmatpush1.msra.mxu0 %v2251
    %2386 = vmatprep.subr.mxu0 %v2258
    %2387 = vmatpush1.msra.mxu0 %v2257
    %2388 = vmatprep.subr.mxu0 %v2264
    %2389 = vmatpush1.msra.mxu0 %v2263
    %2390 = vmatprep.subr.mxu0 %v2270
    %2391 = vmatpush1.msra.mxu0 %v2269
    %2392 = vmatprep.subr.mxu0 %v2276
    %2393 = vmatpush1.msra.mxu0 %v2275
    %2394 = vmatprep.subr.mxu0 %v2282
    %2395 = vmatpush1.msra.mxu0 %v2281
    %2396 = vmatprep.subr.mxu0 0.0
    %2397 = vmatpush1.msra.mxu0 0.0
    %2398 = vmatprep.subr.mxu0 0.0
    %2399 = vmatpush1.msra.mxu0 0.0
    %2400 = vmatprep.subr.mxu0 0.0
    %2401 = vmatpush1.msra.mxu0 0.0
    %2402 = vmatprep.subr.mxu0 0.0
    %2403 = vmatpush1.msra.mxu0 0.0
    %2404 = vmatprep.subr.mxu0 0.0
    %2405 = vmatpush1.msra.mxu0 0.0
    %2406 = vmatprep.subr.mxu0 0.0
    %2407 = vmatpush1.msra.mxu0 0.0
    %2408 = vmatprep.subr.mxu0 0.0
    %2409 = vmatpush1.msra.mxu0 0.0
    %2410 = vmatprep.subr.mxu0 0.0
    %2411 = vmatpush1.msra.mxu0 0.0
    %2412 = vmatprep.subr.mxu0 0.0
    %2413 = vmatpush1.msra.mxu0 0.0
    %2414 = vmatprep.subr.mxu0 0.0
    %2415 = vmatpush1.msra.mxu0 0.0
    %2416 = vmatprep.subr.mxu0 0.0
    %2417 = vmatpush1.msra.mxu0 0.0
    %2418 = vmatprep.subr.mxu0 0.0
    %2419 = vmatpush1.msra.mxu0 0.0
    %2420 = vmatprep.subr.mxu0 0.0
    %2421 = vmatpush1.msra.mxu0 0.0
    %2422 = vmatprep.subr.mxu0 0.0
    %2423 = vmatpush1.msra.mxu0 0.0
    %2424 = vmatprep.mubr.f32.mxu0 %v2287
    %2425 = vmatmul.mubr.f32.gmra.mrb[0].mxu0 %v2175
    %v2426 = vpop.f32.mrb[0].mxu0
    %v2427 = vadd.f32 0.0, %v2426
    %v2428 = vpop.f32.mrb[0].mxu0
    %v2429 = vadd.f32 0.0, %v2428
    %2430 = vdwg.mxu0
    %2431 = vmatprep.subr.mxu0 %v2182
    %2432 = vmatpush1.msra.mxu0 %v2181
    %2433 = vmatprep.subr.mxu0 %v2188
    %2434 = vmatpush1.msra.mxu0 %v2187
    %2435 = vmatprep.subr.mxu0 %v2194
    %2436 = vmatpush1.msra.mxu0 %v2193
    %2437 = vmatprep.subr.mxu0 %v2200
    %2438 = vmatpush1.msra.mxu0 %v2199
    %2439 = vmatprep.subr.mxu0 %v2206
    %2440 = vmatpush1.msra.mxu0 %v2205
    %2441 = vmatprep.subr.mxu0 %v2212
    %2442 = vmatpush1.msra.mxu0 %v2211
    %2443 = vmatprep.subr.mxu0 %v2218
    %2444 = vmatpush1.msra.mxu0 %v2217
    %2445 = vmatprep.subr.mxu0 %v2224
    %2446 = vmatpush1.msra.mxu0 %v2223
    %2447 = vmatprep.subr.mxu0 %v2230
    %2448 = vmatpush1.msra.mxu0 %v2229
    %2449 = vmatprep.subr.mxu0 %v2236
    %2450 = vmatpush1.msra.mxu0 %v2235
    %2451 = vmatprep.subr.mxu0 %v2242
    %2452 = vmatpush1.msra.mxu0 %v2241
    %2453 = vmatprep.subr.mxu0 %v2248
    %2454 = vmatpush1.msra.mxu0 %v2247
    %2455 = vmatprep.subr.mxu0 %v2254
    %2456 = vmatpush1.msra.mxu0 %v2253
    %2457 = vmatprep.subr.mxu0 %v2260
    %2458 = vmatpush1.msra.mxu0 %v2259
    %2459 = vmatprep.subr.mxu0 %v2266
    %2460 = vmatpush1.msra.mxu0 %v2265
    %2461 = vmatprep.subr.mxu0 %v2272
    %2462 = vmatpush1.msra.mxu0 %v2271
    %2463 = vmatprep.subr.mxu0 %v2278
    %2464 = vmatpush1.msra.mxu0 %v2277
    %2465 = vmatprep.subr.mxu0 %v2284
    %2466 = vmatpush1.msra.mxu0 %v2283
    %2467 = vmatprep.subr.mxu0 0.0
    %2468 = vmatpush1.msra.mxu0 0.0
    %2469 = vmatprep.subr.mxu0 0.0
    %2470 = vmatpush1.msra.mxu0 0.0
    %2471 = vmatprep.subr.mxu0 0.0
    %2472 = vmatpush1.msra.mxu0 0.0
    %2473 = vmatprep.subr.mxu0 0.0
    %2474 = vmatpush1.msra.mxu0 0.0
    %2475 = vmatprep.subr.mxu0 0.0
    %2476 = vmatpush1.msra.mxu0 0.0
    %2477 = vmatprep.subr.mxu0 0.0
    %2478 = vmatpush1.msra.mxu0 0.0
    %2479 = vmatprep.subr.mxu0 0.0
    %2480 = vmatpush1.msra.mxu0 0.0
    %2481 = vmatprep.subr.mxu0 0.0
    %2482 = vmatpush1.msra.mxu0 0.0
    %2483 = vmatprep.subr.mxu0 0.0
    %2484 = vmatpush1.msra.mxu0 0.0
    %2485 = vmatprep.subr.mxu0 0.0
    %2486 = vmatpush1.msra.mxu0 0.0
    %2487 = vmatprep.subr.mxu0 0.0
    %2488 = vmatpush1.msra.mxu0 0.0
    %2489 = vmatprep.subr.mxu0 0.0
    %2490 = vmatpush1.msra.mxu0 0.0
    %2491 = vmatprep.subr.mxu0 0.0
    %2492 = vmatpush1.msra.mxu0 0.0
    %2493 = vmatprep.subr.mxu0 0.0
    %2494 = vmatpush1.msra.mxu0 0.0
    %2495 = vmatprep.mubr.f32.mxu0 %v2287
    %2496 = vmatmul.mubr.f32.gmra.mrb[0].mxu0 %v2175
    %v2497 = vpop.f32.mrb[0].mxu0
    %v2498 = vadd.f32 0.0, %v2497
    %v2499 = vpop.f32.mrb[0].mxu0
    %v2500 = vadd.f32 0.0, %v2499
    %2501 = vdwg.mxu0
    %2503 = vset.pattern.permute.xlu0 0
    %2504 = vperm.xlu0 %2503, %v1441
    %v2505 = vpop.permute.xlu0 %2504
    %v2507 = vmul.f32 %v2356, %v2505
    %v2508 = vmul.f32 %v2358, %v2505
    %v2509 = vmul.f32 %v2427, %v2505
    %v2510 = vmul.f32 %v2429, %v2505
    %v2511 = vmul.f32 %v2498, %v2505
    %v2512 = vmul.f32 %v2500, %v2505
    %2514 = vset.pattern.permute.xlu0 0
    %2515 = vperm.xlu0 %2514, %v1442
    %v2516 = vpop.permute.xlu0 %2515
    %v2518 = vadd.f32 %v2507, %v2516
    %v2519 = vadd.f32 %v2508, %v2516
    %v2520 = vadd.f32 %v2509, %v2516
    %v2521 = vadd.f32 %v2510, %v2516
    %v2522 = vadd.f32 %v2511, %v2516
    %v2523 = vadd.f32 %v2512, %v2516
    %v2524 = vmax.f32 %v2518, 0.0
    %v2525 = vmax.f32 %v2519, 0.0
    %v2526 = vmax.f32 %v2520, 0.0
    %v2527 = vmax.f32 %v2521, 0.0
    %v2528 = vmax.f32 %v2522, 0.0
    %v2529 = vmax.f32 %v2523, 0.0
    %s2530 = smul.u32 4, 48
    %s2531 = smul.u32 %s2530, 10
    %s2532 = sshll.u32 %s2531, 4
    %2533 = dma.done [#allocation3], %s2532
    %v2534 = vld [vmem:[#allocation2] sm:$0xff]
    %v2535 = vld [vmem:[#allocation2 + $0x8] sm:$0xff]
    %v2536 = vld [vmem:[#allocation2 + $0x10] sm:$0xff]
    %v2537 = vld [vmem:[#allocation2 + $0x18] sm:$0xff]
    %v2538 = vld [vmem:[#allocation2 + $0x20] sm:$0xff]
    %v2539 = vld [vmem:[#allocation2 + $0x28] sm:$0xff]
    %v2540 = vld [vmem:[#allocation2 + $0x30] sm:$0xff]
    %v2541 = vld [vmem:[#allocation2 + $0x38] sm:$0xff]
    %v2542 = vld [vmem:[#allocation2 + $0x40] sm:$0xff]
    %v2543 = vld [vmem:[#allocation2 + $0x48] sm:$0xff]
    %v2544 = vld [vmem:[#allocation2 + $0x50] sm:$0xff]
    %v2545 = vld [vmem:[#allocation2 + $0x58] sm:$0xff]
    %v2546 = vld [vmem:[#allocation2 + $0x60] sm:$0xff]
    %v2547 = vld [vmem:[#allocation2 + $0x68] sm:$0xff]
    %v2548 = vld [vmem:[#allocation2 + $0x70] sm:$0xff]
    %v2549 = vld [vmem:[#allocation2 + $0x78] sm:$0xff]
    %v2550 = vld [vmem:[#allocation2 + $0x80] sm:$0xff]
    %v2551 = vld [vmem:[#allocation2 + $0x88] sm:$0xff]
    %v2552 = vld [vmem:[#allocation2 + $0x90] sm:$0xff]
    %v2553 = vld [vmem:[#allocation2 + $0x98] sm:$0xff]
    %v2554 = vld [vmem:[#allocation2 + $0xa0] sm:$0xff]
    %v2555 = vld [vmem:[#allocation2 + $0xa8] sm:$0xff]
    %v2556 = vld [vmem:[#allocation2 + $0xb0] sm:$0xff]
    %v2557 = vld [vmem:[#allocation2 + $0xb8] sm:$0xff]
    %v2558 = vld [vmem:[#allocation2 + $0xc0] sm:$0xff]
    %v2559 = vld [vmem:[#allocation2 + $0xc8] sm:$0xff]
    %v2560 = vld [vmem:[#allocation2 + $0xd0] sm:$0xff]
    %v2561 = vld [vmem:[#allocation2 + $0xd8] sm:$0xff]
    %v2562 = vld [vmem:[#allocation2 + $0xe0] sm:$0xff]
    %v2563 = vld [vmem:[#allocation2 + $0xe8] sm:$0xff]
    %v2564 = vld [vmem:[#allocation2 + $0xf0] sm:$0xff]
    %v2565 = vld [vmem:[#allocation2 + $0xf8] sm:$0xff]
    %v2566 = vld [vmem:[#allocation2 + $0x100] sm:$0xff]
    %v2567 = vld [vmem:[#allocation2 + $0x108] sm:$0xff]
    %v2568 = vld [vmem:[#allocation2 + $0x110] sm:$0xff]
    %v2569 = vld [vmem:[#allocation2 + $0x118] sm:$0xff]
    %v2570 = vld [vmem:[#allocation2 + $0x120] sm:$0xff]
    %v2571 = vld [vmem:[#allocation2 + $0x128] sm:$0xff]
    %v2572 = vld [vmem:[#allocation2 + $0x130] sm:$0xff]
    %v2573 = vld [vmem:[#allocation2 + $0x138] sm:$0xff]
    %v2574 = vld [vmem:[#allocation2 + $0x140] sm:$0xff]
    %v2575 = vld [vmem:[#allocation2 + $0x148] sm:$0xff]
    %v2576 = vld [vmem:[#allocation2 + $0x150] sm:$0xff]
    %v2577 = vld [vmem:[#allocation2 + $0x158] sm:$0xff]
    %v2578 = vld [vmem:[#allocation2 + $0x160] sm:$0xff]
    %v2579 = vld [vmem:[#allocation2 + $0x168] sm:$0xff]
    %v2580 = vld [vmem:[#allocation2 + $0x170] sm:$0xff]
    %v2581 = vld [vmem:[#allocation2 + $0x178] sm:$0xff]
    %v2582 = vld [vmem:[#allocation2 + $0x180] sm:$0xff]
    %v2583 = vld [vmem:[#allocation2 + $0x188] sm:$0xff]
    %v2584 = vld [vmem:[#allocation2 + $0x190] sm:$0xff]
    %v2585 = vld [vmem:[#allocation2 + $0x198] sm:$0xff]
    %v2586 = vld [vmem:[#allocation2 + $0x1a0] sm:$0xff]
    %v2587 = vld [vmem:[#allocation2 + $0x1a8] sm:$0xff]
    %v2588 = vld [vmem:[#allocation2 + $0x1b0] sm:$0xff]
    %v2589 = vld [vmem:[#allocation2 + $0x1b8] sm:$0xff]
    %v2590 = vld [vmem:[#allocation2 + $0x1c0] sm:$0xff]
    %v2591 = vld [vmem:[#allocation2 + $0x1c8] sm:$0xff]
    %v2592 = vld [vmem:[#allocation2 + $0x1d0] sm:$0xff]
    %v2593 = vld [vmem:[#allocation2 + $0x1d8] sm:$0xff]
    %v2594 = vld [vmem:[#allocation2 + $0x1e0] sm:$0xff]
    %v2595 = vld [vmem:[#allocation2 + $0x1e8] sm:$0xff]
    %v2596 = vld [vmem:[#allocation2 + $0x1f0] sm:$0xff]
    %v2597 = vld [vmem:[#allocation2 + $0x1f8] sm:$0xff]
    %v2598 = vld [vmem:[#allocation2 + $0x200] sm:$0xff]
    %v2599 = vld [vmem:[#allocation2 + $0x208] sm:$0xff]
    %v2600 = vld [vmem:[#allocation2 + $0x210] sm:$0xff]
    %v2601 = vld [vmem:[#allocation2 + $0x218] sm:$0xff]
    %v2602 = vld [vmem:[#allocation2 + $0x220] sm:$0xff]
    %v2603 = vld [vmem:[#allocation2 + $0x228] sm:$0xff]
    %v2604 = vld [vmem:[#allocation2 + $0x230] sm:$0xff]
    %v2605 = vld [vmem:[#allocation2 + $0x238] sm:$0xff]
    %v2606 = vld [vmem:[#allocation2 + $0x240] sm:$0xff]
    %v2607 = vld [vmem:[#allocation2 + $0x248] sm:$0xff]
    %v2608 = vld [vmem:[#allocation2 + $0x250] sm:$0xff]
    %v2609 = vld [vmem:[#allocation2 + $0x258] sm:$0xff]
    %v2610 = vld [vmem:[#allocation2 + $0x260] sm:$0xff]
    %v2611 = vld [vmem:[#allocation2 + $0x268] sm:$0xff]
    %v2612 = vld [vmem:[#allocation2 + $0x270] sm:$0xff]
    %v2613 = vld [vmem:[#allocation2 + $0x278] sm:$0xff]
    %v2614 = vld [vmem:[#allocation2 + $0x280] sm:$0xff]
    %v2615 = vld [vmem:[#allocation2 + $0x288] sm:$0xff]
    %v2616 = vld [vmem:[#allocation2 + $0x290] sm:$0xff]
    %v2617 = vld [vmem:[#allocation2 + $0x298] sm:$0xff]
    %v2618 = vld [vmem:[#allocation2 + $0x2a0] sm:$0xff]
    %v2619 = vld [vmem:[#allocation2 + $0x2a8] sm:$0xff]
    %v2620 = vld [vmem:[#allocation2 + $0x2b0] sm:$0xff]
    %v2621 = vld [vmem:[#allocation2 + $0x2b8] sm:$0xff]
    %v2622 = vld [vmem:[#allocation2 + $0x2c0] sm:$0xff]
    %v2623 = vld [vmem:[#allocation2 + $0x2c8] sm:$0xff]
    %v2624 = vld [vmem:[#allocation2 + $0x2d0] sm:$0xff]
    %v2625 = vld [vmem:[#allocation2 + $0x2d8] sm:$0xff]
    %v2626 = vld [vmem:[#allocation2 + $0x2e0] sm:$0xff]
    %v2627 = vld [vmem:[#allocation2 + $0x2e8] sm:$0xff]
    %v2628 = vld [vmem:[#allocation2 + $0x2f0] sm:$0xff]
    %v2629 = vld [vmem:[#allocation2 + $0x2f8] sm:$0xff]
    %v2630 = vld [vmem:[#allocation2 + $0x300] sm:$0xff]
    %v2631 = vld [vmem:[#allocation2 + $0x308] sm:$0xff]
    %v2632 = vld [vmem:[#allocation2 + $0x310] sm:$0xff]
    %v2633 = vld [vmem:[#allocation2 + $0x318] sm:$0xff]
    %v2634 = vld [vmem:[#allocation2 + $0x320] sm:$0xff]
    %v2635 = vld [vmem:[#allocation2 + $0x328] sm:$0xff]
    %v2636 = vld [vmem:[#allocation2 + $0x330] sm:$0xff]
    %v2637 = vld [vmem:[#allocation2 + $0x338] sm:$0xff]
    %v2638 = vld [vmem:[#allocation2 + $0x340] sm:$0xff]
    %v2639 = vld [vmem:[#allocation2 + $0x348] sm:$0xff]
    %v2640 = vld [vmem:[#allocation2 + $0x350] sm:$0xff]
    %v2641 = vld [vmem:[#allocation2 + $0x358] sm:$0xff]
    %v2642 = vld [vmem:[#allocation2 + $0x360] sm:$0xff]
    %v2643 = vld [vmem:[#allocation2 + $0x368] sm:$0xff]
    %v2644 = vld [vmem:[#allocation2 + $0x370] sm:$0xff]
    %v2645 = vld [vmem:[#allocation2 + $0x378] sm:$0xff]
    %v2646 = vld [vmem:[#allocation2 + $0x380] sm:$0xff]
    %v2647 = vld [vmem:[#allocation2 + $0x388] sm:$0xff]
    %v2648 = vld [vmem:[#allocation2 + $0x390] sm:$0xff]
    %v2649 = vld [vmem:[#allocation2 + $0x398] sm:$0xff]
    %v2650 = vld [vmem:[#allocation2 + $0x3a0] sm:$0xff]
    %v2651 = vld [vmem:[#allocation2 + $0x3a8] sm:$0xff]
    %v2652 = vld [vmem:[#allocation2 + $0x3b0] sm:$0xff]
    %v2653 = vld [vmem:[#allocation2 + $0x3b8] sm:$0xff]
    %v2654 = vld [vmem:[#allocation2 + $0x3c0] sm:$0xff]
    %v2655 = vld [vmem:[#allocation2 + $0x3c8] sm:$0xff]
    %v2656 = vld [vmem:[#allocation2 + $0x3d0] sm:$0xff]
    %v2657 = vld [vmem:[#allocation2 + $0x3d8] sm:$0xff]
    %v2658 = vld [vmem:[#allocation2 + $0x3e0] sm:$0xff]
    %v2659 = vld [vmem:[#allocation2 + $0x3e8] sm:$0xff]
    %v2660 = vld [vmem:[#allocation2 + $0x3f0] sm:$0xff]
    %v2661 = vld [vmem:[#allocation2 + $0x3f8] sm:$0xff]
    %v2662 = vld [vmem:[#allocation2 + $0x400] sm:$0xff]
    %v2663 = vld [vmem:[#allocation2 + $0x408] sm:$0xff]
    %v2664 = vld [vmem:[#allocation2 + $0x410] sm:$0xff]
    %v2665 = vld [vmem:[#allocation2 + $0x418] sm:$0xff]
    %v2666 = vld [vmem:[#allocation2 + $0x420] sm:$0xff]
    %v2667 = vld [vmem:[#allocation2 + $0x428] sm:$0xff]
    %v2668 = vld [vmem:[#allocation2 + $0x430] sm:$0xff]
    %v2669 = vld [vmem:[#allocation2 + $0x438] sm:$0xff]
    %v2670 = vld [vmem:[#allocation2 + $0x440] sm:$0xff]
    %v2671 = vld [vmem:[#allocation2 + $0x448] sm:$0xff]
    %v2672 = vld [vmem:[#allocation2 + $0x450] sm:$0xff]
    %v2673 = vld [vmem:[#allocation2 + $0x458] sm:$0xff]
    %v2674 = vld [vmem:[#allocation2 + $0x460] sm:$0xff]
    %v2675 = vld [vmem:[#allocation2 + $0x468] sm:$0xff]
    %v2676 = vld [vmem:[#allocation2 + $0x470] sm:$0xff]
    %v2677 = vld [vmem:[#allocation2 + $0x478] sm:$0xff]
    %v2678 = vld [vmem:[#allocation2 + $0x480] sm:$0xff]
    %v2679 = vld [vmem:[#allocation2 + $0x488] sm:$0xff]
    %v2680 = vld [vmem:[#allocation2 + $0x490] sm:$0xff]
    %v2681 = vld [vmem:[#allocation2 + $0x498] sm:$0xff]
    %v2682 = vld [vmem:[#allocation2 + $0x4a0] sm:$0xff]
    %v2683 = vld [vmem:[#allocation2 + $0x4a8] sm:$0xff]
    %v2684 = vld [vmem:[#allocation2 + $0x4b0] sm:$0xff]
    %v2685 = vld [vmem:[#allocation2 + $0x4b8] sm:$0xff]
    %v2686 = vld [vmem:[#allocation2 + $0x4c0] sm:$0xff]
    %v2687 = vld [vmem:[#allocation2 + $0x4c8] sm:$0xff]
    %v2688 = vld [vmem:[#allocation2 + $0x4d0] sm:$0xff]
    %v2689 = vld [vmem:[#allocation2 + $0x4d8] sm:$0xff]
    %v2690 = vld [vmem:[#allocation2 + $0x4e0] sm:$0xff]
    %v2691 = vld [vmem:[#allocation2 + $0x4e8] sm:$0xff]
    %v2692 = vld [vmem:[#allocation2 + $0x4f0] sm:$0xff]
    %v2693 = vld [vmem:[#allocation2 + $0x4f8] sm:$0xff]
    %v2694 = vld [vmem:[#allocation2 + $0x500] sm:$0xff]
    %v2695 = vld [vmem:[#allocation2 + $0x508] sm:$0xff]
    %v2696 = vld [vmem:[#allocation2 + $0x510] sm:$0xff]
    %v2697 = vld [vmem:[#allocation2 + $0x518] sm:$0xff]
    %v2698 = vld [vmem:[#allocation2 + $0x520] sm:$0xff]
    %v2699 = vld [vmem:[#allocation2 + $0x528] sm:$0xff]
    %v2700 = vld [vmem:[#allocation2 + $0x530] sm:$0xff]
    %v2701 = vld [vmem:[#allocation2 + $0x538] sm:$0xff]
    %v2702 = vld [vmem:[#allocation2 + $0x540] sm:$0xff]
    %v2703 = vld [vmem:[#allocation2 + $0x548] sm:$0xff]
    %v2704 = vld [vmem:[#allocation2 + $0x550] sm:$0xff]
    %v2705 = vld [vmem:[#allocation2 + $0x558] sm:$0xff]
    %v2706 = vld [vmem:[#allocation2 + $0x560] sm:$0xff]
    %v2707 = vld [vmem:[#allocation2 + $0x568] sm:$0xff]
    %v2708 = vld [vmem:[#allocation2 + $0x570] sm:$0xff]
    %v2709 = vld [vmem:[#allocation2 + $0x578] sm:$0xff]
    %v2710 = vld [vmem:[#allocation2 + $0x580] sm:$0xff]
    %v2711 = vld [vmem:[#allocation2 + $0x588] sm:$0xff]
    %v2712 = vld [vmem:[#allocation2 + $0x590] sm:$0xff]
    %v2713 = vld [vmem:[#allocation2 + $0x598] sm:$0xff]
    %v2714 = vld [vmem:[#allocation2 + $0x5a0] sm:$0xff]
    %v2715 = vld [vmem:[#allocation2 + $0x5a8] sm:$0xff]
    %v2716 = vld [vmem:[#allocation2 + $0x5b0] sm:$0xff]
    %v2717 = vld [vmem:[#allocation2 + $0x5b8] sm:$0xff]
    %v2718 = vld [vmem:[#allocation2 + $0x5c0] sm:$0xff]
    %v2719 = vld [vmem:[#allocation2 + $0x5c8] sm:$0xff]
    %v2720 = vld [vmem:[#allocation2 + $0x5d0] sm:$0xff]
    %v2721 = vld [vmem:[#allocation2 + $0x5d8] sm:$0xff]
    %v2722 = vld [vmem:[#allocation2 + $0x5e0] sm:$0xff]
    %v2723 = vld [vmem:[#allocation2 + $0x5e8] sm:$0xff]
    %v2724 = vld [vmem:[#allocation2 + $0x5f0] sm:$0xff]
    %v2725 = vld [vmem:[#allocation2 + $0x5f8] sm:$0xff]
    %v2726 = vld [vmem:[#allocation2 + $0x600] sm:$0xff]
    %v2727 = vld [vmem:[#allocation2 + $0x608] sm:$0xff]
    %v2728 = vld [vmem:[#allocation2 + $0x610] sm:$0xff]
    %v2729 = vld [vmem:[#allocation2 + $0x618] sm:$0xff]
    %v2730 = vld [vmem:[#allocation2 + $0x620] sm:$0xff]
    %v2731 = vld [vmem:[#allocation2 + $0x628] sm:$0xff]
    %v2732 = vld [vmem:[#allocation2 + $0x630] sm:$0xff]
    %v2733 = vld [vmem:[#allocation2 + $0x638] sm:$0xff]
    %v2734 = vld [vmem:[#allocation2 + $0x640] sm:$0xff]
    %v2735 = vld [vmem:[#allocation2 + $0x648] sm:$0xff]
    %v2736 = vld [vmem:[#allocation2 + $0x650] sm:$0xff]
    %v2737 = vld [vmem:[#allocation2 + $0x658] sm:$0xff]
    %v2738 = vld [vmem:[#allocation2 + $0x660] sm:$0xff]
    %v2739 = vld [vmem:[#allocation2 + $0x668] sm:$0xff]
    %v2740 = vld [vmem:[#allocation2 + $0x670] sm:$0xff]
    %v2741 = vld [vmem:[#allocation2 + $0x678] sm:$0xff]
    %v2742 = vld [vmem:[#allocation2 + $0x680] sm:$0xff]
    %v2743 = vld [vmem:[#allocation2 + $0x688] sm:$0xff]
    %v2744 = vld [vmem:[#allocation2 + $0x690] sm:$0xff]
    %v2745 = vld [vmem:[#allocation2 + $0x698] sm:$0xff]
    %v2746 = vld [vmem:[#allocation2 + $0x6a0] sm:$0xff]
    %v2747 = vld [vmem:[#allocation2 + $0x6a8] sm:$0xff]
    %v2748 = vld [vmem:[#allocation2 + $0x6b0] sm:$0xff]
    %v2749 = vld [vmem:[#allocation2 + $0x6b8] sm:$0xff]
    %v2750 = vld [vmem:[#allocation2 + $0x6c0] sm:$0xff]
    %v2751 = vld [vmem:[#allocation2 + $0x6c8] sm:$0xff]
    %v2752 = vld [vmem:[#allocation2 + $0x6d0] sm:$0xff]
    %v2753 = vld [vmem:[#allocation2 + $0x6d8] sm:$0xff]
    %v2754 = vld [vmem:[#allocation2 + $0x6e0] sm:$0xff]
    %v2755 = vld [vmem:[#allocation2 + $0x6e8] sm:$0xff]
    %v2756 = vld [vmem:[#allocation2 + $0x6f0] sm:$0xff]
    %v2757 = vld [vmem:[#allocation2 + $0x6f8] sm:$0xff]
    %v2758 = vld [vmem:[#allocation2 + $0x700] sm:$0xff]
    %v2759 = vld [vmem:[#allocation2 + $0x708] sm:$0xff]
    %v2760 = vld [vmem:[#allocation2 + $0x710] sm:$0xff]
    %v2761 = vld [vmem:[#allocation2 + $0x718] sm:$0xff]
    %v2762 = vld [vmem:[#allocation2 + $0x720] sm:$0xff]
    %v2763 = vld [vmem:[#allocation2 + $0x728] sm:$0xff]
    %v2764 = vld [vmem:[#allocation2 + $0x730] sm:$0xff]
    %v2765 = vld [vmem:[#allocation2 + $0x738] sm:$0xff]
    %v2766 = vld [vmem:[#allocation2 + $0x740] sm:$0xff]
    %v2767 = vld [vmem:[#allocation2 + $0x748] sm:$0xff]
    %v2768 = vld [vmem:[#allocation2 + $0x750] sm:$0xff]
    %v2769 = vld [vmem:[#allocation2 + $0x758] sm:$0xff]
    %v2770 = vld [vmem:[#allocation2 + $0x760] sm:$0xff]
    %v2771 = vld [vmem:[#allocation2 + $0x768] sm:$0xff]
    %v2772 = vld [vmem:[#allocation2 + $0x770] sm:$0xff]
    %v2773 = vld [vmem:[#allocation2 + $0x778] sm:$0xff]
    %v2774 = vld [vmem:[#allocation13] sm:$0xff]
    %v2775 = vld [vmem:[#allocation13 + $0x8] sm:$0xff]
    %v2776 = vld [vmem:[#allocation13 + $0x10] sm:$0xff]
    %v2777 = vld [vmem:[#allocation13 + $0x18] sm:$0xff]
    %v2778 = vld [vmem:[#allocation13 + $0x20] sm:$0xff]
    %v2779 = vld [vmem:[#allocation13 + $0x28] sm:$0xff]
    %v2780 = vld [vmem:[#allocation13 + $0x30] sm:$0xff]
    %v2781 = vld [vmem:[#allocation13 + $0x38] sm:$0xff]
    %v2782 = vld [vmem:[#allocation13 + $0x40] sm:$0xff]
    %v2783 = vld [vmem:[#allocation13 + $0x48] sm:$0xff]
    %v2784 = vld [vmem:[#allocation13 + $0x50] sm:$0xff]
    %v2785 = vld [vmem:[#allocation13 + $0x58] sm:$0xff]
    %v2786 = vld [vmem:[#allocation13 + $0x60] sm:$0xff]
    %v2787 = vld [vmem:[#allocation13 + $0x68] sm:$0xff]
    %v2788 = vld [vmem:[#allocation13 + $0x70] sm:$0xff]
    %v2789 = vld [vmem:[#allocation13 + $0x78] sm:$0xff]
    %v2790 = vld [vmem:[#allocation13 + $0x80] sm:$0xff]
    %v2791 = vld [vmem:[#allocation13 + $0x88] sm:$0xff]
    %v2792 = vld [vmem:[#allocation13 + $0x90] sm:$0xff]
    %v2793 = vld [vmem:[#allocation13 + $0x98] sm:$0xff]
    %v2794 = vld [vmem:[%s12] sm:$0xff]
    %v2795 = vunpack.c.l.bf16 %v2534
    %v2796 = vunpack.c.l.bf16 %v2535
    %v2797 = vunpack.c.l.bf16 %v2536
    %v2798 = vunpack.c.l.bf16 %v2537
    %v2799 = vunpack.c.l.bf16 %v2538
    %v2800 = vunpack.c.l.bf16 %v2539
    %v2801 = vunpack.c.l.bf16 %v2540
    %v2802 = vunpack.c.l.bf16 %v2541
    %v2803 = vunpack.c.l.bf16 %v2542
    %v2804 = vunpack.c.l.bf16 %v2543
    %v2805 = vunpack.c.h.bf16 %v2534
    %v2806 = vunpack.c.h.bf16 %v2535
    %v2807 = vunpack.c.h.bf16 %v2536
    %v2808 = vunpack.c.h.bf16 %v2537
    %v2809 = vunpack.c.h.bf16 %v2538
    %v2810 = vunpack.c.h.bf16 %v2539
    %v2811 = vunpack.c.h.bf16 %v2540
    %v2812 = vunpack.c.h.bf16 %v2541
    %v2813 = vunpack.c.h.bf16 %v2542
    %v2814 = vunpack.c.h.bf16 %v2543
    %v2815 = vunpack.c.l.bf16 %v2544
    %v2816 = vunpack.c.l.bf16 %v2545
    %v2817 = vunpack.c.l.bf16 %v2546
    %v2818 = vunpack.c.l.bf16 %v2547
    %v2819 = vunpack.c.l.bf16 %v2548
    %v2820 = vunpack.c.l.bf16 %v2549
    %v2821 = vunpack.c.l.bf16 %v2550
    %v2822 = vunpack.c.l.bf16 %v2551
    %v2823 = vunpack.c.l.bf16 %v2552
    %v2824 = vunpack.c.l.bf16 %v2553
    %v2825 = vunpack.c.h.bf16 %v2544
    %v2826 = vunpack.c.h.bf16 %v2545
    %v2827 = vunpack.c.h.bf16 %v2546
    %v2828 = vunpack.c.h.bf16 %v2547
    %v2829 = vunpack.c.h.bf16 %v2548
    %v2830 = vunpack.c.h.bf16 %v2549
    %v2831 = vunpack.c.h.bf16 %v2550
    %v2832 = vunpack.c.h.bf16 %v2551
    %v2833 = vunpack.c.h.bf16 %v2552
    %v2834 = vunpack.c.h.bf16 %v2553
    %v2835 = vunpack.c.l.bf16 %v2554
    %v2836 = vunpack.c.l.bf16 %v2555
    %v2837 = vunpack.c.l.bf16 %v2556
    %v2838 = vunpack.c.l.bf16 %v2557
    %v2839 = vunpack.c.l.bf16 %v2558
    %v2840 = vunpack.c.l.bf16 %v2559
    %v2841 = vunpack.c.l.bf16 %v2560
    %v2842 = vunpack.c.l.bf16 %v2561
    %v2843 = vunpack.c.l.bf16 %v2562
    %v2844 = vunpack.c.l.bf16 %v2563
    %v2845 = vunpack.c.h.bf16 %v2554
    %v2846 = vunpack.c.h.bf16 %v2555
    %v2847 = vunpack.c.h.bf16 %v2556
    %v2848 = vunpack.c.h.bf16 %v2557
    %v2849 = vunpack.c.h.bf16 %v2558
    %v2850 = vunpack.c.h.bf16 %v2559
    %v2851 = vunpack.c.h.bf16 %v2560
    %v2852 = vunpack.c.h.bf16 %v2561
    %v2853 = vunpack.c.h.bf16 %v2562
    %v2854 = vunpack.c.h.bf16 %v2563
    %v2855 = vunpack.c.l.bf16 %v2564
    %v2856 = vunpack.c.l.bf16 %v2565
    %v2857 = vunpack.c.l.bf16 %v2566
    %v2858 = vunpack.c.l.bf16 %v2567
    %v2859 = vunpack.c.l.bf16 %v2568
    %v2860 = vunpack.c.l.bf16 %v2569
    %v2861 = vunpack.c.l.bf16 %v2570
    %v2862 = vunpack.c.l.bf16 %v2571
    %v2863 = vunpack.c.l.bf16 %v2572
    %v2864 = vunpack.c.l.bf16 %v2573
    %v2865 = vunpack.c.h.bf16 %v2564
    %v2866 = vunpack.c.h.bf16 %v2565
    %v2867 = vunpack.c.h.bf16 %v2566
    %v2868 = vunpack.c.h.bf16 %v2567
    %v2869 = vunpack.c.h.bf16 %v2568
    %v2870 = vunpack.c.h.bf16 %v2569
    %v2871 = vunpack.c.h.bf16 %v2570
    %v2872 = vunpack.c.h.bf16 %v2571
    %v2873 = vunpack.c.h.bf16 %v2572
    %v2874 = vunpack.c.h.bf16 %v2573
    %v2875 = vunpack.c.l.bf16 %v2574
    %v2876 = vunpack.c.l.bf16 %v2575
    %v2877 = vunpack.c.l.bf16 %v2576
    %v2878 = vunpack.c.l.bf16 %v2577
    %v2879 = vunpack.c.l.bf16 %v2578
    %v2880 = vunpack.c.l.bf16 %v2579
    %v2881 = vunpack.c.l.bf16 %v2580
    %v2882 = vunpack.c.l.bf16 %v2581
    %v2883 = vunpack.c.l.bf16 %v2582
    %v2884 = vunpack.c.l.bf16 %v2583
    %v2885 = vunpack.c.h.bf16 %v2574
    %v2886 = vunpack.c.h.bf16 %v2575
    %v2887 = vunpack.c.h.bf16 %v2576
    %v2888 = vunpack.c.h.bf16 %v2577
    %v2889 = vunpack.c.h.bf16 %v2578
    %v2890 = vunpack.c.h.bf16 %v2579
    %v2891 = vunpack.c.h.bf16 %v2580
    %v2892 = vunpack.c.h.bf16 %v2581
    %v2893 = vunpack.c.h.bf16 %v2582
    %v2894 = vunpack.c.h.bf16 %v2583
    %v2895 = vunpack.c.l.bf16 %v2584
    %v2896 = vunpack.c.l.bf16 %v2585
    %v2897 = vunpack.c.l.bf16 %v2586
    %v2898 = vunpack.c.l.bf16 %v2587
    %v2899 = vunpack.c.l.bf16 %v2588
    %v2900 = vunpack.c.l.bf16 %v2589
    %v2901 = vunpack.c.l.bf16 %v2590
    %v2902 = vunpack.c.l.bf16 %v2591
    %v2903 = vunpack.c.l.bf16 %v2592
    %v2904 = vunpack.c.l.bf16 %v2593
    %v2905 = vunpack.c.h.bf16 %v2584
    %v2906 = vunpack.c.h.bf16 %v2585
    %v2907 = vunpack.c.h.bf16 %v2586
    %v2908 = vunpack.c.h.bf16 %v2587
    %v2909 = vunpack.c.h.bf16 %v2588
    %v2910 = vunpack.c.h.bf16 %v2589
    %v2911 = vunpack.c.h.bf16 %v2590
    %v2912 = vunpack.c.h.bf16 %v2591
    %v2913 = vunpack.c.h.bf16 %v2592
    %v2914 = vunpack.c.h.bf16 %v2593
    %v2915 = vunpack.c.l.bf16 %v2594
    %v2916 = vunpack.c.l.bf16 %v2595
    %v2917 = vunpack.c.l.bf16 %v2596
    %v2918 = vunpack.c.l.bf16 %v2597
    %v2919 = vunpack.c.l.bf16 %v2598
    %v2920 = vunpack.c.l.bf16 %v2599
    %v2921 = vunpack.c.l.bf16 %v2600
    %v2922 = vunpack.c.l.bf16 %v2601
    %v2923 = vunpack.c.l.bf16 %v2602
    %v2924 = vunpack.c.l.bf16 %v2603
    %v2925 = vunpack.c.h.bf16 %v2594
    %v2926 = vunpack.c.h.bf16 %v2595
    %v2927 = vunpack.c.h.bf16 %v2596
    %v2928 = vunpack.c.h.bf16 %v2597
    %v2929 = vunpack.c.h.bf16 %v2598
    %v2930 = vunpack.c.h.bf16 %v2599
    %v2931 = vunpack.c.h.bf16 %v2600
    %v2932 = vunpack.c.h.bf16 %v2601
    %v2933 = vunpack.c.h.bf16 %v2602
    %v2934 = vunpack.c.h.bf16 %v2603
    %v2935 = vunpack.c.l.bf16 %v2604
    %v2936 = vunpack.c.l.bf16 %v2605
    %v2937 = vunpack.c.l.bf16 %v2606
    %v2938 = vunpack.c.l.bf16 %v2607
    %v2939 = vunpack.c.l.bf16 %v2608
    %v2940 = vunpack.c.l.bf16 %v2609
    %v2941 = vunpack.c.l.bf16 %v2610
    %v2942 = vunpack.c.l.bf16 %v2611
    %v2943 = vunpack.c.l.bf16 %v2612
    %v2944 = vunpack.c.l.bf16 %v2613
    %v2945 = vunpack.c.h.bf16 %v2604
    %v2946 = vunpack.c.h.bf16 %v2605
    %v2947 = vunpack.c.h.bf16 %v2606
    %v2948 = vunpack.c.h.bf16 %v2607
    %v2949 = vunpack.c.h.bf16 %v2608
    %v2950 = vunpack.c.h.bf16 %v2609
    %v2951 = vunpack.c.h.bf16 %v2610
    %v2952 = vunpack.c.h.bf16 %v2611
    %v2953 = vunpack.c.h.bf16 %v2612
    %v2954 = vunpack.c.h.bf16 %v2613
    %v2955 = vunpack.c.l.bf16 %v2614
    %v2956 = vunpack.c.l.bf16 %v2615
    %v2957 = vunpack.c.l.bf16 %v2616
    %v2958 = vunpack.c.l.bf16 %v2617
    %v2959 = vunpack.c.l.bf16 %v2618
    %v2960 = vunpack.c.l.bf16 %v2619
    %v2961 = vunpack.c.l.bf16 %v2620
    %v2962 = vunpack.c.l.bf16 %v2621
    %v2963 = vunpack.c.l.bf16 %v2622
    %v2964 = vunpack.c.l.bf16 %v2623
    %v2965 = vunpack.c.h.bf16 %v2614
    %v2966 = vunpack.c.h.bf16 %v2615
    %v2967 = vunpack.c.h.bf16 %v2616
    %v2968 = vunpack.c.h.bf16 %v2617
    %v2969 = vunpack.c.h.bf16 %v2618
    %v2970 = vunpack.c.h.bf16 %v2619
    %v2971 = vunpack.c.h.bf16 %v2620
    %v2972 = vunpack.c.h.bf16 %v2621
    %v2973 = vunpack.c.h.bf16 %v2622
    %v2974 = vunpack.c.h.bf16 %v2623
    %v2975 = vunpack.c.l.bf16 %v2624
    %v2976 = vunpack.c.l.bf16 %v2625
    %v2977 = vunpack.c.l.bf16 %v2626
    %v2978 = vunpack.c.l.bf16 %v2627
    %v2979 = vunpack.c.l.bf16 %v2628
    %v2980 = vunpack.c.l.bf16 %v2629
    %v2981 = vunpack.c.l.bf16 %v2630
    %v2982 = vunpack.c.l.bf16 %v2631
    %v2983 = vunpack.c.l.bf16 %v2632
    %v2984 = vunpack.c.l.bf16 %v2633
    %v2985 = vunpack.c.h.bf16 %v2624
    %v2986 = vunpack.c.h.bf16 %v2625
    %v2987 = vunpack.c.h.bf16 %v2626
    %v2988 = vunpack.c.h.bf16 %v2627
    %v2989 = vunpack.c.h.bf16 %v2628
    %v2990 = vunpack.c.h.bf16 %v2629
    %v2991 = vunpack.c.h.bf16 %v2630
    %v2992 = vunpack.c.h.bf16 %v2631
    %v2993 = vunpack.c.h.bf16 %v2632
    %v2994 = vunpack.c.h.bf16 %v2633
    %v2995 = vunpack.c.l.bf16 %v2634
    %v2996 = vunpack.c.l.bf16 %v2635
    %v2997 = vunpack.c.l.bf16 %v2636
    %v2998 = vunpack.c.l.bf16 %v2637
    %v2999 = vunpack.c.l.bf16 %v2638
    %v3000 = vunpack.c.l.bf16 %v2639
    %v3001 = vunpack.c.l.bf16 %v2640
    %v3002 = vunpack.c.l.bf16 %v2641
    %v3003 = vunpack.c.l.bf16 %v2642
    %v3004 = vunpack.c.l.bf16 %v2643
    %v3005 = vunpack.c.h.bf16 %v2634
    %v3006 = vunpack.c.h.bf16 %v2635
    %v3007 = vunpack.c.h.bf16 %v2636
    %v3008 = vunpack.c.h.bf16 %v2637
    %v3009 = vunpack.c.h.bf16 %v2638
    %v3010 = vunpack.c.h.bf16 %v2639
    %v3011 = vunpack.c.h.bf16 %v2640
    %v3012 = vunpack.c.h.bf16 %v2641
    %v3013 = vunpack.c.h.bf16 %v2642
    %v3014 = vunpack.c.h.bf16 %v2643
    %v3015 = vunpack.c.l.bf16 %v2644
    %v3016 = vunpack.c.l.bf16 %v2645
    %v3017 = vunpack.c.l.bf16 %v2646
    %v3018 = vunpack.c.l.bf16 %v2647
    %v3019 = vunpack.c.l.bf16 %v2648
    %v3020 = vunpack.c.l.bf16 %v2649
    %v3021 = vunpack.c.l.bf16 %v2650
    %v3022 = vunpack.c.l.bf16 %v2651
    %v3023 = vunpack.c.l.bf16 %v2652
    %v3024 = vunpack.c.l.bf16 %v2653
    %v3025 = vunpack.c.h.bf16 %v2644
    %v3026 = vunpack.c.h.bf16 %v2645
    %v3027 = vunpack.c.h.bf16 %v2646
    %v3028 = vunpack.c.h.bf16 %v2647
    %v3029 = vunpack.c.h.bf16 %v2648
    %v3030 = vunpack.c.h.bf16 %v2649
    %v3031 = vunpack.c.h.bf16 %v2650
    %v3032 = vunpack.c.h.bf16 %v2651
    %v3033 = vunpack.c.h.bf16 %v2652
    %v3034 = vunpack.c.h.bf16 %v2653
    %v3035 = vunpack.c.l.bf16 %v2654
    %v3036 = vunpack.c.l.bf16 %v2655
    %v3037 = vunpack.c.l.bf16 %v2656
    %v3038 = vunpack.c.l.bf16 %v2657
    %v3039 = vunpack.c.l.bf16 %v2658
    %v3040 = vunpack.c.l.bf16 %v2659
    %v3041 = vunpack.c.l.bf16 %v2660
    %v3042 = vunpack.c.l.bf16 %v2661
    %v3043 = vunpack.c.l.bf16 %v2662
    %v3044 = vunpack.c.l.bf16 %v2663
    %v3045 = vunpack.c.h.bf16 %v2654
    %v3046 = vunpack.c.h.bf16 %v2655
    %v3047 = vunpack.c.h.bf16 %v2656
    %v3048 = vunpack.c.h.bf16 %v2657
    %v3049 = vunpack.c.h.bf16 %v2658
    %v3050 = vunpack.c.h.bf16 %v2659
    %v3051 = vunpack.c.h.bf16 %v2660
    %v3052 = vunpack.c.h.bf16 %v2661
    %v3053 = vunpack.c.h.bf16 %v2662
    %v3054 = vunpack.c.h.bf16 %v2663
    %v3055 = vunpack.c.l.bf16 %v2664
    %v3056 = vunpack.c.l.bf16 %v2665
    %v3057 = vunpack.c.l.bf16 %v2666
    %v3058 = vunpack.c.l.bf16 %v2667
    %v3059 = vunpack.c.l.bf16 %v2668
    %v3060 = vunpack.c.l.bf16 %v2669
    %v3061 = vunpack.c.l.bf16 %v2670
    %v3062 = vunpack.c.l.bf16 %v2671
    %v3063 = vunpack.c.l.bf16 %v2672
    %v3064 = vunpack.c.l.bf16 %v2673
    %v3065 = vunpack.c.h.bf16 %v2664
    %v3066 = vunpack.c.h.bf16 %v2665
    %v3067 = vunpack.c.h.bf16 %v2666
    %v3068 = vunpack.c.h.bf16 %v2667
    %v3069 = vunpack.c.h.bf16 %v2668
    %v3070 = vunpack.c.h.bf16 %v2669
    %v3071 = vunpack.c.h.bf16 %v2670
    %v3072 = vunpack.c.h.bf16 %v2671
    %v3073 = vunpack.c.h.bf16 %v2672
    %v3074 = vunpack.c.h.bf16 %v2673
    %v3075 = vunpack.c.l.bf16 %v2674
    %v3076 = vunpack.c.l.bf16 %v2675
    %v3077 = vunpack.c.l.bf16 %v2676
    %v3078 = vunpack.c.l.bf16 %v2677
    %v3079 = vunpack.c.l.bf16 %v2678
    %v3080 = vunpack.c.l.bf16 %v2679
    %v3081 = vunpack.c.l.bf16 %v2680
    %v3082 = vunpack.c.l.bf16 %v2681
    %v3083 = vunpack.c.l.bf16 %v2682
    %v3084 = vunpack.c.l.bf16 %v2683
    %v3085 = vunpack.c.h.bf16 %v2674
    %v3086 = vunpack.c.h.bf16 %v2675
    %v3087 = vunpack.c.h.bf16 %v2676
    %v3088 = vunpack.c.h.bf16 %v2677
    %v3089 = vunpack.c.h.bf16 %v2678
    %v3090 = vunpack.c.h.bf16 %v2679
    %v3091 = vunpack.c.h.bf16 %v2680
    %v3092 = vunpack.c.h.bf16 %v2681
    %v3093 = vunpack.c.h.bf16 %v2682
    %v3094 = vunpack.c.h.bf16 %v2683
    %v3095 = vunpack.c.l.bf16 %v2684
    %v3096 = vunpack.c.l.bf16 %v2685
    %v3097 = vunpack.c.l.bf16 %v2686
    %v3098 = vunpack.c.l.bf16 %v2687
    %v3099 = vunpack.c.l.bf16 %v2688
    %v3100 = vunpack.c.l.bf16 %v2689
    %v3101 = vunpack.c.l.bf16 %v2690
    %v3102 = vunpack.c.l.bf16 %v2691
    %v3103 = vunpack.c.l.bf16 %v2692
    %v3104 = vunpack.c.l.bf16 %v2693
    %v3105 = vunpack.c.h.bf16 %v2684
    %v3106 = vunpack.c.h.bf16 %v2685
    %v3107 = vunpack.c.h.bf16 %v2686
    %v3108 = vunpack.c.h.bf16 %v2687
    %v3109 = vunpack.c.h.bf16 %v2688
    %v3110 = vunpack.c.h.bf16 %v2689
    %v3111 = vunpack.c.h.bf16 %v2690
    %v3112 = vunpack.c.h.bf16 %v2691
    %v3113 = vunpack.c.h.bf16 %v2692
    %v3114 = vunpack.c.h.bf16 %v2693
    %v3115 = vunpack.c.l.bf16 %v2694
    %v3116 = vunpack.c.l.bf16 %v2695
    %v3117 = vunpack.c.l.bf16 %v2696
    %v3118 = vunpack.c.l.bf16 %v2697
    %v3119 = vunpack.c.l.bf16 %v2698
    %v3120 = vunpack.c.l.bf16 %v2699
    %v3121 = vunpack.c.l.bf16 %v2700
    %v3122 = vunpack.c.l.bf16 %v2701
    %v3123 = vunpack.c.l.bf16 %v2702
    %v3124 = vunpack.c.l.bf16 %v2703
    %v3125 = vunpack.c.h.bf16 %v2694
    %v3126 = vunpack.c.h.bf16 %v2695
    %v3127 = vunpack.c.h.bf16 %v2696
    %v3128 = vunpack.c.h.bf16 %v2697
    %v3129 = vunpack.c.h.bf16 %v2698
    %v3130 = vunpack.c.h.bf16 %v2699
    %v3131 = vunpack.c.h.bf16 %v2700
    %v3132 = vunpack.c.h.bf16 %v2701
    %v3133 = vunpack.c.h.bf16 %v2702
    %v3134 = vunpack.c.h.bf16 %v2703
    %v3135 = vunpack.c.l.bf16 %v2704
    %v3136 = vunpack.c.l.bf16 %v2705
    %v3137 = vunpack.c.l.bf16 %v2706
    %v3138 = vunpack.c.l.bf16 %v2707
    %v3139 = vunpack.c.l.bf16 %v2708
    %v3140 = vunpack.c.l.bf16 %v2709
    %v3141 = vunpack.c.l.bf16 %v2710
    %v3142 = vunpack.c.l.bf16 %v2711
    %v3143 = vunpack.c.l.bf16 %v2712
    %v3144 = vunpack.c.l.bf16 %v2713
    %v3145 = vunpack.c.h.bf16 %v2704
    %v3146 = vunpack.c.h.bf16 %v2705
    %v3147 = vunpack.c.h.bf16 %v2706
    %v3148 = vunpack.c.h.bf16 %v2707
    %v3149 = vunpack.c.h.bf16 %v2708
    %v3150 = vunpack.c.h.bf16 %v2709
    %v3151 = vunpack.c.h.bf16 %v2710
    %v3152 = vunpack.c.h.bf16 %v2711
    %v3153 = vunpack.c.h.bf16 %v2712
    %v3154 = vunpack.c.h.bf16 %v2713
    %v3155 = vunpack.c.l.bf16 %v2714
    %v3156 = vunpack.c.l.bf16 %v2715
    %v3157 = vunpack.c.l.bf16 %v2716
    %v3158 = vunpack.c.l.bf16 %v2717
    %v3159 = vunpack.c.l.bf16 %v2718
    %v3160 = vunpack.c.l.bf16 %v2719
    %v3161 = vunpack.c.l.bf16 %v2720
    %v3162 = vunpack.c.l.bf16 %v2721
    %v3163 = vunpack.c.l.bf16 %v2722
    %v3164 = vunpack.c.l.bf16 %v2723
    %v3165 = vunpack.c.h.bf16 %v2714
    %v3166 = vunpack.c.h.bf16 %v2715
    %v3167 = vunpack.c.h.bf16 %v2716
    %v3168 = vunpack.c.h.bf16 %v2717
    %v3169 = vunpack.c.h.bf16 %v2718
    %v3170 = vunpack.c.h.bf16 %v2719
    %v3171 = vunpack.c.h.bf16 %v2720
    %v3172 = vunpack.c.h.bf16 %v2721
    %v3173 = vunpack.c.h.bf16 %v2722
    %v3174 = vunpack.c.h.bf16 %v2723
    %v3175 = vunpack.c.l.bf16 %v2724
    %v3176 = vunpack.c.l.bf16 %v2725
    %v3177 = vunpack.c.l.bf16 %v2726
    %v3178 = vunpack.c.l.bf16 %v2727
    %v3179 = vunpack.c.l.bf16 %v2728
    %v3180 = vunpack.c.l.bf16 %v2729
    %v3181 = vunpack.c.l.bf16 %v2730
    %v3182 = vunpack.c.l.bf16 %v2731
    %v3183 = vunpack.c.l.bf16 %v2732
    %v3184 = vunpack.c.l.bf16 %v2733
    %v3185 = vunpack.c.h.bf16 %v2724
    %v3186 = vunpack.c.h.bf16 %v2725
    %v3187 = vunpack.c.h.bf16 %v2726
    %v3188 = vunpack.c.h.bf16 %v2727
    %v3189 = vunpack.c.h.bf16 %v2728
    %v3190 = vunpack.c.h.bf16 %v2729
    %v3191 = vunpack.c.h.bf16 %v2730
    %v3192 = vunpack.c.h.bf16 %v2731
    %v3193 = vunpack.c.h.bf16 %v2732
    %v3194 = vunpack.c.h.bf16 %v2733
    %v3195 = vunpack.c.l.bf16 %v2734
    %v3196 = vunpack.c.l.bf16 %v2735
    %v3197 = vunpack.c.l.bf16 %v2736
    %v3198 = vunpack.c.l.bf16 %v2737
    %v3199 = vunpack.c.l.bf16 %v2738
    %v3200 = vunpack.c.l.bf16 %v2739
    %v3201 = vunpack.c.l.bf16 %v2740
    %v3202 = vunpack.c.l.bf16 %v2741
    %v3203 = vunpack.c.l.bf16 %v2742
    %v3204 = vunpack.c.l.bf16 %v2743
    %v3205 = vunpack.c.h.bf16 %v2734
    %v3206 = vunpack.c.h.bf16 %v2735
    %v3207 = vunpack.c.h.bf16 %v2736
    %v3208 = vunpack.c.h.bf16 %v2737
    %v3209 = vunpack.c.h.bf16 %v2738
    %v3210 = vunpack.c.h.bf16 %v2739
    %v3211 = vunpack.c.h.bf16 %v2740
    %v3212 = vunpack.c.h.bf16 %v2741
    %v3213 = vunpack.c.h.bf16 %v2742
    %v3214 = vunpack.c.h.bf16 %v2743
    %v3215 = vunpack.c.l.bf16 %v2744
    %v3216 = vunpack.c.l.bf16 %v2745
    %v3217 = vunpack.c.l.bf16 %v2746
    %v3218 = vunpack.c.l.bf16 %v2747
    %v3219 = vunpack.c.l.bf16 %v2748
    %v3220 = vunpack.c.l.bf16 %v2749
    %v3221 = vunpack.c.l.bf16 %v2750
    %v3222 = vunpack.c.l.bf16 %v2751
    %v3223 = vunpack.c.l.bf16 %v2752
    %v3224 = vunpack.c.l.bf16 %v2753
    %v3225 = vunpack.c.h.bf16 %v2744
    %v3226 = vunpack.c.h.bf16 %v2745
    %v3227 = vunpack.c.h.bf16 %v2746
    %v3228 = vunpack.c.h.bf16 %v2747
    %v3229 = vunpack.c.h.bf16 %v2748
    %v3230 = vunpack.c.h.bf16 %v2749
    %v3231 = vunpack.c.h.bf16 %v2750
    %v3232 = vunpack.c.h.bf16 %v2751
    %v3233 = vunpack.c.h.bf16 %v2752
    %v3234 = vunpack.c.h.bf16 %v2753
    %v3235 = vunpack.c.l.bf16 %v2754
    %v3236 = vunpack.c.l.bf16 %v2755
    %v3237 = vunpack.c.l.bf16 %v2756
    %v3238 = vunpack.c.l.bf16 %v2757
    %v3239 = vunpack.c.l.bf16 %v2758
    %v3240 = vunpack.c.l.bf16 %v2759
    %v3241 = vunpack.c.l.bf16 %v2760
    %v3242 = vunpack.c.l.bf16 %v2761
    %v3243 = vunpack.c.l.bf16 %v2762
    %v3244 = vunpack.c.l.bf16 %v2763
    %v3245 = vunpack.c.h.bf16 %v2754
    %v3246 = vunpack.c.h.bf16 %v2755
    %v3247 = vunpack.c.h.bf16 %v2756
    %v3248 = vunpack.c.h.bf16 %v2757
    %v3249 = vunpack.c.h.bf16 %v2758
    %v3250 = vunpack.c.h.bf16 %v2759
    %v3251 = vunpack.c.h.bf16 %v2760
    %v3252 = vunpack.c.h.bf16 %v2761
    %v3253 = vunpack.c.h.bf16 %v2762
    %v3254 = vunpack.c.h.bf16 %v2763
    %v3255 = vunpack.c.l.bf16 %v2764
    %v3256 = vunpack.c.l.bf16 %v2765
    %v3257 = vunpack.c.l.bf16 %v2766
    %v3258 = vunpack.c.l.bf16 %v2767
    %v3259 = vunpack.c.l.bf16 %v2768
    %v3260 = vunpack.c.l.bf16 %v2769
    %v3261 = vunpack.c.l.bf16 %v2770
    %v3262 = vunpack.c.l.bf16 %v2771
    %v3263 = vunpack.c.l.bf16 %v2772
    %v3264 = vunpack.c.l.bf16 %v2773
    %v3265 = vunpack.c.h.bf16 %v2764
    %v3266 = vunpack.c.h.bf16 %v2765
    %v3267 = vunpack.c.h.bf16 %v2766
    %v3268 = vunpack.c.h.bf16 %v2767
    %v3269 = vunpack.c.h.bf16 %v2768
    %v3270 = vunpack.c.h.bf16 %v2769
    %v3271 = vunpack.c.h.bf16 %v2770
    %v3272 = vunpack.c.h.bf16 %v2771
    %v3273 = vunpack.c.h.bf16 %v2772
    %v3274 = vunpack.c.h.bf16 %v2773
    %3275 = vrot.lane.b32.xlu0 %v2774, 35
    %v3276 = vpop.permute.xlu0 %3275
    %3277 = vrot.lane.b32.xlu0 %v2775, 35
    %v3278 = vpop.permute.xlu0 %3277
    %3279 = vrot.lane.b32.xlu0 %v2776, 35
    %v3280 = vpop.permute.xlu0 %3279
    %3281 = vrot.lane.b32.xlu0 %v2777, 35
    %v3282 = vpop.permute.xlu0 %3281
    %3283 = vrot.lane.b32.xlu0 %v2778, 35
    %v3284 = vpop.permute.xlu0 %3283
    %3285 = vrot.lane.b32.xlu0 %v2779, 35
    %v3286 = vpop.permute.xlu0 %3285
    %3287 = vrot.lane.b32.xlu0 %v2780, 35
    %v3288 = vpop.permute.xlu0 %3287
    %3289 = vrot.lane.b32.xlu0 %v2781, 35
    %v3290 = vpop.permute.xlu0 %3289
    %3291 = vrot.lane.b32.xlu0 %v2782, 35
    %v3292 = vpop.permute.xlu0 %3291
    %3293 = vrot.lane.b32.xlu0 %v2783, 35
    %v3294 = vpop.permute.xlu0 %3293
    %3295 = vrot.lane.b32.xlu0 %v2784, 35
    %v3296 = vpop.permute.xlu0 %3295
    %3297 = vrot.lane.b32.xlu0 %v2785, 35
    %v3298 = vpop.permute.xlu0 %3297
    %3299 = vrot.lane.b32.xlu0 %v2786, 35
    %v3300 = vpop.permute.xlu0 %3299
    %3301 = vrot.lane.b32.xlu0 %v2787, 35
    %v3302 = vpop.permute.xlu0 %3301
    %3303 = vrot.lane.b32.xlu0 %v2788, 35
    %v3304 = vpop.permute.xlu0 %3303
    %3305 = vrot.lane.b32.xlu0 %v2789, 35
    %v3306 = vpop.permute.xlu0 %3305
    %3307 = vrot.lane.b32.xlu0 %v2790, 35
    %v3308 = vpop.permute.xlu0 %3307
    %3309 = vrot.lane.b32.xlu0 %v2791, 35
    %v3310 = vpop.permute.xlu0 %3309
    %3311 = vrot.lane.b32.xlu0 %v2792, 35
    %v3312 = vpop.permute.xlu0 %3311
    %3313 = vrot.lane.b32.xlu0 %v2793, 35
    %v3314 = vpop.permute.xlu0 %3313
    %vm3315 = vcmp.lt.s32.totalorder %v242, 35
    %v3316 = vsel %vm3315, %v3312, %v3314
    %v3317 = vsel %vm3315, %v3310, %v3312
    %v3318 = vsel %vm3315, %v3308, %v3310
    %v3319 = vsel %vm3315, %v3306, %v3308
    %v3320 = vsel %vm3315, %v3304, %v3306
    %v3321 = vsel %vm3315, %v3302, %v3304
    %v3322 = vsel %vm3315, %v3300, %v3302
    %v3323 = vsel %vm3315, %v3298, %v3300
    %v3324 = vsel %vm3315, %v3296, %v3298
    %v3325 = vsel %vm3315, %v3294, %v3296
    %v3326 = vsel %vm3315, %v3292, %v3294
    %v3327 = vsel %vm3315, %v3290, %v3292
    %v3328 = vsel %vm3315, %v3288, %v3290
    %v3329 = vsel %vm3315, %v3286, %v3288
    %v3330 = vsel %vm3315, %v3284, %v3286
    %v3331 = vsel %vm3315, %v3282, %v3284
    %v3332 = vsel %vm3315, %v3280, %v3282
    %v3333 = vsel %vm3315, %v3278, %v3280
    %v3334 = vsel %vm3315, %v3276, %v3278
    %v3335 = vsel %vm3315, %v3314, %v3276
    %3336 = vst [vmem:[#allocation4 + $0x5a0] sm:$0xff] %v3335
    %3337 = vst [vmem:[#allocation4 + $0x5a8] sm:$0xff] %v3334
    %3338 = vst [vmem:[#allocation4 + $0x5b0] sm:$0xff] %v3333
    %3339 = vst [vmem:[#allocation4 + $0x5b8] sm:$0xff] %v3332
    %3340 = vst [vmem:[#allocation4 + $0x5c0] sm:$0xff] %v3331
    %3341 = vst [vmem:[#allocation4 + $0x5c8] sm:$0xff] %v3330
    %3342 = vst [vmem:[#allocation4 + $0x5d0] sm:$0xff] %v3329
    %3343 = vst [vmem:[#allocation4 + $0x5d8] sm:$0xff] %v3328
    %3344 = vst [vmem:[#allocation4 + $0x5e0] sm:$0xff] %v3327
    %3345 = vst [vmem:[#allocation4 + $0x5e8] sm:$0xff] %v3326
    %3346 = vst [vmem:[#allocation4 + $0x5f0] sm:$0xff] %v3325
    %3347 = vst [vmem:[#allocation4 + $0x5f8] sm:$0xff] %v3324
    %3348 = vst [vmem:[#allocation4 + $0x600] sm:$0xff] %v3323
    %3349 = vst [vmem:[#allocation4 + $0x608] sm:$0xff] %v3322
    %3350 = vst [vmem:[#allocation4 + $0x610] sm:$0xff] %v3321
    %3351 = vst [vmem:[#allocation4 + $0x618] sm:$0xff] %v3320
    %3352 = vst [vmem:[#allocation4 + $0x620] sm:$0xff] %v3319
    %3353 = vst [vmem:[#allocation4 + $0x628] sm:$0xff] %v3318
    %3354 = vst [vmem:[#allocation4 + $0x630] sm:$0xff] %v3317
    %3355 = vst [vmem:[#allocation4 + $0x638] sm:$0xff] %v3316
    %3356 = vrot.lane.b32.xlu0 %v2774, 34
    %v3357 = vpop.permute.xlu0 %3356
    %3358 = vrot.lane.b32.xlu0 %v2775, 34
    %v3359 = vpop.permute.xlu0 %3358
    %3360 = vrot.lane.b32.xlu0 %v2776, 34
    %v3361 = vpop.permute.xlu0 %3360
    %3362 = vrot.lane.b32.xlu0 %v2777, 34
    %v3363 = vpop.permute.xlu0 %3362
    %3364 = vrot.lane.b32.xlu0 %v2778, 34
    %v3365 = vpop.permute.xlu0 %3364
    %3366 = vrot.lane.b32.xlu0 %v2779, 34
    %v3367 = vpop.permute.xlu0 %3366
    %3368 = vrot.lane.b32.xlu0 %v2780, 34
    %v3369 = vpop.permute.xlu0 %3368
    %3370 = vrot.lane.b32.xlu0 %v2781, 34
    %v3371 = vpop.permute.xlu0 %3370
    %3372 = vrot.lane.b32.xlu0 %v2782, 34
    %v3373 = vpop.permute.xlu0 %3372
    %3374 = vrot.lane.b32.xlu0 %v2783, 34
    %v3375 = vpop.permute.xlu0 %3374
    %3376 = vrot.lane.b32.xlu0 %v2784, 34
    %v3377 = vpop.permute.xlu0 %3376
    %3378 = vrot.lane.b32.xlu0 %v2785, 34
    %v3379 = vpop.permute.xlu0 %3378
    %3380 = vrot.lane.b32.xlu0 %v2786, 34
    %v3381 = vpop.permute.xlu0 %3380
    %3382 = vrot.lane.b32.xlu0 %v2787, 34
    %v3383 = vpop.permute.xlu0 %3382
    %3384 = vrot.lane.b32.xlu0 %v2788, 34
    %v3385 = vpop.permute.xlu0 %3384
    %3386 = vrot.lane.b32.xlu0 %v2789, 34
    %v3387 = vpop.permute.xlu0 %3386
    %3388 = vrot.lane.b32.xlu0 %v2790, 34
    %v3389 = vpop.permute.xlu0 %3388
    %3390 = vrot.lane.b32.xlu0 %v2791, 34
    %v3391 = vpop.permute.xlu0 %3390
    %3392 = vrot.lane.b32.xlu0 %v2792, 34
    %v3393 = vpop.permute.xlu0 %3392
    %3394 = vrot.lane.b32.xlu0 %v2793, 34
    %v3395 = vpop.permute.xlu0 %3394
    %vm3396 = vcmp.lt.s32.totalorder %v242, 34
    %v3397 = vsel %vm3396, %v3393, %v3395
    %v3398 = vsel %vm3396, %v3391, %v3393
    %v3399 = vsel %vm3396, %v3389, %v3391
    %v3400 = vsel %vm3396, %v3387, %v3389
    %v3401 = vsel %vm3396, %v3385, %v3387
    %v3402 = vsel %vm3396, %v3383, %v3385
    %v3403 = vsel %vm3396, %v3381, %v3383
    %v3404 = vsel %vm3396, %v3379, %v3381
    %v3405 = vsel %vm3396, %v3377, %v3379
    %v3406 = vsel %vm3396, %v3375, %v3377
    %v3407 = vsel %vm3396, %v3373, %v3375
    %v3408 = vsel %vm3396, %v3371, %v3373
    %v3409 = vsel %vm3396, %v3369, %v3371
    %v3410 = vsel %vm3396, %v3367, %v3369
    %v3411 = vsel %vm3396, %v3365, %v3367
    %v3412 = vsel %vm3396, %v3363, %v3365
    %v3413 = vsel %vm3396, %v3361, %v3363
    %v3414 = vsel %vm3396, %v3359, %v3361
    %v3415 = vsel %vm3396, %v3357, %v3359
    %v3416 = vsel %vm3396, %v3395, %v3357
    %3417 = vst [vmem:[#allocation4 + $0x640] sm:$0xff] %v3416
    %3418 = vst [vmem:[#allocation4 + $0x648] sm:$0xff] %v3415
    %3419 = vst [vmem:[#allocation4 + $0x650] sm:$0xff] %v3414
    %3420 = vst [vmem:[#allocation4 + $0x658] sm:$0xff] %v3413
    %3421 = vst [vmem:[#allocation4 + $0x660] sm:$0xff] %v3412
    %3422 = vst [vmem:[#allocation4 + $0x668] sm:$0xff] %v3411
    %3423 = vst [vmem:[#allocation4 + $0x670] sm:$0xff] %v3410
    %3424 = vst [vmem:[#allocation4 + $0x678] sm:$0xff] %v3409
    %3425 = vst [vmem:[#allocation4 + $0x680] sm:$0xff] %v3408
    %3426 = vst [vmem:[#allocation4 + $0x688] sm:$0xff] %v3407
    %3427 = vst [vmem:[#allocation4 + $0x690] sm:$0xff] %v3406
    %3428 = vst [vmem:[#allocation4 + $0x698] sm:$0xff] %v3405
    %3429 = vst [vmem:[#allocation4 + $0x6a0] sm:$0xff] %v3404
    %3430 = vst [vmem:[#allocation4 + $0x6a8] sm:$0xff] %v3403
    %3431 = vst [vmem:[#allocation4 + $0x6b0] sm:$0xff] %v3402
    %3432 = vst [vmem:[#allocation4 + $0x6b8] sm:$0xff] %v3401
    %3433 = vst [vmem:[#allocation4 + $0x6c0] sm:$0xff] %v3400
    %3434 = vst [vmem:[#allocation4 + $0x6c8] sm:$0xff] %v3399
    %3435 = vst [vmem:[#allocation4 + $0x6d0] sm:$0xff] %v3398
    %3436 = vst [vmem:[#allocation4 + $0x6d8] sm:$0xff] %v3397
    %3437 = vrot.lane.b32.xlu0 %v2774, 33
    %v3438 = vpop.permute.xlu0 %3437
    %3439 = vrot.lane.b32.xlu0 %v2775, 33
    %v3440 = vpop.permute.xlu0 %3439
    %3441 = vrot.lane.b32.xlu0 %v2776, 33
    %v3442 = vpop.permute.xlu0 %3441
    %3443 = vrot.lane.b32.xlu0 %v2777, 33
    %v3444 = vpop.permute.xlu0 %3443
    %3445 = vrot.lane.b32.xlu0 %v2778, 33
    %v3446 = vpop.permute.xlu0 %3445
    %3447 = vrot.lane.b32.xlu0 %v2779, 33
    %v3448 = vpop.permute.xlu0 %3447
    %3449 = vrot.lane.b32.xlu0 %v2780, 33
    %v3450 = vpop.permute.xlu0 %3449
    %3451 = vrot.lane.b32.xlu0 %v2781, 33
    %v3452 = vpop.permute.xlu0 %3451
    %3453 = vrot.lane.b32.xlu0 %v2782, 33
    %v3454 = vpop.permute.xlu0 %3453
    %3455 = vrot.lane.b32.xlu0 %v2783, 33
    %v3456 = vpop.permute.xlu0 %3455
    %3457 = vrot.lane.b32.xlu0 %v2784, 33
    %v3458 = vpop.permute.xlu0 %3457
    %3459 = vrot.lane.b32.xlu0 %v2785, 33
    %v3460 = vpop.permute.xlu0 %3459
    %3461 = vrot.lane.b32.xlu0 %v2786, 33
    %v3462 = vpop.permute.xlu0 %3461
    %3463 = vrot.lane.b32.xlu0 %v2787, 33
    %v3464 = vpop.permute.xlu0 %3463
    %3465 = vrot.lane.b32.xlu0 %v2788, 33
    %v3466 = vpop.permute.xlu0 %3465
    %3467 = vrot.lane.b32.xlu0 %v2789, 33
    %v3468 = vpop.permute.xlu0 %3467
    %3469 = vrot.lane.b32.xlu0 %v2790, 33
    %v3470 = vpop.permute.xlu0 %3469
    %3471 = vrot.lane.b32.xlu0 %v2791, 33
    %v3472 = vpop.permute.xlu0 %3471
    %3473 = vrot.lane.b32.xlu0 %v2792, 33
    %v3474 = vpop.permute.xlu0 %3473
    %3475 = vrot.lane.b32.xlu0 %v2793, 33
    %v3476 = vpop.permute.xlu0 %3475
    %vm3477 = vcmp.lt.s32.totalorder %v242, 33
    %v3478 = vsel %vm3477, %v3474, %v3476
    %v3479 = vsel %vm3477, %v3472, %v3474
    %v3480 = vsel %vm3477, %v3470, %v3472
    %v3481 = vsel %vm3477, %v3468, %v3470
    %v3482 = vsel %vm3477, %v3466, %v3468
    %v3483 = vsel %vm3477, %v3464, %v3466
    %v3484 = vsel %vm3477, %v3462, %v3464
    %v3485 = vsel %vm3477, %v3460, %v3462
    %v3486 = vsel %vm3477, %v3458, %v3460
    %v3487 = vsel %vm3477, %v3456, %v3458
    %v3488 = vsel %vm3477, %v3454, %v3456
    %v3489 = vsel %vm3477, %v3452, %v3454
    %v3490 = vsel %vm3477, %v3450, %v3452
    %v3491 = vsel %vm3477, %v3448, %v3450
    %v3492 = vsel %vm3477, %v3446, %v3448
    %v3493 = vsel %vm3477, %v3444, %v3446
    %v3494 = vsel %vm3477, %v3442, %v3444
    %v3495 = vsel %vm3477, %v3440, %v3442
    %v3496 = vsel %vm3477, %v3438, %v3440
    %v3497 = vsel %vm3477, %v3476, %v3438
    %3498 = vst [vmem:[#allocation4 + $0x6e0] sm:$0xff] %v3497
    %3499 = vst [vmem:[#allocation4 + $0x6e8] sm:$0xff] %v3496
    %3500 = vst [vmem:[#allocation4 + $0x6f0] sm:$0xff] %v3495
    %3501 = vst [vmem:[#allocation4 + $0x6f8] sm:$0xff] %v3494
    %3502 = vst [vmem:[#allocation4 + $0x700] sm:$0xff] %v3493
    %3503 = vst [vmem:[#allocation4 + $0x708] sm:$0xff] %v3492
    %3504 = vst [vmem:[#allocation4 + $0x710] sm:$0xff] %v3491
    %3505 = vst [vmem:[#allocation4 + $0x718] sm:$0xff] %v3490
    %3506 = vst [vmem:[#allocation4 + $0x720] sm:$0xff] %v3489
    %3507 = vst [vmem:[#allocation4 + $0x728] sm:$0xff] %v3488
    %3508 = vst [vmem:[#allocation4 + $0x730] sm:$0xff] %v3487
    %3509 = vst [vmem:[#allocation4 + $0x738] sm:$0xff] %v3486
    %3510 = vst [vmem:[#allocation4 + $0x740] sm:$0xff] %v3485
    %3511 = vst [vmem:[#allocation4 + $0x748] sm:$0xff] %v3484
    %3512 = vst [vmem:[#allocation4 + $0x750] sm:$0xff] %v3483
    %3513 = vst [vmem:[#allocation4 + $0x758] sm:$0xff] %v3482
    %3514 = vst [vmem:[#allocation4 + $0x760] sm:$0xff] %v3481
    %3515 = vst [vmem:[#allocation4 + $0x768] sm:$0xff] %v3480
    %3516 = vst [vmem:[#allocation4 + $0x770] sm:$0xff] %v3479
    %3517 = vst [vmem:[#allocation4 + $0x778] sm:$0xff] %v3478
    %3518 = vrot.lane.b32.xlu0 %v2774, 1
    %v3519 = vpop.permute.xlu0 %3518
    %3520 = vrot.lane.b32.xlu0 %v2775, 1
    %v3521 = vpop.permute.xlu0 %3520
    %3522 = vrot.lane.b32.xlu0 %v2776, 1
    %v3523 = vpop.permute.xlu0 %3522
    %3524 = vrot.lane.b32.xlu0 %v2777, 1
    %v3525 = vpop.permute.xlu0 %3524
    %3526 = vrot.lane.b32.xlu0 %v2778, 1
    %v3527 = vpop.permute.xlu0 %3526
    %3528 = vrot.lane.b32.xlu0 %v2779, 1
    %v3529 = vpop.permute.xlu0 %3528
    %3530 = vrot.lane.b32.xlu0 %v2780, 1
    %v3531 = vpop.permute.xlu0 %3530
    %3532 = vrot.lane.b32.xlu0 %v2781, 1
    %v3533 = vpop.permute.xlu0 %3532
    %3534 = vrot.lane.b32.xlu0 %v2782, 1
    %v3535 = vpop.permute.xlu0 %3534
    %3536 = vrot.lane.b32.xlu0 %v2783, 1
    %v3537 = vpop.permute.xlu0 %3536
    %3538 = vrot.lane.b32.xlu0 %v2784, 1
    %v3539 = vpop.permute.xlu0 %3538
    %3540 = vrot.lane.b32.xlu0 %v2785, 1
    %v3541 = vpop.permute.xlu0 %3540
    %3542 = vrot.lane.b32.xlu0 %v2786, 1
    %v3543 = vpop.permute.xlu0 %3542
    %3544 = vrot.lane.b32.xlu0 %v2787, 1
    %v3545 = vpop.permute.xlu0 %3544
    %3546 = vrot.lane.b32.xlu0 %v2788, 1
    %v3547 = vpop.permute.xlu0 %3546
    %3548 = vrot.lane.b32.xlu0 %v2789, 1
    %v3549 = vpop.permute.xlu0 %3548
    %3550 = vrot.lane.b32.xlu0 %v2790, 1
    %v3551 = vpop.permute.xlu0 %3550
    %3552 = vrot.lane.b32.xlu0 %v2791, 1
    %v3553 = vpop.permute.xlu0 %3552
    %3554 = vrot.lane.b32.xlu0 %v2792, 1
    %v3555 = vpop.permute.xlu0 %3554
    %3556 = vrot.lane.b32.xlu0 %v2793, 1
    %v3557 = vpop.permute.xlu0 %3556
    %v3558 = vsel %vm294, %v3555, %v3557
    %v3559 = vsel %vm294, %v3553, %v3555
    %v3560 = vsel %vm294, %v3551, %v3553
    %v3561 = vsel %vm294, %v3549, %v3551
    %v3562 = vsel %vm294, %v3547, %v3549
    %v3563 = vsel %vm294, %v3545, %v3547
    %v3564 = vsel %vm294, %v3543, %v3545
    %v3565 = vsel %vm294, %v3541, %v3543
    %v3566 = vsel %vm294, %v3539, %v3541
    %v3567 = vsel %vm294, %v3537, %v3539
    %v3568 = vsel %vm294, %v3535, %v3537
    %v3569 = vsel %vm294, %v3533, %v3535
    %v3570 = vsel %vm294, %v3531, %v3533
    %v3571 = vsel %vm294, %v3529, %v3531
    %v3572 = vsel %vm294, %v3527, %v3529
    %v3573 = vsel %vm294, %v3525, %v3527
    %v3574 = vsel %vm294, %v3523, %v3525
    %v3575 = vsel %vm294, %v3521, %v3523
    %v3576 = vsel %vm294, %v3519, %v3521
    %v3577 = vsel %vm294, %v3557, %v3519
    %3578 = vst [vmem:[#allocation4 + $0x780] sm:$0xff] %v3577
    %3579 = vst [vmem:[#allocation4 + $0x788] sm:$0xff] %v3576
    %3580 = vst [vmem:[#allocation4 + $0x790] sm:$0xff] %v3575
    %3581 = vst [vmem:[#allocation4 + $0x798] sm:$0xff] %v3574
    %3582 = vst [vmem:[#allocation4 + $0x7a0] sm:$0xff] %v3573
    %3583 = vst [vmem:[#allocation4 + $0x7a8] sm:$0xff] %v3572
    %3584 = vst [vmem:[#allocation4 + $0x7b0] sm:$0xff] %v3571
    %3585 = vst [vmem:[#allocation4 + $0x7b8] sm:$0xff] %v3570
    %3586 = vst [vmem:[#allocation4 + $0x7c0] sm:$0xff] %v3569
    %3587 = vst [vmem:[#allocation4 + $0x7c8] sm:$0xff] %v3568
    %3588 = vst [vmem:[#allocation4 + $0x7d0] sm:$0xff] %v3567
    %3589 = vst [vmem:[#allocation4 + $0x7d8] sm:$0xff] %v3566
    %3590 = vst [vmem:[#allocation4 + $0x7e0] sm:$0xff] %v3565
    %3591 = vst [vmem:[#allocation4 + $0x7e8] sm:$0xff] %v3564
    %3592 = vst [vmem:[#allocation4 + $0x7f0] sm:$0xff] %v3563
    %3593 = vst [vmem:[#allocation4 + $0x7f8] sm:$0xff] %v3562
    %3594 = vst [vmem:[#allocation4 + $0x800] sm:$0xff] %v3561
    %3595 = vst [vmem:[#allocation4 + $0x808] sm:$0xff] %v3560
    %3596 = vst [vmem:[#allocation4 + $0x810] sm:$0xff] %v3559
    %3597 = vst [vmem:[#allocation4 + $0x818] sm:$0xff] %v3558
    %3598 = vst [vmem:[#allocation4 + $0x820] sm:$0xff] %v2774
    %3599 = vst [vmem:[#allocation4 + $0x828] sm:$0xff] %v2775
    %3600 = vst [vmem:[#allocation4 + $0x830] sm:$0xff] %v2776
    %3601 = vst [vmem:[#allocation4 + $0x838] sm:$0xff] %v2777
    %3602 = vst [vmem:[#allocation4 + $0x840] sm:$0xff] %v2778
    %3603 = vst [vmem:[#allocation4 + $0x848] sm:$0xff] %v2779
    %3604 = vst [vmem:[#allocation4 + $0x850] sm:$0xff] %v2780
    %3605 = vst [vmem:[#allocation4 + $0x858] sm:$0xff] %v2781
    %3606 = vst [vmem:[#allocation4 + $0x860] sm:$0xff] %v2782
    %3607 = vst [vmem:[#allocation4 + $0x868] sm:$0xff] %v2783
    %3608 = vst [vmem:[#allocation4 + $0x870] sm:$0xff] %v2784
    %3609 = vst [vmem:[#allocation4 + $0x878] sm:$0xff] %v2785
    %3610 = vst [vmem:[#allocation4 + $0x880] sm:$0xff] %v2786
    %3611 = vst [vmem:[#allocation4 + $0x888] sm:$0xff] %v2787
    %3612 = vst [vmem:[#allocation4 + $0x890] sm:$0xff] %v2788
    %3613 = vst [vmem:[#allocation4 + $0x898] sm:$0xff] %v2789
    %3614 = vst [vmem:[#allocation4 + $0x8a0] sm:$0xff] %v2790
    %3615 = vst [vmem:[#allocation4 + $0x8a8] sm:$0xff] %v2791
    %3616 = vst [vmem:[#allocation4 + $0x8b0] sm:$0xff] %v2792
    %3617 = vst [vmem:[#allocation4 + $0x8b8] sm:$0xff] %v2793
    %3618 = vrot.lane.b32.xlu0 %v2774, 127
    %v3619 = vpop.permute.xlu0 %3618
    %3620 = vrot.lane.b32.xlu0 %v2775, 127
    %v3621 = vpop.permute.xlu0 %3620
    %3622 = vrot.lane.b32.xlu0 %v2776, 127
    %v3623 = vpop.permute.xlu0 %3622
    %3624 = vrot.lane.b32.xlu0 %v2777, 127
    %v3625 = vpop.permute.xlu0 %3624
    %3626 = vrot.lane.b32.xlu0 %v2778, 127
    %v3627 = vpop.permute.xlu0 %3626
    %3628 = vrot.lane.b32.xlu0 %v2779, 127
    %v3629 = vpop.permute.xlu0 %3628
    %3630 = vrot.lane.b32.xlu0 %v2780, 127
    %v3631 = vpop.permute.xlu0 %3630
    %3632 = vrot.lane.b32.xlu0 %v2781, 127
    %v3633 = vpop.permute.xlu0 %3632
    %3634 = vrot.lane.b32.xlu0 %v2782, 127
    %v3635 = vpop.permute.xlu0 %3634
    %3636 = vrot.lane.b32.xlu0 %v2783, 127
    %v3637 = vpop.permute.xlu0 %3636
    %3638 = vrot.lane.b32.xlu0 %v2784, 127
    %v3639 = vpop.permute.xlu0 %3638
    %3640 = vrot.lane.b32.xlu0 %v2785, 127
    %v3641 = vpop.permute.xlu0 %3640
    %3642 = vrot.lane.b32.xlu0 %v2786, 127
    %v3643 = vpop.permute.xlu0 %3642
    %3644 = vrot.lane.b32.xlu0 %v2787, 127
    %v3645 = vpop.permute.xlu0 %3644
    %3646 = vrot.lane.b32.xlu0 %v2788, 127
    %v3647 = vpop.permute.xlu0 %3646
    %3648 = vrot.lane.b32.xlu0 %v2789, 127
    %v3649 = vpop.permute.xlu0 %3648
    %3650 = vrot.lane.b32.xlu0 %v2790, 127
    %v3651 = vpop.permute.xlu0 %3650
    %3652 = vrot.lane.b32.xlu0 %v2791, 127
    %v3653 = vpop.permute.xlu0 %3652
    %3654 = vrot.lane.b32.xlu0 %v2792, 127
    %v3655 = vpop.permute.xlu0 %3654
    %3656 = vrot.lane.b32.xlu0 %v2793, 127
    %v3657 = vpop.permute.xlu0 %3656
    %v3658 = vsel %vm315, %v3655, %v3657
    %v3659 = vsel %vm315, %v3653, %v3655
    %v3660 = vsel %vm315, %v3651, %v3653
    %v3661 = vsel %vm315, %v3649, %v3651
    %v3662 = vsel %vm315, %v3647, %v3649
    %v3663 = vsel %vm315, %v3645, %v3647
    %v3664 = vsel %vm315, %v3643, %v3645
    %v3665 = vsel %vm315, %v3641, %v3643
    %v3666 = vsel %vm315, %v3639, %v3641
    %v3667 = vsel %vm315, %v3637, %v3639
    %v3668 = vsel %vm315, %v3635, %v3637
    %v3669 = vsel %vm315, %v3633, %v3635
    %v3670 = vsel %vm315, %v3631, %v3633
    %v3671 = vsel %vm315, %v3629, %v3631
    %v3672 = vsel %vm315, %v3627, %v3629
    %v3673 = vsel %vm315, %v3625, %v3627
    %v3674 = vsel %vm315, %v3623, %v3625
    %v3675 = vsel %vm315, %v3621, %v3623
    %v3676 = vsel %vm315, %v3619, %v3621
    %v3677 = vsel %vm315, %v3657, %v3619
    %3678 = vst [vmem:[#allocation4 + $0x8c0] sm:$0xff] %v3676
    %3679 = vst [vmem:[#allocation4 + $0x8c8] sm:$0xff] %v3675
    %3680 = vst [vmem:[#allocation4 + $0x8d0] sm:$0xff] %v3674
    %3681 = vst [vmem:[#allocation4 + $0x8d8] sm:$0xff] %v3673
    %3682 = vst [vmem:[#allocation4 + $0x8e0] sm:$0xff] %v3672
    %3683 = vst [vmem:[#allocation4 + $0x8e8] sm:$0xff] %v3671
    %3684 = vst [vmem:[#allocation4 + $0x8f0] sm:$0xff] %v3670
    %3685 = vst [vmem:[#allocation4 + $0x8f8] sm:$0xff] %v3669
    %3686 = vst [vmem:[#allocation4 + $0x900] sm:$0xff] %v3668
    %3687 = vst [vmem:[#allocation4 + $0x908] sm:$0xff] %v3667
    %3688 = vst [vmem:[#allocation4 + $0x910] sm:$0xff] %v3666
    %3689 = vst [vmem:[#allocation4 + $0x918] sm:$0xff] %v3665
    %3690 = vst [vmem:[#allocation4 + $0x920] sm:$0xff] %v3664
    %3691 = vst [vmem:[#allocation4 + $0x928] sm:$0xff] %v3663
    %3692 = vst [vmem:[#allocation4 + $0x930] sm:$0xff] %v3662
    %3693 = vst [vmem:[#allocation4 + $0x938] sm:$0xff] %v3661
    %3694 = vst [vmem:[#allocation4 + $0x940] sm:$0xff] %v3660
    %3695 = vst [vmem:[#allocation4 + $0x948] sm:$0xff] %v3659
    %3696 = vst [vmem:[#allocation4 + $0x950] sm:$0xff] %v3658
    %3697 = vst [vmem:[#allocation4 + $0x958] sm:$0xff] %v3677
    %3698 = vrot.lane.b32.xlu0 %v2774, 95
    %v3699 = vpop.permute.xlu0 %3698
    %3700 = vrot.lane.b32.xlu0 %v2775, 95
    %v3701 = vpop.permute.xlu0 %3700
    %3702 = vrot.lane.b32.xlu0 %v2776, 95
    %v3703 = vpop.permute.xlu0 %3702
    %3704 = vrot.lane.b32.xlu0 %v2777, 95
    %v3705 = vpop.permute.xlu0 %3704
    %3706 = vrot.lane.b32.xlu0 %v2778, 95
    %v3707 = vpop.permute.xlu0 %3706
    %3708 = vrot.lane.b32.xlu0 %v2779, 95
    %v3709 = vpop.permute.xlu0 %3708
    %3710 = vrot.lane.b32.xlu0 %v2780, 95
    %v3711 = vpop.permute.xlu0 %3710
    %3712 = vrot.lane.b32.xlu0 %v2781, 95
    %v3713 = vpop.permute.xlu0 %3712
    %3714 = vrot.lane.b32.xlu0 %v2782, 95
    %v3715 = vpop.permute.xlu0 %3714
    %3716 = vrot.lane.b32.xlu0 %v2783, 95
    %v3717 = vpop.permute.xlu0 %3716
    %3718 = vrot.lane.b32.xlu0 %v2784, 95
    %v3719 = vpop.permute.xlu0 %3718
    %3720 = vrot.lane.b32.xlu0 %v2785, 95
    %v3721 = vpop.permute.xlu0 %3720
    %3722 = vrot.lane.b32.xlu0 %v2786, 95
    %v3723 = vpop.permute.xlu0 %3722
    %3724 = vrot.lane.b32.xlu0 %v2787, 95
    %v3725 = vpop.permute.xlu0 %3724
    %3726 = vrot.lane.b32.xlu0 %v2788, 95
    %v3727 = vpop.permute.xlu0 %3726
    %3728 = vrot.lane.b32.xlu0 %v2789, 95
    %v3729 = vpop.permute.xlu0 %3728
    %3730 = vrot.lane.b32.xlu0 %v2790, 95
    %v3731 = vpop.permute.xlu0 %3730
    %3732 = vrot.lane.b32.xlu0 %v2791, 95
    %v3733 = vpop.permute.xlu0 %3732
    %3734 = vrot.lane.b32.xlu0 %v2792, 95
    %v3735 = vpop.permute.xlu0 %3734
    %3736 = vrot.lane.b32.xlu0 %v2793, 95
    %v3737 = vpop.permute.xlu0 %3736
    %vm3738 = vcmp.lt.s32.totalorder %v242, 95
    %v3739 = vsel %vm3738, %v3735, %v3737
    %v3740 = vsel %vm3738, %v3733, %v3735
    %v3741 = vsel %vm3738, %v3731, %v3733
    %v3742 = vsel %vm3738, %v3729, %v3731
    %v3743 = vsel %vm3738, %v3727, %v3729
    %v3744 = vsel %vm3738, %v3725, %v3727
    %v3745 = vsel %vm3738, %v3723, %v3725
    %v3746 = vsel %vm3738, %v3721, %v3723
    %v3747 = vsel %vm3738, %v3719, %v3721
    %v3748 = vsel %vm3738, %v3717, %v3719
    %v3749 = vsel %vm3738, %v3715, %v3717
    %v3750 = vsel %vm3738, %v3713, %v3715
    %v3751 = vsel %vm3738, %v3711, %v3713
    %v3752 = vsel %vm3738, %v3709, %v3711
    %v3753 = vsel %vm3738, %v3707, %v3709
    %v3754 = vsel %vm3738, %v3705, %v3707
    %v3755 = vsel %vm3738, %v3703, %v3705
    %v3756 = vsel %vm3738, %v3701, %v3703
    %v3757 = vsel %vm3738, %v3699, %v3701
    %v3758 = vsel %vm3738, %v3737, %v3699
    %3759 = vst [vmem:[#allocation4 + $0x960] sm:$0xff] %v3757
    %3760 = vst [vmem:[#allocation4 + $0x968] sm:$0xff] %v3756
    %3761 = vst [vmem:[#allocation4 + $0x970] sm:$0xff] %v3755
    %3762 = vst [vmem:[#allocation4 + $0x978] sm:$0xff] %v3754
    %3763 = vst [vmem:[#allocation4 + $0x980] sm:$0xff] %v3753
    %3764 = vst [vmem:[#allocation4 + $0x988] sm:$0xff] %v3752
    %3765 = vst [vmem:[#allocation4 + $0x990] sm:$0xff] %v3751
    %3766 = vst [vmem:[#allocation4 + $0x998] sm:$0xff] %v3750
    %3767 = vst [vmem:[#allocation4 + $0x9a0] sm:$0xff] %v3749
    %3768 = vst [vmem:[#allocation4 + $0x9a8] sm:$0xff] %v3748
    %3769 = vst [vmem:[#allocation4 + $0x9b0] sm:$0xff] %v3747
    %3770 = vst [vmem:[#allocation4 + $0x9b8] sm:$0xff] %v3746
    %3771 = vst [vmem:[#allocation4 + $0x9c0] sm:$0xff] %v3745
    %3772 = vst [vmem:[#allocation4 + $0x9c8] sm:$0xff] %v3744
    %3773 = vst [vmem:[#allocation4 + $0x9d0] sm:$0xff] %v3743
    %3774 = vst [vmem:[#allocation4 + $0x9d8] sm:$0xff] %v3742
    %3775 = vst [vmem:[#allocation4 + $0x9e0] sm:$0xff] %v3741
    %3776 = vst [vmem:[#allocation4 + $0x9e8] sm:$0xff] %v3740
    %3777 = vst [vmem:[#allocation4 + $0x9f0] sm:$0xff] %v3739
    %3778 = vst [vmem:[#allocation4 + $0x9f8] sm:$0xff] %v3758
    %3779 = vrot.lane.b32.xlu0 %v2774, 94
    %v3780 = vpop.permute.xlu0 %3779
    %3781 = vrot.lane.b32.xlu0 %v2775, 94
    %v3782 = vpop.permute.xlu0 %3781
    %3783 = vrot.lane.b32.xlu0 %v2776, 94
    %v3784 = vpop.permute.xlu0 %3783
    %3785 = vrot.lane.b32.xlu0 %v2777, 94
    %v3786 = vpop.permute.xlu0 %3785
    %3787 = vrot.lane.b32.xlu0 %v2778, 94
    %v3788 = vpop.permute.xlu0 %3787
    %3789 = vrot.lane.b32.xlu0 %v2779, 94
    %v3790 = vpop.permute.xlu0 %3789
    %3791 = vrot.lane.b32.xlu0 %v2780, 94
    %v3792 = vpop.permute.xlu0 %3791
    %3793 = vrot.lane.b32.xlu0 %v2781, 94
    %v3794 = vpop.permute.xlu0 %3793
    %3795 = vrot.lane.b32.xlu0 %v2782, 94
    %v3796 = vpop.permute.xlu0 %3795
    %3797 = vrot.lane.b32.xlu0 %v2783, 94
    %v3798 = vpop.permute.xlu0 %3797
    %3799 = vrot.lane.b32.xlu0 %v2784, 94
    %v3800 = vpop.permute.xlu0 %3799
    %3801 = vrot.lane.b32.xlu0 %v2785, 94
    %v3802 = vpop.permute.xlu0 %3801
    %3803 = vrot.lane.b32.xlu0 %v2786, 94
    %v3804 = vpop.permute.xlu0 %3803
    %3805 = vrot.lane.b32.xlu0 %v2787, 94
    %v3806 = vpop.permute.xlu0 %3805
    %3807 = vrot.lane.b32.xlu0 %v2788, 94
    %v3808 = vpop.permute.xlu0 %3807
    %3809 = vrot.lane.b32.xlu0 %v2789, 94
    %v3810 = vpop.permute.xlu0 %3809
    %3811 = vrot.lane.b32.xlu0 %v2790, 94
    %v3812 = vpop.permute.xlu0 %3811
    %3813 = vrot.lane.b32.xlu0 %v2791, 94
    %v3814 = vpop.permute.xlu0 %3813
    %3815 = vrot.lane.b32.xlu0 %v2792, 94
    %v3816 = vpop.permute.xlu0 %3815
    %3817 = vrot.lane.b32.xlu0 %v2793, 94
    %v3818 = vpop.permute.xlu0 %3817
    %vm3819 = vcmp.lt.s32.totalorder %v242, 94
    %v3820 = vsel %vm3819, %v3816, %v3818
    %v3821 = vsel %vm3819, %v3814, %v3816
    %v3822 = vsel %vm3819, %v3812, %v3814
    %v3823 = vsel %vm3819, %v3810, %v3812
    %v3824 = vsel %vm3819, %v3808, %v3810
    %v3825 = vsel %vm3819, %v3806, %v3808
    %v3826 = vsel %vm3819, %v3804, %v3806
    %v3827 = vsel %vm3819, %v3802, %v3804
    %v3828 = vsel %vm3819, %v3800, %v3802
    %v3829 = vsel %vm3819, %v3798, %v3800
    %v3830 = vsel %vm3819, %v3796, %v3798
    %v3831 = vsel %vm3819, %v3794, %v3796
    %v3832 = vsel %vm3819, %v3792, %v3794
    %v3833 = vsel %vm3819, %v3790, %v3792
    %v3834 = vsel %vm3819, %v3788, %v3790
    %v3835 = vsel %vm3819, %v3786, %v3788
    %v3836 = vsel %vm3819, %v3784, %v3786
    %v3837 = vsel %vm3819, %v3782, %v3784
    %v3838 = vsel %vm3819, %v3780, %v3782
    %v3839 = vsel %vm3819, %v3818, %v3780
    %3840 = vst [vmem:[#allocation4 + $0xa00] sm:$0xff] %v3838
    %3841 = vst [vmem:[#allocation4 + $0xa08] sm:$0xff] %v3837
    %3842 = vst [vmem:[#allocation4 + $0xa10] sm:$0xff] %v3836
    %3843 = vst [vmem:[#allocation4 + $0xa18] sm:$0xff] %v3835
    %3844 = vst [vmem:[#allocation4 + $0xa20] sm:$0xff] %v3834
    %3845 = vst [vmem:[#allocation4 + $0xa28] sm:$0xff] %v3833
    %3846 = vst [vmem:[#allocation4 + $0xa30] sm:$0xff] %v3832
    %3847 = vst [vmem:[#allocation4 + $0xa38] sm:$0xff] %v3831
    %3848 = vst [vmem:[#allocation4 + $0xa40] sm:$0xff] %v3830
    %3849 = vst [vmem:[#allocation4 + $0xa48] sm:$0xff] %v3829
    %3850 = vst [vmem:[#allocation4 + $0xa50] sm:$0xff] %v3828
    %3851 = vst [vmem:[#allocation4 + $0xa58] sm:$0xff] %v3827
    %3852 = vst [vmem:[#allocation4 + $0xa60] sm:$0xff] %v3826
    %3853 = vst [vmem:[#allocation4 + $0xa68] sm:$0xff] %v3825
    %3854 = vst [vmem:[#allocation4 + $0xa70] sm:$0xff] %v3824
    %3855 = vst [vmem:[#allocation4 + $0xa78] sm:$0xff] %v3823
    %3856 = vst [vmem:[#allocation4 + $0xa80] sm:$0xff] %v3822
    %3857 = vst [vmem:[#allocation4 + $0xa88] sm:$0xff] %v3821
    %3858 = vst [vmem:[#allocation4 + $0xa90] sm:$0xff] %v3820
    %3859 = vst [vmem:[#allocation4 + $0xa98] sm:$0xff] %v3839
    %3860 = vrot.lane.b32.xlu0 %v2774, 93
    %v3861 = vpop.permute.xlu0 %3860
    %3862 = vrot.lane.b32.xlu0 %v2775, 93
    %v3863 = vpop.permute.xlu0 %3862
    %3864 = vrot.lane.b32.xlu0 %v2776, 93
    %v3865 = vpop.permute.xlu0 %3864
    %3866 = vrot.lane.b32.xlu0 %v2777, 93
    %v3867 = vpop.permute.xlu0 %3866
    %3868 = vrot.lane.b32.xlu0 %v2778, 93
    %v3869 = vpop.permute.xlu0 %3868
    %3870 = vrot.lane.b32.xlu0 %v2779, 93
    %v3871 = vpop.permute.xlu0 %3870
    %3872 = vrot.lane.b32.xlu0 %v2780, 93
    %v3873 = vpop.permute.xlu0 %3872
    %3874 = vrot.lane.b32.xlu0 %v2781, 93
    %v3875 = vpop.permute.xlu0 %3874
    %3876 = vrot.lane.b32.xlu0 %v2782, 93
    %v3877 = vpop.permute.xlu0 %3876
    %3878 = vrot.lane.b32.xlu0 %v2783, 93
    %v3879 = vpop.permute.xlu0 %3878
    %3880 = vrot.lane.b32.xlu0 %v2784, 93
    %v3881 = vpop.permute.xlu0 %3880
    %3882 = vrot.lane.b32.xlu0 %v2785, 93
    %v3883 = vpop.permute.xlu0 %3882
    %3884 = vrot.lane.b32.xlu0 %v2786, 93
    %v3885 = vpop.permute.xlu0 %3884
    %3886 = vrot.lane.b32.xlu0 %v2787, 93
    %v3887 = vpop.permute.xlu0 %3886
    %3888 = vrot.lane.b32.xlu0 %v2788, 93
    %v3889 = vpop.permute.xlu0 %3888
    %3890 = vrot.lane.b32.xlu0 %v2789, 93
    %v3891 = vpop.permute.xlu0 %3890
    %3892 = vrot.lane.b32.xlu0 %v2790, 93
    %v3893 = vpop.permute.xlu0 %3892
    %3894 = vrot.lane.b32.xlu0 %v2791, 93
    %v3895 = vpop.permute.xlu0 %3894
    %3896 = vrot.lane.b32.xlu0 %v2792, 93
    %v3897 = vpop.permute.xlu0 %3896
    %3898 = vrot.lane.b32.xlu0 %v2793, 93
    %v3899 = vpop.permute.xlu0 %3898
    %vm3900 = vcmp.lt.s32.totalorder %v242, 93
    %v3901 = vsel %vm3900, %v3897, %v3899
    %v3902 = vsel %vm3900, %v3895, %v3897
    %v3903 = vsel %vm3900, %v3893, %v3895
    %v3904 = vsel %vm3900, %v3891, %v3893
    %v3905 = vsel %vm3900, %v3889, %v3891
    %v3906 = vsel %vm3900, %v3887, %v3889
    %v3907 = vsel %vm3900, %v3885, %v3887
    %v3908 = vsel %vm3900, %v3883, %v3885
    %v3909 = vsel %vm3900, %v3881, %v3883
    %v3910 = vsel %vm3900, %v3879, %v3881
    %v3911 = vsel %vm3900, %v3877, %v3879
    %v3912 = vsel %vm3900, %v3875, %v3877
    %v3913 = vsel %vm3900, %v3873, %v3875
    %v3914 = vsel %vm3900, %v3871, %v3873
    %v3915 = vsel %vm3900, %v3869, %v3871
    %v3916 = vsel %vm3900, %v3867, %v3869
    %v3917 = vsel %vm3900, %v3865, %v3867
    %v3918 = vsel %vm3900, %v3863, %v3865
    %v3919 = vsel %vm3900, %v3861, %v3863
    %v3920 = vsel %vm3900, %v3899, %v3861
    %3921 = vst [vmem:[#allocation4 + $0xaa0] sm:$0xff] %v3919
    %3922 = vst [vmem:[#allocation4 + $0xaa8] sm:$0xff] %v3918
    %3923 = vst [vmem:[#allocation4 + $0xab0] sm:$0xff] %v3917
    %3924 = vst [vmem:[#allocation4 + $0xab8] sm:$0xff] %v3916
    %3925 = vst [vmem:[#allocation4 + $0xac0] sm:$0xff] %v3915
    %3926 = vst [vmem:[#allocation4 + $0xac8] sm:$0xff] %v3914
    %3927 = vst [vmem:[#allocation4 + $0xad0] sm:$0xff] %v3913
    %3928 = vst [vmem:[#allocation4 + $0xad8] sm:$0xff] %v3912
    %3929 = vst [vmem:[#allocation4 + $0xae0] sm:$0xff] %v3911
    %3930 = vst [vmem:[#allocation4 + $0xae8] sm:$0xff] %v3910
    %3931 = vst [vmem:[#allocation4 + $0xaf0] sm:$0xff] %v3909
    %3932 = vst [vmem:[#allocation4 + $0xaf8] sm:$0xff] %v3908
    %3933 = vst [vmem:[#allocation4 + $0xb00] sm:$0xff] %v3907
    %3934 = vst [vmem:[#allocation4 + $0xb08] sm:$0xff] %v3906
    %3935 = vst [vmem:[#allocation4 + $0xb10] sm:$0xff] %v3905
    %3936 = vst [vmem:[#allocation4 + $0xb18] sm:$0xff] %v3904
    %3937 = vst [vmem:[#allocation4 + $0xb20] sm:$0xff] %v3903
    %3938 = vst [vmem:[#allocation4 + $0xb28] sm:$0xff] %v3902
    %3939 = vst [vmem:[#allocation4 + $0xb30] sm:$0xff] %v3901
    %3940 = vst [vmem:[#allocation4 + $0xb38] sm:$0xff] %v3920
    %3941 = vmatprep.subr.mxu0 %v2796
    %3942 = vmatpush1.msra.mxu0 %v2795
    %3943 = vmatprep.subr.mxu0 %v2806
    %3944 = vmatpush1.msra.mxu0 %v2805
    %3945 = vmatprep.subr.mxu0 %v2816
    %3946 = vmatpush1.msra.mxu0 %v2815
    %3947 = vmatprep.subr.mxu0 %v2826
    %3948 = vmatpush1.msra.mxu0 %v2825
    %3949 = vmatprep.subr.mxu0 %v2836
    %3950 = vmatpush1.msra.mxu0 %v2835
    %3951 = vmatprep.subr.mxu0 %v2846
    %3952 = vmatpush1.msra.mxu0 %v2845
    %3953 = vmatprep.subr.mxu0 %v2856
    %3954 = vmatpush1.msra.mxu0 %v2855
    %3955 = vmatprep.subr.mxu0 %v2866
    %3956 = vmatpush1.msra.mxu0 %v2865
    %3957 = vmatprep.subr.mxu0 %v2876
    %3958 = vmatpush1.msra.mxu0 %v2875
    %3959 = vmatprep.subr.mxu0 %v2886
    %3960 = vmatpush1.msra.mxu0 %v2885
    %3961 = vmatprep.subr.mxu0 %v2896
    %3962 = vmatpush1.msra.mxu0 %v2895
    %3963 = vmatprep.subr.mxu0 %v2906
    %3964 = vmatpush1.msra.mxu0 %v2905
    %3965 = vmatprep.subr.mxu0 %v2916
    %3966 = vmatpush1.msra.mxu0 %v2915
    %3967 = vmatprep.subr.mxu0 %v2926
    %3968 = vmatpush1.msra.mxu0 %v2925
    %3969 = vmatprep.subr.mxu0 %v2936
    %3970 = vmatpush1.msra.mxu0 %v2935
    %3971 = vmatprep.subr.mxu0 %v2946
    %3972 = vmatpush1.msra.mxu0 %v2945
    %3973 = vmatprep.subr.mxu0 %v2956
    %3974 = vmatpush1.msra.mxu0 %v2955
    %3975 = vmatprep.subr.mxu0 %v2966
    %3976 = vmatpush1.msra.mxu0 %v2965
    %3977 = vmatprep.subr.mxu0 %v2976
    %3978 = vmatpush1.msra.mxu0 %v2975
    %3979 = vmatprep.subr.mxu0 %v2986
    %3980 = vmatpush1.msra.mxu0 %v2985
    %3981 = vmatprep.subr.mxu0 %v2996
    %3982 = vmatpush1.msra.mxu0 %v2995
    %3983 = vmatprep.subr.mxu0 %v3006
    %3984 = vmatpush1.msra.mxu0 %v3005
    %3985 = vmatprep.subr.mxu0 %v3016
    %3986 = vmatpush1.msra.mxu0 %v3015
    %3987 = vmatprep.subr.mxu0 %v3026
    %3988 = vmatpush1.msra.mxu0 %v3025
    %3989 = vmatprep.subr.mxu0 %v3036
    %3990 = vmatpush1.msra.mxu0 %v3035
    %3991 = vmatprep.subr.mxu0 %v3046
    %3992 = vmatpush1.msra.mxu0 %v3045
    %3993 = vmatprep.subr.mxu0 %v3056
    %3994 = vmatpush1.msra.mxu0 %v3055
    %3995 = vmatprep.subr.mxu0 %v3066
    %3996 = vmatpush1.msra.mxu0 %v3065
    %3997 = vmatprep.subr.mxu0 %v3076
    %3998 = vmatpush1.msra.mxu0 %v3075
    %3999 = vmatprep.subr.mxu0 %v3086
    %4000 = vmatpush1.msra.mxu0 %v3085
    %4001 = vmatprep.subr.mxu0 %v3096
    %4002 = vmatpush1.msra.mxu0 %v3095
    %4003 = vmatprep.subr.mxu0 %v3106
    %4004 = vmatpush1.msra.mxu0 %v3105
    %4005 = vmatprep.mubr.f32.mxu0 %v2525
    %4006 = vmatmul.mubr.f32.gmra.mrb[0].mxu0 %v2524
    %v4007 = vpop.f32.mrb[0].mxu0
    %v4008 = vadd.f32 0.0, %v4007
    %v4009 = vpop.f32.mrb[0].mxu0
    %v4010 = vadd.f32 0.0, %v4009
    %4011 = vdwg.mxu0
    %4012 = vmatprep.subr.mxu0 %v3116
    %4013 = vmatpush1.msra.mxu0 %v3115
    %4014 = vmatprep.subr.mxu0 %v3126
    %4015 = vmatpush1.msra.mxu0 %v3125
    %4016 = vmatprep.subr.mxu0 %v3136
    %4017 = vmatpush1.msra.mxu0 %v3135
    %4018 = vmatprep.subr.mxu0 %v3146
    %4019 = vmatpush1.msra.mxu0 %v3145
    %4020 = vmatprep.subr.mxu0 %v3156
    %4021 = vmatpush1.msra.mxu0 %v3155
    %4022 = vmatprep.subr.mxu0 %v3166
    %4023 = vmatpush1.msra.mxu0 %v3165
    %4024 = vmatprep.subr.mxu0 %v3176
    %4025 = vmatpush1.msra.mxu0 %v3175
    %4026 = vmatprep.subr.mxu0 %v3186
    %4027 = vmatpush1.msra.mxu0 %v3185
    %4028 = vmatprep.subr.mxu0 %v3196
    %4029 = vmatpush1.msra.mxu0 %v3195
    %4030 = vmatprep.subr.mxu0 %v3206
    %4031 = vmatpush1.msra.mxu0 %v3205
    %4032 = vmatprep.subr.mxu0 %v3216
    %4033 = vmatpush1.msra.mxu0 %v3215
    %4034 = vmatprep.subr.mxu0 %v3226
    %4035 = vmatpush1.msra.mxu0 %v3225
    %4036 = vmatprep.subr.mxu0 %v3236
    %4037 = vmatpush1.msra.mxu0 %v3235
    %4038 = vmatprep.subr.mxu0 %v3246
    %4039 = vmatpush1.msra.mxu0 %v3245
    %4040 = vmatprep.subr.mxu0 %v3256
    %4041 = vmatpush1.msra.mxu0 %v3255
    %4042 = vmatprep.subr.mxu0 %v3266
    %4043 = vmatpush1.msra.mxu0 %v3265
    %4044 = vmatprep.subr.mxu0 0.0
    %4045 = vmatpush1.msra.mxu0 0.0
    %4046 = vmatprep.subr.mxu0 0.0
    %4047 = vmatpush1.msra.mxu0 0.0
    %4048 = vmatprep.subr.mxu0 0.0
    %4049 = vmatpush1.msra.mxu0 0.0
    %4050 = vmatprep.subr.mxu0 0.0
    %4051 = vmatpush1.msra.mxu0 0.0
    %4052 = vmatprep.subr.mxu0 0.0
    %4053 = vmatpush1.msra.mxu0 0.0
    %4054 = vmatprep.subr.mxu0 0.0
    %4055 = vmatpush1.msra.mxu0 0.0
    %4056 = vmatprep.subr.mxu0 0.0
    %4057 = vmatpush1.msra.mxu0 0.0
    %4058 = vmatprep.subr.mxu0 0.0
    %4059 = vmatpush1.msra.mxu0 0.0
    %4060 = vmatprep.subr.mxu0 0.0
    %4061 = vmatpush1.msra.mxu0 0.0
    %4062 = vmatprep.subr.mxu0 0.0
    %4063 = vmatpush1.msra.mxu0 0.0
    %4064 = vmatprep.subr.mxu0 0.0
    %4065 = vmatpush1.msra.mxu0 0.0
    %4066 = vmatprep.subr.mxu0 0.0
    %4067 = vmatpush1.msra.mxu0 0.0
    %4068 = vmatprep.subr.mxu0 0.0
    %4069 = vmatpush1.msra.mxu0 0.0
    %4070 = vmatprep.subr.mxu0 0.0
    %4071 = vmatpush1.msra.mxu0 0.0
    %4072 = vmatprep.subr.mxu0 0.0
    %4073 = vmatpush1.msra.mxu0 0.0
    %4074 = vmatprep.subr.mxu0 0.0
    %4075 = vmatpush1.msra.mxu0 0.0
    %4076 = vmatprep.mubr.f32.mxu0 0.0
    %4077 = vmatmul.mubr.f32.gmra.mrb[0].mxu0 %v2526
    %v4078 = vpop.f32.mrb[0].mxu0
    %v4079 = vadd.f32 %v4008, %v4078
    %v4080 = vpop.f32.mrb[0].mxu0
    %v4081 = vadd.f32 %v4010, %v4080
    %4082 = vdwg.mxu0
    %4083 = vmatprep.subr.mxu0 %v2798
    %4084 = vmatpush1.msra.mxu0 %v2797
    %4085 = vmatprep.subr.mxu0 %v2808
    %4086 = vmatpush1.msra.mxu0 %v2807
    %4087 = vmatprep.subr.mxu0 %v2818
    %4088 = vmatpush1.msra.mxu0 %v2817
    %4089 = vmatprep.subr.mxu0 %v2828
    %4090 = vmatpush1.msra.mxu0 %v2827
    %4091 = vmatprep.subr.mxu0 %v2838
    %4092 = vmatpush1.msra.mxu0 %v2837
    %4093 = vmatprep.subr.mxu0 %v2848
    %4094 = vmatpush1.msra.mxu0 %v2847
    %4095 = vmatprep.subr.mxu0 %v2858
    %4096 = vmatpush1.msra.mxu0 %v2857
    %4097 = vmatprep.subr.mxu0 %v2868
    %4098 = vmatpush1.msra.mxu0 %v2867
    %4099 = vmatprep.subr.mxu0 %v2878
    %4100 = vmatpush1.msra.mxu0 %v2877
    %4101 = vmatprep.subr.mxu0 %v2888
    %4102 = vmatpush1.msra.mxu0 %v2887
    %4103 = vmatprep.subr.mxu0 %v2898
    %4104 = vmatpush1.msra.mxu0 %v2897
    %4105 = vmatprep.subr.mxu0 %v2908
    %4106 = vmatpush1.msra.mxu0 %v2907
    %4107 = vmatprep.subr.mxu0 %v2918
    %4108 = vmatpush1.msra.mxu0 %v2917
    %4109 = vmatprep.subr.mxu0 %v2928
    %4110 = vmatpush1.msra.mxu0 %v2927
    %4111 = vmatprep.subr.mxu0 %v2938
    %4112 = vmatpush1.msra.mxu0 %v2937
    %4113 = vmatprep.subr.mxu0 %v2948
    %4114 = vmatpush1.msra.mxu0 %v2947
    %4115 = vmatprep.subr.mxu0 %v2958
    %4116 = vmatpush1.msra.mxu0 %v2957
    %4117 = vmatprep.subr.mxu0 %v2968
    %4118 = vmatpush1.msra.mxu0 %v2967
    %4119 = vmatprep.subr.mxu0 %v2978
    %4120 = vmatpush1.msra.mxu0 %v2977
    %4121 = vmatprep.subr.mxu0 %v2988
    %4122 = vmatpush1.msra.mxu0 %v2987
    %4123 = vmatprep.subr.mxu0 %v2998
    %4124 = vmatpush1.msra.mxu0 %v2997
    %4125 = vmatprep.subr.mxu0 %v3008
    %4126 = vmatpush1.msra.mxu0 %v3007
    %4127 = vmatprep.subr.mxu0 %v3018
    %4128 = vmatpush1.msra.mxu0 %v3017
    %4129 = vmatprep.subr.mxu0 %v3028
    %4130 = vmatpush1.msra.mxu0 %v3027
    %4131 = vmatprep.subr.mxu0 %v3038
    %4132 = vmatpush1.msra.mxu0 %v3037
    %4133 = vmatprep.subr.mxu0 %v3048
    %4134 = vmatpush1.msra.mxu0 %v3047
    %4135 = vmatprep.subr.mxu0 %v3058
    %4136 = vmatpush1.msra.mxu0 %v3057
    %4137 = vmatprep.subr.mxu0 %v3068
    %4138 = vmatpush1.msra.mxu0 %v3067
    %4139 = vmatprep.subr.mxu0 %v3078
    %4140 = vmatpush1.msra.mxu0 %v3077
    %4141 = vmatprep.subr.mxu0 %v3088
    %4142 = vmatpush1.msra.mxu0 %v3087
    %4143 = vmatprep.subr.mxu0 %v3098
    %4144 = vmatpush1.msra.mxu0 %v3097
    %4145 = vmatprep.subr.mxu0 %v3108
    %4146 = vmatpush1.msra.mxu0 %v3107
    %4147 = vmatprep.mubr.f32.mxu0 %v2525
    %4148 = vmatmul.mubr.f32.gmra.mrb[0].mxu0 %v2524
    %v4149 = vpop.f32.mrb[0].mxu0
    %v4150 = vadd.f32 0.0, %v4149
    %v4151 = vpop.f32.mrb[0].mxu0
    %v4152 = vadd.f32 0.0, %v4151
    %4153 = vdwg.mxu0
    %4154 = vmatprep.subr.mxu0 %v3118
    %4155 = vmatpush1.msra.mxu0 %v3117
    %4156 = vmatprep.subr.mxu0 %v3128
    %4157 = vmatpush1.msra.mxu0 %v3127
    %4158 = vmatprep.subr.mxu0 %v3138
    %4159 = vmatpush1.msra.mxu0 %v3137
    %4160 = vmatprep.subr.mxu0 %v3148
    %4161 = vmatpush1.msra.mxu0 %v3147
    %4162 = vmatprep.subr.mxu0 %v3158
    %4163 = vmatpush1.msra.mxu0 %v3157
    %4164 = vmatprep.subr.mxu0 %v3168
    %4165 = vmatpush1.msra.mxu0 %v3167
    %4166 = vmatprep.subr.mxu0 %v3178
    %4167 = vmatpush1.msra.mxu0 %v3177
    %4168 = vmatprep.subr.mxu0 %v3188
    %4169 = vmatpush1.msra.mxu0 %v3187
    %4170 = vmatprep.subr.mxu0 %v3198
    %4171 = vmatpush1.msra.mxu0 %v3197
    %4172 = vmatprep.subr.mxu0 %v3208
    %4173 = vmatpush1.msra.mxu0 %v3207
    %4174 = vmatprep.subr.mxu0 %v3218
    %4175 = vmatpush1.msra.mxu0 %v3217
    %4176 = vmatprep.subr.mxu0 %v3228
    %4177 = vmatpush1.msra.mxu0 %v3227
    %4178 = vmatprep.subr.mxu0 %v3238
    %4179 = vmatpush1.msra.mxu0 %v3237
    %4180 = vmatprep.subr.mxu0 %v3248
    %4181 = vmatpush1.msra.mxu0 %v3247
    %4182 = vmatprep.subr.mxu0 %v3258
    %4183 = vmatpush1.msra.mxu0 %v3257
    %4184 = vmatprep.subr.mxu0 %v3268
    %4185 = vmatpush1.msra.mxu0 %v3267
    %4186 = vmatprep.subr.mxu0 0.0
    %4187 = vmatpush1.msra.mxu0 0.0
    %4188 = vmatprep.subr.mxu0 0.0
    %4189 = vmatpush1.msra.mxu0 0.0
    %4190 = vmatprep.subr.mxu0 0.0
    %4191 = vmatpush1.msra.mxu0 0.0
    %4192 = vmatprep.subr.mxu0 0.0
    %4193 = vmatpush1.msra.mxu0 0.0
    %4194 = vmatprep.subr.mxu0 0.0
    %4195 = vmatpush1.msra.mxu0 0.0
    %4196 = vmatprep.subr.mxu0 0.0
    %4197 = vmatpush1.msra.mxu0 0.0
    %4198 = vmatprep.subr.mxu0 0.0
    %4199 = vmatpush1.msra.mxu0 0.0
    %4200 = vmatprep.subr.mxu0 0.0
    %4201 = vmatpush1.msra.mxu0 0.0
    %4202 = vmatprep.subr.mxu0 0.0
    %4203 = vmatpush1.msra.mxu0 0.0
    %4204 = vmatprep.subr.mxu0 0.0
    %4205 = vmatpush1.msra.mxu0 0.0
    %4206 = vmatprep.subr.mxu0 0.0
    %4207 = vmatpush1.msra.mxu0 0.0
    %4208 = vmatprep.subr.mxu0 0.0
    %4209 = vmatpush1.msra.mxu0 0.0
    %4210 = vmatprep.subr.mxu0 0.0
    %4211 = vmatpush1.msra.mxu0 0.0
    %4212 = vmatprep.subr.mxu0 0.0
    %4213 = vmatpush1.msra.mxu0 0.0
    %4214 = vmatprep.subr.mxu0 0.0
    %4215 = vmatpush1.msra.mxu0 0.0
    %4216 = vmatprep.subr.mxu0 0.0
    %4217 = vmatpush1.msra.mxu0 0.0
    %4218 = vmatprep.mubr.f32.mxu0 0.0
    %4219 = vmatmul.mubr.f32.gmra.mrb[0].mxu0 %v2526
    %v4220 = vpop.f32.mrb[0].mxu0
    %v4221 = vadd.f32 %v4150, %v4220
    %v4222 = vpop.f32.mrb[0].mxu0
    %v4223 = vadd.f32 %v4152, %v4222
    %4224 = vdwg.mxu0
    %4225 = vmatprep.subr.mxu0 %v2800
    %4226 = vmatpush1.msra.mxu0 %v2799
    %4227 = vmatprep.subr.mxu0 %v2810
    %4228 = vmatpush1.msra.mxu0 %v2809
    %4229 = vmatprep.subr.mxu0 %v2820
    %4230 = vmatpush1.msra.mxu0 %v2819
    %4231 = vmatprep.subr.mxu0 %v2830
    %4232 = vmatpush1.msra.mxu0 %v2829
    %4233 = vmatprep.subr.mxu0 %v2840
    %4234 = vmatpush1.msra.mxu0 %v2839
    %4235 = vmatprep.subr.mxu0 %v2850
    %4236 = vmatpush1.msra.mxu0 %v2849
    %4237 = vmatprep.subr.mxu0 %v2860
    %4238 = vmatpush1.msra.mxu0 %v2859
    %4239 = vmatprep.subr.mxu0 %v2870
    %4240 = vmatpush1.msra.mxu0 %v2869
    %4241 = vmatprep.subr.mxu0 %v2880
    %4242 = vmatpush1.msra.mxu0 %v2879
    %4243 = vmatprep.subr.mxu0 %v2890
    %4244 = vmatpush1.msra.mxu0 %v2889
    %4245 = vmatprep.subr.mxu0 %v2900
    %4246 = vmatpush1.msra.mxu0 %v2899
    %4247 = vmatprep.subr.mxu0 %v2910
    %4248 = vmatpush1.msra.mxu0 %v2909
    %4249 = vmatprep.subr.mxu0 %v2920
    %4250 = vmatpush1.msra.mxu0 %v2919
    %4251 = vmatprep.subr.mxu0 %v2930
    %4252 = vmatpush1.msra.mxu0 %v2929
    %4253 = vmatprep.subr.mxu0 %v2940
    %4254 = vmatpush1.msra.mxu0 %v2939
    %4255 = vmatprep.subr.mxu0 %v2950
    %4256 = vmatpush1.msra.mxu0 %v2949
    %4257 = vmatprep.subr.mxu0 %v2960
    %4258 = vmatpush1.msra.mxu0 %v2959
    %4259 = vmatprep.subr.mxu0 %v2970
    %4260 = vmatpush1.msra.mxu0 %v2969
    %4261 = vmatprep.subr.mxu0 %v2980
    %4262 = vmatpush1.msra.mxu0 %v2979
    %4263 = vmatprep.subr.mxu0 %v2990
    %4264 = vmatpush1.msra.mxu0 %v2989
    %4265 = vmatprep.subr.mxu0 %v3000
    %4266 = vmatpush1.msra.mxu0 %v2999
    %4267 = vmatprep.subr.mxu0 %v3010
    %4268 = vmatpush1.msra.mxu0 %v3009
    %4269 = vmatprep.subr.mxu0 %v3020
    %4270 = vmatpush1.msra.mxu0 %v3019
    %4271 = vmatprep.subr.mxu0 %v3030
    %4272 = vmatpush1.msra.mxu0 %v3029
    %4273 = vmatprep.subr.mxu0 %v3040
    %4274 = vmatpush1.msra.mxu0 %v3039
    %4275 = vmatprep.subr.mxu0 %v3050
    %4276 = vmatpush1.msra.mxu0 %v3049
    %4277 = vmatprep.subr.mxu0 %v3060
    %4278 = vmatpush1.msra.mxu0 %v3059
    %4279 = vmatprep.subr.mxu0 %v3070
    %4280 = vmatpush1.msra.mxu0 %v3069
    %4281 = vmatprep.subr.mxu0 %v3080
    %4282 = vmatpush1.msra.mxu0 %v3079
    %4283 = vmatprep.subr.mxu0 %v3090
    %4284 = vmatpush1.msra.mxu0 %v3089
    %4285 = vmatprep.subr.mxu0 %v3100
    %4286 = vmatpush1.msra.mxu0 %v3099
    %4287 = vmatprep.subr.mxu0 %v3110
    %4288 = vmatpush1.msra.mxu0 %v3109
    %4289 = vmatprep.mubr.f32.mxu0 %v2525
    %4290 = vmatmul.mubr.f32.gmra.mrb[0].mxu0 %v2524
    %v4291 = vpop.f32.mrb[0].mxu0
    %v4292 = vadd.f32 0.0, %v4291
    %v4293 = vpop.f32.mrb[0].mxu0
    %v4294 = vadd.f32 0.0, %v4293
    %4295 = vdwg.mxu0
    %4296 = vmatprep.subr.mxu0 %v3120
    %4297 = vmatpush1.msra.mxu0 %v3119
    %4298 = vmatprep.subr.mxu0 %v3130
    %4299 = vmatpush1.msra.mxu0 %v3129
    %4300 = vmatprep.subr.mxu0 %v3140
    %4301 = vmatpush1.msra.mxu0 %v3139
    %4302 = vmatprep.subr.mxu0 %v3150
    %4303 = vmatpush1.msra.mxu0 %v3149
    %4304 = vmatprep.subr.mxu0 %v3160
    %4305 = vmatpush1.msra.mxu0 %v3159
    %4306 = vmatprep.subr.mxu0 %v3170
    %4307 = vmatpush1.msra.mxu0 %v3169
    %4308 = vmatprep.subr.mxu0 %v3180
    %4309 = vmatpush1.msra.mxu0 %v3179
    %4310 = vmatprep.subr.mxu0 %v3190
    %4311 = vmatpush1.msra.mxu0 %v3189
    %4312 = vmatprep.subr.mxu0 %v3200
    %4313 = vmatpush1.msra.mxu0 %v3199
    %4314 = vmatprep.subr.mxu0 %v3210
    %4315 = vmatpush1.msra.mxu0 %v3209
    %4316 = vmatprep.subr.mxu0 %v3220
    %4317 = vmatpush1.msra.mxu0 %v3219
    %4318 = vmatprep.subr.mxu0 %v3230
    %4319 = vmatpush1.msra.mxu0 %v3229
    %4320 = vmatprep.subr.mxu0 %v3240
    %4321 = vmatpush1.msra.mxu0 %v3239
    %4322 = vmatprep.subr.mxu0 %v3250
    %4323 = vmatpush1.msra.mxu0 %v3249
    %4324 = vmatprep.subr.mxu0 %v3260
    %4325 = vmatpush1.msra.mxu0 %v3259
    %4326 = vmatprep.subr.mxu0 %v3270
    %4327 = vmatpush1.msra.mxu0 %v3269
    %4328 = vmatprep.subr.mxu0 0.0
    %4329 = vmatpush1.msra.mxu0 0.0
    %4330 = vmatprep.subr.mxu0 0.0
    %4331 = vmatpush1.msra.mxu0 0.0
    %4332 = vmatprep.subr.mxu0 0.0
    %4333 = vmatpush1.msra.mxu0 0.0
    %4334 = vmatprep.subr.mxu0 0.0
    %4335 = vmatpush1.msra.mxu0 0.0
    %4336 = vmatprep.subr.mxu0 0.0
    %4337 = vmatpush1.msra.mxu0 0.0
    %4338 = vmatprep.subr.mxu0 0.0
    %4339 = vmatpush1.msra.mxu0 0.0
    %4340 = vmatprep.subr.mxu0 0.0
    %4341 = vmatpush1.msra.mxu0 0.0
    %4342 = vmatprep.subr.mxu0 0.0
    %4343 = vmatpush1.msra.mxu0 0.0
    %4344 = vmatprep.subr.mxu0 0.0
    %4345 = vmatpush1.msra.mxu0 0.0
    %4346 = vmatprep.subr.mxu0 0.0
    %4347 = vmatpush1.msra.mxu0 0.0
    %4348 = vmatprep.subr.mxu0 0.0
    %4349 = vmatpush1.msra.mxu0 0.0
    %4350 = vmatprep.subr.mxu0 0.0
    %4351 = vmatpush1.msra.mxu0 0.0
    %4352 = vmatprep.subr.mxu0 0.0
    %4353 = vmatpush1.msra.mxu0 0.0
    %4354 = vmatprep.subr.mxu0 0.0
    %4355 = vmatpush1.msra.mxu0 0.0
    %4356 = vmatprep.subr.mxu0 0.0
    %4357 = vmatpush1.msra.mxu0 0.0
    %4358 = vmatprep.subr.mxu0 0.0
    %4359 = vmatpush1.msra.mxu0 0.0
    %4360 = vmatprep.mubr.f32.mxu0 0.0
    %4361 = vmatmul.mubr.f32.gmra.mrb[0].mxu0 %v2526
    %v4362 = vpop.f32.mrb[0].mxu0
    %v4363 = vadd.f32 %v4292, %v4362
    %v4364 = vpop.f32.mrb[0].mxu0
    %v4365 = vadd.f32 %v4294, %v4364
    %4366 = vdwg.mxu0
    %4367 = vmatprep.subr.mxu0 %v2802
    %4368 = vmatpush1.msra.mxu0 %v2801
    %4369 = vmatprep.subr.mxu0 %v2812
    %4370 = vmatpush1.msra.mxu0 %v2811
    %4371 = vmatprep.subr.mxu0 %v2822
    %4372 = vmatpush1.msra.mxu0 %v2821
    %4373 = vmatprep.subr.mxu0 %v2832
    %4374 = vmatpush1.msra.mxu0 %v2831
    %4375 = vmatprep.subr.mxu0 %v2842
    %4376 = vmatpush1.msra.mxu0 %v2841
    %4377 = vmatprep.subr.mxu0 %v2852
    %4378 = vmatpush1.msra.mxu0 %v2851
    %4379 = vmatprep.subr.mxu0 %v2862
    %4380 = vmatpush1.msra.mxu0 %v2861
    %4381 = vmatprep.subr.mxu0 %v2872
    %4382 = vmatpush1.msra.mxu0 %v2871
    %4383 = vmatprep.subr.mxu0 %v2882
    %4384 = vmatpush1.msra.mxu0 %v2881
    %4385 = vmatprep.subr.mxu0 %v2892
    %4386 = vmatpush1.msra.mxu0 %v2891
    %4387 = vmatprep.subr.mxu0 %v2902
    %4388 = vmatpush1.msra.mxu0 %v2901
    %4389 = vmatprep.subr.mxu0 %v2912
    %4390 = vmatpush1.msra.mxu0 %v2911
    %4391 = vmatprep.subr.mxu0 %v2922
    %4392 = vmatpush1.msra.mxu0 %v2921
    %4393 = vmatprep.subr.mxu0 %v2932
    %4394 = vmatpush1.msra.mxu0 %v2931
    %4395 = vmatprep.subr.mxu0 %v2942
    %4396 = vmatpush1.msra.mxu0 %v2941
    %4397 = vmatprep.subr.mxu0 %v2952
    %4398 = vmatpush1.msra.mxu0 %v2951
    %4399 = vmatprep.subr.mxu0 %v2962
    %4400 = vmatpush1.msra.mxu0 %v2961
    %4401 = vmatprep.subr.mxu0 %v2972
    %4402 = vmatpush1.msra.mxu0 %v2971
    %4403 = vmatprep.subr.mxu0 %v2982
    %4404 = vmatpush1.msra.mxu0 %v2981
    %4405 = vmatprep.subr.mxu0 %v2992
    %4406 = vmatpush1.msra.mxu0 %v2991
    %4407 = vmatprep.subr.mxu0 %v3002
    %4408 = vmatpush1.msra.mxu0 %v3001
    %4409 = vmatprep.subr.mxu0 %v3012
    %4410 = vmatpush1.msra.mxu0 %v3011
    %4411 = vmatprep.subr.mxu0 %v3022
    %4412 = vmatpush1.msra.mxu0 %v3021
    %4413 = vmatprep.subr.mxu0 %v3032
    %4414 = vmatpush1.msra.mxu0 %v3031
    %4415 = vmatprep.subr.mxu0 %v3042
    %4416 = vmatpush1.msra.mxu0 %v3041
    %4417 = vmatprep.subr.mxu0 %v3052
    %4418 = vmatpush1.msra.mxu0 %v3051
    %4419 = vmatprep.subr.mxu0 %v3062
    %4420 = vmatpush1.msra.mxu0 %v3061
    %4421 = vmatprep.subr.mxu0 %v3072
    %4422 = vmatpush1.msra.mxu0 %v3071
    %4423 = vmatprep.subr.mxu0 %v3082
    %4424 = vmatpush1.msra.mxu0 %v3081
    %4425 = vmatprep.subr.mxu0 %v3092
    %4426 = vmatpush1.msra.mxu0 %v3091
    %4427 = vmatprep.subr.mxu0 %v3102
    %4428 = vmatpush1.msra.mxu0 %v3101
    %4429 = vmatprep.subr.mxu0 %v3112
    %4430 = vmatpush1.msra.mxu0 %v3111
    %4431 = vmatprep.mubr.f32.mxu0 %v2525
    %4432 = vmatmul.mubr.f32.gmra.mrb[0].mxu0 %v2524
    %v4433 = vpop.f32.mrb[0].mxu0
    %v4434 = vadd.f32 0.0, %v4433
    %v4435 = vpop.f32.mrb[0].mxu0
    %v4436 = vadd.f32 0.0, %v4435
    %4437 = vdwg.mxu0
    %4438 = vmatprep.subr.mxu0 %v3122
    %4439 = vmatpush1.msra.mxu0 %v3121
    %4440 = vmatprep.subr.mxu0 %v3132
    %4441 = vmatpush1.msra.mxu0 %v3131
    %4442 = vmatprep.subr.mxu0 %v3142
    %4443 = vmatpush1.msra.mxu0 %v3141
    %4444 = vmatprep.subr.mxu0 %v3152
    %4445 = vmatpush1.msra.mxu0 %v3151
    %4446 = vmatprep.subr.mxu0 %v3162
    %4447 = vmatpush1.msra.mxu0 %v3161
    %4448 = vmatprep.subr.mxu0 %v3172
    %4449 = vmatpush1.msra.mxu0 %v3171
    %4450 = vmatprep.subr.mxu0 %v3182
    %4451 = vmatpush1.msra.mxu0 %v3181
    %4452 = vmatprep.subr.mxu0 %v3192
    %4453 = vmatpush1.msra.mxu0 %v3191
    %4454 = vmatprep.subr.mxu0 %v3202
    %4455 = vmatpush1.msra.mxu0 %v3201
    %4456 = vmatprep.subr.mxu0 %v3212
    %4457 = vmatpush1.msra.mxu0 %v3211
    %4458 = vmatprep.subr.mxu0 %v3222
    %4459 = vmatpush1.msra.mxu0 %v3221
    %4460 = vmatprep.subr.mxu0 %v3232
    %4461 = vmatpush1.msra.mxu0 %v3231
    %4462 = vmatprep.subr.mxu0 %v3242
    %4463 = vmatpush1.msra.mxu0 %v3241
    %4464 = vmatprep.subr.mxu0 %v3252
    %4465 = vmatpush1.msra.mxu0 %v3251
    %4466 = vmatprep.subr.mxu0 %v3262
    %4467 = vmatpush1.msra.mxu0 %v3261
    %4468 = vmatprep.subr.mxu0 %v3272
    %4469 = vmatpush1.msra.mxu0 %v3271
    %4470 = vmatprep.subr.mxu0 0.0
    %4471 = vmatpush1.msra.mxu0 0.0
    %4472 = vmatprep.subr.mxu0 0.0
    %4473 = vmatpush1.msra.mxu0 0.0
    %4474 = vmatprep.subr.mxu0 0.0
    %4475 = vmatpush1.msra.mxu0 0.0
    %4476 = vmatprep.subr.mxu0 0.0
    %4477 = vmatpush1.msra.mxu0 0.0
    %4478 = vmatprep.subr.mxu0 0.0
    %4479 = vmatpush1.msra.mxu0 0.0
    %4480 = vmatprep.subr.mxu0 0.0
    %4481 = vmatpush1.msra.mxu0 0.0
    %4482 = vmatprep.subr.mxu0 0.0
    %4483 = vmatpush1.msra.mxu0 0.0
    %4484 = vmatprep.subr.mxu0 0.0
    %4485 = vmatpush1.msra.mxu0 0.0
    %4486 = vmatprep.subr.mxu0 0.0
    %4487 = vmatpush1.msra.mxu0 0.0
    %4488 = vmatprep.subr.mxu0 0.0
    %4489 = vmatpush1.msra.mxu0 0.0
    %4490 = vmatprep.subr.mxu0 0.0
    %4491 = vmatpush1.msra.mxu0 0.0
    %4492 = vmatprep.subr.mxu0 0.0
    %4493 = vmatpush1.msra.mxu0 0.0
    %4494 = vmatprep.subr.mxu0 0.0
    %4495 = vmatpush1.msra.mxu0 0.0
    %4496 = vmatprep.subr.mxu0 0.0
    %4497 = vmatpush1.msra.mxu0 0.0
    %4498 = vmatprep.subr.mxu0 0.0
    %4499 = vmatpush1.msra.mxu0 0.0
    %4500 = vmatprep.subr.mxu0 0.0
    %4501 = vmatpush1.msra.mxu0 0.0
    %4502 = vmatprep.mubr.f32.mxu0 0.0
    %4503 = vmatmul.mubr.f32.gmra.mrb[0].mxu0 %v2526
    %v4504 = vpop.f32.mrb[0].mxu0
    %v4505 = vadd.f32 %v4434, %v4504
    %v4506 = vpop.f32.mrb[0].mxu0
    %v4507 = vadd.f32 %v4436, %v4506
    %4508 = vdwg.mxu0
    %4509 = vmatprep.subr.mxu0 %v2804
    %4510 = vmatpush1.msra.mxu0 %v2803
    %4511 = vmatprep.subr.mxu0 %v2814
    %4512 = vmatpush1.msra.mxu0 %v2813
    %4513 = vmatprep.subr.mxu0 %v2824
    %4514 = vmatpush1.msra.mxu0 %v2823
    %4515 = vmatprep.subr.mxu0 %v2834
    %4516 = vmatpush1.msra.mxu0 %v2833
    %4517 = vmatprep.subr.mxu0 %v2844
    %4518 = vmatpush1.msra.mxu0 %v2843
    %4519 = vmatprep.subr.mxu0 %v2854
    %4520 = vmatpush1.msra.mxu0 %v2853
    %4521 = vmatprep.subr.mxu0 %v2864
    %4522 = vmatpush1.msra.mxu0 %v2863
    %4523 = vmatprep.subr.mxu0 %v2874
    %4524 = vmatpush1.msra.mxu0 %v2873
    %4525 = vmatprep.subr.mxu0 %v2884
    %4526 = vmatpush1.msra.mxu0 %v2883
    %4527 = vmatprep.subr.mxu0 %v2894
    %4528 = vmatpush1.msra.mxu0 %v2893
    %4529 = vmatprep.subr.mxu0 %v2904
    %4530 = vmatpush1.msra.mxu0 %v2903
    %4531 = vmatprep.subr.mxu0 %v2914
    %4532 = vmatpush1.msra.mxu0 %v2913
    %4533 = vmatprep.subr.mxu0 %v2924
    %4534 = vmatpush1.msra.mxu0 %v2923
    %4535 = vmatprep.subr.mxu0 %v2934
    %4536 = vmatpush1.msra.mxu0 %v2933
    %4537 = vmatprep.subr.mxu0 %v2944
    %4538 = vmatpush1.msra.mxu0 %v2943
    %4539 = vmatprep.subr.mxu0 %v2954
    %4540 = vmatpush1.msra.mxu0 %v2953
    %4541 = vmatprep.subr.mxu0 %v2964
    %4542 = vmatpush1.msra.mxu0 %v2963
    %4543 = vmatprep.subr.mxu0 %v2974
    %4544 = vmatpush1.msra.mxu0 %v2973
    %4545 = vmatprep.subr.mxu0 %v2984
    %4546 = vmatpush1.msra.mxu0 %v2983
    %4547 = vmatprep.subr.mxu0 %v2994
    %4548 = vmatpush1.msra.mxu0 %v2993
    %4549 = vmatprep.subr.mxu0 %v3004
    %4550 = vmatpush1.msra.mxu0 %v3003
    %4551 = vmatprep.subr.mxu0 %v3014
    %4552 = vmatpush1.msra.mxu0 %v3013
    %4553 = vmatprep.subr.mxu0 %v3024
    %4554 = vmatpush1.msra.mxu0 %v3023
    %4555 = vmatprep.subr.mxu0 %v3034
    %4556 = vmatpush1.msra.mxu0 %v3033
    %4557 = vmatprep.subr.mxu0 %v3044
    %4558 = vmatpush1.msra.mxu0 %v3043
    %4559 = vmatprep.subr.mxu0 %v3054
    %4560 = vmatpush1.msra.mxu0 %v3053
    %4561 = vmatprep.subr.mxu0 %v3064
    %4562 = vmatpush1.msra.mxu0 %v3063
    %4563 = vmatprep.subr.mxu0 %v3074
    %4564 = vmatpush1.msra.mxu0 %v3073
    %4565 = vmatprep.subr.mxu0 %v3084
    %4566 = vmatpush1.msra.mxu0 %v3083
    %4567 = vmatprep.subr.mxu0 %v3094
    %4568 = vmatpush1.msra.mxu0 %v3093
    %4569 = vmatprep.subr.mxu0 %v3104
    %4570 = vmatpush1.msra.mxu0 %v3103
    %4571 = vmatprep.subr.mxu0 %v3114
    %4572 = vmatpush1.msra.mxu0 %v3113
    %4573 = vmatprep.mubr.f32.mxu0 %v2525
    %4574 = vmatmul.mubr.f32.gmra.mrb[0].mxu0 %v2524
    %v4575 = vpop.f32.mrb[0].mxu0
    %v4576 = vadd.f32 0.0, %v4575
    %v4577 = vpop.f32.mrb[0].mxu0
    %v4578 = vadd.f32 0.0, %v4577
    %4579 = vdwg.mxu0
    %4580 = vmatprep.subr.mxu0 %v3124
    %4581 = vmatpush1.msra.mxu0 %v3123
    %4582 = vmatprep.subr.mxu0 %v3134
    %4583 = vmatpush1.msra.mxu0 %v3133
    %4584 = vmatprep.subr.mxu0 %v3144
    %4585 = vmatpush1.msra.mxu0 %v3143
    %4586 = vmatprep.subr.mxu0 %v3154
    %4587 = vmatpush1.msra.mxu0 %v3153
    %4588 = vmatprep.subr.mxu0 %v3164
    %4589 = vmatpush1.msra.mxu0 %v3163
    %4590 = vmatprep.subr.mxu0 %v3174
    %4591 = vmatpush1.msra.mxu0 %v3173
    %4592 = vmatprep.subr.mxu0 %v3184
    %4593 = vmatpush1.msra.mxu0 %v3183
    %4594 = vmatprep.subr.mxu0 %v3194
    %4595 = vmatpush1.msra.mxu0 %v3193
    %4596 = vmatprep.subr.mxu0 %v3204
    %4597 = vmatpush1.msra.mxu0 %v3203
    %4598 = vmatprep.subr.mxu0 %v3214
    %4599 = vmatpush1.msra.mxu0 %v3213
    %4600 = vmatprep.subr.mxu0 %v3224
    %4601 = vmatpush1.msra.mxu0 %v3223
    %4602 = vmatprep.subr.mxu0 %v3234
    %4603 = vmatpush1.msra.mxu0 %v3233
    %4604 = vmatprep.subr.mxu0 %v3244
    %4605 = vmatpush1.msra.mxu0 %v3243
    %4606 = vmatprep.subr.mxu0 %v3254
    %4607 = vmatpush1.msra.mxu0 %v3253
    %4608 = vmatprep.subr.mxu0 %v3264
    %4609 = vmatpush1.msra.mxu0 %v3263
    %4610 = vmatprep.subr.mxu0 %v3274
    %4611 = vmatpush1.msra.mxu0 %v3273
    %4612 = vmatprep.subr.mxu0 0.0
    %4613 = vmatpush1.msra.mxu0 0.0
    %4614 = vmatprep.subr.mxu0 0.0
    %4615 = vmatpush1.msra.mxu0 0.0
    %4616 = vmatprep.subr.mxu0 0.0
    %4617 = vmatpush1.msra.mxu0 0.0
    %4618 = vmatprep.subr.mxu0 0.0
    %4619 = vmatpush1.msra.mxu0 0.0
    %4620 = vmatprep.subr.mxu0 0.0
    %4621 = vmatpush1.msra.mxu0 0.0
    %4622 = vmatprep.subr.mxu0 0.0
    %4623 = vmatpush1.msra.mxu0 0.0
    %4624 = vmatprep.subr.mxu0 0.0
    %4625 = vmatpush1.msra.mxu0 0.0
    %4626 = vmatprep.subr.mxu0 0.0
    %4627 = vmatpush1.msra.mxu0 0.0
    %4628 = vmatprep.subr.mxu0 0.0
    %4629 = vmatpush1.msra.mxu0 0.0
    %4630 = vmatprep.subr.mxu0 0.0
    %4631 = vmatpush1.msra.mxu0 0.0
    %4632 = vmatprep.subr.mxu0 0.0
    %4633 = vmatpush1.msra.mxu0 0.0
    %4634 = vmatprep.subr.mxu0 0.0
    %4635 = vmatpush1.msra.mxu0 0.0
    %4636 = vmatprep.subr.mxu0 0.0
    %4637 = vmatpush1.msra.mxu0 0.0
    %4638 = vmatprep.subr.mxu0 0.0
    %4639 = vmatpush1.msra.mxu0 0.0
    %4640 = vmatprep.subr.mxu0 0.0
    %4641 = vmatpush1.msra.mxu0 0.0
    %4642 = vmatprep.subr.mxu0 0.0
    %4643 = vmatpush1.msra.mxu0 0.0
    %4644 = vmatprep.mubr.f32.mxu0 0.0
    %4645 = vmatmul.mubr.f32.gmra.mrb[0].mxu0 %v2526
    %v4646 = vpop.f32.mrb[0].mxu0
    %v4647 = vadd.f32 %v4576, %v4646
    %v4648 = vpop.f32.mrb[0].mxu0
    %v4649 = vadd.f32 %v4578, %v4648
    %4650 = vdwg.mxu0
    %4651 = vrot.lane.b32.xlu0 %v4079, 35
    %v4652 = vpop.permute.xlu0 %4651
    %4653 = vrot.lane.b32.xlu0 %v4081, 35
    %v4654 = vpop.permute.xlu0 %4653
    %4655 = vrot.lane.b32.xlu0 %v4221, 35
    %v4656 = vpop.permute.xlu0 %4655
    %4657 = vrot.lane.b32.xlu0 %v4223, 35
    %v4658 = vpop.permute.xlu0 %4657
    %4659 = vrot.lane.b32.xlu0 %v4363, 35
    %v4660 = vpop.permute.xlu0 %4659
    %4661 = vrot.lane.b32.xlu0 %v4365, 35
    %v4662 = vpop.permute.xlu0 %4661
    %4663 = vrot.lane.b32.xlu0 %v4505, 35
    %v4664 = vpop.permute.xlu0 %4663
    %4665 = vrot.lane.b32.xlu0 %v4507, 35
    %v4666 = vpop.permute.xlu0 %4665
    %4667 = vrot.lane.b32.xlu0 %v4647, 35
    %v4668 = vpop.permute.xlu0 %4667
    %4669 = vrot.lane.b32.xlu0 %v4649, 35
    %v4670 = vpop.permute.xlu0 %4669
    %v4671 = vsel %vm3315, %v4668, %v4670
    %v4672 = vsel %vm3315, %v4666, %v4668
    %v4673 = vsel %vm3315, %v4664, %v4666
    %v4674 = vsel %vm3315, %v4662, %v4664
    %v4675 = vsel %vm3315, %v4660, %v4662
    %v4676 = vsel %vm3315, %v4658, %v4660
    %v4677 = vsel %vm3315, %v4656, %v4658
    %v4678 = vsel %vm3315, %v4654, %v4656
    %v4679 = vsel %vm3315, %v4652, %v4654
    %v4680 = vsel %vm3315, %v4670, %v4652
    %4681 = vst [vmem:[#allocation4] sm:$0xff] %v4680
    %4682 = vst [vmem:[#allocation4 + $0x8] sm:$0xff] %v4679
    %4683 = vst [vmem:[#allocation4 + $0x10] sm:$0xff] %v4678
    %4684 = vst [vmem:[#allocation4 + $0x18] sm:$0xff] %v4677
    %4685 = vst [vmem:[#allocation4 + $0x20] sm:$0xff] %v4676
    %4686 = vst [vmem:[#allocation4 + $0x28] sm:$0xff] %v4675
    %4687 = vst [vmem:[#allocation4 + $0x30] sm:$0xff] %v4674
    %4688 = vst [vmem:[#allocation4 + $0x38] sm:$0xff] %v4673
    %4689 = vst [vmem:[#allocation4 + $0x40] sm:$0xff] %v4672
    %4690 = vst [vmem:[#allocation4 + $0x48] sm:$0xff] %v4671
    %4691 = vrot.lane.b32.xlu0 %v4079, 34
    %v4692 = vpop.permute.xlu0 %4691
    %4693 = vrot.lane.b32.xlu0 %v4081, 34
    %v4694 = vpop.permute.xlu0 %4693
    %4695 = vrot.lane.b32.xlu0 %v4221, 34
    %v4696 = vpop.permute.xlu0 %4695
    %4697 = vrot.lane.b32.xlu0 %v4223, 34
    %v4698 = vpop.permute.xlu0 %4697
    %4699 = vrot.lane.b32.xlu0 %v4363, 34
    %v4700 = vpop.permute.xlu0 %4699
    %4701 = vrot.lane.b32.xlu0 %v4365, 34
    %v4702 = vpop.permute.xlu0 %4701
    %4703 = vrot.lane.b32.xlu0 %v4505, 34
    %v4704 = vpop.permute.xlu0 %4703
    %4705 = vrot.lane.b32.xlu0 %v4507, 34
    %v4706 = vpop.permute.xlu0 %4705
    %4707 = vrot.lane.b32.xlu0 %v4647, 34
    %v4708 = vpop.permute.xlu0 %4707
    %4709 = vrot.lane.b32.xlu0 %v4649, 34
    %v4710 = vpop.permute.xlu0 %4709
    %v4711 = vsel %vm3396, %v4708, %v4710
    %v4712 = vsel %vm3396, %v4706, %v4708
    %v4713 = vsel %vm3396, %v4704, %v4706
    %v4714 = vsel %vm3396, %v4702, %v4704
    %v4715 = vsel %vm3396, %v4700, %v4702
    %v4716 = vsel %vm3396, %v4698, %v4700
    %v4717 = vsel %vm3396, %v4696, %v4698
    %v4718 = vsel %vm3396, %v4694, %v4696
    %v4719 = vsel %vm3396, %v4692, %v4694
    %v4720 = vsel %vm3396, %v4710, %v4692
    %4721 = vst [vmem:[#allocation4 + $0xa0] sm:$0xff] %v4720
    %4722 = vst [vmem:[#allocation4 + $0xa8] sm:$0xff] %v4719
    %4723 = vst [vmem:[#allocation4 + $0xb0] sm:$0xff] %v4718
    %4724 = vst [vmem:[#allocation4 + $0xb8] sm:$0xff] %v4717
    %4725 = vst [vmem:[#allocation4 + $0xc0] sm:$0xff] %v4716
    %4726 = vst [vmem:[#allocation4 + $0xc8] sm:$0xff] %v4715
    %4727 = vst [vmem:[#allocation4 + $0xd0] sm:$0xff] %v4714
    %4728 = vst [vmem:[#allocation4 + $0xd8] sm:$0xff] %v4713
    %4729 = vst [vmem:[#allocation4 + $0xe0] sm:$0xff] %v4712
    %4730 = vst [vmem:[#allocation4 + $0xe8] sm:$0xff] %v4711
    %4731 = vrot.lane.b32.xlu0 %v4079, 33
    %v4732 = vpop.permute.xlu0 %4731
    %4733 = vrot.lane.b32.xlu0 %v4081, 33
    %v4734 = vpop.permute.xlu0 %4733
    %4735 = vrot.lane.b32.xlu0 %v4221, 33
    %v4736 = vpop.permute.xlu0 %4735
    %4737 = vrot.lane.b32.xlu0 %v4223, 33
    %v4738 = vpop.permute.xlu0 %4737
    %4739 = vrot.lane.b32.xlu0 %v4363, 33
    %v4740 = vpop.permute.xlu0 %4739
    %4741 = vrot.lane.b32.xlu0 %v4365, 33
    %v4742 = vpop.permute.xlu0 %4741
    %4743 = vrot.lane.b32.xlu0 %v4505, 33
    %v4744 = vpop.permute.xlu0 %4743
    %4745 = vrot.lane.b32.xlu0 %v4507, 33
    %v4746 = vpop.permute.xlu0 %4745
    %4747 = vrot.lane.b32.xlu0 %v4647, 33
    %v4748 = vpop.permute.xlu0 %4747
    %4749 = vrot.lane.b32.xlu0 %v4649, 33
    %v4750 = vpop.permute.xlu0 %4749
    %v4751 = vsel %vm3477, %v4748, %v4750
    %v4752 = vsel %vm3477, %v4746, %v4748
    %v4753 = vsel %vm3477, %v4744, %v4746
    %v4754 = vsel %vm3477, %v4742, %v4744
    %v4755 = vsel %vm3477, %v4740, %v4742
    %v4756 = vsel %vm3477, %v4738, %v4740
    %v4757 = vsel %vm3477, %v4736, %v4738
    %v4758 = vsel %vm3477, %v4734, %v4736
    %v4759 = vsel %vm3477, %v4732, %v4734
    %v4760 = vsel %vm3477, %v4750, %v4732
    %4761 = vst [vmem:[#allocation4 + $0x140] sm:$0xff] %v4760
    %4762 = vst [vmem:[#allocation4 + $0x148] sm:$0xff] %v4759
    %4763 = vst [vmem:[#allocation4 + $0x150] sm:$0xff] %v4758
    %4764 = vst [vmem:[#allocation4 + $0x158] sm:$0xff] %v4757
    %4765 = vst [vmem:[#allocation4 + $0x160] sm:$0xff] %v4756
    %4766 = vst [vmem:[#allocation4 + $0x168] sm:$0xff] %v4755
    %4767 = vst [vmem:[#allocation4 + $0x170] sm:$0xff] %v4754
    %4768 = vst [vmem:[#allocation4 + $0x178] sm:$0xff] %v4753
    %4769 = vst [vmem:[#allocation4 + $0x180] sm:$0xff] %v4752
    %4770 = vst [vmem:[#allocation4 + $0x188] sm:$0xff] %v4751
    %4771 = vrot.lane.b32.xlu0 %v4079, 1
    %v4772 = vpop.permute.xlu0 %4771
    %4773 = vrot.lane.b32.xlu0 %v4081, 1
    %v4774 = vpop.permute.xlu0 %4773
    %4775 = vrot.lane.b32.xlu0 %v4221, 1
    %v4776 = vpop.permute.xlu0 %4775
    %4777 = vrot.lane.b32.xlu0 %v4223, 1
    %v4778 = vpop.permute.xlu0 %4777
    %4779 = vrot.lane.b32.xlu0 %v4363, 1
    %v4780 = vpop.permute.xlu0 %4779
    %4781 = vrot.lane.b32.xlu0 %v4365, 1
    %v4782 = vpop.permute.xlu0 %4781
    %4783 = vrot.lane.b32.xlu0 %v4505, 1
    %v4784 = vpop.permute.xlu0 %4783
    %4785 = vrot.lane.b32.xlu0 %v4507, 1
    %v4786 = vpop.permute.xlu0 %4785
    %4787 = vrot.lane.b32.xlu0 %v4647, 1
    %v4788 = vpop.permute.xlu0 %4787
    %4789 = vrot.lane.b32.xlu0 %v4649, 1
    %v4790 = vpop.permute.xlu0 %4789
    %v4791 = vsel %vm294, %v4788, %v4790
    %v4792 = vsel %vm294, %v4786, %v4788
    %v4793 = vsel %vm294, %v4784, %v4786
    %v4794 = vsel %vm294, %v4782, %v4784
    %v4795 = vsel %vm294, %v4780, %v4782
    %v4796 = vsel %vm294, %v4778, %v4780
    %v4797 = vsel %vm294, %v4776, %v4778
    %v4798 = vsel %vm294, %v4774, %v4776
    %v4799 = vsel %vm294, %v4772, %v4774
    %v4800 = vsel %vm294, %v4790, %v4772
    %4801 = vst [vmem:[#allocation4 + $0x1e0] sm:$0xff] %v4800
    %4802 = vst [vmem:[#allocation4 + $0x1e8] sm:$0xff] %v4799
    %4803 = vst [vmem:[#allocation4 + $0x1f0] sm:$0xff] %v4798
    %4804 = vst [vmem:[#allocation4 + $0x1f8] sm:$0xff] %v4797
    %4805 = vst [vmem:[#allocation4 + $0x200] sm:$0xff] %v4796
    %4806 = vst [vmem:[#allocation4 + $0x208] sm:$0xff] %v4795
    %4807 = vst [vmem:[#allocation4 + $0x210] sm:$0xff] %v4794
    %4808 = vst [vmem:[#allocation4 + $0x218] sm:$0xff] %v4793
    %4809 = vst [vmem:[#allocation4 + $0x220] sm:$0xff] %v4792
    %4810 = vst [vmem:[#allocation4 + $0x228] sm:$0xff] %v4791
    %4811 = vst [vmem:[#allocation4 + $0x280] sm:$0xff] %v4079
    %4812 = vst [vmem:[#allocation4 + $0x288] sm:$0xff] %v4081
    %4813 = vst [vmem:[#allocation4 + $0x290] sm:$0xff] %v4221
    %4814 = vst [vmem:[#allocation4 + $0x298] sm:$0xff] %v4223
    %4815 = vst [vmem:[#allocation4 + $0x2a0] sm:$0xff] %v4363
    %4816 = vst [vmem:[#allocation4 + $0x2a8] sm:$0xff] %v4365
    %4817 = vst [vmem:[#allocation4 + $0x2b0] sm:$0xff] %v4505
    %4818 = vst [vmem:[#allocation4 + $0x2b8] sm:$0xff] %v4507
    %4819 = vst [vmem:[#allocation4 + $0x2c0] sm:$0xff] %v4647
    %4820 = vst [vmem:[#allocation4 + $0x2c8] sm:$0xff] %v4649
    %4821 = vrot.lane.b32.xlu0 %v4079, 127
    %v4822 = vpop.permute.xlu0 %4821
    %4823 = vrot.lane.b32.xlu0 %v4081, 127
    %v4824 = vpop.permute.xlu0 %4823
    %4825 = vrot.lane.b32.xlu0 %v4221, 127
    %v4826 = vpop.permute.xlu0 %4825
    %4827 = vrot.lane.b32.xlu0 %v4223, 127
    %v4828 = vpop.permute.xlu0 %4827
    %4829 = vrot.lane.b32.xlu0 %v4363, 127
    %v4830 = vpop.permute.xlu0 %4829
    %4831 = vrot.lane.b32.xlu0 %v4365, 127
    %v4832 = vpop.permute.xlu0 %4831
    %4833 = vrot.lane.b32.xlu0 %v4505, 127
    %v4834 = vpop.permute.xlu0 %4833
    %4835 = vrot.lane.b32.xlu0 %v4507, 127
    %v4836 = vpop.permute.xlu0 %4835
    %4837 = vrot.lane.b32.xlu0 %v4647, 127
    %v4838 = vpop.permute.xlu0 %4837
    %4839 = vrot.lane.b32.xlu0 %v4649, 127
    %v4840 = vpop.permute.xlu0 %4839
    %v4841 = vsel %vm315, %v4838, %v4840
    %v4842 = vsel %vm315, %v4836, %v4838
    %v4843 = vsel %vm315, %v4834, %v4836
    %v4844 = vsel %vm315, %v4832, %v4834
    %v4845 = vsel %vm315, %v4830, %v4832
    %v4846 = vsel %vm315, %v4828, %v4830
    %v4847 = vsel %vm315, %v4826, %v4828
    %v4848 = vsel %vm315, %v4824, %v4826
    %v4849 = vsel %vm315, %v4822, %v4824
    %v4850 = vsel %vm315, %v4840, %v4822
    %4851 = vst [vmem:[#allocation4 + $0x320] sm:$0xff] %v4849
    %4852 = vst [vmem:[#allocation4 + $0x328] sm:$0xff] %v4848
    %4853 = vst [vmem:[#allocation4 + $0x330] sm:$0xff] %v4847
    %4854 = vst [vmem:[#allocation4 + $0x338] sm:$0xff] %v4846
    %4855 = vst [vmem:[#allocation4 + $0x340] sm:$0xff] %v4845
    %4856 = vst [vmem:[#allocation4 + $0x348] sm:$0xff] %v4844
    %4857 = vst [vmem:[#allocation4 + $0x350] sm:$0xff] %v4843
    %4858 = vst [vmem:[#allocation4 + $0x358] sm:$0xff] %v4842
    %4859 = vst [vmem:[#allocation4 + $0x360] sm:$0xff] %v4841
    %4860 = vst [vmem:[#allocation4 + $0x368] sm:$0xff] %v4850
    %4861 = vrot.lane.b32.xlu0 %v4079, 95
    %v4862 = vpop.permute.xlu0 %4861
    %4863 = vrot.lane.b32.xlu0 %v4081, 95
    %v4864 = vpop.permute.xlu0 %4863
    %4865 = vrot.lane.b32.xlu0 %v4221, 95
    %v4866 = vpop.permute.xlu0 %4865
    %4867 = vrot.lane.b32.xlu0 %v4223, 95
    %v4868 = vpop.permute.xlu0 %4867
    %4869 = vrot.lane.b32.xlu0 %v4363, 95
    %v4870 = vpop.permute.xlu0 %4869
    %4871 = vrot.lane.b32.xlu0 %v4365, 95
    %v4872 = vpop.permute.xlu0 %4871
    %4873 = vrot.lane.b32.xlu0 %v4505, 95
    %v4874 = vpop.permute.xlu0 %4873
    %4875 = vrot.lane.b32.xlu0 %v4507, 95
    %v4876 = vpop.permute.xlu0 %4875
    %4877 = vrot.lane.b32.xlu0 %v4647, 95
    %v4878 = vpop.permute.xlu0 %4877
    %4879 = vrot.lane.b32.xlu0 %v4649, 95
    %v4880 = vpop.permute.xlu0 %4879
    %v4881 = vsel %vm3738, %v4878, %v4880
    %v4882 = vsel %vm3738, %v4876, %v4878
    %v4883 = vsel %vm3738, %v4874, %v4876
    %v4884 = vsel %vm3738, %v4872, %v4874
    %v4885 = vsel %vm3738, %v4870, %v4872
    %v4886 = vsel %vm3738, %v4868, %v4870
    %v4887 = vsel %vm3738, %v4866, %v4868
    %v4888 = vsel %vm3738, %v4864, %v4866
    %v4889 = vsel %vm3738, %v4862, %v4864
    %v4890 = vsel %vm3738, %v4880, %v4862
    %4891 = vst [vmem:[#allocation4 + $0x3c0] sm:$0xff] %v4889
    %4892 = vst [vmem:[#allocation4 + $0x3c8] sm:$0xff] %v4888
    %4893 = vst [vmem:[#allocation4 + $0x3d0] sm:$0xff] %v4887
    %4894 = vst [vmem:[#allocation4 + $0x3d8] sm:$0xff] %v4886
    %4895 = vst [vmem:[#allocation4 + $0x3e0] sm:$0xff] %v4885
    %4896 = vst [vmem:[#allocation4 + $0x3e8] sm:$0xff] %v4884
    %4897 = vst [vmem:[#allocation4 + $0x3f0] sm:$0xff] %v4883
    %4898 = vst [vmem:[#allocation4 + $0x3f8] sm:$0xff] %v4882
    %4899 = vst [vmem:[#allocation4 + $0x400] sm:$0xff] %v4881
    %4900 = vst [vmem:[#allocation4 + $0x408] sm:$0xff] %v4890
    %4901 = vrot.lane.b32.xlu0 %v4079, 94
    %v4902 = vpop.permute.xlu0 %4901
    %4903 = vrot.lane.b32.xlu0 %v4081, 94
    %v4904 = vpop.permute.xlu0 %4903
    %4905 = vrot.lane.b32.xlu0 %v4221, 94
    %v4906 = vpop.permute.xlu0 %4905
    %4907 = vrot.lane.b32.xlu0 %v4223, 94
    %v4908 = vpop.permute.xlu0 %4907
    %4909 = vrot.lane.b32.xlu0 %v4363, 94
    %v4910 = vpop.permute.xlu0 %4909
    %4911 = vrot.lane.b32.xlu0 %v4365, 94
    %v4912 = vpop.permute.xlu0 %4911
    %4913 = vrot.lane.b32.xlu0 %v4505, 94
    %v4914 = vpop.permute.xlu0 %4913
    %4915 = vrot.lane.b32.xlu0 %v4507, 94
    %v4916 = vpop.permute.xlu0 %4915
    %4917 = vrot.lane.b32.xlu0 %v4647, 94
    %v4918 = vpop.permute.xlu0 %4917
    %4919 = vrot.lane.b32.xlu0 %v4649, 94
    %v4920 = vpop.permute.xlu0 %4919
    %v4921 = vsel %vm3819, %v4918, %v4920
    %v4922 = vsel %vm3819, %v4916, %v4918
    %v4923 = vsel %vm3819, %v4914, %v4916
    %v4924 = vsel %vm3819, %v4912, %v4914
    %v4925 = vsel %vm3819, %v4910, %v4912
    %v4926 = vsel %vm3819, %v4908, %v4910
    %v4927 = vsel %vm3819, %v4906, %v4908
    %v4928 = vsel %vm3819, %v4904, %v4906
    %v4929 = vsel %vm3819, %v4902, %v4904
    %v4930 = vsel %vm3819, %v4920, %v4902
    %4931 = vst [vmem:[#allocation4 + $0x460] sm:$0xff] %v4929
    %4932 = vst [vmem:[#allocation4 + $0x468] sm:$0xff] %v4928
    %4933 = vst [vmem:[#allocation4 + $0x470] sm:$0xff] %v4927
    %4934 = vst [vmem:[#allocation4 + $0x478] sm:$0xff] %v4926
    %4935 = vst [vmem:[#allocation4 + $0x480] sm:$0xff] %v4925
    %4936 = vst [vmem:[#allocation4 + $0x488] sm:$0xff] %v4924
    %4937 = vst [vmem:[#allocation4 + $0x490] sm:$0xff] %v4923
    %4938 = vst [vmem:[#allocation4 + $0x498] sm:$0xff] %v4922
    %4939 = vst [vmem:[#allocation4 + $0x4a0] sm:$0xff] %v4921
    %4940 = vst [vmem:[#allocation4 + $0x4a8] sm:$0xff] %v4930
    %4941 = vrot.lane.b32.xlu0 %v4079, 93
    %v4942 = vpop.permute.xlu0 %4941
    %4943 = vrot.lane.b32.xlu0 %v4081, 93
    %v4944 = vpop.permute.xlu0 %4943
    %4945 = vrot.lane.b32.xlu0 %v4221, 93
    %v4946 = vpop.permute.xlu0 %4945
    %4947 = vrot.lane.b32.xlu0 %v4223, 93
    %v4948 = vpop.permute.xlu0 %4947
    %4949 = vrot.lane.b32.xlu0 %v4363, 93
    %v4950 = vpop.permute.xlu0 %4949
    %4951 = vrot.lane.b32.xlu0 %v4365, 93
    %v4952 = vpop.permute.xlu0 %4951
    %4953 = vrot.lane.b32.xlu0 %v4505, 93
    %v4954 = vpop.permute.xlu0 %4953
    %4955 = vrot.lane.b32.xlu0 %v4507, 93
    %v4956 = vpop.permute.xlu0 %4955
    %4957 = vrot.lane.b32.xlu0 %v4647, 93
    %v4958 = vpop.permute.xlu0 %4957
    %4959 = vrot.lane.b32.xlu0 %v4649, 93
    %v4960 = vpop.permute.xlu0 %4959
    %v4961 = vsel %vm3900, %v4958, %v4960
    %v4962 = vsel %vm3900, %v4956, %v4958
    %v4963 = vsel %vm3900, %v4954, %v4956
    %v4964 = vsel %vm3900, %v4952, %v4954
    %v4965 = vsel %vm3900, %v4950, %v4952
    %v4966 = vsel %vm3900, %v4948, %v4950
    %v4967 = vsel %vm3900, %v4946, %v4948
    %v4968 = vsel %vm3900, %v4944, %v4946
    %v4969 = vsel %vm3900, %v4942, %v4944
    %v4970 = vsel %vm3900, %v4960, %v4942
    %4971 = vst [vmem:[#allocation4 + $0x500] sm:$0xff] %v4969
    %4972 = vst [vmem:[#allocation4 + $0x508] sm:$0xff] %v4968
    %4973 = vst [vmem:[#allocation4 + $0x510] sm:$0xff] %v4967
    %4974 = vst [vmem:[#allocation4 + $0x518] sm:$0xff] %v4966
    %4975 = vst [vmem:[#allocation4 + $0x520] sm:$0xff] %v4965
    %4976 = vst [vmem:[#allocation4 + $0x528] sm:$0xff] %v4964
    %4977 = vst [vmem:[#allocation4 + $0x530] sm:$0xff] %v4963
    %4978 = vst [vmem:[#allocation4 + $0x538] sm:$0xff] %v4962
    %4979 = vst [vmem:[#allocation4 + $0x540] sm:$0xff] %v4961
    %4980 = vst [vmem:[#allocation4 + $0x548] sm:$0xff] %v4970
    %4981 = vmatprep.subr.mxu0 %v2796
    %4982 = vmatpush1.msra.mxu0 %v2795
    %4983 = vmatprep.subr.mxu0 %v2806
    %4984 = vmatpush1.msra.mxu0 %v2805
    %4985 = vmatprep.subr.mxu0 %v2816
    %4986 = vmatpush1.msra.mxu0 %v2815
    %4987 = vmatprep.subr.mxu0 %v2826
    %4988 = vmatpush1.msra.mxu0 %v2825
    %4989 = vmatprep.subr.mxu0 %v2836
    %4990 = vmatpush1.msra.mxu0 %v2835
    %4991 = vmatprep.subr.mxu0 %v2846
    %4992 = vmatpush1.msra.mxu0 %v2845
    %4993 = vmatprep.subr.mxu0 %v2856
    %4994 = vmatpush1.msra.mxu0 %v2855
    %4995 = vmatprep.subr.mxu0 %v2866
    %4996 = vmatpush1.msra.mxu0 %v2865
    %4997 = vmatprep.subr.mxu0 %v2876
    %4998 = vmatpush1.msra.mxu0 %v2875
    %4999 = vmatprep.subr.mxu0 %v2886
    %5000 = vmatpush1.msra.mxu0 %v2885
    %5001 = vmatprep.subr.mxu0 %v2896
    %5002 = vmatpush1.msra.mxu0 %v2895
    %5003 = vmatprep.subr.mxu0 %v2906
    %5004 = vmatpush1.msra.mxu0 %v2905
    %5005 = vmatprep.subr.mxu0 %v2916
    %5006 = vmatpush1.msra.mxu0 %v2915
    %5007 = vmatprep.subr.mxu0 %v2926
    %5008 = vmatpush1.msra.mxu0 %v2925
    %5009 = vmatprep.subr.mxu0 %v2936
    %5010 = vmatpush1.msra.mxu0 %v2935
    %5011 = vmatprep.subr.mxu0 %v2946
    %5012 = vmatpush1.msra.mxu0 %v2945
    %5013 = vmatprep.subr.mxu0 %v2956
    %5014 = vmatpush1.msra.mxu0 %v2955
    %5015 = vmatprep.subr.mxu0 %v2966
    %5016 = vmatpush1.msra.mxu0 %v2965
    %5017 = vmatprep.subr.mxu0 %v2976
    %5018 = vmatpush1.msra.mxu0 %v2975
    %5019 = vmatprep.subr.mxu0 %v2986
    %5020 = vmatpush1.msra.mxu0 %v2985
    %5021 = vmatprep.subr.mxu0 %v2996
    %5022 = vmatpush1.msra.mxu0 %v2995
    %5023 = vmatprep.subr.mxu0 %v3006
    %5024 = vmatpush1.msra.mxu0 %v3005
    %5025 = vmatprep.subr.mxu0 %v3016
    %5026 = vmatpush1.msra.mxu0 %v3015
    %5027 = vmatprep.subr.mxu0 %v3026
    %5028 = vmatpush1.msra.mxu0 %v3025
    %5029 = vmatprep.subr.mxu0 %v3036
    %5030 = vmatpush1.msra.mxu0 %v3035
    %5031 = vmatprep.subr.mxu0 %v3046
    %5032 = vmatpush1.msra.mxu0 %v3045
    %5033 = vmatprep.subr.mxu0 %v3056
    %5034 = vmatpush1.msra.mxu0 %v3055
    %5035 = vmatprep.subr.mxu0 %v3066
    %5036 = vmatpush1.msra.mxu0 %v3065
    %5037 = vmatprep.subr.mxu0 %v3076
    %5038 = vmatpush1.msra.mxu0 %v3075
    %5039 = vmatprep.subr.mxu0 %v3086
    %5040 = vmatpush1.msra.mxu0 %v3085
    %5041 = vmatprep.subr.mxu0 %v3096
    %5042 = vmatpush1.msra.mxu0 %v3095
    %5043 = vmatprep.subr.mxu0 %v3106
    %5044 = vmatpush1.msra.mxu0 %v3105
    %5045 = vmatprep.mubr.f32.mxu0 %v2528
    %5046 = vmatmul.mubr.f32.gmra.mrb[0].mxu0 %v2527
    %v5047 = vpop.f32.mrb[0].mxu0
    %v5048 = vadd.f32 0.0, %v5047
    %v5049 = vpop.f32.mrb[0].mxu0
    %v5050 = vadd.f32 0.0, %v5049
    %5051 = vdwg.mxu0
    %5052 = vmatprep.subr.mxu0 %v3116
    %5053 = vmatpush1.msra.mxu0 %v3115
    %5054 = vmatprep.subr.mxu0 %v3126
    %5055 = vmatpush1.msra.mxu0 %v3125
    %5056 = vmatprep.subr.mxu0 %v3136
    %5057 = vmatpush1.msra.mxu0 %v3135
    %5058 = vmatprep.subr.mxu0 %v3146
    %5059 = vmatpush1.msra.mxu0 %v3145
    %5060 = vmatprep.subr.mxu0 %v3156
    %5061 = vmatpush1.msra.mxu0 %v3155
    %5062 = vmatprep.subr.mxu0 %v3166
    %5063 = vmatpush1.msra.mxu0 %v3165
    %5064 = vmatprep.subr.mxu0 %v3176
    %5065 = vmatpush1.msra.mxu0 %v3175
    %5066 = vmatprep.subr.mxu0 %v3186
    %5067 = vmatpush1.msra.mxu0 %v3185
    %5068 = vmatprep.subr.mxu0 %v3196
    %5069 = vmatpush1.msra.mxu0 %v3195
    %5070 = vmatprep.subr.mxu0 %v3206
    %5071 = vmatpush1.msra.mxu0 %v3205
    %5072 = vmatprep.subr.mxu0 %v3216
    %5073 = vmatpush1.msra.mxu0 %v3215
    %5074 = vmatprep.subr.mxu0 %v3226
    %5075 = vmatpush1.msra.mxu0 %v3225
    %5076 = vmatprep.subr.mxu0 %v3236
    %5077 = vmatpush1.msra.mxu0 %v3235
    %5078 = vmatprep.subr.mxu0 %v3246
    %5079 = vmatpush1.msra.mxu0 %v3245
    %5080 = vmatprep.subr.mxu0 %v3256
    %5081 = vmatpush1.msra.mxu0 %v3255
    %5082 = vmatprep.subr.mxu0 %v3266
    %5083 = vmatpush1.msra.mxu0 %v3265
    %5084 = vmatprep.subr.mxu0 0.0
    %5085 = vmatpush1.msra.mxu0 0.0
    %5086 = vmatprep.subr.mxu0 0.0
    %5087 = vmatpush1.msra.mxu0 0.0
    %5088 = vmatprep.subr.mxu0 0.0
    %5089 = vmatpush1.msra.mxu0 0.0
    %5090 = vmatprep.subr.mxu0 0.0
    %5091 = vmatpush1.msra.mxu0 0.0
    %5092 = vmatprep.subr.mxu0 0.0
    %5093 = vmatpush1.msra.mxu0 0.0
    %5094 = vmatprep.subr.mxu0 0.0
    %5095 = vmatpush1.msra.mxu0 0.0
    %5096 = vmatprep.subr.mxu0 0.0
    %5097 = vmatpush1.msra.mxu0 0.0
    %5098 = vmatprep.subr.mxu0 0.0
    %5099 = vmatpush1.msra.mxu0 0.0
    %5100 = vmatprep.subr.mxu0 0.0
    %5101 = vmatpush1.msra.mxu0 0.0
    %5102 = vmatprep.subr.mxu0 0.0
    %5103 = vmatpush1.msra.mxu0 0.0
    %5104 = vmatprep.subr.mxu0 0.0
    %5105 = vmatpush1.msra.mxu0 0.0
    %5106 = vmatprep.subr.mxu0 0.0
    %5107 = vmatpush1.msra.mxu0 0.0
    %5108 = vmatprep.subr.mxu0 0.0
    %5109 = vmatpush1.msra.mxu0 0.0
    %5110 = vmatprep.subr.mxu0 0.0
    %5111 = vmatpush1.msra.mxu0 0.0
    %5112 = vmatprep.subr.mxu0 0.0
    %5113 = vmatpush1.msra.mxu0 0.0
    %5114 = vmatprep.subr.mxu0 0.0
    %5115 = vmatpush1.msra.mxu0 0.0
    %5116 = vmatprep.mubr.f32.mxu0 0.0
    %5117 = vmatmul.mubr.f32.gmra.mrb[0].mxu0 %v2529
    %v5118 = vpop.f32.mrb[0].mxu0
    %v5119 = vadd.f32 %v5048, %v5118
    %v5120 = vpop.f32.mrb[0].mxu0
    %v5121 = vadd.f32 %v5050, %v5120
    %5122 = vdwg.mxu0
    %5123 = vmatprep.subr.mxu0 %v2798
    %5124 = vmatpush1.msra.mxu0 %v2797
    %5125 = vmatprep.subr.mxu0 %v2808
    %5126 = vmatpush1.msra.mxu0 %v2807
    %5127 = vmatprep.subr.mxu0 %v2818
    %5128 = vmatpush1.msra.mxu0 %v2817
    %5129 = vmatprep.subr.mxu0 %v2828
    %5130 = vmatpush1.msra.mxu0 %v2827
    %5131 = vmatprep.subr.mxu0 %v2838
    %5132 = vmatpush1.msra.mxu0 %v2837
    %5133 = vmatprep.subr.mxu0 %v2848
    %5134 = vmatpush1.msra.mxu0 %v2847
    %5135 = vmatprep.subr.mxu0 %v2858
    %5136 = vmatpush1.msra.mxu0 %v2857
    %5137 = vmatprep.subr.mxu0 %v2868
    %5138 = vmatpush1.msra.mxu0 %v2867
    %5139 = vmatprep.subr.mxu0 %v2878
    %5140 = vmatpush1.msra.mxu0 %v2877
    %5141 = vmatprep.subr.mxu0 %v2888
    %5142 = vmatpush1.msra.mxu0 %v2887
    %5143 = vmatprep.subr.mxu0 %v2898
    %5144 = vmatpush1.msra.mxu0 %v2897
    %5145 = vmatprep.subr.mxu0 %v2908
    %5146 = vmatpush1.msra.mxu0 %v2907
    %5147 = vmatprep.subr.mxu0 %v2918
    %5148 = vmatpush1.msra.mxu0 %v2917
    %5149 = vmatprep.subr.mxu0 %v2928
    %5150 = vmatpush1.msra.mxu0 %v2927
    %5151 = vmatprep.subr.mxu0 %v2938
    %5152 = vmatpush1.msra.mxu0 %v2937
    %5153 = vmatprep.subr.mxu0 %v2948
    %5154 = vmatpush1.msra.mxu0 %v2947
    %5155 = vmatprep.subr.mxu0 %v2958
    %5156 = vmatpush1.msra.mxu0 %v2957
    %5157 = vmatprep.subr.mxu0 %v2968
    %5158 = vmatpush1.msra.mxu0 %v2967
    %5159 = vmatprep.subr.mxu0 %v2978
    %5160 = vmatpush1.msra.mxu0 %v2977
    %5161 = vmatprep.subr.mxu0 %v2988
    %5162 = vmatpush1.msra.mxu0 %v2987
    %5163 = vmatprep.subr.mxu0 %v2998
    %5164 = vmatpush1.msra.mxu0 %v2997
    %5165 = vmatprep.subr.mxu0 %v3008
    %5166 = vmatpush1.msra.mxu0 %v3007
    %5167 = vmatprep.subr.mxu0 %v3018
    %5168 = vmatpush1.msra.mxu0 %v3017
    %5169 = vmatprep.subr.mxu0 %v3028
    %5170 = vmatpush1.msra.mxu0 %v3027
    %5171 = vmatprep.subr.mxu0 %v3038
    %5172 = vmatpush1.msra.mxu0 %v3037
    %5173 = vmatprep.subr.mxu0 %v3048
    %5174 = vmatpush1.msra.mxu0 %v3047
    %5175 = vmatprep.subr.mxu0 %v3058
    %5176 = vmatpush1.msra.mxu0 %v3057
    %5177 = vmatprep.subr.mxu0 %v3068
    %5178 = vmatpush1.msra.mxu0 %v3067
    %5179 = vmatprep.subr.mxu0 %v3078
    %5180 = vmatpush1.msra.mxu0 %v3077
    %5181 = vmatprep.subr.mxu0 %v3088
    %5182 = vmatpush1.msra.mxu0 %v3087
    %5183 = vmatprep.subr.mxu0 %v3098
    %5184 = vmatpush1.msra.mxu0 %v3097
    %5185 = vmatprep.subr.mxu0 %v3108
    %5186 = vmatpush1.msra.mxu0 %v3107
    %5187 = vmatprep.mubr.f32.mxu0 %v2528
    %5188 = vmatmul.mubr.f32.gmra.mrb[0].mxu0 %v2527
    %v5189 = vpop.f32.mrb[0].mxu0
    %v5190 = vadd.f32 0.0, %v5189
    %v5191 = vpop.f32.mrb[0].mxu0
    %v5192 = vadd.f32 0.0, %v5191
    %5193 = vdwg.mxu0
    %5194 = vmatprep.subr.mxu0 %v3118
    %5195 = vmatpush1.msra.mxu0 %v3117
    %5196 = vmatprep.subr.mxu0 %v3128
    %5197 = vmatpush1.msra.mxu0 %v3127
    %5198 = vmatprep.subr.mxu0 %v3138
    %5199 = vmatpush1.msra.mxu0 %v3137
    %5200 = vmatprep.subr.mxu0 %v3148
    %5201 = vmatpush1.msra.mxu0 %v3147
    %5202 = vmatprep.subr.mxu0 %v3158
    %5203 = vmatpush1.msra.mxu0 %v3157
    %5204 = vmatprep.subr.mxu0 %v3168
    %5205 = vmatpush1.msra.mxu0 %v3167
    %5206 = vmatprep.subr.mxu0 %v3178
    %5207 = vmatpush1.msra.mxu0 %v3177
    %5208 = vmatprep.subr.mxu0 %v3188
    %5209 = vmatpush1.msra.mxu0 %v3187
    %5210 = vmatprep.subr.mxu0 %v3198
    %5211 = vmatpush1.msra.mxu0 %v3197
    %5212 = vmatprep.subr.mxu0 %v3208
    %5213 = vmatpush1.msra.mxu0 %v3207
    %5214 = vmatprep.subr.mxu0 %v3218
    %5215 = vmatpush1.msra.mxu0 %v3217
    %5216 = vmatprep.subr.mxu0 %v3228
    %5217 = vmatpush1.msra.mxu0 %v3227
    %5218 = vmatprep.subr.mxu0 %v3238
    %5219 = vmatpush1.msra.mxu0 %v3237
    %5220 = vmatprep.subr.mxu0 %v3248
    %5221 = vmatpush1.msra.mxu0 %v3247
    %5222 = vmatprep.subr.mxu0 %v3258
    %5223 = vmatpush1.msra.mxu0 %v3257
    %5224 = vmatprep.subr.mxu0 %v3268
    %5225 = vmatpush1.msra.mxu0 %v3267
    %5226 = vmatprep.subr.mxu0 0.0
    %5227 = vmatpush1.msra.mxu0 0.0
    %5228 = vmatprep.subr.mxu0 0.0
    %5229 = vmatpush1.msra.mxu0 0.0
    %5230 = vmatprep.subr.mxu0 0.0
    %5231 = vmatpush1.msra.mxu0 0.0
    %5232 = vmatprep.subr.mxu0 0.0
    %5233 = vmatpush1.msra.mxu0 0.0
    %5234 = vmatprep.subr.mxu0 0.0
    %5235 = vmatpush1.msra.mxu0 0.0
    %5236 = vmatprep.subr.mxu0 0.0
    %5237 = vmatpush1.msra.mxu0 0.0
    %5238 = vmatprep.subr.mxu0 0.0
    %5239 = vmatpush1.msra.mxu0 0.0
    %5240 = vmatprep.subr.mxu0 0.0
    %5241 = vmatpush1.msra.mxu0 0.0
    %5242 = vmatprep.subr.mxu0 0.0
    %5243 = vmatpush1.msra.mxu0 0.0
    %5244 = vmatprep.subr.mxu0 0.0
    %5245 = vmatpush1.msra.mxu0 0.0
    %5246 = vmatprep.subr.mxu0 0.0
    %5247 = vmatpush1.msra.mxu0 0.0
    %5248 = vmatprep.subr.mxu0 0.0
    %5249 = vmatpush1.msra.mxu0 0.0
    %5250 = vmatprep.subr.mxu0 0.0
    %5251 = vmatpush1.msra.mxu0 0.0
    %5252 = vmatprep.subr.mxu0 0.0
    %5253 = vmatpush1.msra.mxu0 0.0
    %5254 = vmatprep.subr.mxu0 0.0
    %5255 = vmatpush1.msra.mxu0 0.0
    %5256 = vmatprep.subr.mxu0 0.0
    %5257 = vmatpush1.msra.mxu0 0.0
    %5258 = vmatprep.mubr.f32.mxu0 0.0
    %5259 = vmatmul.mubr.f32.gmra.mrb[0].mxu0 %v2529
    %v5260 = vpop.f32.mrb[0].mxu0
    %v5261 = vadd.f32 %v5190, %v5260
    %v5262 = vpop.f32.mrb[0].mxu0
    %v5263 = vadd.f32 %v5192, %v5262
    %5264 = vdwg.mxu0
    %5265 = vmatprep.subr.mxu0 %v2800
    %5266 = vmatpush1.msra.mxu0 %v2799
    %5267 = vmatprep.subr.mxu0 %v2810
    %5268 = vmatpush1.msra.mxu0 %v2809
    %5269 = vmatprep.subr.mxu0 %v2820
    %5270 = vmatpush1.msra.mxu0 %v2819
    %5271 = vmatprep.subr.mxu0 %v2830
    %5272 = vmatpush1.msra.mxu0 %v2829
    %5273 = vmatprep.subr.mxu0 %v2840
    %5274 = vmatpush1.msra.mxu0 %v2839
    %5275 = vmatprep.subr.mxu0 %v2850
    %5276 = vmatpush1.msra.mxu0 %v2849
    %5277 = vmatprep.subr.mxu0 %v2860
    %5278 = vmatpush1.msra.mxu0 %v2859
    %5279 = vmatprep.subr.mxu0 %v2870
    %5280 = vmatpush1.msra.mxu0 %v2869
    %5281 = vmatprep.subr.mxu0 %v2880
    %5282 = vmatpush1.msra.mxu0 %v2879
    %5283 = vmatprep.subr.mxu0 %v2890
    %5284 = vmatpush1.msra.mxu0 %v2889
    %5285 = vmatprep.subr.mxu0 %v2900
    %5286 = vmatpush1.msra.mxu0 %v2899
    %5287 = vmatprep.subr.mxu0 %v2910
    %5288 = vmatpush1.msra.mxu0 %v2909
    %5289 = vmatprep.subr.mxu0 %v2920
    %5290 = vmatpush1.msra.mxu0 %v2919
    %5291 = vmatprep.subr.mxu0 %v2930
    %5292 = vmatpush1.msra.mxu0 %v2929
    %5293 = vmatprep.subr.mxu0 %v2940
    %5294 = vmatpush1.msra.mxu0 %v2939
    %5295 = vmatprep.subr.mxu0 %v2950
    %5296 = vmatpush1.msra.mxu0 %v2949
    %5297 = vmatprep.subr.mxu0 %v2960
    %5298 = vmatpush1.msra.mxu0 %v2959
    %5299 = vmatprep.subr.mxu0 %v2970
    %5300 = vmatpush1.msra.mxu0 %v2969
    %5301 = vmatprep.subr.mxu0 %v2980
    %5302 = vmatpush1.msra.mxu0 %v2979
    %5303 = vmatprep.subr.mxu0 %v2990
    %5304 = vmatpush1.msra.mxu0 %v2989
    %5305 = vmatprep.subr.mxu0 %v3000
    %5306 = vmatpush1.msra.mxu0 %v2999
    %5307 = vmatprep.subr.mxu0 %v3010
    %5308 = vmatpush1.msra.mxu0 %v3009
    %5309 = vmatprep.subr.mxu0 %v3020
    %5310 = vmatpush1.msra.mxu0 %v3019
    %5311 = vmatprep.subr.mxu0 %v3030
    %5312 = vmatpush1.msra.mxu0 %v3029
    %5313 = vmatprep.subr.mxu0 %v3040
    %5314 = vmatpush1.msra.mxu0 %v3039
    %5315 = vmatprep.subr.mxu0 %v3050
    %5316 = vmatpush1.msra.mxu0 %v3049
    %5317 = vmatprep.subr.mxu0 %v3060
    %5318 = vmatpush1.msra.mxu0 %v3059
    %5319 = vmatprep.subr.mxu0 %v3070
    %5320 = vmatpush1.msra.mxu0 %v3069
    %5321 = vmatprep.subr.mxu0 %v3080
    %5322 = vmatpush1.msra.mxu0 %v3079
    %5323 = vmatprep.subr.mxu0 %v3090
    %5324 = vmatpush1.msra.mxu0 %v3089
    %5325 = vmatprep.subr.mxu0 %v3100
    %5326 = vmatpush1.msra.mxu0 %v3099
    %5327 = vmatprep.subr.mxu0 %v3110
    %5328 = vmatpush1.msra.mxu0 %v3109
    %5329 = vmatprep.mubr.f32.mxu0 %v2528
    %5330 = vmatmul.mubr.f32.gmra.mrb[0].mxu0 %v2527
    %v5331 = vpop.f32.mrb[0].mxu0
    %v5332 = vadd.f32 0.0, %v5331
    %v5333 = vpop.f32.mrb[0].mxu0
    %v5334 = vadd.f32 0.0, %v5333
    %5335 = vdwg.mxu0
    %5336 = vmatprep.subr.mxu0 %v3120
    %5337 = vmatpush1.msra.mxu0 %v3119
    %5338 = vmatprep.subr.mxu0 %v3130
    %5339 = vmatpush1.msra.mxu0 %v3129
    %5340 = vmatprep.subr.mxu0 %v3140
    %5341 = vmatpush1.msra.mxu0 %v3139
    %5342 = vmatprep.subr.mxu0 %v3150
    %5343 = vmatpush1.msra.mxu0 %v3149
    %5344 = vmatprep.subr.mxu0 %v3160
    %5345 = vmatpush1.msra.mxu0 %v3159
    %5346 = vmatprep.subr.mxu0 %v3170
    %5347 = vmatpush1.msra.mxu0 %v3169
    %5348 = vmatprep.subr.mxu0 %v3180
    %5349 = vmatpush1.msra.mxu0 %v3179
    %5350 = vmatprep.subr.mxu0 %v3190
    %5351 = vmatpush1.msra.mxu0 %v3189
    %5352 = vmatprep.subr.mxu0 %v3200
    %5353 = vmatpush1.msra.mxu0 %v3199
    %5354 = vmatprep.subr.mxu0 %v3210
    %5355 = vmatpush1.msra.mxu0 %v3209
    %5356 = vmatprep.subr.mxu0 %v3220
    %5357 = vmatpush1.msra.mxu0 %v3219
    %5358 = vmatprep.subr.mxu0 %v3230
    %5359 = vmatpush1.msra.mxu0 %v3229
    %5360 = vmatprep.subr.mxu0 %v3240
    %5361 = vmatpush1.msra.mxu0 %v3239
    %5362 = vmatprep.subr.mxu0 %v3250
    %5363 = vmatpush1.msra.mxu0 %v3249
    %5364 = vmatprep.subr.mxu0 %v3260
    %5365 = vmatpush1.msra.mxu0 %v3259
    %5366 = vmatprep.subr.mxu0 %v3270
    %5367 = vmatpush1.msra.mxu0 %v3269
    %5368 = vmatprep.subr.mxu0 0.0
    %5369 = vmatpush1.msra.mxu0 0.0
    %5370 = vmatprep.subr.mxu0 0.0
    %5371 = vmatpush1.msra.mxu0 0.0
    %5372 = vmatprep.subr.mxu0 0.0
    %5373 = vmatpush1.msra.mxu0 0.0
    %5374 = vmatprep.subr.mxu0 0.0
    %5375 = vmatpush1.msra.mxu0 0.0
    %5376 = vmatprep.subr.mxu0 0.0
    %5377 = vmatpush1.msra.mxu0 0.0
    %5378 = vmatprep.subr.mxu0 0.0
    %5379 = vmatpush1.msra.mxu0 0.0
    %5380 = vmatprep.subr.mxu0 0.0
    %5381 = vmatpush1.msra.mxu0 0.0
    %5382 = vmatprep.subr.mxu0 0.0
    %5383 = vmatpush1.msra.mxu0 0.0
    %5384 = vmatprep.subr.mxu0 0.0
    %5385 = vmatpush1.msra.mxu0 0.0
    %5386 = vmatprep.subr.mxu0 0.0
    %5387 = vmatpush1.msra.mxu0 0.0
    %5388 = vmatprep.subr.mxu0 0.0
    %5389 = vmatpush1.msra.mxu0 0.0
    %5390 = vmatprep.subr.mxu0 0.0
    %5391 = vmatpush1.msra.mxu0 0.0
    %5392 = vmatprep.subr.mxu0 0.0
    %5393 = vmatpush1.msra.mxu0 0.0
    %5394 = vmatprep.subr.mxu0 0.0
    %5395 = vmatpush1.msra.mxu0 0.0
    %5396 = vmatprep.subr.mxu0 0.0
    %5397 = vmatpush1.msra.mxu0 0.0
    %5398 = vmatprep.subr.mxu0 0.0
    %5399 = vmatpush1.msra.mxu0 0.0
    %5400 = vmatprep.mubr.f32.mxu0 0.0
    %5401 = vmatmul.mubr.f32.gmra.mrb[0].mxu0 %v2529
    %v5402 = vpop.f32.mrb[0].mxu0
    %v5403 = vadd.f32 %v5332, %v5402
    %v5404 = vpop.f32.mrb[0].mxu0
    %v5405 = vadd.f32 %v5334, %v5404
    %5406 = vdwg.mxu0
    %5407 = vmatprep.subr.mxu0 %v2802
    %5408 = vmatpush1.msra.mxu0 %v2801
    %5409 = vmatprep.subr.mxu0 %v2812
    %5410 = vmatpush1.msra.mxu0 %v2811
    %5411 = vmatprep.subr.mxu0 %v2822
    %5412 = vmatpush1.msra.mxu0 %v2821
    %5413 = vmatprep.subr.mxu0 %v2832
    %5414 = vmatpush1.msra.mxu0 %v2831
    %5415 = vmatprep.subr.mxu0 %v2842
    %5416 = vmatpush1.msra.mxu0 %v2841
    %5417 = vmatprep.subr.mxu0 %v2852
    %5418 = vmatpush1.msra.mxu0 %v2851
    %5419 = vmatprep.subr.mxu0 %v2862
    %5420 = vmatpush1.msra.mxu0 %v2861
    %5421 = vmatprep.subr.mxu0 %v2872
    %5422 = vmatpush1.msra.mxu0 %v2871
    %5423 = vmatprep.subr.mxu0 %v2882
    %5424 = vmatpush1.msra.mxu0 %v2881
    %5425 = vmatprep.subr.mxu0 %v2892
    %5426 = vmatpush1.msra.mxu0 %v2891
    %5427 = vmatprep.subr.mxu0 %v2902
    %5428 = vmatpush1.msra.mxu0 %v2901
    %5429 = vmatprep.subr.mxu0 %v2912
    %5430 = vmatpush1.msra.mxu0 %v2911
    %5431 = vmatprep.subr.mxu0 %v2922
    %5432 = vmatpush1.msra.mxu0 %v2921
    %5433 = vmatprep.subr.mxu0 %v2932
    %5434 = vmatpush1.msra.mxu0 %v2931
    %5435 = vmatprep.subr.mxu0 %v2942
    %5436 = vmatpush1.msra.mxu0 %v2941
    %5437 = vmatprep.subr.mxu0 %v2952
    %5438 = vmatpush1.msra.mxu0 %v2951
    %5439 = vmatprep.subr.mxu0 %v2962
    %5440 = vmatpush1.msra.mxu0 %v2961
    %5441 = vmatprep.subr.mxu0 %v2972
    %5442 = vmatpush1.msra.mxu0 %v2971
    %5443 = vmatprep.subr.mxu0 %v2982
    %5444 = vmatpush1.msra.mxu0 %v2981
    %5445 = vmatprep.subr.mxu0 %v2992
    %5446 = vmatpush1.msra.mxu0 %v2991
    %5447 = vmatprep.subr.mxu0 %v3002
    %5448 = vmatpush1.msra.mxu0 %v3001
    %5449 = vmatprep.subr.mxu0 %v3012
    %5450 = vmatpush1.msra.mxu0 %v3011
    %5451 = vmatprep.subr.mxu0 %v3022
    %5452 = vmatpush1.msra.mxu0 %v3021
    %5453 = vmatprep.subr.mxu0 %v3032
    %5454 = vmatpush1.msra.mxu0 %v3031
    %5455 = vmatprep.subr.mxu0 %v3042
    %5456 = vmatpush1.msra.mxu0 %v3041
    %5457 = vmatprep.subr.mxu0 %v3052
    %5458 = vmatpush1.msra.mxu0 %v3051
    %5459 = vmatprep.subr.mxu0 %v3062
    %5460 = vmatpush1.msra.mxu0 %v3061
    %5461 = vmatprep.subr.mxu0 %v3072
    %5462 = vmatpush1.msra.mxu0 %v3071
    %5463 = vmatprep.subr.mxu0 %v3082
    %5464 = vmatpush1.msra.mxu0 %v3081
    %5465 = vmatprep.subr.mxu0 %v3092
    %5466 = vmatpush1.msra.mxu0 %v3091
    %5467 = vmatprep.subr.mxu0 %v3102
    %5468 = vmatpush1.msra.mxu0 %v3101
    %5469 = vmatprep.subr.mxu0 %v3112
    %5470 = vmatpush1.msra.mxu0 %v3111
    %5471 = vmatprep.mubr.f32.mxu0 %v2528
    %5472 = vmatmul.mubr.f32.gmra.mrb[0].mxu0 %v2527
    %v5473 = vpop.f32.mrb[0].mxu0
    %v5474 = vadd.f32 0.0, %v5473
    %v5475 = vpop.f32.mrb[0].mxu0
    %v5476 = vadd.f32 0.0, %v5475
    %5477 = vdwg.mxu0
    %5478 = vmatprep.subr.mxu0 %v3122
    %5479 = vmatpush1.msra.mxu0 %v3121
    %5480 = vmatprep.subr.mxu0 %v3132
    %5481 = vmatpush1.msra.mxu0 %v3131
    %5482 = vmatprep.subr.mxu0 %v3142
    %5483 = vmatpush1.msra.mxu0 %v3141
    %5484 = vmatprep.subr.mxu0 %v3152
    %5485 = vmatpush1.msra.mxu0 %v3151
    %5486 = vmatprep.subr.mxu0 %v3162
    %5487 = vmatpush1.msra.mxu0 %v3161
    %5488 = vmatprep.subr.mxu0 %v3172
    %5489 = vmatpush1.msra.mxu0 %v3171
    %5490 = vmatprep.subr.mxu0 %v3182
    %5491 = vmatpush1.msra.mxu0 %v3181
    %5492 = vmatprep.subr.mxu0 %v3192
    %5493 = vmatpush1.msra.mxu0 %v3191
    %5494 = vmatprep.subr.mxu0 %v3202
    %5495 = vmatpush1.msra.mxu0 %v3201
    %5496 = vmatprep.subr.mxu0 %v3212
    %5497 = vmatpush1.msra.mxu0 %v3211
    %5498 = vmatprep.subr.mxu0 %v3222
    %5499 = vmatpush1.msra.mxu0 %v3221
    %5500 = vmatprep.subr.mxu0 %v3232
    %5501 = vmatpush1.msra.mxu0 %v3231
    %5502 = vmatprep.subr.mxu0 %v3242
    %5503 = vmatpush1.msra.mxu0 %v3241
    %5504 = vmatprep.subr.mxu0 %v3252
    %5505 = vmatpush1.msra.mxu0 %v3251
    %5506 = vmatprep.subr.mxu0 %v3262
    %5507 = vmatpush1.msra.mxu0 %v3261
    %5508 = vmatprep.subr.mxu0 %v3272
    %5509 = vmatpush1.msra.mxu0 %v3271
    %5510 = vmatprep.subr.mxu0 0.0
    %5511 = vmatpush1.msra.mxu0 0.0
    %5512 = vmatprep.subr.mxu0 0.0
    %5513 = vmatpush1.msra.mxu0 0.0
    %5514 = vmatprep.subr.mxu0 0.0
    %5515 = vmatpush1.msra.mxu0 0.0
    %5516 = vmatprep.subr.mxu0 0.0
    %5517 = vmatpush1.msra.mxu0 0.0
    %5518 = vmatprep.subr.mxu0 0.0
    %5519 = vmatpush1.msra.mxu0 0.0
    %5520 = vmatprep.subr.mxu0 0.0
    %5521 = vmatpush1.msra.mxu0 0.0
    %5522 = vmatprep.subr.mxu0 0.0
    %5523 = vmatpush1.msra.mxu0 0.0
    %5524 = vmatprep.subr.mxu0 0.0
    %5525 = vmatpush1.msra.mxu0 0.0
    %5526 = vmatprep.subr.mxu0 0.0
    %5527 = vmatpush1.msra.mxu0 0.0
    %5528 = vmatprep.subr.mxu0 0.0
    %5529 = vmatpush1.msra.mxu0 0.0
    %5530 = vmatprep.subr.mxu0 0.0
    %5531 = vmatpush1.msra.mxu0 0.0
    %5532 = vmatprep.subr.mxu0 0.0
    %5533 = vmatpush1.msra.mxu0 0.0
    %5534 = vmatprep.subr.mxu0 0.0
    %5535 = vmatpush1.msra.mxu0 0.0
    %5536 = vmatprep.subr.mxu0 0.0
    %5537 = vmatpush1.msra.mxu0 0.0
    %5538 = vmatprep.subr.mxu0 0.0
    %5539 = vmatpush1.msra.mxu0 0.0
    %5540 = vmatprep.subr.mxu0 0.0
    %5541 = vmatpush1.msra.mxu0 0.0
    %5542 = vmatprep.mubr.f32.mxu0 0.0
    %5543 = vmatmul.mubr.f32.gmra.mrb[0].mxu0 %v2529
    %v5544 = vpop.f32.mrb[0].mxu0
    %v5545 = vadd.f32 %v5474, %v5544
    %v5546 = vpop.f32.mrb[0].mxu0
    %v5547 = vadd.f32 %v5476, %v5546
    %5548 = vdwg.mxu0
    %5549 = vmatprep.subr.mxu0 %v2804
    %5550 = vmatpush1.msra.mxu0 %v2803
    %5551 = vmatprep.subr.mxu0 %v2814
    %5552 = vmatpush1.msra.mxu0 %v2813
    %5553 = vmatprep.subr.mxu0 %v2824
    %5554 = vmatpush1.msra.mxu0 %v2823
    %5555 = vmatprep.subr.mxu0 %v2834
    %5556 = vmatpush1.msra.mxu0 %v2833
    %5557 = vmatprep.subr.mxu0 %v2844
    %5558 = vmatpush1.msra.mxu0 %v2843
    %5559 = vmatprep.subr.mxu0 %v2854
    %5560 = vmatpush1.msra.mxu0 %v2853
    %5561 = vmatprep.subr.mxu0 %v2864
    %5562 = vmatpush1.msra.mxu0 %v2863
    %5563 = vmatprep.subr.mxu0 %v2874
    %5564 = vmatpush1.msra.mxu0 %v2873
    %5565 = vmatprep.subr.mxu0 %v2884
    %5566 = vmatpush1.msra.mxu0 %v2883
    %5567 = vmatprep.subr.mxu0 %v2894
    %5568 = vmatpush1.msra.mxu0 %v2893
    %5569 = vmatprep.subr.mxu0 %v2904
    %5570 = vmatpush1.msra.mxu0 %v2903
    %5571 = vmatprep.subr.mxu0 %v2914
    %5572 = vmatpush1.msra.mxu0 %v2913
    %5573 = vmatprep.subr.mxu0 %v2924
    %5574 = vmatpush1.msra.mxu0 %v2923
    %5575 = vmatprep.subr.mxu0 %v2934
    %5576 = vmatpush1.msra.mxu0 %v2933
    %5577 = vmatprep.subr.mxu0 %v2944
    %5578 = vmatpush1.msra.mxu0 %v2943
    %5579 = vmatprep.subr.mxu0 %v2954
    %5580 = vmatpush1.msra.mxu0 %v2953
    %5581 = vmatprep.subr.mxu0 %v2964
    %5582 = vmatpush1.msra.mxu0 %v2963
    %5583 = vmatprep.subr.mxu0 %v2974
    %5584 = vmatpush1.msra.mxu0 %v2973
    %5585 = vmatprep.subr.mxu0 %v2984
    %5586 = vmatpush1.msra.mxu0 %v2983
    %5587 = vmatprep.subr.mxu0 %v2994
    %5588 = vmatpush1.msra.mxu0 %v2993
    %5589 = vmatprep.subr.mxu0 %v3004
    %5590 = vmatpush1.msra.mxu0 %v3003
    %5591 = vmatprep.subr.mxu0 %v3014
    %5592 = vmatpush1.msra.mxu0 %v3013
    %5593 = vmatprep.subr.mxu0 %v3024
    %5594 = vmatpush1.msra.mxu0 %v3023
    %5595 = vmatprep.subr.mxu0 %v3034
    %5596 = vmatpush1.msra.mxu0 %v3033
    %5597 = vmatprep.subr.mxu0 %v3044
    %5598 = vmatpush1.msra.mxu0 %v3043
    %5599 = vmatprep.subr.mxu0 %v3054
    %5600 = vmatpush1.msra.mxu0 %v3053
    %5601 = vmatprep.subr.mxu0 %v3064
    %5602 = vmatpush1.msra.mxu0 %v3063
    %5603 = vmatprep.subr.mxu0 %v3074
    %5604 = vmatpush1.msra.mxu0 %v3073
    %5605 = vmatprep.subr.mxu0 %v3084
    %5606 = vmatpush1.msra.mxu0 %v3083
    %5607 = vmatprep.subr.mxu0 %v3094
    %5608 = vmatpush1.msra.mxu0 %v3093
    %5609 = vmatprep.subr.mxu0 %v3104
    %5610 = vmatpush1.msra.mxu0 %v3103
    %5611 = vmatprep.subr.mxu0 %v3114
    %5612 = vmatpush1.msra.mxu0 %v3113
    %5613 = vmatprep.mubr.f32.mxu0 %v2528
    %5614 = vmatmul.mubr.f32.gmra.mrb[0].mxu0 %v2527
    %v5615 = vpop.f32.mrb[0].mxu0
    %v5616 = vadd.f32 0.0, %v5615
    %v5617 = vpop.f32.mrb[0].mxu0
    %v5618 = vadd.f32 0.0, %v5617
    %5619 = vdwg.mxu0
    %5620 = vmatprep.subr.mxu0 %v3124
    %5621 = vmatpush1.msra.mxu0 %v3123
    %5622 = vmatprep.subr.mxu0 %v3134
    %5623 = vmatpush1.msra.mxu0 %v3133
    %5624 = vmatprep.subr.mxu0 %v3144
    %5625 = vmatpush1.msra.mxu0 %v3143
    %5626 = vmatprep.subr.mxu0 %v3154
    %5627 = vmatpush1.msra.mxu0 %v3153
    %5628 = vmatprep.subr.mxu0 %v3164
    %5629 = vmatpush1.msra.mxu0 %v3163
    %5630 = vmatprep.subr.mxu0 %v3174
    %5631 = vmatpush1.msra.mxu0 %v3173
    %5632 = vmatprep.subr.mxu0 %v3184
    %5633 = vmatpush1.msra.mxu0 %v3183
    %5634 = vmatprep.subr.mxu0 %v3194
    %5635 = vmatpush1.msra.mxu0 %v3193
    %5636 = vmatprep.subr.mxu0 %v3204
    %5637 = vmatpush1.msra.mxu0 %v3203
    %5638 = vmatprep.subr.mxu0 %v3214
    %5639 = vmatpush1.msra.mxu0 %v3213
    %5640 = vmatprep.subr.mxu0 %v3224
    %5641 = vmatpush1.msra.mxu0 %v3223
    %5642 = vmatprep.subr.mxu0 %v3234
    %5643 = vmatpush1.msra.mxu0 %v3233
    %5644 = vmatprep.subr.mxu0 %v3244
    %5645 = vmatpush1.msra.mxu0 %v3243
    %5646 = vmatprep.subr.mxu0 %v3254
    %5647 = vmatpush1.msra.mxu0 %v3253
    %5648 = vmatprep.subr.mxu0 %v3264
    %5649 = vmatpush1.msra.mxu0 %v3263
    %5650 = vmatprep.subr.mxu0 %v3274
    %5651 = vmatpush1.msra.mxu0 %v3273
    %5652 = vmatprep.subr.mxu0 0.0
    %5653 = vmatpush1.msra.mxu0 0.0
    %5654 = vmatprep.subr.mxu0 0.0
    %5655 = vmatpush1.msra.mxu0 0.0
    %5656 = vmatprep.subr.mxu0 0.0
    %5657 = vmatpush1.msra.mxu0 0.0
    %5658 = vmatprep.subr.mxu0 0.0
    %5659 = vmatpush1.msra.mxu0 0.0
    %5660 = vmatprep.subr.mxu0 0.0
    %5661 = vmatpush1.msra.mxu0 0.0
    %5662 = vmatprep.subr.mxu0 0.0
    %5663 = vmatpush1.msra.mxu0 0.0
    %5664 = vmatprep.subr.mxu0 0.0
    %5665 = vmatpush1.msra.mxu0 0.0
    %5666 = vmatprep.subr.mxu0 0.0
    %5667 = vmatpush1.msra.mxu0 0.0
    %5668 = vmatprep.subr.mxu0 0.0
    %5669 = vmatpush1.msra.mxu0 0.0
    %5670 = vmatprep.subr.mxu0 0.0
    %5671 = vmatpush1.msra.mxu0 0.0
    %5672 = vmatprep.subr.mxu0 0.0
    %5673 = vmatpush1.msra.mxu0 0.0
    %5674 = vmatprep.subr.mxu0 0.0
    %5675 = vmatpush1.msra.mxu0 0.0
    %5676 = vmatprep.subr.mxu0 0.0
    %5677 = vmatpush1.msra.mxu0 0.0
    %5678 = vmatprep.subr.mxu0 0.0
    %5679 = vmatpush1.msra.mxu0 0.0
    %5680 = vmatprep.subr.mxu0 0.0
    %5681 = vmatpush1.msra.mxu0 0.0
    %5682 = vmatprep.subr.mxu0 0.0
    %5683 = vmatpush1.msra.mxu0 0.0
    %5684 = vmatprep.mubr.f32.mxu0 0.0
    %5685 = vmatmul.mubr.f32.gmra.mrb[0].mxu0 %v2529
    %v5686 = vpop.f32.mrb[0].mxu0
    %v5687 = vadd.f32 %v5616, %v5686
    %v5688 = vpop.f32.mrb[0].mxu0
    %v5689 = vadd.f32 %v5618, %v5688
    %5690 = vdwg.mxu0
    %5691 = vrot.lane.b32.xlu0 %v5119, 35
    %v5692 = vpop.permute.xlu0 %5691
    %5693 = vrot.lane.b32.xlu0 %v5121, 35
    %v5694 = vpop.permute.xlu0 %5693
    %5695 = vrot.lane.b32.xlu0 %v5261, 35
    %v5696 = vpop.permute.xlu0 %5695
    %5697 = vrot.lane.b32.xlu0 %v5263, 35
    %v5698 = vpop.permute.xlu0 %5697
    %5699 = vrot.lane.b32.xlu0 %v5403, 35
    %v5700 = vpop.permute.xlu0 %5699
    %5701 = vrot.lane.b32.xlu0 %v5405, 35
    %v5702 = vpop.permute.xlu0 %5701
    %5703 = vrot.lane.b32.xlu0 %v5545, 35
    %v5704 = vpop.permute.xlu0 %5703
    %5705 = vrot.lane.b32.xlu0 %v5547, 35
    %v5706 = vpop.permute.xlu0 %5705
    %5707 = vrot.lane.b32.xlu0 %v5687, 35
    %v5708 = vpop.permute.xlu0 %5707
    %5709 = vrot.lane.b32.xlu0 %v5689, 35
    %v5710 = vpop.permute.xlu0 %5709
    %v5711 = vsel %vm3315, %v5708, %v5710
    %v5712 = vsel %vm3315, %v5706, %v5708
    %v5713 = vsel %vm3315, %v5704, %v5706
    %v5714 = vsel %vm3315, %v5702, %v5704
    %v5715 = vsel %vm3315, %v5700, %v5702
    %v5716 = vsel %vm3315, %v5698, %v5700
    %v5717 = vsel %vm3315, %v5696, %v5698
    %v5718 = vsel %vm3315, %v5694, %v5696
    %v5719 = vsel %vm3315, %v5692, %v5694
    %v5720 = vsel %vm3315, %v5710, %v5692
    %5721 = vst [vmem:[#allocation4 + $0x50] sm:$0xff] %v5720
    %5722 = vst [vmem:[#allocation4 + $0x58] sm:$0xff] %v5719
    %5723 = vst [vmem:[#allocation4 + $0x60] sm:$0xff] %v5718
    %5724 = vst [vmem:[#allocation4 + $0x68] sm:$0xff] %v5717
    %5725 = vst [vmem:[#allocation4 + $0x70] sm:$0xff] %v5716
    %5726 = vst [vmem:[#allocation4 + $0x78] sm:$0xff] %v5715
    %5727 = vst [vmem:[#allocation4 + $0x80] sm:$0xff] %v5714
    %5728 = vst [vmem:[#allocation4 + $0x88] sm:$0xff] %v5713
    %5729 = vst [vmem:[#allocation4 + $0x90] sm:$0xff] %v5712
    %5730 = vst [vmem:[#allocation4 + $0x98] sm:$0xff] %v5711
    %5731 = vrot.lane.b32.xlu0 %v5119, 34
    %v5732 = vpop.permute.xlu0 %5731
    %5733 = vrot.lane.b32.xlu0 %v5121, 34
    %v5734 = vpop.permute.xlu0 %5733
    %5735 = vrot.lane.b32.xlu0 %v5261, 34
    %v5736 = vpop.permute.xlu0 %5735
    %5737 = vrot.lane.b32.xlu0 %v5263, 34
    %v5738 = vpop.permute.xlu0 %5737
    %5739 = vrot.lane.b32.xlu0 %v5403, 34
    %v5740 = vpop.permute.xlu0 %5739
    %5741 = vrot.lane.b32.xlu0 %v5405, 34
    %v5742 = vpop.permute.xlu0 %5741
    %5743 = vrot.lane.b32.xlu0 %v5545, 34
    %v5744 = vpop.permute.xlu0 %5743
    %5745 = vrot.lane.b32.xlu0 %v5547, 34
    %v5746 = vpop.permute.xlu0 %5745
    %5747 = vrot.lane.b32.xlu0 %v5687, 34
    %v5748 = vpop.permute.xlu0 %5747
    %5749 = vrot.lane.b32.xlu0 %v5689, 34
    %v5750 = vpop.permute.xlu0 %5749
    %v5751 = vsel %vm3396, %v5748, %v5750
    %v5752 = vsel %vm3396, %v5746, %v5748
    %v5753 = vsel %vm3396, %v5744, %v5746
    %v5754 = vsel %vm3396, %v5742, %v5744
    %v5755 = vsel %vm3396, %v5740, %v5742
    %v5756 = vsel %vm3396, %v5738, %v5740
    %v5757 = vsel %vm3396, %v5736, %v5738
    %v5758 = vsel %vm3396, %v5734, %v5736
    %v5759 = vsel %vm3396, %v5732, %v5734
    %v5760 = vsel %vm3396, %v5750, %v5732
    %5761 = vst [vmem:[#allocation4 + $0xf0] sm:$0xff] %v5760
    %5762 = vst [vmem:[#allocation4 + $0xf8] sm:$0xff] %v5759
    %5763 = vst [vmem:[#allocation4 + $0x100] sm:$0xff] %v5758
    %5764 = vst [vmem:[#allocation4 + $0x108] sm:$0xff] %v5757
    %5765 = vst [vmem:[#allocation4 + $0x110] sm:$0xff] %v5756
    %5766 = vst [vmem:[#allocation4 + $0x118] sm:$0xff] %v5755
    %5767 = vst [vmem:[#allocation4 + $0x120] sm:$0xff] %v5754
    %5768 = vst [vmem:[#allocation4 + $0x128] sm:$0xff] %v5753
    %5769 = vst [vmem:[#allocation4 + $0x130] sm:$0xff] %v5752
    %5770 = vst [vmem:[#allocation4 + $0x138] sm:$0xff] %v5751
    %5771 = vrot.lane.b32.xlu0 %v5119, 33
    %v5772 = vpop.permute.xlu0 %5771
    %5773 = vrot.lane.b32.xlu0 %v5121, 33
    %v5774 = vpop.permute.xlu0 %5773
    %5775 = vrot.lane.b32.xlu0 %v5261, 33
    %v5776 = vpop.permute.xlu0 %5775
    %5777 = vrot.lane.b32.xlu0 %v5263, 33
    %v5778 = vpop.permute.xlu0 %5777
    %5779 = vrot.lane.b32.xlu0 %v5403, 33
    %v5780 = vpop.permute.xlu0 %5779
    %5781 = vrot.lane.b32.xlu0 %v5405, 33
    %v5782 = vpop.permute.xlu0 %5781
    %5783 = vrot.lane.b32.xlu0 %v5545, 33
    %v5784 = vpop.permute.xlu0 %5783
    %5785 = vrot.lane.b32.xlu0 %v5547, 33
    %v5786 = vpop.permute.xlu0 %5785
    %5787 = vrot.lane.b32.xlu0 %v5687, 33
    %v5788 = vpop.permute.xlu0 %5787
    %5789 = vrot.lane.b32.xlu0 %v5689, 33
    %v5790 = vpop.permute.xlu0 %5789
    %v5791 = vsel %vm3477, %v5788, %v5790
    %v5792 = vsel %vm3477, %v5786, %v5788
    %v5793 = vsel %vm3477, %v5784, %v5786
    %v5794 = vsel %vm3477, %v5782, %v5784
    %v5795 = vsel %vm3477, %v5780, %v5782
    %v5796 = vsel %vm3477, %v5778, %v5780
    %v5797 = vsel %vm3477, %v5776, %v5778
    %v5798 = vsel %vm3477, %v5774, %v5776
    %v5799 = vsel %vm3477, %v5772, %v5774
    %v5800 = vsel %vm3477, %v5790, %v5772
    %5801 = vst [vmem:[#allocation4 + $0x190] sm:$0xff] %v5800
    %5802 = vst [vmem:[#allocation4 + $0x198] sm:$0xff] %v5799
    %5803 = vst [vmem:[#allocation4 + $0x1a0] sm:$0xff] %v5798
    %5804 = vst [vmem:[#allocation4 + $0x1a8] sm:$0xff] %v5797
    %5805 = vst [vmem:[#allocation4 + $0x1b0] sm:$0xff] %v5796
    %5806 = vst [vmem:[#allocation4 + $0x1b8] sm:$0xff] %v5795
    %5807 = vst [vmem:[#allocation4 + $0x1c0] sm:$0xff] %v5794
    %5808 = vst [vmem:[#allocation4 + $0x1c8] sm:$0xff] %v5793
    %5809 = vst [vmem:[#allocation4 + $0x1d0] sm:$0xff] %v5792
    %5810 = vst [vmem:[#allocation4 + $0x1d8] sm:$0xff] %v5791
    %5811 = vrot.lane.b32.xlu0 %v5119, 1
    %v5812 = vpop.permute.xlu0 %5811
    %5813 = vrot.lane.b32.xlu0 %v5121, 1
    %v5814 = vpop.permute.xlu0 %5813
    %5815 = vrot.lane.b32.xlu0 %v5261, 1
    %v5816 = vpop.permute.xlu0 %5815
    %5817 = vrot.lane.b32.xlu0 %v5263, 1
    %v5818 = vpop.permute.xlu0 %5817
    %5819 = vrot.lane.b32.xlu0 %v5403, 1
    %v5820 = vpop.permute.xlu0 %5819
    %5821 = vrot.lane.b32.xlu0 %v5405, 1
    %v5822 = vpop.permute.xlu0 %5821
    %5823 = vrot.lane.b32.xlu0 %v5545, 1
    %v5824 = vpop.permute.xlu0 %5823
    %5825 = vrot.lane.b32.xlu0 %v5547, 1
    %v5826 = vpop.permute.xlu0 %5825
    %5827 = vrot.lane.b32.xlu0 %v5687, 1
    %v5828 = vpop.permute.xlu0 %5827
    %5829 = vrot.lane.b32.xlu0 %v5689, 1
    %v5830 = vpop.permute.xlu0 %5829
    %v5831 = vsel %vm294, %v5828, %v5830
    %v5832 = vsel %vm294, %v5826, %v5828
    %v5833 = vsel %vm294, %v5824, %v5826
    %v5834 = vsel %vm294, %v5822, %v5824
    %v5835 = vsel %vm294, %v5820, %v5822
    %v5836 = vsel %vm294, %v5818, %v5820
    %v5837 = vsel %vm294, %v5816, %v5818
    %v5838 = vsel %vm294, %v5814, %v5816
    %v5839 = vsel %vm294, %v5812, %v5814
    %v5840 = vsel %vm294, %v5830, %v5812
    %5841 = vst [vmem:[#allocation4 + $0x230] sm:$0xff] %v5840
    %5842 = vst [vmem:[#allocation4 + $0x238] sm:$0xff] %v5839
    %5843 = vst [vmem:[#allocation4 + $0x240] sm:$0xff] %v5838
    %5844 = vst [vmem:[#allocation4 + $0x248] sm:$0xff] %v5837
    %5845 = vst [vmem:[#allocation4 + $0x250] sm:$0xff] %v5836
    %5846 = vst [vmem:[#allocation4 + $0x258] sm:$0xff] %v5835
    %5847 = vst [vmem:[#allocation4 + $0x260] sm:$0xff] %v5834
    %5848 = vst [vmem:[#allocation4 + $0x268] sm:$0xff] %v5833
    %5849 = vst [vmem:[#allocation4 + $0x270] sm:$0xff] %v5832
    %5850 = vst [vmem:[#allocation4 + $0x278] sm:$0xff] %v5831
    %5851 = vst [vmem:[#allocation4 + $0x2d0] sm:$0xff] %v5119
    %5852 = vst [vmem:[#allocation4 + $0x2d8] sm:$0xff] %v5121
    %5853 = vst [vmem:[#allocation4 + $0x2e0] sm:$0xff] %v5261
    %5854 = vst [vmem:[#allocation4 + $0x2e8] sm:$0xff] %v5263
    %5855 = vst [vmem:[#allocation4 + $0x2f0] sm:$0xff] %v5403
    %5856 = vst [vmem:[#allocation4 + $0x2f8] sm:$0xff] %v5405
    %5857 = vst [vmem:[#allocation4 + $0x300] sm:$0xff] %v5545
    %5858 = vst [vmem:[#allocation4 + $0x308] sm:$0xff] %v5547
    %5859 = vst [vmem:[#allocation4 + $0x310] sm:$0xff] %v5687
    %5860 = vst [vmem:[#allocation4 + $0x318] sm:$0xff] %v5689
    %5861 = vrot.lane.b32.xlu0 %v5119, 127
    %v5862 = vpop.permute.xlu0 %5861
    %5863 = vrot.lane.b32.xlu0 %v5121, 127
    %v5864 = vpop.permute.xlu0 %5863
    %5865 = vrot.lane.b32.xlu0 %v5261, 127
    %v5866 = vpop.permute.xlu0 %5865
    %5867 = vrot.lane.b32.xlu0 %v5263, 127
    %v5868 = vpop.permute.xlu0 %5867
    %5869 = vrot.lane.b32.xlu0 %v5403, 127
    %v5870 = vpop.permute.xlu0 %5869
    %5871 = vrot.lane.b32.xlu0 %v5405, 127
    %v5872 = vpop.permute.xlu0 %5871
    %5873 = vrot.lane.b32.xlu0 %v5545, 127
    %v5874 = vpop.permute.xlu0 %5873
    %5875 = vrot.lane.b32.xlu0 %v5547, 127
    %v5876 = vpop.permute.xlu0 %5875
    %5877 = vrot.lane.b32.xlu0 %v5687, 127
    %v5878 = vpop.permute.xlu0 %5877
    %5879 = vrot.lane.b32.xlu0 %v5689, 127
    %v5880 = vpop.permute.xlu0 %5879
    %v5881 = vsel %vm315, %v5878, %v5880
    %v5882 = vsel %vm315, %v5876, %v5878
    %v5883 = vsel %vm315, %v5874, %v5876
    %v5884 = vsel %vm315, %v5872, %v5874
    %v5885 = vsel %vm315, %v5870, %v5872
    %v5886 = vsel %vm315, %v5868, %v5870
    %v5887 = vsel %vm315, %v5866, %v5868
    %v5888 = vsel %vm315, %v5864, %v5866
    %v5889 = vsel %vm315, %v5862, %v5864
    %v5890 = vsel %vm315, %v5880, %v5862
    %5891 = vst [vmem:[#allocation4 + $0x370] sm:$0xff] %v5889
    %5892 = vst [vmem:[#allocation4 + $0x378] sm:$0xff] %v5888
    %5893 = vst [vmem:[#allocation4 + $0x380] sm:$0xff] %v5887
    %5894 = vst [vmem:[#allocation4 + $0x388] sm:$0xff] %v5886
    %5895 = vst [vmem:[#allocation4 + $0x390] sm:$0xff] %v5885
    %5896 = vst [vmem:[#allocation4 + $0x398] sm:$0xff] %v5884
    %5897 = vst [vmem:[#allocation4 + $0x3a0] sm:$0xff] %v5883
    %5898 = vst [vmem:[#allocation4 + $0x3a8] sm:$0xff] %v5882
    %5899 = vst [vmem:[#allocation4 + $0x3b0] sm:$0xff] %v5881
    %5900 = vst [vmem:[#allocation4 + $0x3b8] sm:$0xff] %v5890
    %5901 = vrot.lane.b32.xlu0 %v5119, 95
    %v5902 = vpop.permute.xlu0 %5901
    %5903 = vrot.lane.b32.xlu0 %v5121, 95
    %v5904 = vpop.permute.xlu0 %5903
    %5905 = vrot.lane.b32.xlu0 %v5261, 95
    %v5906 = vpop.permute.xlu0 %5905
    %5907 = vrot.lane.b32.xlu0 %v5263, 95
    %v5908 = vpop.permute.xlu0 %5907
    %5909 = vrot.lane.b32.xlu0 %v5403, 95
    %v5910 = vpop.permute.xlu0 %5909
    %5911 = vrot.lane.b32.xlu0 %v5405, 95
    %v5912 = vpop.permute.xlu0 %5911
    %5913 = vrot.lane.b32.xlu0 %v5545, 95
    %v5914 = vpop.permute.xlu0 %5913
    %5915 = vrot.lane.b32.xlu0 %v5547, 95
    %v5916 = vpop.permute.xlu0 %5915
    %5917 = vrot.lane.b32.xlu0 %v5687, 95
    %v5918 = vpop.permute.xlu0 %5917
    %5919 = vrot.lane.b32.xlu0 %v5689, 95
    %v5920 = vpop.permute.xlu0 %5919
    %v5921 = vsel %vm3738, %v5918, %v5920
    %v5922 = vsel %vm3738, %v5916, %v5918
    %v5923 = vsel %vm3738, %v5914, %v5916
    %v5924 = vsel %vm3738, %v5912, %v5914
    %v5925 = vsel %vm3738, %v5910, %v5912
    %v5926 = vsel %vm3738, %v5908, %v5910
    %v5927 = vsel %vm3738, %v5906, %v5908
    %v5928 = vsel %vm3738, %v5904, %v5906
    %v5929 = vsel %vm3738, %v5902, %v5904
    %v5930 = vsel %vm3738, %v5920, %v5902
    %5931 = vst [vmem:[#allocation4 + $0x410] sm:$0xff] %v5929
    %5932 = vst [vmem:[#allocation4 + $0x418] sm:$0xff] %v5928
    %5933 = vst [vmem:[#allocation4 + $0x420] sm:$0xff] %v5927
    %5934 = vst [vmem:[#allocation4 + $0x428] sm:$0xff] %v5926
    %5935 = vst [vmem:[#allocation4 + $0x430] sm:$0xff] %v5925
    %5936 = vst [vmem:[#allocation4 + $0x438] sm:$0xff] %v5924
    %5937 = vst [vmem:[#allocation4 + $0x440] sm:$0xff] %v5923
    %5938 = vst [vmem:[#allocation4 + $0x448] sm:$0xff] %v5922
    %5939 = vst [vmem:[#allocation4 + $0x450] sm:$0xff] %v5921
    %5940 = vst [vmem:[#allocation4 + $0x458] sm:$0xff] %v5930
    %5941 = vrot.lane.b32.xlu0 %v5119, 94
    %v5942 = vpop.permute.xlu0 %5941
    %5943 = vrot.lane.b32.xlu0 %v5121, 94
    %v5944 = vpop.permute.xlu0 %5943
    %5945 = vrot.lane.b32.xlu0 %v5261, 94
    %v5946 = vpop.permute.xlu0 %5945
    %5947 = vrot.lane.b32.xlu0 %v5263, 94
    %v5948 = vpop.permute.xlu0 %5947
    %5949 = vrot.lane.b32.xlu0 %v5403, 94
    %v5950 = vpop.permute.xlu0 %5949
    %5951 = vrot.lane.b32.xlu0 %v5405, 94
    %v5952 = vpop.permute.xlu0 %5951
    %5953 = vrot.lane.b32.xlu0 %v5545, 94
    %v5954 = vpop.permute.xlu0 %5953
    %5955 = vrot.lane.b32.xlu0 %v5547, 94
    %v5956 = vpop.permute.xlu0 %5955
    %5957 = vrot.lane.b32.xlu0 %v5687, 94
    %v5958 = vpop.permute.xlu0 %5957
    %5959 = vrot.lane.b32.xlu0 %v5689, 94
    %v5960 = vpop.permute.xlu0 %5959
    %v5961 = vsel %vm3819, %v5958, %v5960
    %v5962 = vsel %vm3819, %v5956, %v5958
    %v5963 = vsel %vm3819, %v5954, %v5956
    %v5964 = vsel %vm3819, %v5952, %v5954
    %v5965 = vsel %vm3819, %v5950, %v5952
    %v5966 = vsel %vm3819, %v5948, %v5950
    %v5967 = vsel %vm3819, %v5946, %v5948
    %v5968 = vsel %vm3819, %v5944, %v5946
    %v5969 = vsel %vm3819, %v5942, %v5944
    %v5970 = vsel %vm3819, %v5960, %v5942
    %5971 = vst [vmem:[#allocation4 + $0x4b0] sm:$0xff] %v5969
    %5972 = vst [vmem:[#allocation4 + $0x4b8] sm:$0xff] %v5968
    %5973 = vst [vmem:[#allocation4 + $0x4c0] sm:$0xff] %v5967
    %5974 = vst [vmem:[#allocation4 + $0x4c8] sm:$0xff] %v5966
    %5975 = vst [vmem:[#allocation4 + $0x4d0] sm:$0xff] %v5965
    %5976 = vst [vmem:[#allocation4 + $0x4d8] sm:$0xff] %v5964
    %5977 = vst [vmem:[#allocation4 + $0x4e0] sm:$0xff] %v5963
    %5978 = vst [vmem:[#allocation4 + $0x4e8] sm:$0xff] %v5962
    %5979 = vst [vmem:[#allocation4 + $0x4f0] sm:$0xff] %v5961
    %5980 = vst [vmem:[#allocation4 + $0x4f8] sm:$0xff] %v5970
    %5981 = vrot.lane.b32.xlu0 %v5119, 93
    %v5982 = vpop.permute.xlu0 %5981
    %5983 = vrot.lane.b32.xlu0 %v5121, 93
    %v5984 = vpop.permute.xlu0 %5983
    %5985 = vrot.lane.b32.xlu0 %v5261, 93
    %v5986 = vpop.permute.xlu0 %5985
    %5987 = vrot.lane.b32.xlu0 %v5263, 93
    %v5988 = vpop.permute.xlu0 %5987
    %5989 = vrot.lane.b32.xlu0 %v5403, 93
    %v5990 = vpop.permute.xlu0 %5989
    %5991 = vrot.lane.b32.xlu0 %v5405, 93
    %v5992 = vpop.permute.xlu0 %5991
    %5993 = vrot.lane.b32.xlu0 %v5545, 93
    %v5994 = vpop.permute.xlu0 %5993
    %5995 = vrot.lane.b32.xlu0 %v5547, 93
    %v5996 = vpop.permute.xlu0 %5995
    %5997 = vrot.lane.b32.xlu0 %v5687, 93
    %v5998 = vpop.permute.xlu0 %5997
    %5999 = vrot.lane.b32.xlu0 %v5689, 93
    %v6000 = vpop.permute.xlu0 %5999
    %v6001 = vsel %vm3900, %v5998, %v6000
    %v6002 = vsel %vm3900, %v5996, %v5998
    %v6003 = vsel %vm3900, %v5994, %v5996
    %v6004 = vsel %vm3900, %v5992, %v5994
    %v6005 = vsel %vm3900, %v5990, %v5992
    %v6006 = vsel %vm3900, %v5988, %v5990
    %v6007 = vsel %vm3900, %v5986, %v5988
    %v6008 = vsel %vm3900, %v5984, %v5986
    %v6009 = vsel %vm3900, %v5982, %v5984
    %v6010 = vsel %vm3900, %v6000, %v5982
    %6011 = vst [vmem:[#allocation4 + $0x550] sm:$0xff] %v6009
    %6012 = vst [vmem:[#allocation4 + $0x558] sm:$0xff] %v6008
    %6013 = vst [vmem:[#allocation4 + $0x560] sm:$0xff] %v6007
    %6014 = vst [vmem:[#allocation4 + $0x568] sm:$0xff] %v6006
    %6015 = vst [vmem:[#allocation4 + $0x570] sm:$0xff] %v6005
    %6016 = vst [vmem:[#allocation4 + $0x578] sm:$0xff] %v6004
    %6017 = vst [vmem:[#allocation4 + $0x580] sm:$0xff] %v6003
    %6018 = vst [vmem:[#allocation4 + $0x588] sm:$0xff] %v6002
    %6019 = vst [vmem:[#allocation4 + $0x590] sm:$0xff] %v6001
    %6020 = vst [vmem:[#allocation4 + $0x598] sm:$0xff] %v6010
    %v6021 = vunpack.c.l.bf16 %v2794
    %v6022 = vunpack.c.h.bf16 %v2794
    %v6023 = vld [vmem:[#allocation4] sm:$0xff]
    %v6024 = vld [vmem:[#allocation4 + $0x8] sm:$0xff]
    %v6025 = vld [vmem:[#allocation4 + $0x10] sm:$0xff]
    %v6026 = vld [vmem:[#allocation4 + $0x18] sm:$0xff]
    %v6027 = vld [vmem:[#allocation4 + $0x20] sm:$0xff]
    %v6028 = vld [vmem:[#allocation4 + $0x28] sm:$0xff]
    %v6029 = vld [vmem:[#allocation4 + $0x30] sm:$0xff]
    %v6030 = vld [vmem:[#allocation4 + $0x38] sm:$0xff]
    %v6031 = vld [vmem:[#allocation4 + $0x40] sm:$0xff]
    %v6032 = vld [vmem:[#allocation4 + $0x48] sm:$0xff]
    %v6033 = vld [vmem:[#allocation4 + $0x50] sm:$0xff]
    %v6034 = vld [vmem:[#allocation4 + $0x58] sm:$0xff]
    %v6035 = vld [vmem:[#allocation4 + $0x60] sm:$0xff]
    %v6036 = vld [vmem:[#allocation4 + $0x68] sm:$0xff]
    %v6037 = vld [vmem:[#allocation4 + $0x70] sm:$0xff]
    %v6038 = vld [vmem:[#allocation4 + $0x78] sm:$0xff]
    %v6039 = vld [vmem:[#allocation4 + $0x80] sm:$0xff]
    %v6040 = vld [vmem:[#allocation4 + $0x88] sm:$0xff]
    %v6041 = vld [vmem:[#allocation4 + $0x90] sm:$0xff]
    %v6042 = vld [vmem:[#allocation4 + $0x98] sm:$0xff]
    %v6043 = vld [vmem:[#allocation4 + $0xa0] sm:$0xff]
    %v6044 = vld [vmem:[#allocation4 + $0xa8] sm:$0xff]
    %v6045 = vld [vmem:[#allocation4 + $0xb0] sm:$0xff]
    %v6046 = vld [vmem:[#allocation4 + $0xb8] sm:$0xff]
    %v6047 = vld [vmem:[#allocation4 + $0xc0] sm:$0xff]
    %v6048 = vld [vmem:[#allocation4 + $0xc8] sm:$0xff]
    %v6049 = vld [vmem:[#allocation4 + $0xd0] sm:$0xff]
    %v6050 = vld [vmem:[#allocation4 + $0xd8] sm:$0xff]
    %v6051 = vld [vmem:[#allocation4 + $0xe0] sm:$0xff]
    %v6052 = vld [vmem:[#allocation4 + $0xe8] sm:$0xff]
    %v6053 = vld [vmem:[#allocation4 + $0xf0] sm:$0xff]
    %v6054 = vld [vmem:[#allocation4 + $0xf8] sm:$0xff]
    %v6055 = vld [vmem:[#allocation4 + $0x100] sm:$0xff]
    %v6056 = vld [vmem:[#allocation4 + $0x108] sm:$0xff]
    %v6057 = vld [vmem:[#allocation4 + $0x110] sm:$0xff]
    %v6058 = vld [vmem:[#allocation4 + $0x118] sm:$0xff]
    %v6059 = vld [vmem:[#allocation4 + $0x120] sm:$0xff]
    %v6060 = vld [vmem:[#allocation4 + $0x128] sm:$0xff]
    %v6061 = vld [vmem:[#allocation4 + $0x130] sm:$0xff]
    %v6062 = vld [vmem:[#allocation4 + $0x138] sm:$0xff]
    %v6063 = vld [vmem:[#allocation4 + $0x140] sm:$0xff]
    %v6064 = vld [vmem:[#allocation4 + $0x148] sm:$0xff]
    %v6065 = vld [vmem:[#allocation4 + $0x150] sm:$0xff]
    %v6066 = vld [vmem:[#allocation4 + $0x158] sm:$0xff]
    %v6067 = vld [vmem:[#allocation4 + $0x160] sm:$0xff]
    %v6068 = vld [vmem:[#allocation4 + $0x168] sm:$0xff]
    %v6069 = vld [vmem:[#allocation4 + $0x170] sm:$0xff]
    %v6070 = vld [vmem:[#allocation4 + $0x178] sm:$0xff]
    %v6071 = vld [vmem:[#allocation4 + $0x180] sm:$0xff]
    %v6072 = vld [vmem:[#allocation4 + $0x188] sm:$0xff]
    %v6073 = vld [vmem:[#allocation4 + $0x190] sm:$0xff]
    %v6074 = vld [vmem:[#allocation4 + $0x198] sm:$0xff]
    %v6075 = vld [vmem:[#allocation4 + $0x1a0] sm:$0xff]
    %v6076 = vld [vmem:[#allocation4 + $0x1a8] sm:$0xff]
    %v6077 = vld [vmem:[#allocation4 + $0x1b0] sm:$0xff]
    %v6078 = vld [vmem:[#allocation4 + $0x1b8] sm:$0xff]
    %v6079 = vld [vmem:[#allocation4 + $0x1c0] sm:$0xff]
    %v6080 = vld [vmem:[#allocation4 + $0x1c8] sm:$0xff]
    %v6081 = vld [vmem:[#allocation4 + $0x1d0] sm:$0xff]
    %v6082 = vld [vmem:[#allocation4 + $0x1d8] sm:$0xff]
    %v6083 = vld [vmem:[#allocation4 + $0x1e0] sm:$0xff]
    %v6084 = vld [vmem:[#allocation4 + $0x1e8] sm:$0xff]
    %v6085 = vld [vmem:[#allocation4 + $0x1f0] sm:$0xff]
    %v6086 = vld [vmem:[#allocation4 + $0x1f8] sm:$0xff]
    %v6087 = vld [vmem:[#allocation4 + $0x200] sm:$0xff]
    %v6088 = vld [vmem:[#allocation4 + $0x208] sm:$0xff]
    %v6089 = vld [vmem:[#allocation4 + $0x210] sm:$0xff]
    %v6090 = vld [vmem:[#allocation4 + $0x218] sm:$0xff]
    %v6091 = vld [vmem:[#allocation4 + $0x220] sm:$0xff]
    %v6092 = vld [vmem:[#allocation4 + $0x228] sm:$0xff]
    %v6093 = vld [vmem:[#allocation4 + $0x230] sm:$0xff]
    %v6094 = vld [vmem:[#allocation4 + $0x238] sm:$0xff]
    %v6095 = vld [vmem:[#allocation4 + $0x240] sm:$0xff]
    %v6096 = vld [vmem:[#allocation4 + $0x248] sm:$0xff]
    %v6097 = vld [vmem:[#allocation4 + $0x250] sm:$0xff]
    %v6098 = vld [vmem:[#allocation4 + $0x258] sm:$0xff]
    %v6099 = vld [vmem:[#allocation4 + $0x260] sm:$0xff]
    %v6100 = vld [vmem:[#allocation4 + $0x268] sm:$0xff]
    %v6101 = vld [vmem:[#allocation4 + $0x270] sm:$0xff]
    %v6102 = vld [vmem:[#allocation4 + $0x278] sm:$0xff]
    %v6103 = vld [vmem:[#allocation4 + $0x280] sm:$0xff]
    %v6104 = vld [vmem:[#allocation4 + $0x288] sm:$0xff]
    %v6105 = vld [vmem:[#allocation4 + $0x290] sm:$0xff]
    %v6106 = vld [vmem:[#allocation4 + $0x298] sm:$0xff]
    %v6107 = vld [vmem:[#allocation4 + $0x2a0] sm:$0xff]
    %v6108 = vld [vmem:[#allocation4 + $0x2a8] sm:$0xff]
    %v6109 = vld [vmem:[#allocation4 + $0x2b0] sm:$0xff]
    %v6110 = vld [vmem:[#allocation4 + $0x2b8] sm:$0xff]
    %v6111 = vld [vmem:[#allocation4 + $0x2c0] sm:$0xff]
    %v6112 = vld [vmem:[#allocation4 + $0x2c8] sm:$0xff]
    %v6113 = vld [vmem:[#allocation4 + $0x2d0] sm:$0xff]
    %v6114 = vld [vmem:[#allocation4 + $0x2d8] sm:$0xff]
    %v6115 = vld [vmem:[#allocation4 + $0x2e0] sm:$0xff]
    %v6116 = vld [vmem:[#allocation4 + $0x2e8] sm:$0xff]
    %v6117 = vld [vmem:[#allocation4 + $0x2f0] sm:$0xff]
    %v6118 = vld [vmem:[#allocation4 + $0x2f8] sm:$0xff]
    %v6119 = vld [vmem:[#allocation4 + $0x300] sm:$0xff]
    %v6120 = vld [vmem:[#allocation4 + $0x308] sm:$0xff]
    %v6121 = vld [vmem:[#allocation4 + $0x310] sm:$0xff]
    %v6122 = vld [vmem:[#allocation4 + $0x318] sm:$0xff]
    %v6123 = vld [vmem:[#allocation4 + $0x320] sm:$0xff]
    %v6124 = vld [vmem:[#allocation4 + $0x328] sm:$0xff]
    %v6125 = vld [vmem:[#allocation4 + $0x330] sm:$0xff]
    %v6126 = vld [vmem:[#allocation4 + $0x338] sm:$0xff]
    %v6127 = vld [vmem:[#allocation4 + $0x340] sm:$0xff]
    %v6128 = vld [vmem:[#allocation4 + $0x348] sm:$0xff]
    %v6129 = vld [vmem:[#allocation4 + $0x350] sm:$0xff]
    %v6130 = vld [vmem:[#allocation4 + $0x358] sm:$0xff]
    %v6131 = vld [vmem:[#allocation4 + $0x360] sm:$0xff]
    %v6132 = vld [vmem:[#allocation4 + $0x368] sm:$0xff]
    %v6133 = vld [vmem:[#allocation4 + $0x370] sm:$0xff]
    %v6134 = vld [vmem:[#allocation4 + $0x378] sm:$0xff]
    %v6135 = vld [vmem:[#allocation4 + $0x380] sm:$0xff]
    %v6136 = vld [vmem:[#allocation4 + $0x388] sm:$0xff]
    %v6137 = vld [vmem:[#allocation4 + $0x390] sm:$0xff]
    %v6138 = vld [vmem:[#allocation4 + $0x398] sm:$0xff]
    %v6139 = vld [vmem:[#allocation4 + $0x3a0] sm:$0xff]
    %v6140 = vld [vmem:[#allocation4 + $0x3a8] sm:$0xff]
    %v6141 = vld [vmem:[#allocation4 + $0x3b0] sm:$0xff]
    %v6142 = vld [vmem:[#allocation4 + $0x3b8] sm:$0xff]
    %v6143 = vld [vmem:[#allocation4 + $0x3c0] sm:$0xff]
    %v6144 = vld [vmem:[#allocation4 + $0x3c8] sm:$0xff]
    %v6145 = vld [vmem:[#allocation4 + $0x3d0] sm:$0xff]
    %v6146 = vld [vmem:[#allocation4 + $0x3d8] sm:$0xff]
    %v6147 = vld [vmem:[#allocation4 + $0x3e0] sm:$0xff]
    %v6148 = vld [vmem:[#allocation4 + $0x3e8] sm:$0xff]
    %v6149 = vld [vmem:[#allocation4 + $0x3f0] sm:$0xff]
    %v6150 = vld [vmem:[#allocation4 + $0x3f8] sm:$0xff]
    %v6151 = vld [vmem:[#allocation4 + $0x400] sm:$0xff]
    %v6152 = vld [vmem:[#allocation4 + $0x408] sm:$0xff]
    %v6153 = vld [vmem:[#allocation4 + $0x410] sm:$0xff]
    %v6154 = vld [vmem:[#allocation4 + $0x418] sm:$0xff]
    %v6155 = vld [vmem:[#allocation4 + $0x420] sm:$0xff]
    %v6156 = vld [vmem:[#allocation4 + $0x428] sm:$0xff]
    %v6157 = vld [vmem:[#allocation4 + $0x430] sm:$0xff]
    %v6158 = vld [vmem:[#allocation4 + $0x438] sm:$0xff]
    %v6159 = vld [vmem:[#allocation4 + $0x440] sm:$0xff]
    %v6160 = vld [vmem:[#allocation4 + $0x448] sm:$0xff]
    %v6161 = vld [vmem:[#allocation4 + $0x450] sm:$0xff]
    %v6162 = vld [vmem:[#allocation4 + $0x458] sm:$0xff]
    %v6163 = vld [vmem:[#allocation4 + $0x460] sm:$0xff]
    %v6164 = vld [vmem:[#allocation4 + $0x468] sm:$0xff]
    %v6165 = vld [vmem:[#allocation4 + $0x470] sm:$0xff]
    %v6166 = vld [vmem:[#allocation4 + $0x478] sm:$0xff]
    %v6167 = vld [vmem:[#allocation4 + $0x480] sm:$0xff]
    %v6168 = vld [vmem:[#allocation4 + $0x488] sm:$0xff]
    %v6169 = vld [vmem:[#allocation4 + $0x490] sm:$0xff]
    %v6170 = vld [vmem:[#allocation4 + $0x498] sm:$0xff]
    %v6171 = vld [vmem:[#allocation4 + $0x4a0] sm:$0xff]
    %v6172 = vld [vmem:[#allocation4 + $0x4a8] sm:$0xff]
    %v6173 = vld [vmem:[#allocation4 + $0x4b0] sm:$0xff]
    %v6174 = vld [vmem:[#allocation4 + $0x4b8] sm:$0xff]
    %v6175 = vld [vmem:[#allocation4 + $0x4c0] sm:$0xff]
    %v6176 = vld [vmem:[#allocation4 + $0x4c8] sm:$0xff]
    %v6177 = vld [vmem:[#allocation4 + $0x4d0] sm:$0xff]
    %v6178 = vld [vmem:[#allocation4 + $0x4d8] sm:$0xff]
    %v6179 = vld [vmem:[#allocation4 + $0x4e0] sm:$0xff]
    %v6180 = vld [vmem:[#allocation4 + $0x4e8] sm:$0xff]
    %v6181 = vld [vmem:[#allocation4 + $0x4f0] sm:$0xff]
    %v6182 = vld [vmem:[#allocation4 + $0x4f8] sm:$0xff]
    %v6183 = vld [vmem:[#allocation4 + $0x500] sm:$0xff]
    %v6184 = vld [vmem:[#allocation4 + $0x508] sm:$0xff]
    %v6185 = vld [vmem:[#allocation4 + $0x510] sm:$0xff]
    %v6186 = vld [vmem:[#allocation4 + $0x518] sm:$0xff]
    %v6187 = vld [vmem:[#allocation4 + $0x520] sm:$0xff]
    %v6188 = vld [vmem:[#allocation4 + $0x528] sm:$0xff]
    %v6189 = vld [vmem:[#allocation4 + $0x530] sm:$0xff]
    %v6190 = vld [vmem:[#allocation4 + $0x538] sm:$0xff]
    %v6191 = vld [vmem:[#allocation4 + $0x540] sm:$0xff]
    %v6192 = vld [vmem:[#allocation4 + $0x548] sm:$0xff]
    %v6193 = vld [vmem:[#allocation4 + $0x550] sm:$0xff]
    %v6194 = vld [vmem:[#allocation4 + $0x558] sm:$0xff]
    %v6195 = vld [vmem:[#allocation4 + $0x560] sm:$0xff]
    %v6196 = vld [vmem:[#allocation4 + $0x568] sm:$0xff]
    %v6197 = vld [vmem:[#allocation4 + $0x570] sm:$0xff]
    %v6198 = vld [vmem:[#allocation4 + $0x578] sm:$0xff]
    %v6199 = vld [vmem:[#allocation4 + $0x580] sm:$0xff]
    %v6200 = vld [vmem:[#allocation4 + $0x588] sm:$0xff]
    %v6201 = vld [vmem:[#allocation4 + $0x590] sm:$0xff]
    %v6202 = vld [vmem:[#allocation4 + $0x598] sm:$0xff]
    %v6203 = vld [vmem:[#allocation4 + $0x5a0] sm:$0xff]
    %v6204 = vld [vmem:[#allocation4 + $0x5a8] sm:$0xff]
    %v6205 = vld [vmem:[#allocation4 + $0x5b0] sm:$0xff]
    %v6206 = vld [vmem:[#allocation4 + $0x5b8] sm:$0xff]
    %v6207 = vld [vmem:[#allocation4 + $0x5c0] sm:$0xff]
    %v6208 = vld [vmem:[#allocation4 + $0x5c8] sm:$0xff]
    %v6209 = vld [vmem:[#allocation4 + $0x5d0] sm:$0xff]
    %v6210 = vld [vmem:[#allocation4 + $0x5d8] sm:$0xff]
    %v6211 = vld [vmem:[#allocation4 + $0x5e0] sm:$0xff]
    %v6212 = vld [vmem:[#allocation4 + $0x5e8] sm:$0xff]
    %v6213 = vld [vmem:[#allocation4 + $0x5f0] sm:$0xff]
    %v6214 = vld [vmem:[#allocation4 + $0x5f8] sm:$0xff]
    %v6215 = vld [vmem:[#allocation4 + $0x600] sm:$0xff]
    %v6216 = vld [vmem:[#allocation4 + $0x608] sm:$0xff]
    %v6217 = vld [vmem:[#allocation4 + $0x610] sm:$0xff]
    %v6218 = vld [vmem:[#allocation4 + $0x618] sm:$0xff]
    %v6219 = vld [vmem:[#allocation4 + $0x620] sm:$0xff]
    %v6220 = vld [vmem:[#allocation4 + $0x628] sm:$0xff]
    %v6221 = vld [vmem:[#allocation4 + $0x630] sm:$0xff]
    %v6222 = vld [vmem:[#allocation4 + $0x638] sm:$0xff]
    %v6223 = vld [vmem:[#allocation4 + $0x640] sm:$0xff]
    %v6224 = vld [vmem:[#allocation4 + $0x648] sm:$0xff]
    %v6225 = vld [vmem:[#allocation4 + $0x650] sm:$0xff]
    %v6226 = vld [vmem:[#allocation4 + $0x658] sm:$0xff]
    %v6227 = vld [vmem:[#allocation4 + $0x660] sm:$0xff]
    %v6228 = vld [vmem:[#allocation4 + $0x668] sm:$0xff]
    %v6229 = vld [vmem:[#allocation4 + $0x670] sm:$0xff]
    %v6230 = vld [vmem:[#allocation4 + $0x678] sm:$0xff]
    %v6231 = vld [vmem:[#allocation4 + $0x680] sm:$0xff]
    %v6232 = vld [vmem:[#allocation4 + $0x688] sm:$0xff]
    %v6233 = vld [vmem:[#allocation4 + $0x690] sm:$0xff]
    %v6234 = vld [vmem:[#allocation4 + $0x698] sm:$0xff]
    %v6235 = vld [vmem:[#allocation4 + $0x6a0] sm:$0xff]
    %v6236 = vld [vmem:[#allocation4 + $0x6a8] sm:$0xff]
    %v6237 = vld [vmem:[#allocation4 + $0x6b0] sm:$0xff]
    %v6238 = vld [vmem:[#allocation4 + $0x6b8] sm:$0xff]
    %v6239 = vld [vmem:[#allocation4 + $0x6c0] sm:$0xff]
    %v6240 = vld [vmem:[#allocation4 + $0x6c8] sm:$0xff]
    %v6241 = vld [vmem:[#allocation4 + $0x6d0] sm:$0xff]
    %v6242 = vld [vmem:[#allocation4 + $0x6d8] sm:$0xff]
    %v6243 = vld [vmem:[#allocation4 + $0x6e0] sm:$0xff]
    %v6244 = vld [vmem:[#allocation4 + $0x6e8] sm:$0xff]
    %v6245 = vld [vmem:[#allocation4 + $0x6f0] sm:$0xff]
    %v6246 = vld [vmem:[#allocation4 + $0x6f8] sm:$0xff]
    %v6247 = vld [vmem:[#allocation4 + $0x700] sm:$0xff]
    %v6248 = vld [vmem:[#allocation4 + $0x708] sm:$0xff]
    %v6249 = vld [vmem:[#allocation4 + $0x710] sm:$0xff]
    %v6250 = vld [vmem:[#allocation4 + $0x718] sm:$0xff]
    %v6251 = vld [vmem:[#allocation4 + $0x720] sm:$0xff]
    %v6252 = vld [vmem:[#allocation4 + $0x728] sm:$0xff]
    %v6253 = vld [vmem:[#allocation4 + $0x730] sm:$0xff]
    %v6254 = vld [vmem:[#allocation4 + $0x738] sm:$0xff]
    %v6255 = vld [vmem:[#allocation4 + $0x740] sm:$0xff]
    %v6256 = vld [vmem:[#allocation4 + $0x748] sm:$0xff]
    %v6257 = vld [vmem:[#allocation4 + $0x750] sm:$0xff]
    %v6258 = vld [vmem:[#allocation4 + $0x758] sm:$0xff]
    %v6259 = vld [vmem:[#allocation4 + $0x760] sm:$0xff]
    %v6260 = vld [vmem:[#allocation4 + $0x768] sm:$0xff]
    %v6261 = vld [vmem:[#allocation4 + $0x770] sm:$0xff]
    %v6262 = vld [vmem:[#allocation4 + $0x778] sm:$0xff]
    %v6263 = vld [vmem:[#allocation4 + $0x780] sm:$0xff]
    %v6264 = vld [vmem:[#allocation4 + $0x788] sm:$0xff]
    %v6265 = vld [vmem:[#allocation4 + $0x790] sm:$0xff]
    %v6266 = vld [vmem:[#allocation4 + $0x798] sm:$0xff]
    %v6267 = vld [vmem:[#allocation4 + $0x7a0] sm:$0xff]
    %v6268 = vld [vmem:[#allocation4 + $0x7a8] sm:$0xff]
    %v6269 = vld [vmem:[#allocation4 + $0x7b0] sm:$0xff]
    %v6270 = vld [vmem:[#allocation4 + $0x7b8] sm:$0xff]
    %v6271 = vld [vmem:[#allocation4 + $0x7c0] sm:$0xff]
    %v6272 = vld [vmem:[#allocation4 + $0x7c8] sm:$0xff]
    %v6273 = vld [vmem:[#allocation4 + $0x7d0] sm:$0xff]
    %v6274 = vld [vmem:[#allocation4 + $0x7d8] sm:$0xff]
    %v6275 = vld [vmem:[#allocation4 + $0x7e0] sm:$0xff]
    %v6276 = vld [vmem:[#allocation4 + $0x7e8] sm:$0xff]
    %v6277 = vld [vmem:[#allocation4 + $0x7f0] sm:$0xff]
    %v6278 = vld [vmem:[#allocation4 + $0x7f8] sm:$0xff]
    %v6279 = vld [vmem:[#allocation4 + $0x800] sm:$0xff]
    %v6280 = vld [vmem:[#allocation4 + $0x808] sm:$0xff]
    %v6281 = vld [vmem:[#allocation4 + $0x810] sm:$0xff]
    %v6282 = vld [vmem:[#allocation4 + $0x818] sm:$0xff]
    %v6283 = vld [vmem:[#allocation4 + $0x820] sm:$0xff]
    %v6284 = vld [vmem:[#allocation4 + $0x828] sm:$0xff]
    %v6285 = vld [vmem:[#allocation4 + $0x830] sm:$0xff]
    %v6286 = vld [vmem:[#allocation4 + $0x838] sm:$0xff]
    %v6287 = vld [vmem:[#allocation4 + $0x840] sm:$0xff]
    %v6288 = vld [vmem:[#allocation4 + $0x848] sm:$0xff]
    %v6289 = vld [vmem:[#allocation4 + $0x850] sm:$0xff]
    %v6290 = vld [vmem:[#allocation4 + $0x858] sm:$0xff]
    %v6291 = vld [vmem:[#allocation4 + $0x860] sm:$0xff]
    %v6292 = vld [vmem:[#allocation4 + $0x868] sm:$0xff]
    %v6293 = vld [vmem:[#allocation4 + $0x870] sm:$0xff]
    %v6294 = vld [vmem:[#allocation4 + $0x878] sm:$0xff]
    %v6295 = vld [vmem:[#allocation4 + $0x880] sm:$0xff]
    %v6296 = vld [vmem:[#allocation4 + $0x888] sm:$0xff]
    %v6297 = vld [vmem:[#allocation4 + $0x890] sm:$0xff]
    %v6298 = vld [vmem:[#allocation4 + $0x898] sm:$0xff]
    %v6299 = vld [vmem:[#allocation4 + $0x8a0] sm:$0xff]
    %v6300 = vld [vmem:[#allocation4 + $0x8a8] sm:$0xff]
    %v6301 = vld [vmem:[#allocation4 + $0x8b0] sm:$0xff]
    %v6302 = vld [vmem:[#allocation4 + $0x8b8] sm:$0xff]
    %v6303 = vld [vmem:[#allocation4 + $0x8c0] sm:$0xff]
    %v6304 = vld [vmem:[#allocation4 + $0x8c8] sm:$0xff]
    %v6305 = vld [vmem:[#allocation4 + $0x8d0] sm:$0xff]
    %v6306 = vld [vmem:[#allocation4 + $0x8d8] sm:$0xff]
    %v6307 = vld [vmem:[#allocation4 + $0x8e0] sm:$0xff]
    %v6308 = vld [vmem:[#allocation4 + $0x8e8] sm:$0xff]
    %v6309 = vld [vmem:[#allocation4 + $0x8f0] sm:$0xff]
    %v6310 = vld [vmem:[#allocation4 + $0x8f8] sm:$0xff]
    %v6311 = vld [vmem:[#allocation4 + $0x900] sm:$0xff]
    %v6312 = vld [vmem:[#allocation4 + $0x908] sm:$0xff]
    %v6313 = vld [vmem:[#allocation4 + $0x910] sm:$0xff]
    %v6314 = vld [vmem:[#allocation4 + $0x918] sm:$0xff]
    %v6315 = vld [vmem:[#allocation4 + $0x920] sm:$0xff]
    %v6316 = vld [vmem:[#allocation4 + $0x928] sm:$0xff]
    %v6317 = vld [vmem:[#allocation4 + $0x930] sm:$0xff]
    %v6318 = vld [vmem:[#allocation4 + $0x938] sm:$0xff]
    %v6319 = vld [vmem:[#allocation4 + $0x940] sm:$0xff]
    %v6320 = vld [vmem:[#allocation4 + $0x948] sm:$0xff]
    %v6321 = vld [vmem:[#allocation4 + $0x950] sm:$0xff]
    %v6322 = vld [vmem:[#allocation4 + $0x958] sm:$0xff]
    %v6323 = vld [vmem:[#allocation4 + $0x960] sm:$0xff]
    %v6324 = vld [vmem:[#allocation4 + $0x968] sm:$0xff]
    %v6325 = vld [vmem:[#allocation4 + $0x970] sm:$0xff]
    %v6326 = vld [vmem:[#allocation4 + $0x978] sm:$0xff]
    %v6327 = vld [vmem:[#allocation4 + $0x980] sm:$0xff]
    %v6328 = vld [vmem:[#allocation4 + $0x988] sm:$0xff]
    %v6329 = vld [vmem:[#allocation4 + $0x990] sm:$0xff]
    %v6330 = vld [vmem:[#allocation4 + $0x998] sm:$0xff]
    %v6331 = vld [vmem:[#allocation4 + $0x9a0] sm:$0xff]
    %v6332 = vld [vmem:[#allocation4 + $0x9a8] sm:$0xff]
    %v6333 = vld [vmem:[#allocation4 + $0x9b0] sm:$0xff]
    %v6334 = vld [vmem:[#allocation4 + $0x9b8] sm:$0xff]
    %v6335 = vld [vmem:[#allocation4 + $0x9c0] sm:$0xff]
    %v6336 = vld [vmem:[#allocation4 + $0x9c8] sm:$0xff]
    %v6337 = vld [vmem:[#allocation4 + $0x9d0] sm:$0xff]
    %v6338 = vld [vmem:[#allocation4 + $0x9d8] sm:$0xff]
    %v6339 = vld [vmem:[#allocation4 + $0x9e0] sm:$0xff]
    %v6340 = vld [vmem:[#allocation4 + $0x9e8] sm:$0xff]
    %v6341 = vld [vmem:[#allocation4 + $0x9f0] sm:$0xff]
    %v6342 = vld [vmem:[#allocation4 + $0x9f8] sm:$0xff]
    %v6343 = vld [vmem:[#allocation4 + $0xa00] sm:$0xff]
    %v6344 = vld [vmem:[#allocation4 + $0xa08] sm:$0xff]
    %v6345 = vld [vmem:[#allocation4 + $0xa10] sm:$0xff]
    %v6346 = vld [vmem:[#allocation4 + $0xa18] sm:$0xff]
    %v6347 = vld [vmem:[#allocation4 + $0xa20] sm:$0xff]
    %v6348 = vld [vmem:[#allocation4 + $0xa28] sm:$0xff]
    %v6349 = vld [vmem:[#allocation4 + $0xa30] sm:$0xff]
    %v6350 = vld [vmem:[#allocation4 + $0xa38] sm:$0xff]
    %v6351 = vld [vmem:[#allocation4 + $0xa40] sm:$0xff]
    %v6352 = vld [vmem:[#allocation4 + $0xa48] sm:$0xff]
    %v6353 = vld [vmem:[#allocation4 + $0xa50] sm:$0xff]
    %v6354 = vld [vmem:[#allocation4 + $0xa58] sm:$0xff]
    %v6355 = vld [vmem:[#allocation4 + $0xa60] sm:$0xff]
    %v6356 = vld [vmem:[#allocation4 + $0xa68] sm:$0xff]
    %v6357 = vld [vmem:[#allocation4 + $0xa70] sm:$0xff]
    %v6358 = vld [vmem:[#allocation4 + $0xa78] sm:$0xff]
    %v6359 = vld [vmem:[#allocation4 + $0xa80] sm:$0xff]
    %v6360 = vld [vmem:[#allocation4 + $0xa88] sm:$0xff]
    %v6361 = vld [vmem:[#allocation4 + $0xa90] sm:$0xff]
    %v6362 = vld [vmem:[#allocation4 + $0xa98] sm:$0xff]
    %v6363 = vld [vmem:[#allocation4 + $0xaa0] sm:$0xff]
    %v6364 = vld [vmem:[#allocation4 + $0xaa8] sm:$0xff]
    %v6365 = vld [vmem:[#allocation4 + $0xab0] sm:$0xff]
    %v6366 = vld [vmem:[#allocation4 + $0xab8] sm:$0xff]
    %v6367 = vld [vmem:[#allocation4 + $0xac0] sm:$0xff]
    %v6368 = vld [vmem:[#allocation4 + $0xac8] sm:$0xff]
    %v6369 = vld [vmem:[#allocation4 + $0xad0] sm:$0xff]
    %v6370 = vld [vmem:[#allocation4 + $0xad8] sm:$0xff]
    %v6371 = vld [vmem:[#allocation4 + $0xae0] sm:$0xff]
    %v6372 = vld [vmem:[#allocation4 + $0xae8] sm:$0xff]
    %v6373 = vld [vmem:[#allocation4 + $0xaf0] sm:$0xff]
    %v6374 = vld [vmem:[#allocation4 + $0xaf8] sm:$0xff]
    %v6375 = vld [vmem:[#allocation4 + $0xb00] sm:$0xff]
    %v6376 = vld [vmem:[#allocation4 + $0xb08] sm:$0xff]
    %v6377 = vld [vmem:[#allocation4 + $0xb10] sm:$0xff]
    %v6378 = vld [vmem:[#allocation4 + $0xb18] sm:$0xff]
    %v6379 = vld [vmem:[#allocation4 + $0xb20] sm:$0xff]
    %v6380 = vld [vmem:[#allocation4 + $0xb28] sm:$0xff]
    %v6381 = vld [vmem:[#allocation4 + $0xb30] sm:$0xff]
    %v6382 = vld [vmem:[#allocation4 + $0xb38] sm:$0xff]
    %v6384 = vsel %vm2285, %v6022, 0
    %6386 = vmatprep.subr.mxu0 %v6024
    %6387 = vmatpush1.msra.mxu0 %v6023
    %6388 = vmatprep.subr.mxu0 %v6044
    %6389 = vmatpush1.msra.mxu0 %v6043
    %6390 = vmatprep.subr.mxu0 %v6064
    %6391 = vmatpush1.msra.mxu0 %v6063
    %6392 = vmatprep.subr.mxu0 %v6084
    %6393 = vmatpush1.msra.mxu0 %v6083
    %6394 = vmatprep.subr.mxu0 %v6104
    %6395 = vmatpush1.msra.mxu0 %v6103
    %6396 = vmatprep.subr.mxu0 %v6124
    %6397 = vmatpush1.msra.mxu0 %v6123
    %6398 = vmatprep.subr.mxu0 %v6144
    %6399 = vmatpush1.msra.mxu0 %v6143
    %6400 = vmatprep.subr.mxu0 %v6164
    %6401 = vmatpush1.msra.mxu0 %v6163
    %6402 = vmatprep.subr.mxu0 %v6184
    %6403 = vmatpush1.msra.mxu0 %v6183
    %6404 = vmatprep.subr.mxu0 %v6204
    %6405 = vmatpush1.msra.mxu0 %v6203
    %6406 = vmatprep.subr.mxu0 %v6224
    %6407 = vmatpush1.msra.mxu0 %v6223
    %6408 = vmatprep.subr.mxu0 %v6244
    %6409 = vmatpush1.msra.mxu0 %v6243
    %6410 = vmatprep.subr.mxu0 %v6264
    %6411 = vmatpush1.msra.mxu0 %v6263
    %6412 = vmatprep.subr.mxu0 %v6284
    %6413 = vmatpush1.msra.mxu0 %v6283
    %6414 = vmatprep.subr.mxu0 %v6304
    %6415 = vmatpush1.msra.mxu0 %v6303
    %6416 = vmatprep.subr.mxu0 %v6324
    %6417 = vmatpush1.msra.mxu0 %v6323
    %6418 = vmatprep.subr.mxu0 %v6344
    %6419 = vmatpush1.msra.mxu0 %v6343
    %6420 = vmatprep.subr.mxu0 %v6364
    %6421 = vmatpush1.msra.mxu0 %v6363
    %6422 = vmatprep.subr.mxu0 0.0
    %6423 = vmatpush1.msra.mxu0 0.0
    %6424 = vmatprep.subr.mxu0 0.0
    %6425 = vmatpush1.msra.mxu0 0.0
    %6426 = vmatprep.subr.mxu0 0.0
    %6427 = vmatpush1.msra.mxu0 0.0
    %6428 = vmatprep.subr.mxu0 0.0
    %6429 = vmatpush1.msra.mxu0 0.0
    %6430 = vmatprep.subr.mxu0 0.0
    %6431 = vmatpush1.msra.mxu0 0.0
    %6432 = vmatprep.subr.mxu0 0.0
    %6433 = vmatpush1.msra.mxu0 0.0
    %6434 = vmatprep.subr.mxu0 0.0
    %6435 = vmatpush1.msra.mxu0 0.0
    %6436 = vmatprep.subr.mxu0 0.0
    %6437 = vmatpush1.msra.mxu0 0.0
    %6438 = vmatprep.subr.mxu0 0.0
    %6439 = vmatpush1.msra.mxu0 0.0
    %6440 = vmatprep.subr.mxu0 0.0
    %6441 = vmatpush1.msra.mxu0 0.0
    %6442 = vmatprep.subr.mxu0 0.0
    %6443 = vmatpush1.msra.mxu0 0.0
    %6444 = vmatprep.subr.mxu0 0.0
    %6445 = vmatpush1.msra.mxu0 0.0
    %6446 = vmatprep.subr.mxu0 0.0
    %6447 = vmatpush1.msra.mxu0 0.0
    %6448 = vmatprep.subr.mxu0 0.0
    %6449 = vmatpush1.msra.mxu0 0.0
    %6450 = vmatprep.mubr.f32.mxu0 %v6384
    %6451 = vmatmul.mubr.f32.gmra.mrb[0].mxu0 %v6021
    %v6452 = vpop.f32.mrb[0].mxu0
    %v6453 = vadd.f32 0.0, %v6452
    %v6454 = vpop.f32.mrb[0].mxu0
    %v6455 = vadd.f32 0.0, %v6454
    %6456 = vdwg.mxu0
    %6457 = vmatprep.subr.mxu0 %v6026
    %6458 = vmatpush1.msra.mxu0 %v6025
    %6459 = vmatprep.subr.mxu0 %v6046
    %6460 = vmatpush1.msra.mxu0 %v6045
    %6461 = vmatprep.subr.mxu0 %v6066
    %6462 = vmatpush1.msra.mxu0 %v6065
    %6463 = vmatprep.subr.mxu0 %v6086
    %6464 = vmatpush1.msra.mxu0 %v6085
    %6465 = vmatprep.subr.mxu0 %v6106
    %6466 = vmatpush1.msra.mxu0 %v6105
    %6467 = vmatprep.subr.mxu0 %v6126
    %6468 = vmatpush1.msra.mxu0 %v6125
    %6469 = vmatprep.subr.mxu0 %v6146
    %6470 = vmatpush1.msra.mxu0 %v6145
    %6471 = vmatprep.subr.mxu0 %v6166
    %6472 = vmatpush1.msra.mxu0 %v6165
    %6473 = vmatprep.subr.mxu0 %v6186
    %6474 = vmatpush1.msra.mxu0 %v6185
    %6475 = vmatprep.subr.mxu0 %v6206
    %6476 = vmatpush1.msra.mxu0 %v6205
    %6477 = vmatprep.subr.mxu0 %v6226
    %6478 = vmatpush1.msra.mxu0 %v6225
    %6479 = vmatprep.subr.mxu0 %v6246
    %6480 = vmatpush1.msra.mxu0 %v6245
    %6481 = vmatprep.subr.mxu0 %v6266
    %6482 = vmatpush1.msra.mxu0 %v6265
    %6483 = vmatprep.subr.mxu0 %v6286
    %6484 = vmatpush1.msra.mxu0 %v6285
    %6485 = vmatprep.subr.mxu0 %v6306
    %6486 = vmatpush1.msra.mxu0 %v6305
    %6487 = vmatprep.subr.mxu0 %v6326
    %6488 = vmatpush1.msra.mxu0 %v6325
    %6489 = vmatprep.subr.mxu0 %v6346
    %6490 = vmatpush1.msra.mxu0 %v6345
    %6491 = vmatprep.subr.mxu0 %v6366
    %6492 = vmatpush1.msra.mxu0 %v6365
    %6493 = vmatprep.subr.mxu0 0.0
    %6494 = vmatpush1.msra.mxu0 0.0
    %6495 = vmatprep.subr.mxu0 0.0
    %6496 = vmatpush1.msra.mxu0 0.0
    %6497 = vmatprep.subr.mxu0 0.0
    %6498 = vmatpush1.msra.mxu0 0.0
    %6499 = vmatprep.subr.mxu0 0.0
    %6500 = vmatpush1.msra.mxu0 0.0
    %6501 = vmatprep.subr.mxu0 0.0
    %6502 = vmatpush1.msra.mxu0 0.0
    %6503 = vmatprep.subr.mxu0 0.0
    %6504 = vmatpush1.msra.mxu0 0.0
    %6505 = vmatprep.subr.mxu0 0.0
    %6506 = vmatpush1.msra.mxu0 0.0
    %6507 = vmatprep.subr.mxu0 0.0
    %6508 = vmatpush1.msra.mxu0 0.0
    %6509 = vmatprep.subr.mxu0 0.0
    %6510 = vmatpush1.msra.mxu0 0.0
    %6511 = vmatprep.subr.mxu0 0.0
    %6512 = vmatpush1.msra.mxu0 0.0
    %6513 = vmatprep.subr.mxu0 0.0
    %6514 = vmatpush1.msra.mxu0 0.0
    %6515 = vmatprep.subr.mxu0 0.0
    %6516 = vmatpush1.msra.mxu0 0.0
    %6517 = vmatprep.subr.mxu0 0.0
    %6518 = vmatpush1.msra.mxu0 0.0
    %6519 = vmatprep.subr.mxu0 0.0
    %6520 = vmatpush1.msra.mxu0 0.0
    %6521 = vmatprep.mubr.f32.mxu0 %v6384
    %6522 = vmatmul.mubr.f32.gmra.mrb[0].mxu0 %v6021
    %v6523 = vpop.f32.mrb[0].mxu0
    %v6524 = vadd.f32 0.0, %v6523
    %v6525 = vpop.f32.mrb[0].mxu0
    %v6526 = vadd.f32 0.0, %v6525
    %6527 = vdwg.mxu0
    %6528 = vmatprep.subr.mxu0 %v6028
    %6529 = vmatpush1.msra.mxu0 %v6027
    %6530 = vmatprep.subr.mxu0 %v6048
    %6531 = vmatpush1.msra.mxu0 %v6047
    %6532 = vmatprep.subr.mxu0 %v6068
    %6533 = vmatpush1.msra.mxu0 %v6067
    %6534 = vmatprep.subr.mxu0 %v6088
    %6535 = vmatpush1.msra.mxu0 %v6087
    %6536 = vmatprep.subr.mxu0 %v6108
    %6537 = vmatpush1.msra.mxu0 %v6107
    %6538 = vmatprep.subr.mxu0 %v6128
    %6539 = vmatpush1.msra.mxu0 %v6127
    %6540 = vmatprep.subr.mxu0 %v6148
    %6541 = vmatpush1.msra.mxu0 %v6147
    %6542 = vmatprep.subr.mxu0 %v6168
    %6543 = vmatpush1.msra.mxu0 %v6167
    %6544 = vmatprep.subr.mxu0 %v6188
    %6545 = vmatpush1.msra.mxu0 %v6187
    %6546 = vmatprep.subr.mxu0 %v6208
    %6547 = vmatpush1.msra.mxu0 %v6207
    %6548 = vmatprep.subr.mxu0 %v6228
    %6549 = vmatpush1.msra.mxu0 %v6227
    %6550 = vmatprep.subr.mxu0 %v6248
    %6551 = vmatpush1.msra.mxu0 %v6247
    %6552 = vmatprep.subr.mxu0 %v6268
    %6553 = vmatpush1.msra.mxu0 %v6267
    %6554 = vmatprep.subr.mxu0 %v6288
    %6555 = vmatpush1.msra.mxu0 %v6287
    %6556 = vmatprep.subr.mxu0 %v6308
    %6557 = vmatpush1.msra.mxu0 %v6307
    %6558 = vmatprep.subr.mxu0 %v6328
    %6559 = vmatpush1.msra.mxu0 %v6327
    %6560 = vmatprep.subr.mxu0 %v6348
    %6561 = vmatpush1.msra.mxu0 %v6347
    %6562 = vmatprep.subr.mxu0 %v6368
    %6563 = vmatpush1.msra.mxu0 %v6367
    %6564 = vmatprep.subr.mxu0 0.0
    %6565 = vmatpush1.msra.mxu0 0.0
    %6566 = vmatprep.subr.mxu0 0.0
    %6567 = vmatpush1.msra.mxu0 0.0
    %6568 = vmatprep.subr.mxu0 0.0
    %6569 = vmatpush1.msra.mxu0 0.0
    %6570 = vmatprep.subr.mxu0 0.0
    %6571 = vmatpush1.msra.mxu0 0.0
    %6572 = vmatprep.subr.mxu0 0.0
    %6573 = vmatpush1.msra.mxu0 0.0
    %6574 = vmatprep.subr.mxu0 0.0
    %6575 = vmatpush1.msra.mxu0 0.0
    %6576 = vmatprep.subr.mxu0 0.0
    %6577 = vmatpush1.msra.mxu0 0.0
    %6578 = vmatprep.subr.mxu0 0.0
    %6579 = vmatpush1.msra.mxu0 0.0
    %6580 = vmatprep.subr.mxu0 0.0
    %6581 = vmatpush1.msra.mxu0 0.0
    %6582 = vmatprep.subr.mxu0 0.0
    %6583 = vmatpush1.msra.mxu0 0.0
    %6584 = vmatprep.subr.mxu0 0.0
    %6585 = vmatpush1.msra.mxu0 0.0
    %6586 = vmatprep.subr.mxu0 0.0
    %6587 = vmatpush1.msra.mxu0 0.0
    %6588 = vmatprep.subr.mxu0 0.0
    %6589 = vmatpush1.msra.mxu0 0.0
    %6590 = vmatprep.subr.mxu0 0.0
    %6591 = vmatpush1.msra.mxu0 0.0
    %6592 = vmatprep.mubr.f32.mxu0 %v6384
    %6593 = vmatmul.mubr.f32.gmra.mrb[0].mxu0 %v6021
    %v6594 = vpop.f32.mrb[0].mxu0
    %v6595 = vadd.f32 0.0, %v6594
    %v6596 = vpop.f32.mrb[0].mxu0
    %v6597 = vadd.f32 0.0, %v6596
    %6598 = vdwg.mxu0
    %6599 = vmatprep.subr.mxu0 %v6030
    %6600 = vmatpush1.msra.mxu0 %v6029
    %6601 = vmatprep.subr.mxu0 %v6050
    %6602 = vmatpush1.msra.mxu0 %v6049
    %6603 = vmatprep.subr.mxu0 %v6070
    %6604 = vmatpush1.msra.mxu0 %v6069
    %6605 = vmatprep.subr.mxu0 %v6090
    %6606 = vmatpush1.msra.mxu0 %v6089
    %6607 = vmatprep.subr.mxu0 %v6110
    %6608 = vmatpush1.msra.mxu0 %v6109
    %6609 = vmatprep.subr.mxu0 %v6130
    %6610 = vmatpush1.msra.mxu0 %v6129
    %6611 = vmatprep.subr.mxu0 %v6150
    %6612 = vmatpush1.msra.mxu0 %v6149
    %6613 = vmatprep.subr.mxu0 %v6170
    %6614 = vmatpush1.msra.mxu0 %v6169
    %6615 = vmatprep.subr.mxu0 %v6190
    %6616 = vmatpush1.msra.mxu0 %v6189
    %6617 = vmatprep.subr.mxu0 %v6210
    %6618 = vmatpush1.msra.mxu0 %v6209
    %6619 = vmatprep.subr.mxu0 %v6230
    %6620 = vmatpush1.msra.mxu0 %v6229
    %6621 = vmatprep.subr.mxu0 %v6250
    %6622 = vmatpush1.msra.mxu0 %v6249
    %6623 = vmatprep.subr.mxu0 %v6270
    %6624 = vmatpush1.msra.mxu0 %v6269
    %6625 = vmatprep.subr.mxu0 %v6290
    %6626 = vmatpush1.msra.mxu0 %v6289
    %6627 = vmatprep.subr.mxu0 %v6310
    %6628 = vmatpush1.msra.mxu0 %v6309
    %6629 = vmatprep.subr.mxu0 %v6330
    %6630 = vmatpush1.msra.mxu0 %v6329
    %6631 = vmatprep.subr.mxu0 %v6350
    %6632 = vmatpush1.msra.mxu0 %v6349
    %6633 = vmatprep.subr.mxu0 %v6370
    %6634 = vmatpush1.msra.mxu0 %v6369
    %6635 = vmatprep.subr.mxu0 0.0
    %6636 = vmatpush1.msra.mxu0 0.0
    %6637 = vmatprep.subr.mxu0 0.0
    %6638 = vmatpush1.msra.mxu0 0.0
    %6639 = vmatprep.subr.mxu0 0.0
    %6640 = vmatpush1.msra.mxu0 0.0
    %6641 = vmatprep.subr.mxu0 0.0
    %6642 = vmatpush1.msra.mxu0 0.0
    %6643 = vmatprep.subr.mxu0 0.0
    %6644 = vmatpush1.msra.mxu0 0.0
    %6645 = vmatprep.subr.mxu0 0.0
    %6646 = vmatpush1.msra.mxu0 0.0
    %6647 = vmatprep.subr.mxu0 0.0
    %6648 = vmatpush1.msra.mxu0 0.0
    %6649 = vmatprep.subr.mxu0 0.0
    %6650 = vmatpush1.msra.mxu0 0.0
    %6651 = vmatprep.subr.mxu0 0.0
    %6652 = vmatpush1.msra.mxu0 0.0
    %6653 = vmatprep.subr.mxu0 0.0
    %6654 = vmatpush1.msra.mxu0 0.0
    %6655 = vmatprep.subr.mxu0 0.0
    %6656 = vmatpush1.msra.mxu0 0.0
    %6657 = vmatprep.subr.mxu0 0.0
    %6658 = vmatpush1.msra.mxu0 0.0
    %6659 = vmatprep.subr.mxu0 0.0
    %6660 = vmatpush1.msra.mxu0 0.0
    %6661 = vmatprep.subr.mxu0 0.0
    %6662 = vmatpush1.msra.mxu0 0.0
    %6663 = vmatprep.mubr.f32.mxu0 %v6384
    %6664 = vmatmul.mubr.f32.gmra.mrb[0].mxu0 %v6021
    %v6665 = vpop.f32.mrb[0].mxu0
    %v6666 = vadd.f32 0.0, %v6665
    %v6667 = vpop.f32.mrb[0].mxu0
    %v6668 = vadd.f32 0.0, %v6667
    %6669 = vdwg.mxu0
    %6670 = vmatprep.subr.mxu0 %v6032
    %6671 = vmatpush1.msra.mxu0 %v6031
    %6672 = vmatprep.subr.mxu0 %v6052
    %6673 = vmatpush1.msra.mxu0 %v6051
    %6674 = vmatprep.subr.mxu0 %v6072
    %6675 = vmatpush1.msra.mxu0 %v6071
    %6676 = vmatprep.subr.mxu0 %v6092
    %6677 = vmatpush1.msra.mxu0 %v6091
    %6678 = vmatprep.subr.mxu0 %v6112
    %6679 = vmatpush1.msra.mxu0 %v6111
    %6680 = vmatprep.subr.mxu0 %v6132
    %6681 = vmatpush1.msra.mxu0 %v6131
    %6682 = vmatprep.subr.mxu0 %v6152
    %6683 = vmatpush1.msra.mxu0 %v6151
    %6684 = vmatprep.subr.mxu0 %v6172
    %6685 = vmatpush1.msra.mxu0 %v6171
    %6686 = vmatprep.subr.mxu0 %v6192
    %6687 = vmatpush1.msra.mxu0 %v6191
    %6688 = vmatprep.subr.mxu0 %v6212
    %6689 = vmatpush1.msra.mxu0 %v6211
    %6690 = vmatprep.subr.mxu0 %v6232
    %6691 = vmatpush1.msra.mxu0 %v6231
    %6692 = vmatprep.subr.mxu0 %v6252
    %6693 = vmatpush1.msra.mxu0 %v6251
    %6694 = vmatprep.subr.mxu0 %v6272
    %6695 = vmatpush1.msra.mxu0 %v6271
    %6696 = vmatprep.subr.mxu0 %v6292
    %6697 = vmatpush1.msra.mxu0 %v6291
    %6698 = vmatprep.subr.mxu0 %v6312
    %6699 = vmatpush1.msra.mxu0 %v6311
    %6700 = vmatprep.subr.mxu0 %v6332
    %6701 = vmatpush1.msra.mxu0 %v6331
    %6702 = vmatprep.subr.mxu0 %v6352
    %6703 = vmatpush1.msra.mxu0 %v6351
    %6704 = vmatprep.subr.mxu0 %v6372
    %6705 = vmatpush1.msra.mxu0 %v6371
    %6706 = vmatprep.subr.mxu0 0.0
    %6707 = vmatpush1.msra.mxu0 0.0
    %6708 = vmatprep.subr.mxu0 0.0
    %6709 = vmatpush1.msra.mxu0 0.0
    %6710 = vmatprep.subr.mxu0 0.0
    %6711 = vmatpush1.msra.mxu0 0.0
    %6712 = vmatprep.subr.mxu0 0.0
    %6713 = vmatpush1.msra.mxu0 0.0
    %6714 = vmatprep.subr.mxu0 0.0
    %6715 = vmatpush1.msra.mxu0 0.0
    %6716 = vmatprep.subr.mxu0 0.0
    %6717 = vmatpush1.msra.mxu0 0.0
    %6718 = vmatprep.subr.mxu0 0.0
    %6719 = vmatpush1.msra.mxu0 0.0
    %6720 = vmatprep.subr.mxu0 0.0
    %6721 = vmatpush1.msra.mxu0 0.0
    %6722 = vmatprep.subr.mxu0 0.0
    %6723 = vmatpush1.msra.mxu0 0.0
    %6724 = vmatprep.subr.mxu0 0.0
    %6725 = vmatpush1.msra.mxu0 0.0
    %6726 = vmatprep.subr.mxu0 0.0
    %6727 = vmatpush1.msra.mxu0 0.0
    %6728 = vmatprep.subr.mxu0 0.0
    %6729 = vmatpush1.msra.mxu0 0.0
    %6730 = vmatprep.subr.mxu0 0.0
    %6731 = vmatpush1.msra.mxu0 0.0
    %6732 = vmatprep.subr.mxu0 0.0
    %6733 = vmatpush1.msra.mxu0 0.0
    %6734 = vmatprep.mubr.f32.mxu0 %v6384
    %6735 = vmatmul.mubr.f32.gmra.mrb[0].mxu0 %v6021
    %v6736 = vpop.f32.mrb[0].mxu0
    %v6737 = vadd.f32 0.0, %v6736
    %v6738 = vpop.f32.mrb[0].mxu0
    %v6739 = vadd.f32 0.0, %v6738
    %6740 = vdwg.mxu0
    %6741 = vmatprep.subr.mxu0 %v6034
    %6742 = vmatpush1.msra.mxu0 %v6033
    %6743 = vmatprep.subr.mxu0 %v6054
    %6744 = vmatpush1.msra.mxu0 %v6053
    %6745 = vmatprep.subr.mxu0 %v6074
    %6746 = vmatpush1.msra.mxu0 %v6073
    %6747 = vmatprep.subr.mxu0 %v6094
    %6748 = vmatpush1.msra.mxu0 %v6093
    %6749 = vmatprep.subr.mxu0 %v6114
    %6750 = vmatpush1.msra.mxu0 %v6113
    %6751 = vmatprep.subr.mxu0 %v6134
    %6752 = vmatpush1.msra.mxu0 %v6133
    %6753 = vmatprep.subr.mxu0 %v6154
    %6754 = vmatpush1.msra.mxu0 %v6153
    %6755 = vmatprep.subr.mxu0 %v6174
    %6756 = vmatpush1.msra.mxu0 %v6173
    %6757 = vmatprep.subr.mxu0 %v6194
    %6758 = vmatpush1.msra.mxu0 %v6193
    %6759 = vmatprep.subr.mxu0 %v6214
    %6760 = vmatpush1.msra.mxu0 %v6213
    %6761 = vmatprep.subr.mxu0 %v6234
    %6762 = vmatpush1.msra.mxu0 %v6233
    %6763 = vmatprep.subr.mxu0 %v6254
    %6764 = vmatpush1.msra.mxu0 %v6253
    %6765 = vmatprep.subr.mxu0 %v6274
    %6766 = vmatpush1.msra.mxu0 %v6273
    %6767 = vmatprep.subr.mxu0 %v6294
    %6768 = vmatpush1.msra.mxu0 %v6293
    %6769 = vmatprep.subr.mxu0 %v6314
    %6770 = vmatpush1.msra.mxu0 %v6313
    %6771 = vmatprep.subr.mxu0 %v6334
    %6772 = vmatpush1.msra.mxu0 %v6333
    %6773 = vmatprep.subr.mxu0 %v6354
    %6774 = vmatpush1.msra.mxu0 %v6353
    %6775 = vmatprep.subr.mxu0 %v6374
    %6776 = vmatpush1.msra.mxu0 %v6373
    %6777 = vmatprep.subr.mxu0 0.0
    %6778 = vmatpush1.msra.mxu0 0.0
    %6779 = vmatprep.subr.mxu0 0.0
    %6780 = vmatpush1.msra.mxu0 0.0
    %6781 = vmatprep.subr.mxu0 0.0
    %6782 = vmatpush1.msra.mxu0 0.0
    %6783 = vmatprep.subr.mxu0 0.0
    %6784 = vmatpush1.msra.mxu0 0.0
    %6785 = vmatprep.subr.mxu0 0.0
    %6786 = vmatpush1.msra.mxu0 0.0
    %6787 = vmatprep.subr.mxu0 0.0
    %6788 = vmatpush1.msra.mxu0 0.0
    %6789 = vmatprep.subr.mxu0 0.0
    %6790 = vmatpush1.msra.mxu0 0.0
    %6791 = vmatprep.subr.mxu0 0.0
    %6792 = vmatpush1.msra.mxu0 0.0
    %6793 = vmatprep.subr.mxu0 0.0
    %6794 = vmatpush1.msra.mxu0 0.0
    %6795 = vmatprep.subr.mxu0 0.0
    %6796 = vmatpush1.msra.mxu0 0.0
    %6797 = vmatprep.subr.mxu0 0.0
    %6798 = vmatpush1.msra.mxu0 0.0
    %6799 = vmatprep.subr.mxu0 0.0
    %6800 = vmatpush1.msra.mxu0 0.0
    %6801 = vmatprep.subr.mxu0 0.0
    %6802 = vmatpush1.msra.mxu0 0.0
    %6803 = vmatprep.subr.mxu0 0.0
    %6804 = vmatpush1.msra.mxu0 0.0
    %6805 = vmatprep.mubr.f32.mxu0 %v6384
    %6806 = vmatmul.mubr.f32.gmra.mrb[0].mxu0 %v6021
    %v6807 = vpop.f32.mrb[0].mxu0
    %v6808 = vadd.f32 0.0, %v6807
    %v6809 = vpop.f32.mrb[0].mxu0
    %v6810 = vadd.f32 0.0, %v6809
    %6811 = vdwg.mxu0
    %6812 = vmatprep.subr.mxu0 %v6036
    %6813 = vmatpush1.msra.mxu0 %v6035
    %6814 = vmatprep.subr.mxu0 %v6056
    %6815 = vmatpush1.msra.mxu0 %v6055
    %6816 = vmatprep.subr.mxu0 %v6076
    %6817 = vmatpush1.msra.mxu0 %v6075
    %6818 = vmatprep.subr.mxu0 %v6096
    %6819 = vmatpush1.msra.mxu0 %v6095
    %6820 = vmatprep.subr.mxu0 %v6116
    %6821 = vmatpush1.msra.mxu0 %v6115
    %6822 = vmatprep.subr.mxu0 %v6136
    %6823 = vmatpush1.msra.mxu0 %v6135
    %6824 = vmatprep.subr.mxu0 %v6156
    %6825 = vmatpush1.msra.mxu0 %v6155
    %6826 = vmatprep.subr.mxu0 %v6176
    %6827 = vmatpush1.msra.mxu0 %v6175
    %6828 = vmatprep.subr.mxu0 %v6196
    %6829 = vmatpush1.msra.mxu0 %v6195
    %6830 = vmatprep.subr.mxu0 %v6216
    %6831 = vmatpush1.msra.mxu0 %v6215
    %6832 = vmatprep.subr.mxu0 %v6236
    %6833 = vmatpush1.msra.mxu0 %v6235
    %6834 = vmatprep.subr.mxu0 %v6256
    %6835 = vmatpush1.msra.mxu0 %v6255
    %6836 = vmatprep.subr.mxu0 %v6276
    %6837 = vmatpush1.msra.mxu0 %v6275
    %6838 = vmatprep.subr.mxu0 %v6296
    %6839 = vmatpush1.msra.mxu0 %v6295
    %6840 = vmatprep.subr.mxu0 %v6316
    %6841 = vmatpush1.msra.mxu0 %v6315
    %6842 = vmatprep.subr.mxu0 %v6336
    %6843 = vmatpush1.msra.mxu0 %v6335
    %6844 = vmatprep.subr.mxu0 %v6356
    %6845 = vmatpush1.msra.mxu0 %v6355
    %6846 = vmatprep.subr.mxu0 %v6376
    %6847 = vmatpush1.msra.mxu0 %v6375
    %6848 = vmatprep.subr.mxu0 0.0
    %6849 = vmatpush1.msra.mxu0 0.0
    %6850 = vmatprep.subr.mxu0 0.0
    %6851 = vmatpush1.msra.mxu0 0.0
    %6852 = vmatprep.subr.mxu0 0.0
    %6853 = vmatpush1.msra.mxu0 0.0
    %6854 = vmatprep.subr.mxu0 0.0
    %6855 = vmatpush1.msra.mxu0 0.0
    %6856 = vmatprep.subr.mxu0 0.0
    %6857 = vmatpush1.msra.mxu0 0.0
    %6858 = vmatprep.subr.mxu0 0.0
    %6859 = vmatpush1.msra.mxu0 0.0
    %6860 = vmatprep.subr.mxu0 0.0
    %6861 = vmatpush1.msra.mxu0 0.0
    %6862 = vmatprep.subr.mxu0 0.0
    %6863 = vmatpush1.msra.mxu0 0.0
    %6864 = vmatprep.subr.mxu0 0.0
    %6865 = vmatpush1.msra.mxu0 0.0
    %6866 = vmatprep.subr.mxu0 0.0
    %6867 = vmatpush1.msra.mxu0 0.0
    %6868 = vmatprep.subr.mxu0 0.0
    %6869 = vmatpush1.msra.mxu0 0.0
    %6870 = vmatprep.subr.mxu0 0.0
    %6871 = vmatpush1.msra.mxu0 0.0
    %6872 = vmatprep.subr.mxu0 0.0
    %6873 = vmatpush1.msra.mxu0 0.0
    %6874 = vmatprep.subr.mxu0 0.0
    %6875 = vmatpush1.msra.mxu0 0.0
    %6876 = vmatprep.mubr.f32.mxu0 %v6384
    %6877 = vmatmul.mubr.f32.gmra.mrb[0].mxu0 %v6021
    %v6878 = vpop.f32.mrb[0].mxu0
    %v6879 = vadd.f32 0.0, %v6878
    %v6880 = vpop.f32.mrb[0].mxu0
    %v6881 = vadd.f32 0.0, %v6880
    %6882 = vdwg.mxu0
    %6883 = vmatprep.subr.mxu0 %v6038
    %6884 = vmatpush1.msra.mxu0 %v6037
    %6885 = vmatprep.subr.mxu0 %v6058
    %6886 = vmatpush1.msra.mxu0 %v6057
    %6887 = vmatprep.subr.mxu0 %v6078
    %6888 = vmatpush1.msra.mxu0 %v6077
    %6889 = vmatprep.subr.mxu0 %v6098
    %6890 = vmatpush1.msra.mxu0 %v6097
    %6891 = vmatprep.subr.mxu0 %v6118
    %6892 = vmatpush1.msra.mxu0 %v6117
    %6893 = vmatprep.subr.mxu0 %v6138
    %6894 = vmatpush1.msra.mxu0 %v6137
    %6895 = vmatprep.subr.mxu0 %v6158
    %6896 = vmatpush1.msra.mxu0 %v6157
    %6897 = vmatprep.subr.mxu0 %v6178
    %6898 = vmatpush1.msra.mxu0 %v6177
    %6899 = vmatprep.subr.mxu0 %v6198
    %6900 = vmatpush1.msra.mxu0 %v6197
    %6901 = vmatprep.subr.mxu0 %v6218
    %6902 = vmatpush1.msra.mxu0 %v6217
    %6903 = vmatprep.subr.mxu0 %v6238
    %6904 = vmatpush1.msra.mxu0 %v6237
    %6905 = vmatprep.subr.mxu0 %v6258
    %6906 = vmatpush1.msra.mxu0 %v6257
    %6907 = vmatprep.subr.mxu0 %v6278
    %6908 = vmatpush1.msra.mxu0 %v6277
    %6909 = vmatprep.subr.mxu0 %v6298
    %6910 = vmatpush1.msra.mxu0 %v6297
    %6911 = vmatprep.subr.mxu0 %v6318
    %6912 = vmatpush1.msra.mxu0 %v6317
    %6913 = vmatprep.subr.mxu0 %v6338
    %6914 = vmatpush1.msra.mxu0 %v6337
    %6915 = vmatprep.subr.mxu0 %v6358
    %6916 = vmatpush1.msra.mxu0 %v6357
    %6917 = vmatprep.subr.mxu0 %v6378
    %6918 = vmatpush1.msra.mxu0 %v6377
    %6919 = vmatprep.subr.mxu0 0.0
    %6920 = vmatpush1.msra.mxu0 0.0
    %6921 = vmatprep.subr.mxu0 0.0
    %6922 = vmatpush1.msra.mxu0 0.0
    %6923 = vmatprep.subr.mxu0 0.0
    %6924 = vmatpush1.msra.mxu0 0.0
    %6925 = vmatprep.subr.mxu0 0.0
    %6926 = vmatpush1.msra.mxu0 0.0
    %6927 = vmatprep.subr.mxu0 0.0
    %6928 = vmatpush1.msra.mxu0 0.0
    %6929 = vmatprep.subr.mxu0 0.0
    %6930 = vmatpush1.msra.mxu0 0.0
    %6931 = vmatprep.subr.mxu0 0.0
    %6932 = vmatpush1.msra.mxu0 0.0
    %6933 = vmatprep.subr.mxu0 0.0
    %6934 = vmatpush1.msra.mxu0 0.0
    %6935 = vmatprep.subr.mxu0 0.0
    %6936 = vmatpush1.msra.mxu0 0.0
    %6937 = vmatprep.subr.mxu0 0.0
    %6938 = vmatpush1.msra.mxu0 0.0
    %6939 = vmatprep.subr.mxu0 0.0
    %6940 = vmatpush1.msra.mxu0 0.0
    %6941 = vmatprep.subr.mxu0 0.0
    %6942 = vmatpush1.msra.mxu0 0.0
    %6943 = vmatprep.subr.mxu0 0.0
    %6944 = vmatpush1.msra.mxu0 0.0
    %6945 = vmatprep.subr.mxu0 0.0
    %6946 = vmatpush1.msra.mxu0 0.0
    %6947 = vmatprep.mubr.f32.mxu0 %v6384
    %6948 = vmatmul.mubr.f32.gmra.mrb[0].mxu0 %v6021
    %v6949 = vpop.f32.mrb[0].mxu0
    %v6950 = vadd.f32 0.0, %v6949
    %v6951 = vpop.f32.mrb[0].mxu0
    %v6952 = vadd.f32 0.0, %v6951
    %6953 = vdwg.mxu0
    %6954 = vmatprep.subr.mxu0 %v6040
    %6955 = vmatpush1.msra.mxu0 %v6039
    %6956 = vmatprep.subr.mxu0 %v6060
    %6957 = vmatpush1.msra.mxu0 %v6059
    %6958 = vmatprep.subr.mxu0 %v6080
    %6959 = vmatpush1.msra.mxu0 %v6079
    %6960 = vmatprep.subr.mxu0 %v6100
    %6961 = vmatpush1.msra.mxu0 %v6099
    %6962 = vmatprep.subr.mxu0 %v6120
    %6963 = vmatpush1.msra.mxu0 %v6119
    %6964 = vmatprep.subr.mxu0 %v6140
    %6965 = vmatpush1.msra.mxu0 %v6139
    %6966 = vmatprep.subr.mxu0 %v6160
    %6967 = vmatpush1.msra.mxu0 %v6159
    %6968 = vmatprep.subr.mxu0 %v6180
    %6969 = vmatpush1.msra.mxu0 %v6179
    %6970 = vmatprep.subr.mxu0 %v6200
    %6971 = vmatpush1.msra.mxu0 %v6199
    %6972 = vmatprep.subr.mxu0 %v6220
    %6973 = vmatpush1.msra.mxu0 %v6219
    %6974 = vmatprep.subr.mxu0 %v6240
    %6975 = vmatpush1.msra.mxu0 %v6239
    %6976 = vmatprep.subr.mxu0 %v6260
    %6977 = vmatpush1.msra.mxu0 %v6259
    %6978 = vmatprep.subr.mxu0 %v6280
    %6979 = vmatpush1.msra.mxu0 %v6279
    %6980 = vmatprep.subr.mxu0 %v6300
    %6981 = vmatpush1.msra.mxu0 %v6299
    %6982 = vmatprep.subr.mxu0 %v6320
    %6983 = vmatpush1.msra.mxu0 %v6319
    %6984 = vmatprep.subr.mxu0 %v6340
    %6985 = vmatpush1.msra.mxu0 %v6339
    %6986 = vmatprep.subr.mxu0 %v6360
    %6987 = vmatpush1.msra.mxu0 %v6359
    %6988 = vmatprep.subr.mxu0 %v6380
    %6989 = vmatpush1.msra.mxu0 %v6379
    %6990 = vmatprep.subr.mxu0 0.0
    %6991 = vmatpush1.msra.mxu0 0.0
    %6992 = vmatprep.subr.mxu0 0.0
    %6993 = vmatpush1.msra.mxu0 0.0
    %6994 = vmatprep.subr.mxu0 0.0
    %6995 = vmatpush1.msra.mxu0 0.0
    %6996 = vmatprep.subr.mxu0 0.0
    %6997 = vmatpush1.msra.mxu0 0.0
    %6998 = vmatprep.subr.mxu0 0.0
    %6999 = vmatpush1.msra.mxu0 0.0
    %7000 = vmatprep.subr.mxu0 0.0
    %7001 = vmatpush1.msra.mxu0 0.0
    %7002 = vmatprep.subr.mxu0 0.0
    %7003 = vmatpush1.msra.mxu0 0.0
    %7004 = vmatprep.subr.mxu0 0.0
    %7005 = vmatpush1.msra.mxu0 0.0
    %7006 = vmatprep.subr.mxu0 0.0
    %7007 = vmatpush1.msra.mxu0 0.0
    %7008 = vmatprep.subr.mxu0 0.0
    %7009 = vmatpush1.msra.mxu0 0.0
    %7010 = vmatprep.subr.mxu0 0.0
    %7011 = vmatpush1.msra.mxu0 0.0
    %7012 = vmatprep.subr.mxu0 0.0
    %7013 = vmatpush1.msra.mxu0 0.0
    %7014 = vmatprep.subr.mxu0 0.0
    %7015 = vmatpush1.msra.mxu0 0.0
    %7016 = vmatprep.subr.mxu0 0.0
    %7017 = vmatpush1.msra.mxu0 0.0
    %7018 = vmatprep.mubr.f32.mxu0 %v6384
    %7019 = vmatmul.mubr.f32.gmra.mrb[0].mxu0 %v6021
    %v7020 = vpop.f32.mrb[0].mxu0
    %v7021 = vadd.f32 0.0, %v7020
    %v7022 = vpop.f32.mrb[0].mxu0
    %v7023 = vadd.f32 0.0, %v7022
    %7024 = vdwg.mxu0
    %7025 = vmatprep.subr.mxu0 %v6042
    %7026 = vmatpush1.msra.mxu0 %v6041
    %7027 = vmatprep.subr.mxu0 %v6062
    %7028 = vmatpush1.msra.mxu0 %v6061
    %7029 = vmatprep.subr.mxu0 %v6082
    %7030 = vmatpush1.msra.mxu0 %v6081
    %7031 = vmatprep.subr.mxu0 %v6102
    %7032 = vmatpush1.msra.mxu0 %v6101
    %7033 = vmatprep.subr.mxu0 %v6122
    %7034 = vmatpush1.msra.mxu0 %v6121
    %7035 = vmatprep.subr.mxu0 %v6142
    %7036 = vmatpush1.msra.mxu0 %v6141
    %7037 = vmatprep.subr.mxu0 %v6162
    %7038 = vmatpush1.msra.mxu0 %v6161
    %7039 = vmatprep.subr.mxu0 %v6182
    %7040 = vmatpush1.msra.mxu0 %v6181
    %7041 = vmatprep.subr.mxu0 %v6202
    %7042 = vmatpush1.msra.mxu0 %v6201
    %7043 = vmatprep.subr.mxu0 %v6222
    %7044 = vmatpush1.msra.mxu0 %v6221
    %7045 = vmatprep.subr.mxu0 %v6242
    %7046 = vmatpush1.msra.mxu0 %v6241
    %7047 = vmatprep.subr.mxu0 %v6262
    %7048 = vmatpush1.msra.mxu0 %v6261
    %7049 = vmatprep.subr.mxu0 %v6282
    %7050 = vmatpush1.msra.mxu0 %v6281
    %7051 = vmatprep.subr.mxu0 %v6302
    %7052 = vmatpush1.msra.mxu0 %v6301
    %7053 = vmatprep.subr.mxu0 %v6322
    %7054 = vmatpush1.msra.mxu0 %v6321
    %7055 = vmatprep.subr.mxu0 %v6342
    %7056 = vmatpush1.msra.mxu0 %v6341
    %7057 = vmatprep.subr.mxu0 %v6362
    %7058 = vmatpush1.msra.mxu0 %v6361
    %7059 = vmatprep.subr.mxu0 %v6382
    %7060 = vmatpush1.msra.mxu0 %v6381
    %7061 = vmatprep.subr.mxu0 0.0
    %7062 = vmatpush1.msra.mxu0 0.0
    %7063 = vmatprep.subr.mxu0 0.0
    %7064 = vmatpush1.msra.mxu0 0.0
    %7065 = vmatprep.subr.mxu0 0.0
    %7066 = vmatpush1.msra.mxu0 0.0
    %7067 = vmatprep.subr.mxu0 0.0
    %7068 = vmatpush1.msra.mxu0 0.0
    %7069 = vmatprep.subr.mxu0 0.0
    %7070 = vmatpush1.msra.mxu0 0.0
    %7071 = vmatprep.subr.mxu0 0.0
    %7072 = vmatpush1.msra.mxu0 0.0
    %7073 = vmatprep.subr.mxu0 0.0
    %7074 = vmatpush1.msra.mxu0 0.0
    %7075 = vmatprep.subr.mxu0 0.0
    %7076 = vmatpush1.msra.mxu0 0.0
    %7077 = vmatprep.subr.mxu0 0.0
    %7078 = vmatpush1.msra.mxu0 0.0
    %7079 = vmatprep.subr.mxu0 0.0
    %7080 = vmatpush1.msra.mxu0 0.0
    %7081 = vmatprep.subr.mxu0 0.0
    %7082 = vmatpush1.msra.mxu0 0.0
    %7083 = vmatprep.subr.mxu0 0.0
    %7084 = vmatpush1.msra.mxu0 0.0
    %7085 = vmatprep.subr.mxu0 0.0
    %7086 = vmatpush1.msra.mxu0 0.0
    %7087 = vmatprep.subr.mxu0 0.0
    %7088 = vmatpush1.msra.mxu0 0.0
    %7089 = vmatprep.mubr.f32.mxu0 %v6384
    %7090 = vmatmul.mubr.f32.gmra.mrb[0].mxu0 %v6021
    %v7091 = vpop.f32.mrb[0].mxu0
    %v7092 = vadd.f32 0.0, %v7091
    %v7093 = vpop.f32.mrb[0].mxu0
    %v7094 = vadd.f32 0.0, %v7093
    %7095 = vdwg.mxu0
    %7096 = vst [vmem:[#allocation17] sm:$0xff] %v6453
    %7097 = vst [vmem:[#allocation17 + $0x8] sm:$0xff] %v6455
    %7098 = vst [vmem:[#allocation17 + $0x10] sm:$0xff] %v6524
    %7099 = vst [vmem:[#allocation17 + $0x18] sm:$0xff] %v6526
    %7100 = vst [vmem:[#allocation17 + $0x20] sm:$0xff] %v6595
    %7101 = vst [vmem:[#allocation17 + $0x28] sm:$0xff] %v6597
    %7102 = vst [vmem:[#allocation17 + $0x30] sm:$0xff] %v6666
    %7103 = vst [vmem:[#allocation17 + $0x38] sm:$0xff] %v6668
    %7104 = vst [vmem:[#allocation17 + $0x40] sm:$0xff] %v6737
    %7105 = vst [vmem:[#allocation17 + $0x48] sm:$0xff] %v6739
    %7106 = vst [vmem:[#allocation17 + $0x50] sm:$0xff] %v6808
    %7107 = vst [vmem:[#allocation17 + $0x58] sm:$0xff] %v6810
    %7108 = vst [vmem:[#allocation17 + $0x60] sm:$0xff] %v6879
    %7109 = vst [vmem:[#allocation17 + $0x68] sm:$0xff] %v6881
    %7110 = vst [vmem:[#allocation17 + $0x70] sm:$0xff] %v6950
    %7111 = vst [vmem:[#allocation17 + $0x78] sm:$0xff] %v6952
    %7112 = vst [vmem:[#allocation17 + $0x80] sm:$0xff] %v7021
    %7113 = vst [vmem:[#allocation17 + $0x88] sm:$0xff] %v7023
    %7114 = vst [vmem:[#allocation17 + $0x90] sm:$0xff] %v7092
    %7115 = vst [vmem:[#allocation17 + $0x98] sm:$0xff] %v7094
    // Predicated region
    $region102: #{tpu_custom_call.1} parent=1 // pred_check
      _
    $region103: #{tpu_custom_call.1} parent=1 // pred_check_branch
      %7117 = sbr.rel (0) target = $region105
    $region104: #{tpu_custom_call.1} parent=1 // pred_region
      %s7119 = ssub.s32 2560, 2560
      %7120 = vsyncadd [#allocation7], %s7119
      %s7122 = sshll.u32 [#allocation17], 4
      %s7123 = int_to_ptr.vmem [resolvable:$true] %s7122
      %7125 = dma.vmem_to_hbm [thread:$0]  %s7123, 2560, %s19, [#allocation7]
    $region105: #{tpu_custom_call.1} parent=1 // pred_fallthru
      _
    // Predicated region
    $region106: #{tpu_custom_call.1} parent=1 // pred_check
      _
    $region107: #{tpu_custom_call.1} parent=1 // pred_check_branch
      %7127 = sbr.rel (0) target = $region109
    $region108: #{tpu_custom_call.1} parent=1 // pred_region
      %7128 = dma.done [#allocation7], 2560
    $region109: #{tpu_custom_call.1} parent=1 // pred_fallthru
      _
    %7129 = vsyncpa [#allocation6], 1
    %7130 = vsyncpa [#allocation9], 1
    %7131 = vsyncpa [#allocation12], 1
    %7132 = vsyncpa [#allocation15], 1
    %7133 = vsyncpa [#allocation7], 1
  %7134 = vsyncmov [#allocation3]
  %s7135 = vpop.sfrf %7134
  %p7136 = scmp.eq.s32.totalorder %s7135, 0
  %p7137 = pneg %p7136
  %7139 = shalt.err (%p7137)

</llo_original>
